<compile_context>
chip_gen: v6e
topology: v6e:2x2x1
jax: 0.10.0
libtpu: 0.0.40
codegen_flags: <defaults>
</compile_context>

<pallas_src>
import functools

import jax
import jax.numpy as jnp
from jax.experimental import pallas as pl
from jax.experimental.pallas import tpu as pltpu

EPS = 1e-5  # torch.nn.GroupNorm default eps


# --------------------------------------------------------------------------
# In-kernel helpers
# --------------------------------------------------------------------------
def _group_totals(stat_c, num_groups):
    """Per-group totals of a per-channel statistic, broadcast back to channels.

    stat_c: (1, C) f32.  Groups are contiguous channel blocks (torch GroupNorm).
    Static lane slices + tiny reductions only (no group-membership matmul).
    """
    C = stat_c.shape[-1]
    cg = C // num_groups
    parts = []
    for g in range(num_groups):
        tot = jnp.sum(stat_c[:, g * cg:(g + 1) * cg], axis=-1, keepdims=True)  # (1, 1)
        parts.append(jnp.broadcast_to(tot, (1, cg)))
    return jnp.concatenate(parts, axis=-1)                                      # (1, C)


# --------------------------------------------------------------------------
# Fused BasicConv layer kernel:  out = x + conv2(SiLU(GN2(conv1(SiLU(GN1(x))))))
# --------------------------------------------------------------------------
def basic_conv_kernel(x_ref, g1_ref, be1_ref, w1_ref, b1_ref,
                      g2_ref, be2_ref, w2_ref, b2_ref, o_ref, xp,
                      *, W, num_groups):
    """Refs:
      x_ref : (H*W, C)       bf16 activations (spatial flattened, channels last)
      g*/be*: (1, C)          f32 GroupNorm scale / shift
      w*    : (3, 3*C, C)     bf16 conv taps, [ky, kx*C + cin, cout]
      b*    : (1, C)          f32 conv bias
      o_ref : (H*W, C)        bf16 output
      xp    : ((H+2)*W, 3*C)  bf16 scratch: xp[a*W + j, kx*C + c] == padded_act[a, j+kx, c]
    """
    HW, C = x_ref.shape
    H = HW // W
    inv_cnt = 1.0 / (HW * (C // num_groups))
    bf = xp.dtype

    # Top/bottom halo rows of the padded scratch (never touched by interior writes).
    # Zeroed every step (only 2*W rows) so the kernel is correct under megacore sharding.
    xp[0:W, :] = jnp.zeros((W, 3 * C), bf)
    xp[(H + 1) * W:(H + 2) * W, :] = jnp.zeros((W, 3 * C), bf)

    # Column index of each flattened row -> left/right conv-halo masks (hoisted, reused).
    col = jax.lax.broadcasted_iota(jnp.int32, (HW, C), 0) % W
    at_left = col == 0
    at_right = col == (W - 1)

    def half_layer(v, gamma_ref, beta_ref, w_ref, bias_ref):
        # ---- GroupNorm (one-pass stats, f32) + SiLU; Dropout = identity (eval) ----
        s1 = jnp.sum(v, axis=0, keepdims=True)                       # (1, C)
        s2 = jnp.sum(v * v, axis=0, keepdims=True)                   # (1, C)
        mean = _group_totals(s1, num_groups) * inv_cnt
        var = jnp.maximum(_group_totals(s2, num_groups) * inv_cnt - mean * mean, 0.0)
        scale = gamma_ref[...] * jax.lax.rsqrt(var + EPS)             # (1, C)
        shift = beta_ref[...] - mean * scale
        y = v * scale + shift
        y = y * jax.nn.sigmoid(y)                                     # SiLU

        # ---- build the flat conv operand: center + left/right shifted copies ----
        xp[W:W + HW, C:2 * C] = y.astype(bf)                                        # kx = 1
        xp[W:W + HW, 0:C] = jnp.where(
            at_left, 0.0, pltpu.roll(y, shift=1, axis=0)).astype(bf)                # kx = 0
        xp[W:W + HW, 2 * C:3 * C] = jnp.where(
            at_right, 0.0, pltpu.roll(y, shift=HW - 1, axis=0)).astype(bf)          # kx = 2

        # ---- 3x3 conv as 3 matmuls with K = 3*C; operands are scratch row views ----
        acc = jnp.dot(xp[0:HW, :], w_ref[0],
                      preferred_element_type=jnp.float32) + bias_ref[...]
        acc = acc + jnp.dot(xp[W:W + HW, :], w_ref[1], preferred_element_type=jnp.float32)
        acc = acc + jnp.dot(xp[2 * W:2 * W + HW, :], w_ref[2],
                            preferred_element_type=jnp.float32)
        return acc                                                    # (HW, C) f32

    x = x_ref[...].astype(jnp.float32)
    h = half_layer(x, g1_ref, be1_ref, w1_ref, b1_ref)
    out = half_layer(h, g2_ref, be2_ref, w2_ref, b2_ref) + x          # residual add
    o_ref[...] = out.astype(o_ref.dtype)


# --------------------------------------------------------------------------
# 4x4 stride-2 pad-1 downsample conv kernel (row-parity pair layout)
# --------------------------------------------------------------------------
def down4x4s2_kernel(x_ref, w_ref, b_ref, o_ref, xq0, xq1, *, W2):
    """Refs:
      x_ref : (H2, 2, W2, 2C)    bf16, x_ref[hh, p, j, q*C+c] == x[2hh+p, 2j+q, c]
      w_ref : (4, 4*C, Cout)      bf16 taps, [ky, kx*C + cin, cout]
      b_ref : (1, Cout)           f32
      o_ref : (H2*W2, Cout)       f32
      xq0/1 : ((H2+1)*W2, 4*C)    bf16 row-parity planes:
              xq{hp}[hh*W2 + j, kx*C + c] == zero-padded x[2hh+hp, 2j+kx, c]
    """
    H2 = x_ref.shape[0]
    C = x_ref.shape[3] // 2
    HW2 = H2 * W2
    bf = xq0.dtype

    # Never-overwritten halo rows (top of hp=0 plane, bottom of hp=1 plane).
    xq0[0:W2, :] = jnp.zeros((W2, 4 * C), bf)
    xq1[HW2:HW2 + W2, :] = jnp.zeros((W2, 4 * C), bf)

    col = jax.lax.broadcasted_iota(jnp.int32, (HW2, C), 0) % W2
    at_left = col == 0
    at_right = col == (W2 - 1)

    # hp=1 plane <- source p'=0 at flat-row offset 0 ; hp=0 plane <- p'=1 at offset W2.
    for xq, p_src, row0 in ((xq1, 0, 0), (xq0, 1, W2)):
        xe = x_ref[:, p_src:p_src + 1, :, 0:C].astype(jnp.float32).reshape(HW2, C)       # q'=0
        xo = x_ref[:, p_src:p_src + 1, :, C:2 * C].astype(jnp.float32).reshape(HW2, C)   # q'=1
        xq[row0:row0 + HW2, C:2 * C] = xe.astype(bf)                                     # kx = 1
        xq[row0:row0 + HW2, 2 * C:3 * C] = xo.astype(bf)                                 # kx = 2
        xq[row0:row0 + HW2, 0:C] = jnp.where(
            at_left, 0.0, pltpu.roll(xo, shift=1, axis=0)).astype(bf)                    # kx = 0
        xq[row0:row0 + HW2, 3 * C:4 * C] = jnp.where(
            at_right, 0.0, pltpu.roll(xe, shift=HW2 - 1, axis=0)).astype(bf)             # kx = 3

    # ky -> (row-parity plane, flat-row offset); 4 matmuls with K = 4*C.
    acc = jnp.dot(xq0[0:HW2, :], w_ref[0], preferred_element_type=jnp.float32) + b_ref[...]
    acc = acc + jnp.dot(xq1[0:HW2, :], w_ref[1], preferred_element_type=jnp.float32)
    acc = acc + jnp.dot(xq0[W2:W2 + HW2, :], w_ref[2], preferred_element_type=jnp.float32)
    acc = acc + jnp.dot(xq1[W2:W2 + HW2, :], w_ref[3], preferred_element_type=jnp.float32)
    o_ref[...] = acc.astype(o_ref.dtype)


# --------------------------------------------------------------------------
# Pallas wrappers
# --------------------------------------------------------------------------
def basic_conv_layer(x, lp, *, num_groups, H, W):
    """x: (N, H*W, C) bf16 -> (N, H*W, C) bf16  (one full BasicConv layer, fused)."""
    N, HW, C = x.shape
    kern = functools.partial(basic_conv_kernel, W=W, num_groups=num_groups)
    vec_spec = pl.BlockSpec((1, C), lambda n: (0, 0))
    w_spec = pl.BlockSpec((3, 3 * C, C), lambda n: (0, 0, 0))
    act_spec = pl.BlockSpec((None, HW, C), lambda n: (n, 0, 0))
    return pl.pallas_call(
        kern,
        out_shape=jax.ShapeDtypeStruct((N, HW, C), jnp.bfloat16),
        grid=(N,),
        in_specs=[act_spec, vec_spec, vec_spec, w_spec, vec_spec,
                  vec_spec, vec_spec, w_spec, vec_spec],
        out_specs=act_spec,
        scratch_shapes=[pltpu.VMEM(((H + 2) * W, 3 * C), jnp.bfloat16)],
        compiler_params=pltpu.CompilerParams(
            dimension_semantics=("parallel",),
            vmem_limit_bytes=64 * 1024 * 1024),
    )(x, lp["gamma1"], lp["beta1"], lp["w1"], lp["b1"],
      lp["gamma2"], lp["beta2"], lp["w2"], lp["b2"])


def downsample_4x4s2(x, w, b, *, H, W):
    """x: (N, H*W, C) bf16 -> (N, (H/2)*(W/2), Cout) f32  (Conv2d k=4, s=2, p=1)."""
    N, HW, C = x.shape
    assert H % 2 == 0 and W % 2 == 0 and HW == H * W
    H2, W2 = H // 2, W // 2
    Cout = w.shape[-1]

    # FREE metadata-only reshape: xr[n, hh, p, j, q*C+c] == x[n, 2hh+p, 2j+q, c]
    xr = x.reshape(N, H2, 2, W2, 2 * C)

    kern = functools.partial(down4x4s2_kernel, W2=W2)
    return pl.pallas_call(
        kern,
        out_shape=jax.ShapeDtypeStruct((N, H2 * W2, Cout), jnp.float32),
        grid=(N,),
        in_specs=[
            pl.BlockSpec((None, H2, 2, W2, 2 * C), lambda n: (n, 0, 0, 0, 0)),
            pl.BlockSpec((4, 4 * C, Cout), lambda n: (0, 0, 0)),
            pl.BlockSpec((1, Cout), lambda n: (0, 0)),
        ],
        out_specs=pl.BlockSpec((None, H2 * W2, Cout), lambda n: (n, 0, 0)),
        scratch_shapes=[pltpu.VMEM(((H2 + 1) * W2, 4 * C), jnp.bfloat16),
                        pltpu.VMEM(((H2 + 1) * W2, 4 * C), jnp.bfloat16)],
        compiler_params=pltpu.CompilerParams(
            dimension_semantics=("parallel",),
            vmem_limit_bytes=64 * 1024 * 1024),
    )(xr, w, b)


# --------------------------------------------------------------------------
# Module forward (NCHW <-> flattened NHWC only at the boundary)
# --------------------------------------------------------------------------
def res_block_up_down_sample(x_nchw, params, num_groups):
    """Forward pass of ResBlockUpDownSample with sample='down' (eval mode)."""
    N, C, H, W = x_nchw.shape
    # NCHW -> (N, H*W, C) bf16 once; inter-layer activations stay bf16.
    x = jnp.transpose(x_nchw, (0, 2, 3, 1)).reshape(N, H * W, C).astype(jnp.bfloat16)

    for lp in params["layers"]:
        x = basic_conv_layer(x, lp, num_groups=num_groups, H=H, W=W)

    out = downsample_4x4s2(x, params["w_down"], params["b_down"], H=H, W=W)
    Cout = params["w_down"].shape[-1]
    out = out.reshape(N, H // 2, W // 2, Cout)
    return jnp.transpose(out, (0, 3, 1, 2))                          # NHWC -> NCHW


def init_params(key, in_channels, out_channels, num_layers):
    """Deterministic synthetic parameters, stored directly in kernel layout.

    A torch Conv2d weight Wt[cout, cin, ky, kx] maps to w[ky, kx*Cin + cin, cout] (bf16);
    GroupNorm gamma/beta and conv biases are (1, C) f32.
    """
    C, Co = in_channels, out_channels
    layers = []
    for l in range(num_layers):
        k = jax.random.fold_in(key, l)
        ks = jax.random.split(k, 8)
        layers.append(dict(
            gamma1=1.0 + 0.1 * jax.random.normal(ks[0], (1, C), jnp.float32),
            beta1=0.1 * jax.random.normal(ks[1], (1, C), jnp.float32),
            w1=(0.1 * jax.random.normal(ks[2], (3, 3 * C, C), jnp.float32)).astype(jnp.bfloat16),
            b1=0.1 * jax.random.normal(ks[3], (1, C), jnp.float32),
            gamma2=1.0 + 0.1 * jax.random.normal(ks[4], (1, C), jnp.float32),
            beta2=0.1 * jax.random.normal(ks[5], (1, C), jnp.float32),
            w2=(0.1 * jax.random.normal(ks[6], (3, 3 * C, C), jnp.float32)).astype(jnp.bfloat16),
            b2=0.1 * jax.random.normal(ks[7], (1, C), jnp.float32),
        ))
    kd1, kd2 = jax.random.split(jax.random.fold_in(key, 10_000), 2)
    return dict(
        layers=layers,
        w_down=(0.1 * jax.random.normal(kd1, (4, 4 * C, Co), jnp.float32)).astype(jnp.bfloat16),
        b_down=0.1 * jax.random.normal(kd2, (1, Co), jnp.float32),
    )


if __name__ == "__main__":
    key = jax.random.PRNGKey(0)
    kx_, kp = jax.random.split(key)

    N, Cin, H, W = 2, 32, 16, 16
    Cout, num_groups, num_layers = 64, 8, 2

    x = jax.random.normal(kx_, (N, Cin, H, W), jnp.float32)
    params = init_params(kp, Cin, Cout, num_layers)

    fwd = jax.jit(functools.partial(res_block_up_down_sample, num_groups=num_groups))
    out = jax.block_until_ready(fwd(x, params))

    assert out.shape == (N, Cout, H // 2, W // 2), out.shape
    assert bool(jnp.all(jnp.isfinite(out)))
    print("KERNEL_OK")
</pallas_src>

<mosaic_0001>
module attributes {stable_mosaic.version = 11 : i64} {
  func.func @basic_conv_kernel(%arg0: i32, %arg1: memref<1x256x32xbf16, #tpu.memory_space<vmem>>, %arg2: memref<1x32xf32, #tpu.memory_space<vmem>>, %arg3: memref<1x32xf32, #tpu.memory_space<vmem>>, %arg4: memref<3x96x32xbf16, #tpu.memory_space<vmem>>, %arg5: memref<1x32xf32, #tpu.memory_space<vmem>>, %arg6: memref<1x32xf32, #tpu.memory_space<vmem>>, %arg7: memref<1x32xf32, #tpu.memory_space<vmem>>, %arg8: memref<3x96x32xbf16, #tpu.memory_space<vmem>>, %arg9: memref<1x32xf32, #tpu.memory_space<vmem>>, %arg10: memref<1x256x32xbf16, #tpu.memory_space<vmem>>, %arg11: memref<288x96xbf16, #tpu.memory_space<vmem>>) attributes {dimension_semantics = [#tpu.dimension_semantics<parallel>], iteration_bounds = array<i64: 2>, scalar_prefetch = 0 : i64, scratch_operands = 1 : i64, tpu.core_type = #tpu.core_type<tc>, window_params = [{transform_indices = @transform_0, window_bounds = array<i64: 1, 256, 32>}, {pipeline_mode = #tpu.pipeline_mode<synchronous>, transform_indices = @transform_1, window_bounds = array<i64: 1, 32>}, {pipeline_mode = #tpu.pipeline_mode<synchronous>, transform_indices = @transform_2, window_bounds = array<i64: 1, 32>}, {pipeline_mode = #tpu.pipeline_mode<synchronous>, transform_indices = @transform_3, window_bounds = array<i64: 3, 96, 32>}, {pipeline_mode = #tpu.pipeline_mode<synchronous>, transform_indices = @transform_4, window_bounds = array<i64: 1, 32>}, {pipeline_mode = #tpu.pipeline_mode<synchronous>, transform_indices = @transform_5, window_bounds = array<i64: 1, 32>}, {pipeline_mode = #tpu.pipeline_mode<synchronous>, transform_indices = @transform_6, window_bounds = array<i64: 1, 32>}, {pipeline_mode = #tpu.pipeline_mode<synchronous>, transform_indices = @transform_7, window_bounds = array<i64: 3, 96, 32>}, {pipeline_mode = #tpu.pipeline_mode<synchronous>, transform_indices = @transform_8, window_bounds = array<i64: 1, 32>}, {transform_indices = @transform_9, window_bounds = array<i64: 1, 256, 32>}]} {
    %cst = arith.constant 0.000000e+00 : bf16
    %0 = vector.broadcast %cst : bf16 to vector<16x96xbf16>
    %c0 = arith.constant 0 : index
    %c0_0 = arith.constant 0 : index
    %1 = vector.load %arg11[%c0, %c0_0] : memref<288x96xbf16, #tpu.memory_space<vmem>>, vector<16x96xbf16>
    tpu.vector_store %arg11[%c0, %c0_0], %0 {strides = array<i32>} : memref<288x96xbf16, #tpu.memory_space<vmem>>, vector<16x96xbf16>,
    %cst_1 = arith.constant 0.000000e+00 : bf16
    %2 = vector.broadcast %cst_1 : bf16 to vector<16x96xbf16>
    %c272 = arith.constant 272 : index
    %c0_2 = arith.constant 0 : index
    %3 = vector.load %arg11[%c272, %c0_2] : memref<288x96xbf16, #tpu.memory_space<vmem>>, vector<16x96xbf16>
    tpu.vector_store %arg11[%c272, %c0_2], %2 {strides = array<i32>} : memref<288x96xbf16, #tpu.memory_space<vmem>>, vector<16x96xbf16>,
    %4 = tpu.iota {dimensions = array<i32: 0>} : vector<256x32xi32>
    %c16_i32 = arith.constant 16 : i32
    %c0_i32 = arith.constant 0 : i32
    %5 = arith.cmpi eq, %c16_i32, %c0_i32 : i32
    %c1_i32 = arith.constant 1 : i32
    %6 = arith.select %5, %c1_i32, %c16_i32 : i32
    %7 = vector.broadcast %6 : i32 to vector<256x32xi32>
    %8 = arith.remsi %4, %7 : vector<256x32xi32>
    %c0_i32_3 = arith.constant 0 : i32
    %9 = vector.broadcast %c0_i32_3 : i32 to vector<256x32xi32>
    %10 = arith.cmpi ne, %8, %9 : vector<256x32xi32>
    %c0_i32_4 = arith.constant 0 : i32
    %11 = vector.broadcast %c0_i32_4 : i32 to vector<256x32xi32>
    %12 = arith.cmpi slt, %8, %11 : vector<256x32xi32>
    %c0_i32_5 = arith.constant 0 : i32
    %13 = arith.cmpi slt, %6, %c0_i32_5 : i32
    %14 = vector.broadcast %13 : i1 to vector<256x32xi1>
    %15 = vector.broadcast %14 : vector<256x32xi1> to vector<256x32xi1>
    %16 = arith.xori %12, %15 : vector<256x32xi1>
    %17 = arith.andi %16, %10 : vector<256x32xi1>
    %18 = vector.broadcast %6 : i32 to vector<256x32xi32>
    %19 = arith.addi %8, %18 : vector<256x32xi32>
    %20 = arith.select %17, %19, %8 : vector<256x32xi1>, vector<256x32xi32>
    %c0_i32_6 = arith.constant 0 : i32
    %21 = vector.broadcast %c0_i32_6 : i32 to vector<256x32xi32>
    %22 = arith.cmpi eq, %20, %21 : vector<256x32xi32>
    %c15_i32 = arith.constant 15 : i32
    %23 = vector.broadcast %c15_i32 : i32 to vector<256x32xi32>
    %24 = arith.cmpi eq, %20, %23 : vector<256x32xi32>
    %c0_7 = arith.constant 0 : index
    %c0_8 = arith.constant 0 : index
    %c0_9 = arith.constant 0 : index
    %25 = vector.load %arg1[%c0_7, %c0_8, %c0_9] : memref<1x256x32xbf16, #tpu.memory_space<vmem>>, vector<1x256x32xbf16>
    %26 = vector.shape_cast %25 : vector<1x256x32xbf16> to vector<256x32xbf16>
    %27 = arith.extf %26 : vector<256x32xbf16> to vector<256x32xf32>
    %cst_10 = arith.constant dense<0.000000e+00> : vector<32xf32>
    %28 = vector.multi_reduction <add>, %27, %cst_10 [0] : vector<256x32xf32> to vector<32xf32>
    %29 = vector.shape_cast %28 : vector<32xf32> to vector<1x32xf32>
    %30 = arith.mulf %27, %27 : vector<256x32xf32>
    %cst_11 = arith.constant dense<0.000000e+00> : vector<32xf32>
    %31 = vector.multi_reduction <add>, %30, %cst_11 [0] : vector<256x32xf32> to vector<32xf32>
    %32 = vector.shape_cast %31 : vector<32xf32> to vector<1x32xf32>
    %33 = vector.extract_strided_slice %29 {offsets = [0, 0], sizes = [1, 4], strides = [1, 1]} : vector<1x32xf32> to vector<1x4xf32>
    %cst_12 = arith.constant dense<0.000000e+00> : vector<1xf32>
    %34 = vector.multi_reduction <add>, %33, %cst_12 [1] : vector<1x4xf32> to vector<1xf32>
    %35 = vector.shape_cast %34 : vector<1xf32> to vector<1x1xf32>
    %36 = vector.shape_cast %35 : vector<1x1xf32> to vector<1x1xf32>
    %37 = vector.broadcast %36 : vector<1x1xf32> to vector<1x4xf32>
    %38 = vector.extract_strided_slice %29 {offsets = [0, 4], sizes = [1, 4], strides = [1, 1]} : vector<1x32xf32> to vector<1x4xf32>
    %cst_13 = arith.constant dense<0.000000e+00> : vector<1xf32>
    %39 = vector.multi_reduction <add>, %38, %cst_13 [1] : vector<1x4xf32> to vector<1xf32>
    %40 = vector.shape_cast %39 : vector<1xf32> to vector<1x1xf32>
    %41 = vector.shape_cast %40 : vector<1x1xf32> to vector<1x1xf32>
    %42 = vector.broadcast %41 : vector<1x1xf32> to vector<1x4xf32>
    %43 = vector.extract_strided_slice %29 {offsets = [0, 8], sizes = [1, 4], strides = [1, 1]} : vector<1x32xf32> to vector<1x4xf32>
    %cst_14 = arith.constant dense<0.000000e+00> : vector<1xf32>
    %44 = vector.multi_reduction <add>, %43, %cst_14 [1] : vector<1x4xf32> to vector<1xf32>
    %45 = vector.shape_cast %44 : vector<1xf32> to vector<1x1xf32>
    %46 = vector.shape_cast %45 : vector<1x1xf32> to vector<1x1xf32>
    %47 = vector.broadcast %46 : vector<1x1xf32> to vector<1x4xf32>
    %48 = vector.extract_strided_slice %29 {offsets = [0, 12], sizes = [1, 4], strides = [1, 1]} : vector<1x32xf32> to vector<1x4xf32>
    %cst_15 = arith.constant dense<0.000000e+00> : vector<1xf32>
    %49 = vector.multi_reduction <add>, %48, %cst_15 [1] : vector<1x4xf32> to vector<1xf32>
    %50 = vector.shape_cast %49 : vector<1xf32> to vector<1x1xf32>
    %51 = vector.shape_cast %50 : vector<1x1xf32> to vector<1x1xf32>
    %52 = vector.broadcast %51 : vector<1x1xf32> to vector<1x4xf32>
    %53 = vector.extract_strided_slice %29 {offsets = [0, 16], sizes = [1, 4], strides = [1, 1]} : vector<1x32xf32> to vector<1x4xf32>
    %cst_16 = arith.constant dense<0.000000e+00> : vector<1xf32>
    %54 = vector.multi_reduction <add>, %53, %cst_16 [1] : vector<1x4xf32> to vector<1xf32>
    %55 = vector.shape_cast %54 : vector<1xf32> to vector<1x1xf32>
    %56 = vector.shape_cast %55 : vector<1x1xf32> to vector<1x1xf32>
    %57 = vector.broadcast %56 : vector<1x1xf32> to vector<1x4xf32>
    %58 = vector.extract_strided_slice %29 {offsets = [0, 20], sizes = [1, 4], strides = [1, 1]} : vector<1x32xf32> to vector<1x4xf32>
    %cst_17 = arith.constant dense<0.000000e+00> : vector<1xf32>
    %59 = vector.multi_reduction <add>, %58, %cst_17 [1] : vector<1x4xf32> to vector<1xf32>
    %60 = vector.shape_cast %59 : vector<1xf32> to vector<1x1xf32>
    %61 = vector.shape_cast %60 : vector<1x1xf32> to vector<1x1xf32>
    %62 = vector.broadcast %61 : vector<1x1xf32> to vector<1x4xf32>
    %63 = vector.extract_strided_slice %29 {offsets = [0, 24], sizes = [1, 4], strides = [1, 1]} : vector<1x32xf32> to vector<1x4xf32>
    %cst_18 = arith.constant dense<0.000000e+00> : vector<1xf32>
    %64 = vector.multi_reduction <add>, %63, %cst_18 [1] : vector<1x4xf32> to vector<1xf32>
    %65 = vector.shape_cast %64 : vector<1xf32> to vector<1x1xf32>
    %66 = vector.shape_cast %65 : vector<1x1xf32> to vector<1x1xf32>
    %67 = vector.broadcast %66 : vector<1x1xf32> to vector<1x4xf32>
    %68 = vector.extract_strided_slice %29 {offsets = [0, 28], sizes = [1, 4], strides = [1, 1]} : vector<1x32xf32> to vector<1x4xf32>
    %cst_19 = arith.constant dense<0.000000e+00> : vector<1xf32>
    %69 = vector.multi_reduction <add>, %68, %cst_19 [1] : vector<1x4xf32> to vector<1xf32>
    %70 = vector.shape_cast %69 : vector<1xf32> to vector<1x1xf32>
    %71 = vector.shape_cast %70 : vector<1x1xf32> to vector<1x1xf32>
    %72 = vector.broadcast %71 : vector<1x1xf32> to vector<1x4xf32>
    %73 = tpu.concatenate %37, %42, %47, %52, %57, %62, %67, %72 in 1 : vector<1x4xf32>, vector<1x4xf32>, vector<1x4xf32>, vector<1x4xf32>, vector<1x4xf32>, vector<1x4xf32>, vector<1x4xf32>, vector<1x4xf32> -> vector<1x32xf32>
    %cst_20 = arith.constant 9.765625E-4 : f32
    %74 = vector.broadcast %cst_20 : f32 to vector<1x32xf32>
    %75 = arith.mulf %73, %74 : vector<1x32xf32>
    %76 = vector.extract_strided_slice %32 {offsets = [0, 0], sizes = [1, 4], strides = [1, 1]} : vector<1x32xf32> to vector<1x4xf32>
    %cst_21 = arith.constant dense<0.000000e+00> : vector<1xf32>
    %77 = vector.multi_reduction <add>, %76, %cst_21 [1] : vector<1x4xf32> to vector<1xf32>
    %78 = vector.shape_cast %77 : vector<1xf32> to vector<1x1xf32>
    %79 = vector.shape_cast %78 : vector<1x1xf32> to vector<1x1xf32>
    %80 = vector.broadcast %79 : vector<1x1xf32> to vector<1x4xf32>
    %81 = vector.extract_strided_slice %32 {offsets = [0, 4], sizes = [1, 4], strides = [1, 1]} : vector<1x32xf32> to vector<1x4xf32>
    %cst_22 = arith.constant dense<0.000000e+00> : vector<1xf32>
    %82 = vector.multi_reduction <add>, %81, %cst_22 [1] : vector<1x4xf32> to vector<1xf32>
    %83 = vector.shape_cast %82 : vector<1xf32> to vector<1x1xf32>
    %84 = vector.shape_cast %83 : vector<1x1xf32> to vector<1x1xf32>
    %85 = vector.broadcast %84 : vector<1x1xf32> to vector<1x4xf32>
    %86 = vector.extract_strided_slice %32 {offsets = [0, 8], sizes = [1, 4], strides = [1, 1]} : vector<1x32xf32> to vector<1x4xf32>
    %cst_23 = arith.constant dense<0.000000e+00> : vector<1xf32>
    %87 = vector.multi_reduction <add>, %86, %cst_23 [1] : vector<1x4xf32> to vector<1xf32>
    %88 = vector.shape_cast %87 : vector<1xf32> to vector<1x1xf32>
    %89 = vector.shape_cast %88 : vector<1x1xf32> to vector<1x1xf32>
    %90 = vector.broadcast %89 : vector<1x1xf32> to vector<1x4xf32>
    %91 = vector.extract_strided_slice %32 {offsets = [0, 12], sizes = [1, 4], strides = [1, 1]} : vector<1x32xf32> to vector<1x4xf32>
    %cst_24 = arith.constant dense<0.000000e+00> : vector<1xf32>
    %92 = vector.multi_reduction <add>, %91, %cst_24 [1] : vector<1x4xf32> to vector<1xf32>
    %93 = vector.shape_cast %92 : vector<1xf32> to vector<1x1xf32>
    %94 = vector.shape_cast %93 : vector<1x1xf32> to vector<1x1xf32>
    %95 = vector.broadcast %94 : vector<1x1xf32> to vector<1x4xf32>
    %96 = vector.extract_strided_slice %32 {offsets = [0, 16], sizes = [1, 4], strides = [1, 1]} : vector<1x32xf32> to vector<1x4xf32>
    %cst_25 = arith.constant dense<0.000000e+00> : vector<1xf32>
    %97 = vector.multi_reduction <add>, %96, %cst_25 [1] : vector<1x4xf32> to vector<1xf32>
    %98 = vector.shape_cast %97 : vector<1xf32> to vector<1x1xf32>
    %99 = vector.shape_cast %98 : vector<1x1xf32> to vector<1x1xf32>
    %100 = vector.broadcast %99 : vector<1x1xf32> to vector<1x4xf32>
    %101 = vector.extract_strided_slice %32 {offsets = [0, 20], sizes = [1, 4], strides = [1, 1]} : vector<1x32xf32> to vector<1x4xf32>
    %cst_26 = arith.constant dense<0.000000e+00> : vector<1xf32>
    %102 = vector.multi_reduction <add>, %101, %cst_26 [1] : vector<1x4xf32> to vector<1xf32>
    %103 = vector.shape_cast %102 : vector<1xf32> to vector<1x1xf32>
    %104 = vector.shape_cast %103 : vector<1x1xf32> to vector<1x1xf32>
    %105 = vector.broadcast %104 : vector<1x1xf32> to vector<1x4xf32>
    %106 = vector.extract_strided_slice %32 {offsets = [0, 24], sizes = [1, 4], strides = [1, 1]} : vector<1x32xf32> to vector<1x4xf32>
    %cst_27 = arith.constant dense<0.000000e+00> : vector<1xf32>
    %107 = vector.multi_reduction <add>, %106, %cst_27 [1] : vector<1x4xf32> to vector<1xf32>
    %108 = vector.shape_cast %107 : vector<1xf32> to vector<1x1xf32>
    %109 = vector.shape_cast %108 : vector<1x1xf32> to vector<1x1xf32>
    %110 = vector.broadcast %109 : vector<1x1xf32> to vector<1x4xf32>
    %111 = vector.extract_strided_slice %32 {offsets = [0, 28], sizes = [1, 4], strides = [1, 1]} : vector<1x32xf32> to vector<1x4xf32>
    %cst_28 = arith.constant dense<0.000000e+00> : vector<1xf32>
    %112 = vector.multi_reduction <add>, %111, %cst_28 [1] : vector<1x4xf32> to vector<1xf32>
    %113 = vector.shape_cast %112 : vector<1xf32> to vector<1x1xf32>
    %114 = vector.shape_cast %113 : vector<1x1xf32> to vector<1x1xf32>
    %115 = vector.broadcast %114 : vector<1x1xf32> to vector<1x4xf32>
    %116 = tpu.concatenate %80, %85, %90, %95, %100, %105, %110, %115 in 1 : vector<1x4xf32>, vector<1x4xf32>, vector<1x4xf32>, vector<1x4xf32>, vector<1x4xf32>, vector<1x4xf32>, vector<1x4xf32>, vector<1x4xf32> -> vector<1x32xf32>
    %cst_29 = arith.constant 9.765625E-4 : f32
    %117 = vector.broadcast %cst_29 : f32 to vector<1x32xf32>
    %118 = arith.mulf %116, %117 : vector<1x32xf32>
    %119 = arith.mulf %75, %75 : vector<1x32xf32>
    %120 = arith.subf %118, %119 : vector<1x32xf32>
    %cst_30 = arith.constant 0.000000e+00 : f32
    %121 = vector.broadcast %cst_30 : f32 to vector<1x32xf32>
    %122 = arith.maximumf %120, %121 : vector<1x32xf32>
    %c0_31 = arith.constant 0 : index
    %c0_32 = arith.constant 0 : index
    %123 = vector.load %arg2[%c0_31, %c0_32] : memref<1x32xf32, #tpu.memory_space<vmem>>, vector<1x32xf32>
    %cst_33 = arith.constant 9.99999974E-6 : f32
    %124 = vector.broadcast %cst_33 : f32 to vector<1x32xf32>
    %125 = arith.addf %122, %124 : vector<1x32xf32>
    %126 = math.rsqrt %125 : vector<1x32xf32>
    %127 = arith.mulf %123, %126 : vector<1x32xf32>
    %c0_34 = arith.constant 0 : index
    %c0_35 = arith.constant 0 : index
    %128 = vector.load %arg3[%c0_34, %c0_35] : memref<1x32xf32, #tpu.memory_space<vmem>>, vector<1x32xf32>
    %129 = arith.mulf %75, %127 : vector<1x32xf32>
    %130 = arith.subf %128, %129 : vector<1x32xf32>
    %131 = vector.broadcast %127 : vector<1x32xf32> to vector<256x32xf32>
    %132 = arith.mulf %27, %131 : vector<256x32xf32>
    %133 = vector.broadcast %130 : vector<1x32xf32> to vector<256x32xf32>
    %134 = arith.addf %132, %133 : vector<256x32xf32>
    %135 = arith.negf %134 : vector<256x32xf32>
    %136 = math.exp %135 : vector<256x32xf32>
    %cst_36 = arith.constant 1.000000e+00 : f32
    %137 = vector.broadcast %cst_36 : f32 to vector<256x32xf32>
    %138 = arith.addf %137, %136 : vector<256x32xf32>
    %139 = arith.divf %137, %138 : vector<256x32xf32>
    %140 = arith.mulf %134, %139 : vector<256x32xf32>
    %141 = arith.truncf %140 : vector<256x32xf32> to vector<256x32xbf16>
    %c16 = arith.constant 16 : index
    %c32 = arith.constant 32 : index
    %142 = vector.load %arg11[%c16, %c32] : memref<288x96xbf16, #tpu.memory_space<vmem>>, vector<256x32xbf16>
    tpu.vector_store %arg11[%c16, %c32], %141 {strides = array<i32>} : memref<288x96xbf16, #tpu.memory_space<vmem>>, vector<256x32xbf16>,
    %c1_i32_37 = arith.constant 1 : i32
    %143 = tpu.dynamic_rotate %140 by %c1_i32_37 dim 0 : vector<256x32xf32>, i32 -> vector<256x32xf32>
    %cst_38 = arith.constant 0.000000e+00 : f32
    %144 = vector.broadcast %cst_38 : f32 to vector<256x32xf32>
    %145 = arith.select %22, %144, %143 : vector<256x32xi1>, vector<256x32xf32>
    %146 = arith.truncf %145 : vector<256x32xf32> to vector<256x32xbf16>
    %c16_39 = arith.constant 16 : index
    %c0_40 = arith.constant 0 : index
    %147 = vector.load %arg11[%c16_39, %c0_40] : memref<288x96xbf16, #tpu.memory_space<vmem>>, vector<256x32xbf16>
    tpu.vector_store %arg11[%c16_39, %c0_40], %146 {strides = array<i32>} : memref<288x96xbf16, #tpu.memory_space<vmem>>, vector<256x32xbf16>,
    %c255_i32 = arith.constant 255 : i32
    %148 = tpu.dynamic_rotate %140 by %c255_i32 dim 0 : vector<256x32xf32>, i32 -> vector<256x32xf32>
    %cst_41 = arith.constant 0.000000e+00 : f32
    %149 = vector.broadcast %cst_41 : f32 to vector<256x32xf32>
    %150 = arith.select %24, %149, %148 : vector<256x32xi1>, vector<256x32xf32>
    %151 = arith.truncf %150 : vector<256x32xf32> to vector<256x32xbf16>
    %c16_42 = arith.constant 16 : index
    %c64 = arith.constant 64 : index
    %152 = vector.load %arg11[%c16_42, %c64] : memref<288x96xbf16, #tpu.memory_space<vmem>>, vector<256x32xbf16>
    tpu.vector_store %arg11[%c16_42, %c64], %151 {strides = array<i32>} : memref<288x96xbf16, #tpu.memory_space<vmem>>, vector<256x32xbf16>,
    %c0_43 = arith.constant 0 : index
    %c0_44 = arith.constant 0 : index
    %153 = vector.load %arg11[%c0_43, %c0_44] : memref<288x96xbf16, #tpu.memory_space<vmem>>, vector<256x96xbf16>
    %c0_45 = arith.constant 0 : index
    %c0_46 = arith.constant 0 : index
    %c0_47 = arith.constant 0 : index
    %154 = vector.load %arg4[%c0_45, %c0_46, %c0_47] : memref<3x96x32xbf16, #tpu.memory_space<vmem>>, vector<1x96x32xbf16>
    %155 = vector.shape_cast %154 : vector<1x96x32xbf16> to vector<96x32xbf16>
    %cst_48 = arith.constant dense<0.000000e+00> : vector<256x32xf32>
    %156 = tpu.matmul %153, %155, %cst_48 {dimension_numbers = #tpu.dot_dimension_numbers<[1], [0], [0], [1], [0, 0, 1, 1], [], []>} : vector<256x96xbf16>, vector<96x32xbf16>, vector<256x32xf32> -> vector<256x32xf32>
    %c0_49 = arith.constant 0 : index
    %c0_50 = arith.constant 0 : index
    %157 = vector.load %arg5[%c0_49, %c0_50] : memref<1x32xf32, #tpu.memory_space<vmem>>, vector<1x32xf32>
    %158 = vector.broadcast %157 : vector<1x32xf32> to vector<256x32xf32>
    %159 = arith.addf %156, %158 : vector<256x32xf32>
    %c16_51 = arith.constant 16 : index
    %c0_52 = arith.constant 0 : index
    %160 = vector.load %arg11[%c16_51, %c0_52] : memref<288x96xbf16, #tpu.memory_space<vmem>>, vector<256x96xbf16>
    %c1 = arith.constant 1 : index
    %c0_53 = arith.constant 0 : index
    %c0_54 = arith.constant 0 : index
    %161 = vector.load %arg4[%c1, %c0_53, %c0_54] : memref<3x96x32xbf16, #tpu.memory_space<vmem>>, vector<1x96x32xbf16>
    %162 = vector.shape_cast %161 : vector<1x96x32xbf16> to vector<96x32xbf16>
    %cst_55 = arith.constant dense<0.000000e+00> : vector<256x32xf32>
    %163 = tpu.matmul %160, %162, %cst_55 {dimension_numbers = #tpu.dot_dimension_numbers<[1], [0], [0], [1], [0, 0, 1, 1], [], []>} : vector<256x96xbf16>, vector<96x32xbf16>, vector<256x32xf32> -> vector<256x32xf32>
    %164 = arith.addf %159, %163 : vector<256x32xf32>
    %c32_56 = arith.constant 32 : index
    %c0_57 = arith.constant 0 : index
    %165 = vector.load %arg11[%c32_56, %c0_57] : memref<288x96xbf16, #tpu.memory_space<vmem>>, vector<256x96xbf16>
    %c2 = arith.constant 2 : index
    %c0_58 = arith.constant 0 : index
    %c0_59 = arith.constant 0 : index
    %166 = vector.load %arg4[%c2, %c0_58, %c0_59] : memref<3x96x32xbf16, #tpu.memory_space<vmem>>, vector<1x96x32xbf16>
    %167 = vector.shape_cast %166 : vector<1x96x32xbf16> to vector<96x32xbf16>
    %cst_60 = arith.constant dense<0.000000e+00> : vector<256x32xf32>
    %168 = tpu.matmul %165, %167, %cst_60 {dimension_numbers = #tpu.dot_dimension_numbers<[1], [0], [0], [1], [0, 0, 1, 1], [], []>} : vector<256x96xbf16>, vector<96x32xbf16>, vector<256x32xf32> -> vector<256x32xf32>
    %169 = arith.addf %164, %168 : vector<256x32xf32>
    %cst_61 = arith.constant dense<0.000000e+00> : vector<32xf32>
    %170 = vector.multi_reduction <add>, %169, %cst_61 [0] : vector<256x32xf32> to vector<32xf32>
    %171 = vector.shape_cast %170 : vector<32xf32> to vector<1x32xf32>
    %172 = arith.mulf %169, %169 : vector<256x32xf32>
    %cst_62 = arith.constant dense<0.000000e+00> : vector<32xf32>
    %173 = vector.multi_reduction <add>, %172, %cst_62 [0] : vector<256x32xf32> to vector<32xf32>
    %174 = vector.shape_cast %173 : vector<32xf32> to vector<1x32xf32>
    %175 = vector.extract_strided_slice %171 {offsets = [0, 0], sizes = [1, 4], strides = [1, 1]} : vector<1x32xf32> to vector<1x4xf32>
    %cst_63 = arith.constant dense<0.000000e+00> : vector<1xf32>
    %176 = vector.multi_reduction <add>, %175, %cst_63 [1] : vector<1x4xf32> to vector<1xf32>
    %177 = vector.shape_cast %176 : vector<1xf32> to vector<1x1xf32>
    %178 = vector.shape_cast %177 : vector<1x1xf32> to vector<1x1xf32>
    %179 = vector.broadcast %178 : vector<1x1xf32> to vector<1x4xf32>
    %180 = vector.extract_strided_slice %171 {offsets = [0, 4], sizes = [1, 4], strides = [1, 1]} : vector<1x32xf32> to vector<1x4xf32>
    %cst_64 = arith.constant dense<0.000000e+00> : vector<1xf32>
    %181 = vector.multi_reduction <add>, %180, %cst_64 [1] : vector<1x4xf32> to vector<1xf32>
    %182 = vector.shape_cast %181 : vector<1xf32> to vector<1x1xf32>
    %183 = vector.shape_cast %182 : vector<1x1xf32> to vector<1x1xf32>
    %184 = vector.broadcast %183 : vector<1x1xf32> to vector<1x4xf32>
    %185 = vector.extract_strided_slice %171 {offsets = [0, 8], sizes = [1, 4], strides = [1, 1]} : vector<1x32xf32> to vector<1x4xf32>
    %cst_65 = arith.constant dense<0.000000e+00> : vector<1xf32>
    %186 = vector.multi_reduction <add>, %185, %cst_65 [1] : vector<1x4xf32> to vector<1xf32>
    %187 = vector.shape_cast %186 : vector<1xf32> to vector<1x1xf32>
    %188 = vector.shape_cast %187 : vector<1x1xf32> to vector<1x1xf32>
    %189 = vector.broadcast %188 : vector<1x1xf32> to vector<1x4xf32>
    %190 = vector.extract_strided_slice %171 {offsets = [0, 12], sizes = [1, 4], strides = [1, 1]} : vector<1x32xf32> to vector<1x4xf32>
    %cst_66 = arith.constant dense<0.000000e+00> : vector<1xf32>
    %191 = vector.multi_reduction <add>, %190, %cst_66 [1] : vector<1x4xf32> to vector<1xf32>
    %192 = vector.shape_cast %191 : vector<1xf32> to vector<1x1xf32>
    %193 = vector.shape_cast %192 : vector<1x1xf32> to vector<1x1xf32>
    %194 = vector.broadcast %193 : vector<1x1xf32> to vector<1x4xf32>
    %195 = vector.extract_strided_slice %171 {offsets = [0, 16], sizes = [1, 4], strides = [1, 1]} : vector<1x32xf32> to vector<1x4xf32>
    %cst_67 = arith.constant dense<0.000000e+00> : vector<1xf32>
    %196 = vector.multi_reduction <add>, %195, %cst_67 [1] : vector<1x4xf32> to vector<1xf32>
    %197 = vector.shape_cast %196 : vector<1xf32> to vector<1x1xf32>
    %198 = vector.shape_cast %197 : vector<1x1xf32> to vector<1x1xf32>
    %199 = vector.broadcast %198 : vector<1x1xf32> to vector<1x4xf32>
    %200 = vector.extract_strided_slice %171 {offsets = [0, 20], sizes = [1, 4], strides = [1, 1]} : vector<1x32xf32> to vector<1x4xf32>
    %cst_68 = arith.constant dense<0.000000e+00> : vector<1xf32>
    %201 = vector.multi_reduction <add>, %200, %cst_68 [1] : vector<1x4xf32> to vector<1xf32>
    %202 = vector.shape_cast %201 : vector<1xf32> to vector<1x1xf32>
    %203 = vector.shape_cast %202 : vector<1x1xf32> to vector<1x1xf32>
    %204 = vector.broadcast %203 : vector<1x1xf32> to vector<1x4xf32>
    %205 = vector.extract_strided_slice %171 {offsets = [0, 24], sizes = [1, 4], strides = [1, 1]} : vector<1x32xf32> to vector<1x4xf32>
    %cst_69 = arith.constant dense<0.000000e+00> : vector<1xf32>
    %206 = vector.multi_reduction <add>, %205, %cst_69 [1] : vector<1x4xf32> to vector<1xf32>
    %207 = vector.shape_cast %206 : vector<1xf32> to vector<1x1xf32>
    %208 = vector.shape_cast %207 : vector<1x1xf32> to vector<1x1xf32>
    %209 = vector.broadcast %208 : vector<1x1xf32> to vector<1x4xf32>
    %210 = vector.extract_strided_slice %171 {offsets = [0, 28], sizes = [1, 4], strides = [1, 1]} : vector<1x32xf32> to vector<1x4xf32>
    %cst_70 = arith.constant dense<0.000000e+00> : vector<1xf32>
    %211 = vector.multi_reduction <add>, %210, %cst_70 [1] : vector<1x4xf32> to vector<1xf32>
    %212 = vector.shape_cast %211 : vector<1xf32> to vector<1x1xf32>
    %213 = vector.shape_cast %212 : vector<1x1xf32> to vector<1x1xf32>
    %214 = vector.broadcast %213 : vector<1x1xf32> to vector<1x4xf32>
    %215 = tpu.concatenate %179, %184, %189, %194, %199, %204, %209, %214 in 1 : vector<1x4xf32>, vector<1x4xf32>, vector<1x4xf32>, vector<1x4xf32>, vector<1x4xf32>, vector<1x4xf32>, vector<1x4xf32>, vector<1x4xf32> -> vector<1x32xf32>
    %cst_71 = arith.constant 9.765625E-4 : f32
    %216 = vector.broadcast %cst_71 : f32 to vector<1x32xf32>
    %217 = arith.mulf %215, %216 : vector<1x32xf32>
    %218 = vector.extract_strided_slice %174 {offsets = [0, 0], sizes = [1, 4], strides = [1, 1]} : vector<1x32xf32> to vector<1x4xf32>
    %cst_72 = arith.constant dense<0.000000e+00> : vector<1xf32>
    %219 = vector.multi_reduction <add>, %218, %cst_72 [1] : vector<1x4xf32> to vector<1xf32>
    %220 = vector.shape_cast %219 : vector<1xf32> to vector<1x1xf32>
    %221 = vector.shape_cast %220 : vector<1x1xf32> to vector<1x1xf32>
    %222 = vector.broadcast %221 : vector<1x1xf32> to vector<1x4xf32>
    %223 = vector.extract_strided_slice %174 {offsets = [0, 4], sizes = [1, 4], strides = [1, 1]} : vector<1x32xf32> to vector<1x4xf32>
    %cst_73 = arith.constant dense<0.000000e+00> : vector<1xf32>
    %224 = vector.multi_reduction <add>, %223, %cst_73 [1] : vector<1x4xf32> to vector<1xf32>
    %225 = vector.shape_cast %224 : vector<1xf32> to vector<1x1xf32>
    %226 = vector.shape_cast %225 : vector<1x1xf32> to vector<1x1xf32>
    %227 = vector.broadcast %226 : vector<1x1xf32> to vector<1x4xf32>
    %228 = vector.extract_strided_slice %174 {offsets = [0, 8], sizes = [1, 4], strides = [1, 1]} : vector<1x32xf32> to vector<1x4xf32>
    %cst_74 = arith.constant dense<0.000000e+00> : vector<1xf32>
    %229 = vector.multi_reduction <add>, %228, %cst_74 [1] : vector<1x4xf32> to vector<1xf32>
    %230 = vector.shape_cast %229 : vector<1xf32> to vector<1x1xf32>
    %231 = vector.shape_cast %230 : vector<1x1xf32> to vector<1x1xf32>
    %232 = vector.broadcast %231 : vector<1x1xf32> to vector<1x4xf32>
    %233 = vector.extract_strided_slice %174 {offsets = [0, 12], sizes = [1, 4], strides = [1, 1]} : vector<1x32xf32> to vector<1x4xf32>
    %cst_75 = arith.constant dense<0.000000e+00> : vector<1xf32>
    %234 = vector.multi_reduction <add>, %233, %cst_75 [1] : vector<1x4xf32> to vector<1xf32>
    %235 = vector.shape_cast %234 : vector<1xf32> to vector<1x1xf32>
    %236 = vector.shape_cast %235 : vector<1x1xf32> to vector<1x1xf32>
    %237 = vector.broadcast %236 : vector<1x1xf32> to vector<1x4xf32>
    %238 = vector.extract_strided_slice %174 {offsets = [0, 16], sizes = [1, 4], strides = [1, 1]} : vector<1x32xf32> to vector<1x4xf32>
    %cst_76 = arith.constant dense<0.000000e+00> : vector<1xf32>
    %239 = vector.multi_reduction <add>, %238, %cst_76 [1] : vector<1x4xf32> to vector<1xf32>
    %240 = vector.shape_cast %239 : vector<1xf32> to vector<1x1xf32>
    %241 = vector.shape_cast %240 : vector<1x1xf32> to vector<1x1xf32>
    %242 = vector.broadcast %241 : vector<1x1xf32> to vector<1x4xf32>
    %243 = vector.extract_strided_slice %174 {offsets = [0, 20], sizes = [1, 4], strides = [1, 1]} : vector<1x32xf32> to vector<1x4xf32>
    %cst_77 = arith.constant dense<0.000000e+00> : vector<1xf32>
    %244 = vector.multi_reduction <add>, %243, %cst_77 [1] : vector<1x4xf32> to vector<1xf32>
    %245 = vector.shape_cast %244 : vector<1xf32> to vector<1x1xf32>
    %246 = vector.shape_cast %245 : vector<1x1xf32> to vector<1x1xf32>
    %247 = vector.broadcast %246 : vector<1x1xf32> to vector<1x4xf32>
    %248 = vector.extract_strided_slice %174 {offsets = [0, 24], sizes = [1, 4], strides = [1, 1]} : vector<1x32xf32> to vector<1x4xf32>
    %cst_78 = arith.constant dense<0.000000e+00> : vector<1xf32>
    %249 = vector.multi_reduction <add>, %248, %cst_78 [1] : vector<1x4xf32> to vector<1xf32>
    %250 = vector.shape_cast %249 : vector<1xf32> to vector<1x1xf32>
    %251 = vector.shape_cast %250 : vector<1x1xf32> to vector<1x1xf32>
    %252 = vector.broadcast %251 : vector<1x1xf32> to vector<1x4xf32>
    %253 = vector.extract_strided_slice %174 {offsets = [0, 28], sizes = [1, 4], strides = [1, 1]} : vector<1x32xf32> to vector<1x4xf32>
    %cst_79 = arith.constant dense<0.000000e+00> : vector<1xf32>
    %254 = vector.multi_reduction <add>, %253, %cst_79 [1] : vector<1x4xf32> to vector<1xf32>
    %255 = vector.shape_cast %254 : vector<1xf32> to vector<1x1xf32>
    %256 = vector.shape_cast %255 : vector<1x1xf32> to vector<1x1xf32>
    %257 = vector.broadcast %256 : vector<1x1xf32> to vector<1x4xf32>
    %258 = tpu.concatenate %222, %227, %232, %237, %242, %247, %252, %257 in 1 : vector<1x4xf32>, vector<1x4xf32>, vector<1x4xf32>, vector<1x4xf32>, vector<1x4xf32>, vector<1x4xf32>, vector<1x4xf32>, vector<1x4xf32> -> vector<1x32xf32>
    %cst_80 = arith.constant 9.765625E-4 : f32
    %259 = vector.broadcast %cst_80 : f32 to vector<1x32xf32>
    %260 = arith.mulf %258, %259 : vector<1x32xf32>
    %261 = arith.mulf %217, %217 : vector<1x32xf32>
    %262 = arith.subf %260, %261 : vector<1x32xf32>
    %cst_81 = arith.constant 0.000000e+00 : f32
    %263 = vector.broadcast %cst_81 : f32 to vector<1x32xf32>
    %264 = arith.maximumf %262, %263 : vector<1x32xf32>
    %c0_82 = arith.constant 0 : index
    %c0_83 = arith.constant 0 : index
    %265 = vector.load %arg6[%c0_82, %c0_83] : memref<1x32xf32, #tpu.memory_space<vmem>>, vector<1x32xf32>
    %cst_84 = arith.constant 9.99999974E-6 : f32
    %266 = vector.broadcast %cst_84 : f32 to vector<1x32xf32>
    %267 = arith.addf %264, %266 : vector<1x32xf32>
    %268 = math.rsqrt %267 : vector<1x32xf32>
    %269 = arith.mulf %265, %268 : vector<1x32xf32>
    %c0_85 = arith.constant 0 : index
    %c0_86 = arith.constant 0 : index
    %270 = vector.load %arg7[%c0_85, %c0_86] : memref<1x32xf32, #tpu.memory_space<vmem>>, vector<1x32xf32>
    %271 = arith.mulf %217, %269 : vector<1x32xf32>
    %272 = arith.subf %270, %271 : vector<1x32xf32>
    %273 = vector.broadcast %269 : vector<1x32xf32> to vector<256x32xf32>
    %274 = arith.mulf %169, %273 : vector<256x32xf32>
    %275 = vector.broadcast %272 : vector<1x32xf32> to vector<256x32xf32>
    %276 = arith.addf %274, %275 : vector<256x32xf32>
    %277 = arith.negf %276 : vector<256x32xf32>
    %278 = math.exp %277 : vector<256x32xf32>
    %cst_87 = arith.constant 1.000000e+00 : f32
    %279 = vector.broadcast %cst_87 : f32 to vector<256x32xf32>
    %280 = arith.addf %279, %278 : vector<256x32xf32>
    %281 = arith.divf %279, %280 : vector<256x32xf32>
    %282 = arith.mulf %276, %281 : vector<256x32xf32>
    %283 = arith.truncf %282 : vector<256x32xf32> to vector<256x32xbf16>
    %c16_88 = arith.constant 16 : index
    %c32_89 = arith.constant 32 : index
    %284 = vector.load %arg11[%c16_88, %c32_89] : memref<288x96xbf16, #tpu.memory_space<vmem>>, vector<256x32xbf16>
    tpu.vector_store %arg11[%c16_88, %c32_89], %283 {strides = array<i32>} : memref<288x96xbf16, #tpu.memory_space<vmem>>, vector<256x32xbf16>,
    %c1_i32_90 = arith.constant 1 : i32
    %285 = tpu.dynamic_rotate %282 by %c1_i32_90 dim 0 : vector<256x32xf32>, i32 -> vector<256x32xf32>
    %cst_91 = arith.constant 0.000000e+00 : f32
    %286 = vector.broadcast %cst_91 : f32 to vector<256x32xf32>
    %287 = arith.select %22, %286, %285 : vector<256x32xi1>, vector<256x32xf32>
    %288 = arith.truncf %287 : vector<256x32xf32> to vector<256x32xbf16>
    %c16_92 = arith.constant 16 : index
    %c0_93 = arith.constant 0 : index
    %289 = vector.load %arg11[%c16_92, %c0_93] : memref<288x96xbf16, #tpu.memory_space<vmem>>, vector<256x32xbf16>
    tpu.vector_store %arg11[%c16_92, %c0_93], %288 {strides = array<i32>} : memref<288x96xbf16, #tpu.memory_space<vmem>>, vector<256x32xbf16>,
    %c255_i32_94 = arith.constant 255 : i32
    %290 = tpu.dynamic_rotate %282 by %c255_i32_94 dim 0 : vector<256x32xf32>, i32 -> vector<256x32xf32>
    %cst_95 = arith.constant 0.000000e+00 : f32
    %291 = vector.broadcast %cst_95 : f32 to vector<256x32xf32>
    %292 = arith.select %24, %291, %290 : vector<256x32xi1>, vector<256x32xf32>
    %293 = arith.truncf %292 : vector<256x32xf32> to vector<256x32xbf16>
    %c16_96 = arith.constant 16 : index
    %c64_97 = arith.constant 64 : index
    %294 = vector.load %arg11[%c16_96, %c64_97] : memref<288x96xbf16, #tpu.memory_space<vmem>>, vector<256x32xbf16>
    tpu.vector_store %arg11[%c16_96, %c64_97], %293 {strides = array<i32>} : memref<288x96xbf16, #tpu.memory_space<vmem>>, vector<256x32xbf16>,
    %c0_98 = arith.constant 0 : index
    %c0_99 = arith.constant 0 : index
    %295 = vector.load %arg11[%c0_98, %c0_99] : memref<288x96xbf16, #tpu.memory_space<vmem>>, vector<256x96xbf16>
    %c0_100 = arith.constant 0 : index
    %c0_101 = arith.constant 0 : index
    %c0_102 = arith.constant 0 : index
    %296 = vector.load %arg8[%c0_100, %c0_101, %c0_102] : memref<3x96x32xbf16, #tpu.memory_space<vmem>>, vector<1x96x32xbf16>
    %297 = vector.shape_cast %296 : vector<1x96x32xbf16> to vector<96x32xbf16>
    %cst_103 = arith.constant dense<0.000000e+00> : vector<256x32xf32>
    %298 = tpu.matmul %295, %297, %cst_103 {dimension_numbers = #tpu.dot_dimension_numbers<[1], [0], [0], [1], [0, 0, 1, 1], [], []>} : vector<256x96xbf16>, vector<96x32xbf16>, vector<256x32xf32> -> vector<256x32xf32>
    %c0_104 = arith.constant 0 : index
    %c0_105 = arith.constant 0 : index
    %299 = vector.load %arg9[%c0_104, %c0_105] : memref<1x32xf32, #tpu.memory_space<vmem>>, vector<1x32xf32>
    %300 = vector.broadcast %299 : vector<1x32xf32> to vector<256x32xf32>
    %301 = arith.addf %298, %300 : vector<256x32xf32>
    %c16_106 = arith.constant 16 : index
    %c0_107 = arith.constant 0 : index
    %302 = vector.load %arg11[%c16_106, %c0_107] : memref<288x96xbf16, #tpu.memory_space<vmem>>, vector<256x96xbf16>
    %c1_108 = arith.constant 1 : index
    %c0_109 = arith.constant 0 : index
    %c0_110 = arith.constant 0 : index
    %303 = vector.load %arg8[%c1_108, %c0_109, %c0_110] : memref<3x96x32xbf16, #tpu.memory_space<vmem>>, vector<1x96x32xbf16>
    %304 = vector.shape_cast %303 : vector<1x96x32xbf16> to vector<96x32xbf16>
    %cst_111 = arith.constant dense<0.000000e+00> : vector<256x32xf32>
    %305 = tpu.matmul %302, %304, %cst_111 {dimension_numbers = #tpu.dot_dimension_numbers<[1], [0], [0], [1], [0, 0, 1, 1], [], []>} : vector<256x96xbf16>, vector<96x32xbf16>, vector<256x32xf32> -> vector<256x32xf32>
    %306 = arith.addf %301, %305 : vector<256x32xf32>
    %c32_112 = arith.constant 32 : index
    %c0_113 = arith.constant 0 : index
    %307 = vector.load %arg11[%c32_112, %c0_113] : memref<288x96xbf16, #tpu.memory_space<vmem>>, vector<256x96xbf16>
    %c2_114 = arith.constant 2 : index
    %c0_115 = arith.constant 0 : index
    %c0_116 = arith.constant 0 : index
    %308 = vector.load %arg8[%c2_114, %c0_115, %c0_116] : memref<3x96x32xbf16, #tpu.memory_space<vmem>>, vector<1x96x32xbf16>
    %309 = vector.shape_cast %308 : vector<1x96x32xbf16> to vector<96x32xbf16>
    %cst_117 = arith.constant dense<0.000000e+00> : vector<256x32xf32>
    %310 = tpu.matmul %307, %309, %cst_117 {dimension_numbers = #tpu.dot_dimension_numbers<[1], [0], [0], [1], [0, 0, 1, 1], [], []>} : vector<256x96xbf16>, vector<96x32xbf16>, vector<256x32xf32> -> vector<256x32xf32>
    %311 = arith.addf %306, %310 : vector<256x32xf32>
    %312 = arith.addf %311, %27 : vector<256x32xf32>
    %313 = arith.truncf %312 : vector<256x32xf32> to vector<256x32xbf16>
    %c0_118 = arith.constant 0 : index
    %c0_119 = arith.constant 0 : index
    %c0_120 = arith.constant 0 : index
    %314 = vector.load %arg10[%c0_118, %c0_119, %c0_120] : memref<1x256x32xbf16, #tpu.memory_space<vmem>>, vector<1x256x32xbf16>
    %315 = vector.shape_cast %314 : vector<1x256x32xbf16> to vector<256x32xbf16>
    %316 = vector.shape_cast %313 : vector<256x32xbf16> to vector<1x256x32xbf16>
    tpu.vector_store %arg10[%c0_118, %c0_119, %c0_120], %316 {strides = array<i32>} : memref<1x256x32xbf16, #tpu.memory_space<vmem>>, vector<1x256x32xbf16>,
    return
  }
  func.func @transform_0(%arg0: i32) -> (i32, i32, i32) {
    %c0_i32 = arith.constant 0 : i32
    %c0_i32_0 = arith.constant 0 : i32
    %c0_i32_1 = arith.constant 0 : i32
    return %arg0, %c0_i32, %c0_i32_0 : i32, i32, i32
  }
  func.func @transform_1(%arg0: i32) -> (i32, i32) {
    %c0_i32 = arith.constant 0 : i32
    %c0_i32_0 = arith.constant 0 : i32
    %c0_i32_1 = arith.constant 0 : i32
    return %c0_i32, %c0_i32_0 : i32, i32
  }
  func.func @transform_2(%arg0: i32) -> (i32, i32) {
    %c0_i32 = arith.constant 0 : i32
    %c0_i32_0 = arith.constant 0 : i32
    %c0_i32_1 = arith.constant 0 : i32
    return %c0_i32, %c0_i32_0 : i32, i32
  }
  func.func @transform_3(%arg0: i32) -> (i32, i32, i32) {
    %c0_i32 = arith.constant 0 : i32
    %c0_i32_0 = arith.constant 0 : i32
    %c0_i32_1 = arith.constant 0 : i32
    %c0_i32_2 = arith.constant 0 : i32
    return %c0_i32, %c0_i32_0, %c0_i32_1 : i32, i32, i32
  }
  func.func @transform_4(%arg0: i32) -> (i32, i32) {
    %c0_i32 = arith.constant 0 : i32
    %c0_i32_0 = arith.constant 0 : i32
    %c0_i32_1 = arith.constant 0 : i32
    return %c0_i32, %c0_i32_0 : i32, i32
  }
  func.func @transform_5(%arg0: i32) -> (i32, i32) {
    %c0_i32 = arith.constant 0 : i32
    %c0_i32_0 = arith.constant 0 : i32
    %c0_i32_1 = arith.constant 0 : i32
    return %c0_i32, %c0_i32_0 : i32, i32
  }
  func.func @transform_6(%arg0: i32) -> (i32, i32) {
    %c0_i32 = arith.constant 0 : i32
    %c0_i32_0 = arith.constant 0 : i32
    %c0_i32_1 = arith.constant 0 : i32
    return %c0_i32, %c0_i32_0 : i32, i32
  }
  func.func @transform_7(%arg0: i32) -> (i32, i32, i32) {
    %c0_i32 = arith.constant 0 : i32
    %c0_i32_0 = arith.constant 0 : i32
    %c0_i32_1 = arith.constant 0 : i32
    %c0_i32_2 = arith.constant 0 : i32
    return %c0_i32, %c0_i32_0, %c0_i32_1 : i32, i32, i32
  }
  func.func @transform_8(%arg0: i32) -> (i32, i32) {
    %c0_i32 = arith.constant 0 : i32
    %c0_i32_0 = arith.constant 0 : i32
    %c0_i32_1 = arith.constant 0 : i32
    return %c0_i32, %c0_i32_0 : i32, i32
  }
  func.func @transform_9(%arg0: i32) -> (i32, i32, i32) {
    %c0_i32 = arith.constant 0 : i32
    %c0_i32_0 = arith.constant 0 : i32
    %c0_i32_1 = arith.constant 0 : i32
    return %arg0, %c0_i32, %c0_i32_0 : i32, i32, i32
  }
}

module attributes {stable_mosaic.version = 11 : i64} {
  func.func @down4x4s2_kernel(%arg0: i32, %arg1: memref<1x8x2x8x64xbf16, #tpu.memory_space<vmem>>, %arg2: memref<4x128x64xbf16, #tpu.memory_space<vmem>>, %arg3: memref<1x64xf32, #tpu.memory_space<vmem>>, %arg4: memref<1x64x64xf32, #tpu.memory_space<vmem>>, %arg5: memref<72x128xbf16, #tpu.memory_space<vmem>>, %arg6: memref<72x128xbf16, #tpu.memory_space<vmem>>) attributes {dimension_semantics = [#tpu.dimension_semantics<parallel>], iteration_bounds = array<i64: 2>, scalar_prefetch = 0 : i64, scratch_operands = 2 : i64, tpu.core_type = #tpu.core_type<tc>, window_params = [{transform_indices = @transform_0, window_bounds = array<i64: 1, 8, 2, 8, 64>}, {pipeline_mode = #tpu.pipeline_mode<synchronous>, transform_indices = @transform_1, window_bounds = array<i64: 4, 128, 64>}, {pipeline_mode = #tpu.pipeline_mode<synchronous>, transform_indices = @transform_2, window_bounds = array<i64: 1, 64>}, {transform_indices = @transform_3, window_bounds = array<i64: 1, 64, 64>}]} {
    %cst = arith.constant 0.000000e+00 : bf16
    %0 = vector.broadcast %cst : bf16 to vector<8x128xbf16>
    %c0 = arith.constant 0 : index
    %c0_0 = arith.constant 0 : index
    %1 = vector.load %arg5[%c0, %c0_0] : memref<72x128xbf16, #tpu.memory_space<vmem>>, vector<8x128xbf16>
    tpu.vector_store %arg5[%c0, %c0_0], %0 {strides = array<i32>} : memref<72x128xbf16, #tpu.memory_space<vmem>>, vector<8x128xbf16>,
    %cst_1 = arith.constant 0.000000e+00 : bf16
    %2 = vector.broadcast %cst_1 : bf16 to vector<8x128xbf16>
    %c64 = arith.constant 64 : index
    %c0_2 = arith.constant 0 : index
    %3 = vector.load %arg6[%c64, %c0_2] : memref<72x128xbf16, #tpu.memory_space<vmem>>, vector<8x128xbf16>
    tpu.vector_store %arg6[%c64, %c0_2], %2 {strides = array<i32>} : memref<72x128xbf16, #tpu.memory_space<vmem>>, vector<8x128xbf16>,
    %4 = tpu.iota {dimensions = array<i32: 0>} : vector<64x32xi32>
    %c8_i32 = arith.constant 8 : i32
    %c0_i32 = arith.constant 0 : i32
    %5 = arith.cmpi eq, %c8_i32, %c0_i32 : i32
    %c1_i32 = arith.constant 1 : i32
    %6 = arith.select %5, %c1_i32, %c8_i32 : i32
    %7 = vector.broadcast %6 : i32 to vector<64x32xi32>
    %8 = arith.remsi %4, %7 : vector<64x32xi32>
    %c0_i32_3 = arith.constant 0 : i32
    %9 = vector.broadcast %c0_i32_3 : i32 to vector<64x32xi32>
    %10 = arith.cmpi ne, %8, %9 : vector<64x32xi32>
    %c0_i32_4 = arith.constant 0 : i32
    %11 = vector.broadcast %c0_i32_4 : i32 to vector<64x32xi32>
    %12 = arith.cmpi slt, %8, %11 : vector<64x32xi32>
    %c0_i32_5 = arith.constant 0 : i32
    %13 = arith.cmpi slt, %6, %c0_i32_5 : i32
    %14 = vector.broadcast %13 : i1 to vector<64x32xi1>
    %15 = vector.broadcast %14 : vector<64x32xi1> to vector<64x32xi1>
    %16 = arith.xori %12, %15 : vector<64x32xi1>
    %17 = arith.andi %16, %10 : vector<64x32xi1>
    %18 = vector.broadcast %6 : i32 to vector<64x32xi32>
    %19 = arith.addi %8, %18 : vector<64x32xi32>
    %20 = arith.select %17, %19, %8 : vector<64x32xi1>, vector<64x32xi32>
    %c0_i32_6 = arith.constant 0 : i32
    %21 = vector.broadcast %c0_i32_6 : i32 to vector<64x32xi32>
    %22 = arith.cmpi eq, %20, %21 : vector<64x32xi32>
    %c7_i32 = arith.constant 7 : i32
    %23 = vector.broadcast %c7_i32 : i32 to vector<64x32xi32>
    %24 = arith.cmpi eq, %20, %23 : vector<64x32xi32>
    %c0_7 = arith.constant 0 : index
    %c0_8 = arith.constant 0 : index
    %c0_9 = arith.constant 0 : index
    %c0_10 = arith.constant 0 : index
    %c0_11 = arith.constant 0 : index
    %25 = vector.load %arg1[%c0_7, %c0_8, %c0_9, %c0_10, %c0_11] : memref<1x8x2x8x64xbf16, #tpu.memory_space<vmem>>, vector<1x8x1x8x32xbf16>
    %26 = vector.shape_cast %25 : vector<1x8x1x8x32xbf16> to vector<8x1x8x32xbf16>
    %27 = arith.extf %26 : vector<8x1x8x32xbf16> to vector<8x1x8x32xf32>
    %28 = vector.shape_cast %27 : vector<8x1x8x32xf32> to vector<64x32xf32>
    %c0_12 = arith.constant 0 : index
    %c0_13 = arith.constant 0 : index
    %c0_14 = arith.constant 0 : index
    %c0_15 = arith.constant 0 : index
    %c32 = arith.constant 32 : index
    %29 = vector.load %arg1[%c0_12, %c0_13, %c0_14, %c0_15, %c32] : memref<1x8x2x8x64xbf16, #tpu.memory_space<vmem>>, vector<1x8x1x8x32xbf16>
    %30 = vector.shape_cast %29 : vector<1x8x1x8x32xbf16> to vector<8x1x8x32xbf16>
    %31 = arith.extf %30 : vector<8x1x8x32xbf16> to vector<8x1x8x32xf32>
    %32 = vector.shape_cast %31 : vector<8x1x8x32xf32> to vector<64x32xf32>
    %33 = arith.truncf %28 : vector<64x32xf32> to vector<64x32xbf16>
    %c0_16 = arith.constant 0 : index
    %c32_17 = arith.constant 32 : index
    %34 = vector.load %arg6[%c0_16, %c32_17] : memref<72x128xbf16, #tpu.memory_space<vmem>>, vector<64x32xbf16>
    tpu.vector_store %arg6[%c0_16, %c32_17], %33 {strides = array<i32>} : memref<72x128xbf16, #tpu.memory_space<vmem>>, vector<64x32xbf16>,
    %35 = arith.truncf %32 : vector<64x32xf32> to vector<64x32xbf16>
    %c0_18 = arith.constant 0 : index
    %c64_19 = arith.constant 64 : index
    %36 = vector.load %arg6[%c0_18, %c64_19] : memref<72x128xbf16, #tpu.memory_space<vmem>>, vector<64x32xbf16>
    tpu.vector_store %arg6[%c0_18, %c64_19], %35 {strides = array<i32>} : memref<72x128xbf16, #tpu.memory_space<vmem>>, vector<64x32xbf16>,
    %c1_i32_20 = arith.constant 1 : i32
    %37 = tpu.dynamic_rotate %32 by %c1_i32_20 dim 0 : vector<64x32xf32>, i32 -> vector<64x32xf32>
    %cst_21 = arith.constant 0.000000e+00 : f32
    %38 = vector.broadcast %cst_21 : f32 to vector<64x32xf32>
    %39 = arith.select %22, %38, %37 : vector<64x32xi1>, vector<64x32xf32>
    %40 = arith.truncf %39 : vector<64x32xf32> to vector<64x32xbf16>
    %c0_22 = arith.constant 0 : index
    %c0_23 = arith.constant 0 : index
    %41 = vector.load %arg6[%c0_22, %c0_23] : memref<72x128xbf16, #tpu.memory_space<vmem>>, vector<64x32xbf16>
    tpu.vector_store %arg6[%c0_22, %c0_23], %40 {strides = array<i32>} : memref<72x128xbf16, #tpu.memory_space<vmem>>, vector<64x32xbf16>,
    %c63_i32 = arith.constant 63 : i32
    %42 = tpu.dynamic_rotate %28 by %c63_i32 dim 0 : vector<64x32xf32>, i32 -> vector<64x32xf32>
    %cst_24 = arith.constant 0.000000e+00 : f32
    %43 = vector.broadcast %cst_24 : f32 to vector<64x32xf32>
    %44 = arith.select %24, %43, %42 : vector<64x32xi1>, vector<64x32xf32>
    %45 = arith.truncf %44 : vector<64x32xf32> to vector<64x32xbf16>
    %c0_25 = arith.constant 0 : index
    %c96 = arith.constant 96 : index
    %46 = vector.load %arg6[%c0_25, %c96] : memref<72x128xbf16, #tpu.memory_space<vmem>>, vector<64x32xbf16>
    tpu.vector_store %arg6[%c0_25, %c96], %45 {strides = array<i32>} : memref<72x128xbf16, #tpu.memory_space<vmem>>, vector<64x32xbf16>,
    %c0_26 = arith.constant 0 : index
    %c0_27 = arith.constant 0 : index
    %c1 = arith.constant 1 : index
    %c0_28 = arith.constant 0 : index
    %c0_29 = arith.constant 0 : index
    %47 = vector.load %arg1[%c0_26, %c0_27, %c1, %c0_28, %c0_29] : memref<1x8x2x8x64xbf16, #tpu.memory_space<vmem>>, vector<1x8x1x8x32xbf16>
    %48 = vector.shape_cast %47 : vector<1x8x1x8x32xbf16> to vector<8x1x8x32xbf16>
    %49 = arith.extf %48 : vector<8x1x8x32xbf16> to vector<8x1x8x32xf32>
    %50 = vector.shape_cast %49 : vector<8x1x8x32xf32> to vector<64x32xf32>
    %c0_30 = arith.constant 0 : index
    %c0_31 = arith.constant 0 : index
    %c1_32 = arith.constant 1 : index
    %c0_33 = arith.constant 0 : index
    %c32_34 = arith.constant 32 : index
    %51 = vector.load %arg1[%c0_30, %c0_31, %c1_32, %c0_33, %c32_34] : memref<1x8x2x8x64xbf16, #tpu.memory_space<vmem>>, vector<1x8x1x8x32xbf16>
    %52 = vector.shape_cast %51 : vector<1x8x1x8x32xbf16> to vector<8x1x8x32xbf16>
    %53 = arith.extf %52 : vector<8x1x8x32xbf16> to vector<8x1x8x32xf32>
    %54 = vector.shape_cast %53 : vector<8x1x8x32xf32> to vector<64x32xf32>
    %55 = arith.truncf %50 : vector<64x32xf32> to vector<64x32xbf16>
    %c8 = arith.constant 8 : index
    %c32_35 = arith.constant 32 : index
    %56 = vector.load %arg5[%c8, %c32_35] : memref<72x128xbf16, #tpu.memory_space<vmem>>, vector<64x32xbf16>
    tpu.vector_store %arg5[%c8, %c32_35], %55 {strides = array<i32>} : memref<72x128xbf16, #tpu.memory_space<vmem>>, vector<64x32xbf16>,
    %57 = arith.truncf %54 : vector<64x32xf32> to vector<64x32xbf16>
    %c8_36 = arith.constant 8 : index
    %c64_37 = arith.constant 64 : index
    %58 = vector.load %arg5[%c8_36, %c64_37] : memref<72x128xbf16, #tpu.memory_space<vmem>>, vector<64x32xbf16>
    tpu.vector_store %arg5[%c8_36, %c64_37], %57 {strides = array<i32>} : memref<72x128xbf16, #tpu.memory_space<vmem>>, vector<64x32xbf16>,
    %c1_i32_38 = arith.constant 1 : i32
    %59 = tpu.dynamic_rotate %54 by %c1_i32_38 dim 0 : vector<64x32xf32>, i32 -> vector<64x32xf32>
    %cst_39 = arith.constant 0.000000e+00 : f32
    %60 = vector.broadcast %cst_39 : f32 to vector<64x32xf32>
    %61 = arith.select %22, %60, %59 : vector<64x32xi1>, vector<64x32xf32>
    %62 = arith.truncf %61 : vector<64x32xf32> to vector<64x32xbf16>
    %c8_40 = arith.constant 8 : index
    %c0_41 = arith.constant 0 : index
    %63 = vector.load %arg5[%c8_40, %c0_41] : memref<72x128xbf16, #tpu.memory_space<vmem>>, vector<64x32xbf16>
    tpu.vector_store %arg5[%c8_40, %c0_41], %62 {strides = array<i32>} : memref<72x128xbf16, #tpu.memory_space<vmem>>, vector<64x32xbf16>,
    %c63_i32_42 = arith.constant 63 : i32
    %64 = tpu.dynamic_rotate %50 by %c63_i32_42 dim 0 : vector<64x32xf32>, i32 -> vector<64x32xf32>
    %cst_43 = arith.constant 0.000000e+00 : f32
    %65 = vector.broadcast %cst_43 : f32 to vector<64x32xf32>
    %66 = arith.select %24, %65, %64 : vector<64x32xi1>, vector<64x32xf32>
    %67 = arith.truncf %66 : vector<64x32xf32> to vector<64x32xbf16>
    %c8_44 = arith.constant 8 : index
    %c96_45 = arith.constant 96 : index
    %68 = vector.load %arg5[%c8_44, %c96_45] : memref<72x128xbf16, #tpu.memory_space<vmem>>, vector<64x32xbf16>
    tpu.vector_store %arg5[%c8_44, %c96_45], %67 {strides = array<i32>} : memref<72x128xbf16, #tpu.memory_space<vmem>>, vector<64x32xbf16>,
    %c0_46 = arith.constant 0 : index
    %c0_47 = arith.constant 0 : index
    %69 = vector.load %arg5[%c0_46, %c0_47] : memref<72x128xbf16, #tpu.memory_space<vmem>>, vector<64x128xbf16>
    %c0_48 = arith.constant 0 : index
    %c0_49 = arith.constant 0 : index
    %c0_50 = arith.constant 0 : index
    %70 = vector.load %arg2[%c0_48, %c0_49, %c0_50] : memref<4x128x64xbf16, #tpu.memory_space<vmem>>, vector<1x128x64xbf16>
    %71 = vector.shape_cast %70 : vector<1x128x64xbf16> to vector<128x64xbf16>
    %cst_51 = arith.constant dense<0.000000e+00> : vector<64x64xf32>
    %72 = tpu.matmul %69, %71, %cst_51 {dimension_numbers = #tpu.dot_dimension_numbers<[1], [0], [0], [1], [0, 0, 1, 1], [], []>} : vector<64x128xbf16>, vector<128x64xbf16>, vector<64x64xf32> -> vector<64x64xf32>
    %c0_52 = arith.constant 0 : index
    %c0_53 = arith.constant 0 : index
    %73 = vector.load %arg3[%c0_52, %c0_53] : memref<1x64xf32, #tpu.memory_space<vmem>>, vector<1x64xf32>
    %74 = vector.broadcast %73 : vector<1x64xf32> to vector<64x64xf32>
    %75 = arith.addf %72, %74 : vector<64x64xf32>
    %c0_54 = arith.constant 0 : index
    %c0_55 = arith.constant 0 : index
    %76 = vector.load %arg6[%c0_54, %c0_55] : memref<72x128xbf16, #tpu.memory_space<vmem>>, vector<64x128xbf16>
    %c1_56 = arith.constant 1 : index
    %c0_57 = arith.constant 0 : index
    %c0_58 = arith.constant 0 : index
    %77 = vector.load %arg2[%c1_56, %c0_57, %c0_58] : memref<4x128x64xbf16, #tpu.memory_space<vmem>>, vector<1x128x64xbf16>
    %78 = vector.shape_cast %77 : vector<1x128x64xbf16> to vector<128x64xbf16>
    %cst_59 = arith.constant dense<0.000000e+00> : vector<64x64xf32>
    %79 = tpu.matmul %76, %78, %cst_59 {dimension_numbers = #tpu.dot_dimension_numbers<[1], [0], [0], [1], [0, 0, 1, 1], [], []>} : vector<64x128xbf16>, vector<128x64xbf16>, vector<64x64xf32> -> vector<64x64xf32>
    %80 = arith.addf %75, %79 : vector<64x64xf32>
    %c8_60 = arith.constant 8 : index
    %c0_61 = arith.constant 0 : index
    %81 = vector.load %arg5[%c8_60, %c0_61] : memref<72x128xbf16, #tpu.memory_space<vmem>>, vector<64x128xbf16>
    %c2 = arith.constant 2 : index
    %c0_62 = arith.constant 0 : index
    %c0_63 = arith.constant 0 : index
    %82 = vector.load %arg2[%c2, %c0_62, %c0_63] : memref<4x128x64xbf16, #tpu.memory_space<vmem>>, vector<1x128x64xbf16>
    %83 = vector.shape_cast %82 : vector<1x128x64xbf16> to vector<128x64xbf16>
    %cst_64 = arith.constant dense<0.000000e+00> : vector<64x64xf32>
    %84 = tpu.matmul %81, %83, %cst_64 {dimension_numbers = #tpu.dot_dimension_numbers<[1], [0], [0], [1], [0, 0, 1, 1], [], []>} : vector<64x128xbf16>, vector<128x64xbf16>, vector<64x64xf32> -> vector<64x64xf32>
    %85 = arith.addf %80, %84 : vector<64x64xf32>
    %c8_65 = arith.constant 8 : index
    %c0_66 = arith.constant 0 : index
    %86 = vector.load %arg6[%c8_65, %c0_66] : memref<72x128xbf16, #tpu.memory_space<vmem>>, vector<64x128xbf16>
    %c3 = arith.constant 3 : index
    %c0_67 = arith.constant 0 : index
    %c0_68 = arith.constant 0 : index
    %87 = vector.load %arg2[%c3, %c0_67, %c0_68] : memref<4x128x64xbf16, #tpu.memory_space<vmem>>, vector<1x128x64xbf16>
    %88 = vector.shape_cast %87 : vector<1x128x64xbf16> to vector<128x64xbf16>
    %cst_69 = arith.constant dense<0.000000e+00> : vector<64x64xf32>
    %89 = tpu.matmul %86, %88, %cst_69 {dimension_numbers = #tpu.dot_dimension_numbers<[1], [0], [0], [1], [0, 0, 1, 1], [], []>} : vector<64x128xbf16>, vector<128x64xbf16>, vector<64x64xf32> -> vector<64x64xf32>
    %90 = arith.addf %85, %89 : vector<64x64xf32>
    %c0_70 = arith.constant 0 : index
    %c0_71 = arith.constant 0 : index
    %c0_72 = arith.constant 0 : index
    %91 = vector.load %arg4[%c0_70, %c0_71, %c0_72] : memref<1x64x64xf32, #tpu.memory_space<vmem>>, vector<1x64x64xf32>
    %92 = vector.shape_cast %91 : vector<1x64x64xf32> to vector<64x64xf32>
    %93 = vector.shape_cast %90 : vector<64x64xf32> to vector<1x64x64xf32>
    tpu.vector_store %arg4[%c0_70, %c0_71, %c0_72], %93 {strides = array<i32>} : memref<1x64x64xf32, #tpu.memory_space<vmem>>, vector<1x64x64xf32>,
    return
  }
  func.func @transform_0(%arg0: i32) -> (i32, i32, i32, i32, i32) {
    %c0_i32 = arith.constant 0 : i32
    %c0_i32_0 = arith.constant 0 : i32
    %c0_i32_1 = arith.constant 0 : i32
    %c0_i32_2 = arith.constant 0 : i32
    %c0_i32_3 = arith.constant 0 : i32
    return %arg0, %c0_i32, %c0_i32_0, %c0_i32_1, %c0_i32_2 : i32, i32, i32, i32, i32
  }
  func.func @transform_1(%arg0: i32) -> (i32, i32, i32) {
    %c0_i32 = arith.constant 0 : i32
    %c0_i32_0 = arith.constant 0 : i32
    %c0_i32_1 = arith.constant 0 : i32
    %c0_i32_2 = arith.constant 0 : i32
    return %c0_i32, %c0_i32_0, %c0_i32_1 : i32, i32, i32
  }
  func.func @transform_2(%arg0: i32) -> (i32, i32) {
    %c0_i32 = arith.constant 0 : i32
    %c0_i32_0 = arith.constant 0 : i32
    %c0_i32_1 = arith.constant 0 : i32
    return %c0_i32, %c0_i32_0 : i32, i32
  }
  func.func @transform_3(%arg0: i32) -> (i32, i32, i32) {
    %c0_i32 = arith.constant 0 : i32
    %c0_i32_0 = arith.constant 0 : i32
    %c0_i32_1 = arith.constant 0 : i32
    return %arg0, %c0_i32, %c0_i32_0 : i32, i32, i32
  }
}

</mosaic_0001>

<llo_original>
// kernel: res_block_up_down_sample.5
$region0: #{res_block_up_down_sample.5}
  #allocation0 [shape = 'u32[]', space=smem, size = 0x4, offset = 0x4, fixed_abs, tag = 'smem constant byte address 0x4 - core index']
  #allocation1 [shape = 'u32[144,128]{1,0:T(1,128)}', space=vmem, size = 0x12000, scoped, tag = 'internal scratch']
  #allocation2 [shape = 'bf16[72,128]{1,0:T(8,128)(2,1)}', space=vmem, size = 0x4800, scoped, tag = 'scratch operand']
  #allocation3 [shape = 'bf16[72,128]{1,0:T(8,128)(2,1)}', space=vmem, size = 0x4800, scoped, tag = 'scratch operand']
  %s0 = inlined_call_operand.vmem [shape: bf16[2,8,2,8,64], index: 0, kind: input, shape index: {}]
  %s1 = inlined_call_operand.vmem [shape: bf16[4,128,64], index: 1, kind: input, shape index: {}]
  %s2 = inlined_call_operand.vmem [shape: f32[1,64], index: 2, kind: input, shape index: {}]
  %s3 = inlined_call_operand.hbm [shape: f32[2,64,64], index: 3, kind: output, shape index: {}]
  %s4 = sld [smem:[#allocation0]]
  $region45: #{res_block_up_down_sample.5} parent=0
    _
  %s6 = ssub.s32 1, %s4
  %s7 = scalar_select 0, %s6, %s4
  $region1: #{res_block_up_down_sample.5} parent=0
    #allocation4 [shape = 'u8[65536]{0}', space=vmem, size = 0x10000, scoped, tag = 'output window, operand 0']
    #allocation5 [shape = 's32[2]{0}', space=sflag, size = 0x8, scoped, tag = 'scoped memory for res_block_up_down_sample.5']
    %8 = vsyncpa [#allocation5], 0
    %s9 = scalar_lea.sflag [#allocation5], 1
    %10 = vsyncpa %s9, 0
    loop: start=0, step=1, limit=4
    $region2: #{res_block_up_down_sample.5} parent=1 // loop_pre_header
      _
    $region3: #{res_block_up_down_sample.5} parent=1 // loop_header
      %s12 = sphi 0, %s16
      %p13 = scmp.ge.s32.totalorder %s12, 4
      %s22 = sphi 0, %s24
      %s25 = sphi 0, %s22
      %s26 = sphi 0, %s25
      %s42 = sphi 0, %s26
      %s46 = sphi 0, %s46
      %s48 = sphi 0, %s46
      %s49 = sphi 0, %s48
      %s63 = sphi 0, %s49
      %s67 = sphi 0, %s67
      %s69 = sphi 0, %s67
      %s70 = sphi 0, %s69
      %s84 = sphi 0, %s70
      %s90 = sphi 0, %s92
      %s93 = sphi 0, %s90
      %s94 = sphi 0, %s93
      %s110 = sphi 0, %s94
    $region4: #{res_block_up_down_sample.5} parent=1 // loop_header_branch
      %15 = sbr.rel (%p13) target = $region8
    $region5: #{res_block_up_down_sample.5} parent=1 // loop_body
      %s17 = ssub.s32 %s12, 1
      %s18 = ssub.s32 %s12, 2
      %s19 = sadd.s32 %s12, 1
      %s20 = ssub.s32 %s12, %s19
      %p21 = scmp.eq.s32.totalorder %s20, 0
      %s23 = sadd.s32 %s22, 1
      %s24 = scalar_select %p21, %s22, %s23
      %p27 = pneg %p21
      %p28 = scmp.eq.s32.totalorder %s12, 1
      %p29 = por %p27, %p28
      %p30 = scmp.ne.s32.totalorder %s22, %s25
      %p31 = scmp.eq.s32.totalorder %s12, 0
      %p32 = por %p30, %p31
      %p33 = scmp.ne.s32.totalorder %s22, %s25
      %p34 = scmp.eq.s32.totalorder %s17, 1
      %p35 = por %p33, %p34
      %p36 = scmp.ne.s32.totalorder %s25, %s26
      %p37 = scmp.eq.s32.totalorder %s17, 0
      %p38 = por %p36, %p37
      %p39 = scmp.ne.s32.totalorder %s25, %s26
      %p40 = scmp.eq.s32.totalorder %s18, 1
      %p41 = por %p39, %p40
      %p43 = scmp.ne.s32.totalorder %s26, %s42
      %p44 = scmp.eq.s32.totalorder %s18, 0
      %p45 = por %p43, %p44
      %s47 = sadd.s32 %s46, 1
      %p50 = scmp.eq.s32.totalorder %s12, 1
      %p51 = scmp.ne.s32.totalorder %s46, %s48
      %p52 = scmp.eq.s32.totalorder %s12, 0
      %p53 = por %p51, %p52
      %p54 = scmp.ne.s32.totalorder %s46, %s48
      %p55 = scmp.eq.s32.totalorder %s17, 1
      %p56 = por %p54, %p55
      %p57 = scmp.ne.s32.totalorder %s48, %s49
      %p58 = scmp.eq.s32.totalorder %s17, 0
      %p59 = por %p57, %p58
      %p60 = scmp.ne.s32.totalorder %s48, %s49
      %p61 = scmp.eq.s32.totalorder %s18, 1
      %p62 = por %p60, %p61
      %p64 = scmp.ne.s32.totalorder %s49, %s63
      %p65 = scmp.eq.s32.totalorder %s18, 0
      %p66 = por %p64, %p65
      %s68 = sadd.s32 %s67, 1
      %p71 = scmp.eq.s32.totalorder %s12, 1
      %p72 = scmp.ne.s32.totalorder %s67, %s69
      %p73 = scmp.eq.s32.totalorder %s12, 0
      %p74 = por %p72, %p73
      %p75 = scmp.ne.s32.totalorder %s67, %s69
      %p76 = scmp.eq.s32.totalorder %s17, 1
      %p77 = por %p75, %p76
      %p78 = scmp.ne.s32.totalorder %s69, %s70
      %p79 = scmp.eq.s32.totalorder %s17, 0
      %p80 = por %p78, %p79
      %p81 = scmp.ne.s32.totalorder %s69, %s70
      %p82 = scmp.eq.s32.totalorder %s18, 1
      %p83 = por %p81, %p82
      %p85 = scmp.ne.s32.totalorder %s70, %s84
      %p86 = scmp.eq.s32.totalorder %s18, 0
      %p87 = por %p85, %p86
      %s88 = ssub.s32 %s12, %s19
      %p89 = scmp.eq.s32.totalorder %s88, 0
      %s91 = sadd.s32 %s90, 1
      %s92 = scalar_select %p89, %s90, %s91
      %p95 = pneg %p89
      %p96 = scmp.eq.s32.totalorder %s12, 1
      %p97 = por %p95, %p96
      %p98 = scmp.ne.s32.totalorder %s90, %s93
      %p99 = scmp.eq.s32.totalorder %s12, 0
      %p100 = por %p98, %p99
      %p101 = scmp.ne.s32.totalorder %s90, %s93
      %p102 = scmp.eq.s32.totalorder %s17, 1
      %p103 = por %p101, %p102
      %p104 = scmp.ne.s32.totalorder %s93, %s94
      %p105 = scmp.eq.s32.totalorder %s17, 0
      %p106 = por %p104, %p105
      %p107 = scmp.ne.s32.totalorder %s93, %s94
      %p108 = scmp.eq.s32.totalorder %s18, 1
      %p109 = por %p107, %p108
      %p111 = scmp.ne.s32.totalorder %s94, %s110
      %p112 = scmp.eq.s32.totalorder %s18, 0
      %p113 = por %p111, %p112
      %p114 = scmp.le.s32.totalorder 1, %s12
      %p115 = scmp.lt.s32.totalorder %s12, 3
      %p116 = pnand %p114, %p115
      %p117 = pneg %p116
      // Predicated region
      $region9: #{res_block_up_down_sample.5} parent=5 // pred_check
        _
      $region10: #{res_block_up_down_sample.5} parent=5 // pred_check_branch
        %119 = sbr.rel (%p116) target = $region12
      $region11: #{res_block_up_down_sample.5} parent=5 // pred_region
        %s120 = ssub.s32 %s12, 1
        // Predicated region
        $region13: #{res_block_up_down_sample.5} parent=11 // pred_check
          %p121 = pneg %p59
        $region14: #{res_block_up_down_sample.5} parent=11 // pred_check_branch
          %123 = sbr.rel (%p121) target = $region16
        $region15: #{res_block_up_down_sample.5} parent=11 // pred_region
          _
        $region16: #{res_block_up_down_sample.5} parent=11 // pred_fallthru
          _
        // Predicated region
        $region17: #{res_block_up_down_sample.5} parent=11 // pred_check
          %p124 = pneg %p80
        $region18: #{res_block_up_down_sample.5} parent=11 // pred_check_branch
          %126 = sbr.rel (%p124) target = $region20
        $region19: #{res_block_up_down_sample.5} parent=11 // pred_region
          _
        $region20: #{res_block_up_down_sample.5} parent=11 // pred_fallthru
          _
      $region12: #{res_block_up_down_sample.5} parent=5 // pred_fallthru
        _
      %p127 = scmp.lt.s32.totalorder %s12, 2
      // Predicated region
      $region21: #{res_block_up_down_sample.5} parent=5 // pred_check
        %p128 = pneg %p127
      $region22: #{res_block_up_down_sample.5} parent=5 // pred_check_branch
        %130 = sbr.rel (%p128) target = $region24
      $region23: #{res_block_up_down_sample.5} parent=5 // pred_region
        // Predicated region
        $region25: #{res_block_up_down_sample.5} parent=23 // pred_check
          %p131 = pneg %p32
        $region26: #{res_block_up_down_sample.5} parent=23 // pred_check_branch
          %133 = sbr.rel (%p131) target = $region28
        $region27: #{res_block_up_down_sample.5} parent=23 // pred_region
          %p134 = scmp.lt.s32.totalorder %s12, 1
          %s135 = scalar_select %p134, %s12, 1
          %s136 = smul.addr %s135, 16
          %s137 = smul.addr %s136, 4
          %s138 = scalar_lea.vmem %s0, %s137
        $region28: #{res_block_up_down_sample.5} parent=23 // pred_fallthru
          _
      $region24: #{res_block_up_down_sample.5} parent=5 // pred_fallthru
        _
      %p139 = scmp.le.s32.totalorder 1, %s12
      %p140 = scmp.lt.s32.totalorder %s12, 3
      %p141 = pnand %p139, %p140
      %p142 = pneg %p141
      // Predicated region
      $region29: #{res_block_up_down_sample.5} parent=5 // pred_check
        _
      $region30: #{res_block_up_down_sample.5} parent=5 // pred_check_branch
        %144 = sbr.rel (%p141) target = $region32
      $region31: #{res_block_up_down_sample.5} parent=5 // pred_region
        %s145 = ssub.s32 %s12, 1
        %p146 = scmp.lt.s32.totalorder %s17, 1
        %s147 = scalar_select %p146, %s17, 1
        %s148 = smul.addr %s147, 16
        %s149 = smul.addr %s148, 4
        %s150 = scalar_lea.vmem %s0, %s149
        %p151 = pneg %p38
        %p152 = pneg %p35
        %p153 = pneg %p59
        %p154 = pneg %p56
        %p155 = pneg %p80
        %p156 = pneg %p77
        %p157 = pneg %p106
        %p158 = pneg %p103
        %s159 = sand.u32 %s93, 1
        %s160 = scalar_lea.sflag [#allocation5], %s159
        %s161 = sand.u32 %s93, 1
        %s162 = smul.addr %s161, 64
        %s163 = scalar_lea.vmem [#allocation4], %s162
        %p164 = scmp.lt.s32.totalorder %s17, 1
        %s165 = scalar_select %p164, %s17, 1
        %s166 = smul.addr %s165, 16
        %s167 = smul.addr %s166, 4
        %s168 = scalar_lea.vmem %s0, %s167
        %170 = vst [vmem:[#allocation2] sm:$0xf] 0
        %171 = vst [vmem:[#allocation3 + $0x20] sm:$0xf] 0
        %v172 = vlaneseq
        %v173 = vshrl.u32 %v172, 7
        %v174 = vadd.s32 %v173, 8
        %v175 = vadd.s32 %v173, 16
        %v176 = vadd.s32 %v173, 24
        %v177 = vadd.s32 %v173, 32
        %v178 = vadd.s32 %v173, 40
        %v179 = vadd.s32 %v173, 48
        %v180 = vadd.s32 %v173, 56
        %vm181 = vcmp.lt.s32.totalorder %v173, 0
        %v182 = vsub.s32 0, %v173
        %v183 = vsel %vm181, %v182, %v173
        %v184 = vshrl.u32 %v183, 3
        %v185 = vand.u32 %v183, 7
        %v186 = vsub.s32 0, %v185
        %v187 = vsel %vm181, %v186, %v185
        %vm188 = vcmp.lt.s32.totalorder %v174, 0
        %v189 = vsub.s32 0, %v174
        %v190 = vsel %vm188, %v189, %v174
        %v191 = vshrl.u32 %v190, 3
        %v192 = vand.u32 %v190, 7
        %v193 = vsub.s32 0, %v192
        %v194 = vsel %vm188, %v193, %v192
        %vm195 = vcmp.lt.s32.totalorder %v175, 0
        %v196 = vsub.s32 0, %v175
        %v197 = vsel %vm195, %v196, %v175
        %v198 = vshrl.u32 %v197, 3
        %v199 = vand.u32 %v197, 7
        %v200 = vsub.s32 0, %v199
        %v201 = vsel %vm195, %v200, %v199
        %vm202 = vcmp.lt.s32.totalorder %v176, 0
        %v203 = vsub.s32 0, %v176
        %v204 = vsel %vm202, %v203, %v176
        %v205 = vshrl.u32 %v204, 3
        %v206 = vand.u32 %v204, 7
        %v207 = vsub.s32 0, %v206
        %v208 = vsel %vm202, %v207, %v206
        %vm209 = vcmp.lt.s32.totalorder %v177, 0
        %v210 = vsub.s32 0, %v177
        %v211 = vsel %vm209, %v210, %v177
        %v212 = vshrl.u32 %v211, 3
        %v213 = vand.u32 %v211, 7
        %v214 = vsub.s32 0, %v213
        %v215 = vsel %vm209, %v214, %v213
        %vm216 = vcmp.lt.s32.totalorder %v178, 0
        %v217 = vsub.s32 0, %v178
        %v218 = vsel %vm216, %v217, %v178
        %v219 = vshrl.u32 %v218, 3
        %v220 = vand.u32 %v218, 7
        %v221 = vsub.s32 0, %v220
        %v222 = vsel %vm216, %v221, %v220
        %vm223 = vcmp.lt.s32.totalorder %v179, 0
        %v224 = vsub.s32 0, %v179
        %v225 = vsel %vm223, %v224, %v179
        %v226 = vshrl.u32 %v225, 3
        %v227 = vand.u32 %v225, 7
        %v228 = vsub.s32 0, %v227
        %v229 = vsel %vm223, %v228, %v227
        %vm230 = vcmp.lt.s32.totalorder %v180, 0
        %v231 = vsub.s32 0, %v180
        %v232 = vsel %vm230, %v231, %v180
        %v233 = vshrl.u32 %v232, 3
        %v234 = vand.u32 %v232, 7
        %v235 = vsub.s32 0, %v234
        %v236 = vsel %vm230, %v235, %v234
        %vm237 = vcmp.ne.s32.totalorder %v187, 0
        %vm238 = vcmp.ne.s32.totalorder %v194, 0
        %vm239 = vcmp.ne.s32.totalorder %v201, 0
        %vm240 = vcmp.ne.s32.totalorder %v208, 0
        %vm241 = vcmp.ne.s32.totalorder %v215, 0
        %vm242 = vcmp.ne.s32.totalorder %v222, 0
        %vm243 = vcmp.ne.s32.totalorder %v229, 0
        %vm244 = vcmp.ne.s32.totalorder %v236, 0
        %vm245 = vcmp.lt.s32.totalorder %v187, 0
        %vm246 = vcmp.lt.s32.totalorder %v194, 0
        %vm247 = vcmp.lt.s32.totalorder %v201, 0
        %vm248 = vcmp.lt.s32.totalorder %v208, 0
        %vm249 = vcmp.lt.s32.totalorder %v215, 0
        %vm250 = vcmp.lt.s32.totalorder %v222, 0
        %vm251 = vcmp.lt.s32.totalorder %v229, 0
        %vm252 = vcmp.lt.s32.totalorder %v236, 0
        %vm253 = vmand %vm245, %vm237
        %vm254 = vmand %vm246, %vm238
        %vm255 = vmand %vm247, %vm239
        %vm256 = vmand %vm248, %vm240
        %vm257 = vmand %vm249, %vm241
        %vm258 = vmand %vm250, %vm242
        %vm259 = vmand %vm251, %vm243
        %vm260 = vmand %vm252, %vm244
        %v261 = vadd.s32 %v187, 8
        %v262 = vadd.s32 %v194, 8
        %v263 = vadd.s32 %v201, 8
        %v264 = vadd.s32 %v208, 8
        %v265 = vadd.s32 %v215, 8
        %v266 = vadd.s32 %v222, 8
        %v267 = vadd.s32 %v229, 8
        %v268 = vadd.s32 %v236, 8
        %v269 = vsel %vm253, %v261, %v187
        %v270 = vsel %vm254, %v262, %v194
        %v271 = vsel %vm255, %v263, %v201
        %v272 = vsel %vm256, %v264, %v208
        %v273 = vsel %vm257, %v265, %v215
        %v274 = vsel %vm258, %v266, %v222
        %v275 = vsel %vm259, %v267, %v229
        %v276 = vsel %vm260, %v268, %v236
        %vm277 = vcmp.eq.s32.totalorder %v269, 0
        %vm278 = vcmp.eq.s32.totalorder %v270, 0
        %vm279 = vcmp.eq.s32.totalorder %v271, 0
        %vm280 = vcmp.eq.s32.totalorder %v272, 0
        %vm281 = vcmp.eq.s32.totalorder %v273, 0
        %vm282 = vcmp.eq.s32.totalorder %v274, 0
        %vm283 = vcmp.eq.s32.totalorder %v275, 0
        %vm284 = vcmp.eq.s32.totalorder %v276, 0
        %vm285 = vcmp.eq.s32.totalorder %v269, 7
        %vm286 = vcmp.eq.s32.totalorder %v270, 7
        %vm287 = vcmp.eq.s32.totalorder %v271, 7
        %vm288 = vcmp.eq.s32.totalorder %v272, 7
        %vm289 = vcmp.eq.s32.totalorder %v273, 7
        %vm290 = vcmp.eq.s32.totalorder %v274, 7
        %vm291 = vcmp.eq.s32.totalorder %v275, 7
        %vm292 = vcmp.eq.s32.totalorder %v276, 7
        %v293 = vld [vmem:[%s168] sm:$0xf]
        %v294 = vld [vmem:[%s168 + $0x8] sm:$0xf]
        %v295 = vld [vmem:[%s168 + $0x10] sm:$0xf]
        %v296 = vld [vmem:[%s168 + $0x18] sm:$0xf]
        %v297 = vld [vmem:[%s168 + $0x20] sm:$0xf]
        %v298 = vld [vmem:[%s168 + $0x28] sm:$0xf]
        %v299 = vld [vmem:[%s168 + $0x30] sm:$0xf]
        %v300 = vld [vmem:[%s168 + $0x38] sm:$0xf]
        %v301 = vunpack.c.l.bf16 %v293
        %v302 = vunpack.c.l.bf16 %v294
        %v303 = vunpack.c.l.bf16 %v295
        %v304 = vunpack.c.l.bf16 %v296
        %v305 = vunpack.c.l.bf16 %v297
        %v306 = vunpack.c.l.bf16 %v298
        %v307 = vunpack.c.l.bf16 %v299
        %v308 = vunpack.c.l.bf16 %v300
        %v309 = vpack.c.bf16 %v302, %v301
        %v310 = vpack.c.bf16 %v304, %v303
        %v311 = vpack.c.bf16 %v306, %v305
        %v312 = vpack.c.bf16 %v308, %v307
        %v317 = vunpack.c.l.b16 %v309
        %v318 = vunpack.c.h.b16 %v309
        %v319 = vunpack.c.l.b16 %v310
        %v320 = vunpack.c.h.b16 %v310
        %v321 = vunpack.c.l.b16 %v311
        %v322 = vunpack.c.h.b16 %v311
        %v323 = vunpack.c.l.b16 %v312
        %v324 = vunpack.c.h.b16 %v312
        %v325 = vpack.c.b16 %v317, %v317
        %v326 = vpack.c.b16 %v318, %v318
        %v327 = vpack.c.b16 %v319, %v319
        %v328 = vpack.c.b16 %v320, %v320
        %v329 = vpack.c.b16 %v321, %v321
        %v330 = vpack.c.b16 %v322, %v322
        %v331 = vpack.c.b16 %v323, %v323
        %v332 = vpack.c.b16 %v324, %v324
        %333 = vrot.lane.b32.xlu0 %v325, 32
        %v334 = vpop.permute.xlu0 %333
        %335 = vrot.lane.b32.xlu0 %v326, 32
        %v336 = vpop.permute.xlu0 %335
        %337 = vrot.lane.b32.xlu0 %v327, 32
        %v338 = vpop.permute.xlu0 %337
        %339 = vrot.lane.b32.xlu0 %v328, 32
        %v340 = vpop.permute.xlu0 %339
        %341 = vrot.lane.b32.xlu0 %v329, 32
        %v342 = vpop.permute.xlu0 %341
        %343 = vrot.lane.b32.xlu0 %v330, 32
        %v344 = vpop.permute.xlu0 %343
        %345 = vrot.lane.b32.xlu0 %v331, 32
        %v346 = vpop.permute.xlu0 %345
        %347 = vrot.lane.b32.xlu0 %v332, 32
        %v348 = vpop.permute.xlu0 %347
        %vm357 = vcmask 519424
        %358 = vst.msk [vmem:[#allocation3] sm:$0xf] %vm357, %v334
        %359 = vst.msk [vmem:[#allocation3 + $0x4] sm:$0xf] %vm357, %v336
        %360 = vst.msk [vmem:[#allocation3 + $0x8] sm:$0xf] %vm357, %v338
        %361 = vst.msk [vmem:[#allocation3 + $0xc] sm:$0xf] %vm357, %v340
        %362 = vst.msk [vmem:[#allocation3 + $0x10] sm:$0xf] %vm357, %v342
        %363 = vst.msk [vmem:[#allocation3 + $0x14] sm:$0xf] %vm357, %v344
        %364 = vst.msk [vmem:[#allocation3 + $0x18] sm:$0xf] %vm357, %v346
        %365 = vst.msk [vmem:[#allocation3 + $0x1c] sm:$0xf] %vm357, %v348
        %vm366 = vcmask 781824
        %367 = vst.msk [vmem:[#allocation3] sm:$0xf] %vm366, %v334
        %368 = vst.msk [vmem:[#allocation3 + $0x4] sm:$0xf] %vm366, %v336
        %369 = vst.msk [vmem:[#allocation3 + $0x8] sm:$0xf] %vm366, %v338
        %370 = vst.msk [vmem:[#allocation3 + $0xc] sm:$0xf] %vm366, %v340
        %371 = vst.msk [vmem:[#allocation3 + $0x10] sm:$0xf] %vm366, %v342
        %372 = vst.msk [vmem:[#allocation3 + $0x14] sm:$0xf] %vm366, %v344
        %373 = vst.msk [vmem:[#allocation3 + $0x18] sm:$0xf] %vm366, %v346
        %374 = vst.msk [vmem:[#allocation3 + $0x1c] sm:$0xf] %vm366, %v348
        %383 = vrot.lane.b32.xlu0 %v301, 96
        %v384 = vpop.permute.xlu0 %383
        %385 = vrot.lane.b32.xlu0 %v302, 96
        %v386 = vpop.permute.xlu0 %385
        %387 = vrot.lane.b32.xlu0 %v303, 96
        %v388 = vpop.permute.xlu0 %387
        %389 = vrot.lane.b32.xlu0 %v304, 96
        %v390 = vpop.permute.xlu0 %389
        %391 = vrot.lane.b32.xlu0 %v305, 96
        %v392 = vpop.permute.xlu0 %391
        %393 = vrot.lane.b32.xlu0 %v306, 96
        %v394 = vpop.permute.xlu0 %393
        %395 = vrot.lane.b32.xlu0 %v307, 96
        %v396 = vpop.permute.xlu0 %395
        %397 = vrot.lane.b32.xlu0 %v308, 96
        %v398 = vpop.permute.xlu0 %397
        %v407 = vrot.slane %v384, 7
        %v408 = vrot.slane %v386, 7
        %v409 = vrot.slane %v388, 7
        %v410 = vrot.slane %v390, 7
        %v411 = vrot.slane %v392, 7
        %v412 = vrot.slane %v394, 7
        %v413 = vrot.slane %v396, 7
        %v414 = vrot.slane %v398, 7
        %vm415 = vcmp.lt.s32.totalorder %v173, 1
        %v416 = vsel %vm415, %v413, %v414
        %v417 = vsel %vm415, %v412, %v413
        %v418 = vsel %vm415, %v411, %v412
        %v419 = vsel %vm415, %v410, %v411
        %v420 = vsel %vm415, %v409, %v410
        %v421 = vsel %vm415, %v408, %v409
        %v422 = vsel %vm415, %v407, %v408
        %v423 = vsel %vm415, %v414, %v407
        %v424 = vsel %vm277, 0.0, %v423
        %v425 = vsel %vm278, 0.0, %v422
        %v426 = vsel %vm279, 0.0, %v421
        %v427 = vsel %vm280, 0.0, %v420
        %v428 = vsel %vm281, 0.0, %v419
        %v429 = vsel %vm282, 0.0, %v418
        %v430 = vsel %vm283, 0.0, %v417
        %v431 = vsel %vm284, 0.0, %v416
        %v432 = vpack.c.bf16 %v425, %v424
        %v433 = vpack.c.bf16 %v427, %v426
        %v434 = vpack.c.bf16 %v429, %v428
        %v435 = vpack.c.bf16 %v431, %v430
        %v440 = vunpack.c.l.b16 %v432
        %v441 = vunpack.c.h.b16 %v432
        %v442 = vunpack.c.l.b16 %v433
        %v443 = vunpack.c.h.b16 %v433
        %v444 = vunpack.c.l.b16 %v434
        %v445 = vunpack.c.h.b16 %v434
        %v446 = vunpack.c.l.b16 %v435
        %v447 = vunpack.c.h.b16 %v435
        %v448 = vpack.c.b16 %v440, %v440
        %v449 = vpack.c.b16 %v441, %v441
        %v450 = vpack.c.b16 %v442, %v442
        %v451 = vpack.c.b16 %v443, %v443
        %v452 = vpack.c.b16 %v444, %v444
        %v453 = vpack.c.b16 %v445, %v445
        %v454 = vpack.c.b16 %v446, %v446
        %v455 = vpack.c.b16 %v447, %v447
        %vm464 = vcmask 257024
        %465 = vst.msk [vmem:[#allocation3] sm:$0xf] %vm464, %v448
        %466 = vst.msk [vmem:[#allocation3 + $0x4] sm:$0xf] %vm464, %v449
        %467 = vst.msk [vmem:[#allocation3 + $0x8] sm:$0xf] %vm464, %v450
        %468 = vst.msk [vmem:[#allocation3 + $0xc] sm:$0xf] %vm464, %v451
        %469 = vst.msk [vmem:[#allocation3 + $0x10] sm:$0xf] %vm464, %v452
        %470 = vst.msk [vmem:[#allocation3 + $0x14] sm:$0xf] %vm464, %v453
        %471 = vst.msk [vmem:[#allocation3 + $0x18] sm:$0xf] %vm464, %v454
        %472 = vst.msk [vmem:[#allocation3 + $0x1c] sm:$0xf] %vm464, %v455
        %v473 = vrot.slane %v301, 1
        %v474 = vrot.slane %v302, 1
        %v475 = vrot.slane %v303, 1
        %v476 = vrot.slane %v304, 1
        %v477 = vrot.slane %v305, 1
        %v478 = vrot.slane %v306, 1
        %v479 = vrot.slane %v307, 1
        %v480 = vrot.slane %v308, 1
        %vm481 = vcmp.lt.s32.totalorder %v173, 7
        %v482 = vsel %vm481, %v479, %v480
        %v483 = vsel %vm481, %v478, %v479
        %v484 = vsel %vm481, %v477, %v478
        %v485 = vsel %vm481, %v476, %v477
        %v486 = vsel %vm481, %v475, %v476
        %v487 = vsel %vm481, %v474, %v475
        %v488 = vsel %vm481, %v473, %v474
        %v489 = vsel %vm481, %v480, %v473
        %v490 = vsel %vm285, 0.0, %v488
        %v491 = vsel %vm286, 0.0, %v487
        %v492 = vsel %vm287, 0.0, %v486
        %v493 = vsel %vm288, 0.0, %v485
        %v494 = vsel %vm289, 0.0, %v484
        %v495 = vsel %vm290, 0.0, %v483
        %v496 = vsel %vm291, 0.0, %v482
        %v497 = vsel %vm292, 0.0, %v489
        %v498 = vpack.c.bf16 %v491, %v490
        %v499 = vpack.c.bf16 %v493, %v492
        %v500 = vpack.c.bf16 %v495, %v494
        %v501 = vpack.c.bf16 %v497, %v496
        %v506 = vunpack.c.l.b16 %v498
        %v507 = vunpack.c.h.b16 %v498
        %v508 = vunpack.c.l.b16 %v499
        %v509 = vunpack.c.h.b16 %v499
        %v510 = vunpack.c.l.b16 %v500
        %v511 = vunpack.c.h.b16 %v500
        %v512 = vunpack.c.l.b16 %v501
        %v513 = vunpack.c.h.b16 %v501
        %v514 = vpack.c.b16 %v506, %v506
        %v515 = vpack.c.b16 %v507, %v507
        %v516 = vpack.c.b16 %v508, %v508
        %v517 = vpack.c.b16 %v509, %v509
        %v518 = vpack.c.b16 %v510, %v510
        %v519 = vpack.c.b16 %v511, %v511
        %v520 = vpack.c.b16 %v512, %v512
        %v521 = vpack.c.b16 %v513, %v513
        %522 = vrot.lane.b32.xlu0 %v514, 96
        %v523 = vpop.permute.xlu0 %522
        %524 = vrot.lane.b32.xlu0 %v515, 96
        %v525 = vpop.permute.xlu0 %524
        %526 = vrot.lane.b32.xlu0 %v516, 96
        %v527 = vpop.permute.xlu0 %526
        %528 = vrot.lane.b32.xlu0 %v517, 96
        %v529 = vpop.permute.xlu0 %528
        %530 = vrot.lane.b32.xlu0 %v518, 96
        %v531 = vpop.permute.xlu0 %530
        %532 = vrot.lane.b32.xlu0 %v519, 96
        %v533 = vpop.permute.xlu0 %532
        %534 = vrot.lane.b32.xlu0 %v520, 96
        %v535 = vpop.permute.xlu0 %534
        %536 = vrot.lane.b32.xlu0 %v521, 96
        %v537 = vpop.permute.xlu0 %536
        %vm546 = vcmask 1044224
        %547 = vst.msk [vmem:[#allocation3] sm:$0xf] %vm546, %v523
        %548 = vst.msk [vmem:[#allocation3 + $0x4] sm:$0xf] %vm546, %v525
        %549 = vst.msk [vmem:[#allocation3 + $0x8] sm:$0xf] %vm546, %v527
        %550 = vst.msk [vmem:[#allocation3 + $0xc] sm:$0xf] %vm546, %v529
        %551 = vst.msk [vmem:[#allocation3 + $0x10] sm:$0xf] %vm546, %v531
        %552 = vst.msk [vmem:[#allocation3 + $0x14] sm:$0xf] %vm546, %v533
        %553 = vst.msk [vmem:[#allocation3 + $0x18] sm:$0xf] %vm546, %v535
        %554 = vst.msk [vmem:[#allocation3 + $0x1c] sm:$0xf] %vm546, %v537
        %s555 = scalar_lea.vmem %s168, 4
        %v556 = vld [vmem:[%s555] sm:$0xf]
        %v557 = vld [vmem:[%s555 + $0x8] sm:$0xf]
        %v558 = vld [vmem:[%s555 + $0x10] sm:$0xf]
        %v559 = vld [vmem:[%s555 + $0x18] sm:$0xf]
        %v560 = vld [vmem:[%s555 + $0x20] sm:$0xf]
        %v561 = vld [vmem:[%s555 + $0x28] sm:$0xf]
        %v562 = vld [vmem:[%s555 + $0x30] sm:$0xf]
        %v563 = vld [vmem:[%s555 + $0x38] sm:$0xf]
        %v564 = vunpack.c.l.bf16 %v556
        %v565 = vunpack.c.l.bf16 %v557
        %v566 = vunpack.c.l.bf16 %v558
        %v567 = vunpack.c.l.bf16 %v559
        %v568 = vunpack.c.l.bf16 %v560
        %v569 = vunpack.c.l.bf16 %v561
        %v570 = vunpack.c.l.bf16 %v562
        %v571 = vunpack.c.l.bf16 %v563
        %v572 = vpack.c.bf16 %v565, %v564
        %v573 = vpack.c.bf16 %v567, %v566
        %v574 = vpack.c.bf16 %v569, %v568
        %v575 = vpack.c.bf16 %v571, %v570
        %v580 = vunpack.c.l.b16 %v572
        %v581 = vunpack.c.h.b16 %v572
        %v582 = vunpack.c.l.b16 %v573
        %v583 = vunpack.c.h.b16 %v573
        %v584 = vunpack.c.l.b16 %v574
        %v585 = vunpack.c.h.b16 %v574
        %v586 = vunpack.c.l.b16 %v575
        %v587 = vunpack.c.h.b16 %v575
        %v588 = vpack.c.b16 %v580, %v580
        %v589 = vpack.c.b16 %v581, %v581
        %v590 = vpack.c.b16 %v582, %v582
        %v591 = vpack.c.b16 %v583, %v583
        %v592 = vpack.c.b16 %v584, %v584
        %v593 = vpack.c.b16 %v585, %v585
        %v594 = vpack.c.b16 %v586, %v586
        %v595 = vpack.c.b16 %v587, %v587
        %596 = vrot.lane.b32.xlu0 %v588, 32
        %v597 = vpop.permute.xlu0 %596
        %598 = vrot.lane.b32.xlu0 %v589, 32
        %v599 = vpop.permute.xlu0 %598
        %600 = vrot.lane.b32.xlu0 %v590, 32
        %v601 = vpop.permute.xlu0 %600
        %602 = vrot.lane.b32.xlu0 %v591, 32
        %v603 = vpop.permute.xlu0 %602
        %604 = vrot.lane.b32.xlu0 %v592, 32
        %v605 = vpop.permute.xlu0 %604
        %606 = vrot.lane.b32.xlu0 %v593, 32
        %v607 = vpop.permute.xlu0 %606
        %608 = vrot.lane.b32.xlu0 %v594, 32
        %v609 = vpop.permute.xlu0 %608
        %610 = vrot.lane.b32.xlu0 %v595, 32
        %v611 = vpop.permute.xlu0 %610
        %620 = vst.msk [vmem:[#allocation2 + $0x4] sm:$0xf] %vm357, %v597
        %621 = vst.msk [vmem:[#allocation2 + $0x8] sm:$0xf] %vm357, %v599
        %622 = vst.msk [vmem:[#allocation2 + $0xc] sm:$0xf] %vm357, %v601
        %623 = vst.msk [vmem:[#allocation2 + $0x10] sm:$0xf] %vm357, %v603
        %624 = vst.msk [vmem:[#allocation2 + $0x14] sm:$0xf] %vm357, %v605
        %625 = vst.msk [vmem:[#allocation2 + $0x18] sm:$0xf] %vm357, %v607
        %626 = vst.msk [vmem:[#allocation2 + $0x1c] sm:$0xf] %vm357, %v609
        %627 = vst.msk [vmem:[#allocation2 + $0x20] sm:$0xf] %vm357, %v611
        %628 = vst.msk [vmem:[#allocation2 + $0x4] sm:$0xf] %vm366, %v597
        %629 = vst.msk [vmem:[#allocation2 + $0x8] sm:$0xf] %vm366, %v599
        %630 = vst.msk [vmem:[#allocation2 + $0xc] sm:$0xf] %vm366, %v601
        %631 = vst.msk [vmem:[#allocation2 + $0x10] sm:$0xf] %vm366, %v603
        %632 = vst.msk [vmem:[#allocation2 + $0x14] sm:$0xf] %vm366, %v605
        %633 = vst.msk [vmem:[#allocation2 + $0x18] sm:$0xf] %vm366, %v607
        %634 = vst.msk [vmem:[#allocation2 + $0x1c] sm:$0xf] %vm366, %v609
        %635 = vst.msk [vmem:[#allocation2 + $0x20] sm:$0xf] %vm366, %v611
        %644 = vrot.lane.b32.xlu0 %v564, 96
        %v645 = vpop.permute.xlu0 %644
        %646 = vrot.lane.b32.xlu0 %v565, 96
        %v647 = vpop.permute.xlu0 %646
        %648 = vrot.lane.b32.xlu0 %v566, 96
        %v649 = vpop.permute.xlu0 %648
        %650 = vrot.lane.b32.xlu0 %v567, 96
        %v651 = vpop.permute.xlu0 %650
        %652 = vrot.lane.b32.xlu0 %v568, 96
        %v653 = vpop.permute.xlu0 %652
        %654 = vrot.lane.b32.xlu0 %v569, 96
        %v655 = vpop.permute.xlu0 %654
        %656 = vrot.lane.b32.xlu0 %v570, 96
        %v657 = vpop.permute.xlu0 %656
        %658 = vrot.lane.b32.xlu0 %v571, 96
        %v659 = vpop.permute.xlu0 %658
        %v668 = vrot.slane %v645, 7
        %v669 = vrot.slane %v647, 7
        %v670 = vrot.slane %v649, 7
        %v671 = vrot.slane %v651, 7
        %v672 = vrot.slane %v653, 7
        %v673 = vrot.slane %v655, 7
        %v674 = vrot.slane %v657, 7
        %v675 = vrot.slane %v659, 7
        %v676 = vsel %vm415, %v674, %v675
        %v677 = vsel %vm415, %v673, %v674
        %v678 = vsel %vm415, %v672, %v673
        %v679 = vsel %vm415, %v671, %v672
        %v680 = vsel %vm415, %v670, %v671
        %v681 = vsel %vm415, %v669, %v670
        %v682 = vsel %vm415, %v668, %v669
        %v683 = vsel %vm415, %v675, %v668
        %v684 = vsel %vm277, 0.0, %v683
        %v685 = vsel %vm278, 0.0, %v682
        %v686 = vsel %vm279, 0.0, %v681
        %v687 = vsel %vm280, 0.0, %v680
        %v688 = vsel %vm281, 0.0, %v679
        %v689 = vsel %vm282, 0.0, %v678
        %v690 = vsel %vm283, 0.0, %v677
        %v691 = vsel %vm284, 0.0, %v676
        %v692 = vpack.c.bf16 %v685, %v684
        %v693 = vpack.c.bf16 %v687, %v686
        %v694 = vpack.c.bf16 %v689, %v688
        %v695 = vpack.c.bf16 %v691, %v690
        %v700 = vunpack.c.l.b16 %v692
        %v701 = vunpack.c.h.b16 %v692
        %v702 = vunpack.c.l.b16 %v693
        %v703 = vunpack.c.h.b16 %v693
        %v704 = vunpack.c.l.b16 %v694
        %v705 = vunpack.c.h.b16 %v694
        %v706 = vunpack.c.l.b16 %v695
        %v707 = vunpack.c.h.b16 %v695
        %v708 = vpack.c.b16 %v700, %v700
        %v709 = vpack.c.b16 %v701, %v701
        %v710 = vpack.c.b16 %v702, %v702
        %v711 = vpack.c.b16 %v703, %v703
        %v712 = vpack.c.b16 %v704, %v704
        %v713 = vpack.c.b16 %v705, %v705
        %v714 = vpack.c.b16 %v706, %v706
        %v715 = vpack.c.b16 %v707, %v707
        %724 = vst.msk [vmem:[#allocation2 + $0x4] sm:$0xf] %vm464, %v708
        %725 = vst.msk [vmem:[#allocation2 + $0x8] sm:$0xf] %vm464, %v709
        %726 = vst.msk [vmem:[#allocation2 + $0xc] sm:$0xf] %vm464, %v710
        %727 = vst.msk [vmem:[#allocation2 + $0x10] sm:$0xf] %vm464, %v711
        %728 = vst.msk [vmem:[#allocation2 + $0x14] sm:$0xf] %vm464, %v712
        %729 = vst.msk [vmem:[#allocation2 + $0x18] sm:$0xf] %vm464, %v713
        %730 = vst.msk [vmem:[#allocation2 + $0x1c] sm:$0xf] %vm464, %v714
        %731 = vst.msk [vmem:[#allocation2 + $0x20] sm:$0xf] %vm464, %v715
        %v732 = vrot.slane %v564, 1
        %v733 = vrot.slane %v565, 1
        %v734 = vrot.slane %v566, 1
        %v735 = vrot.slane %v567, 1
        %v736 = vrot.slane %v568, 1
        %v737 = vrot.slane %v569, 1
        %v738 = vrot.slane %v570, 1
        %v739 = vrot.slane %v571, 1
        %v740 = vsel %vm481, %v738, %v739
        %v741 = vsel %vm481, %v737, %v738
        %v742 = vsel %vm481, %v736, %v737
        %v743 = vsel %vm481, %v735, %v736
        %v744 = vsel %vm481, %v734, %v735
        %v745 = vsel %vm481, %v733, %v734
        %v746 = vsel %vm481, %v732, %v733
        %v747 = vsel %vm481, %v739, %v732
        %v748 = vsel %vm285, 0.0, %v746
        %v749 = vsel %vm286, 0.0, %v745
        %v750 = vsel %vm287, 0.0, %v744
        %v751 = vsel %vm288, 0.0, %v743
        %v752 = vsel %vm289, 0.0, %v742
        %v753 = vsel %vm290, 0.0, %v741
        %v754 = vsel %vm291, 0.0, %v740
        %v755 = vsel %vm292, 0.0, %v747
        %v756 = vpack.c.bf16 %v749, %v748
        %v757 = vpack.c.bf16 %v751, %v750
        %v758 = vpack.c.bf16 %v753, %v752
        %v759 = vpack.c.bf16 %v755, %v754
        %v764 = vunpack.c.l.b16 %v756
        %v765 = vunpack.c.h.b16 %v756
        %v766 = vunpack.c.l.b16 %v757
        %v767 = vunpack.c.h.b16 %v757
        %v768 = vunpack.c.l.b16 %v758
        %v769 = vunpack.c.h.b16 %v758
        %v770 = vunpack.c.l.b16 %v759
        %v771 = vunpack.c.h.b16 %v759
        %v772 = vpack.c.b16 %v764, %v764
        %v773 = vpack.c.b16 %v765, %v765
        %v774 = vpack.c.b16 %v766, %v766
        %v775 = vpack.c.b16 %v767, %v767
        %v776 = vpack.c.b16 %v768, %v768
        %v777 = vpack.c.b16 %v769, %v769
        %v778 = vpack.c.b16 %v770, %v770
        %v779 = vpack.c.b16 %v771, %v771
        %780 = vrot.lane.b32.xlu0 %v772, 96
        %v781 = vpop.permute.xlu0 %780
        %782 = vrot.lane.b32.xlu0 %v773, 96
        %v783 = vpop.permute.xlu0 %782
        %784 = vrot.lane.b32.xlu0 %v774, 96
        %v785 = vpop.permute.xlu0 %784
        %786 = vrot.lane.b32.xlu0 %v775, 96
        %v787 = vpop.permute.xlu0 %786
        %788 = vrot.lane.b32.xlu0 %v776, 96
        %v789 = vpop.permute.xlu0 %788
        %790 = vrot.lane.b32.xlu0 %v777, 96
        %v791 = vpop.permute.xlu0 %790
        %792 = vrot.lane.b32.xlu0 %v778, 96
        %v793 = vpop.permute.xlu0 %792
        %794 = vrot.lane.b32.xlu0 %v779, 96
        %v795 = vpop.permute.xlu0 %794
        %804 = vst.msk [vmem:[#allocation2 + $0x4] sm:$0xf] %vm546, %v781
        %805 = vst.msk [vmem:[#allocation2 + $0x8] sm:$0xf] %vm546, %v783
        %806 = vst.msk [vmem:[#allocation2 + $0xc] sm:$0xf] %vm546, %v785
        %807 = vst.msk [vmem:[#allocation2 + $0x10] sm:$0xf] %vm546, %v787
        %808 = vst.msk [vmem:[#allocation2 + $0x14] sm:$0xf] %vm546, %v789
        %809 = vst.msk [vmem:[#allocation2 + $0x18] sm:$0xf] %vm546, %v791
        %810 = vst.msk [vmem:[#allocation2 + $0x1c] sm:$0xf] %vm546, %v793
        %811 = vst.msk [vmem:[#allocation2 + $0x20] sm:$0xf] %vm546, %v795
        %v812 = vld [vmem:[#allocation2] sm:$0xf]
        %v813 = vld [vmem:[#allocation2 + $0x4] sm:$0xf]
        %v814 = vld [vmem:[#allocation2 + $0x8] sm:$0xf]
        %v815 = vld [vmem:[#allocation2 + $0xc] sm:$0xf]
        %v816 = vld [vmem:[#allocation2 + $0x10] sm:$0xf]
        %v817 = vld [vmem:[#allocation2 + $0x14] sm:$0xf]
        %v818 = vld [vmem:[#allocation2 + $0x18] sm:$0xf]
        %v819 = vld [vmem:[#allocation2 + $0x1c] sm:$0xf]
        %v820 = vld [vmem:[%s1] sm:$0xf]
        %v821 = vld [vmem:[%s1 + $0x4] sm:$0xf]
        %v822 = vld [vmem:[%s1 + $0x8] sm:$0xf]
        %v823 = vld [vmem:[%s1 + $0xc] sm:$0xf]
        %v824 = vld [vmem:[%s1 + $0x10] sm:$0xf]
        %v825 = vld [vmem:[%s1 + $0x14] sm:$0xf]
        %v826 = vld [vmem:[%s1 + $0x18] sm:$0xf]
        %v827 = vld [vmem:[%s1 + $0x1c] sm:$0xf]
        %v828 = vld [vmem:[%s1 + $0x20] sm:$0xf]
        %v829 = vld [vmem:[%s1 + $0x24] sm:$0xf]
        %v830 = vld [vmem:[%s1 + $0x28] sm:$0xf]
        %v831 = vld [vmem:[%s1 + $0x2c] sm:$0xf]
        %v832 = vld [vmem:[%s1 + $0x30] sm:$0xf]
        %v833 = vld [vmem:[%s1 + $0x34] sm:$0xf]
        %v834 = vld [vmem:[%s1 + $0x38] sm:$0xf]
        %v835 = vld [vmem:[%s1 + $0x3c] sm:$0xf]
        %v836 = vld [vmem:[%s2] sm:$0x1]
        %v838 = vlaneseq
        %v839 = vshrl.u32 %v838, 7
        %v840 = vsub.s32 0, %v839
        %v841 = vrot.slane %v836, %v840
        %v851 = vunpack.c.l.b16 %v812
        %v852 = vunpack.c.l.b16 %v813
        %v853 = vunpack.c.l.b16 %v814
        %v854 = vunpack.c.l.b16 %v815
        %v855 = vunpack.c.l.b16 %v816
        %v856 = vunpack.c.l.b16 %v817
        %v857 = vunpack.c.l.b16 %v818
        %v858 = vunpack.c.l.b16 %v819
        %v859 = vpack.c.b16 %v852, %v851
        %v860 = vpack.c.b16 %v854, %v853
        %v861 = vpack.c.b16 %v856, %v855
        %v862 = vpack.c.b16 %v858, %v857
        %v883 = vunpack.c.l.b16 %v820
        %v884 = vunpack.c.l.b16 %v821
        %v885 = vunpack.c.l.b16 %v822
        %v886 = vunpack.c.l.b16 %v823
        %v887 = vunpack.c.l.b16 %v824
        %v888 = vunpack.c.l.b16 %v825
        %v889 = vunpack.c.l.b16 %v826
        %v890 = vunpack.c.l.b16 %v827
        %v891 = vunpack.c.l.b16 %v828
        %v892 = vunpack.c.l.b16 %v829
        %v893 = vunpack.c.l.b16 %v830
        %v894 = vunpack.c.l.b16 %v831
        %v895 = vunpack.c.l.b16 %v832
        %v896 = vunpack.c.l.b16 %v833
        %v897 = vunpack.c.l.b16 %v834
        %v898 = vunpack.c.l.b16 %v835
        %v899 = vpack.c.b16 %v884, %v883
        %v900 = vpack.c.b16 %v886, %v885
        %v901 = vpack.c.b16 %v888, %v887
        %v902 = vpack.c.b16 %v890, %v889
        %v903 = vpack.c.b16 %v892, %v891
        %v904 = vpack.c.b16 %v894, %v893
        %v905 = vpack.c.b16 %v896, %v895
        %v906 = vpack.c.b16 %v898, %v897
        %915 = vmatprep.subr.bf16.mxu0 0
        %916 = vmatpush1.bf16.msra.mxu0 %v906
        %917 = vmatprep.subr.bf16.mxu0 0
        %918 = vmatpush1.bf16.msra.mxu0 %v905
        %919 = vmatprep.subr.bf16.mxu0 0
        %920 = vmatpush1.bf16.msra.mxu0 %v904
        %921 = vmatprep.subr.bf16.mxu0 0
        %922 = vmatpush1.bf16.msra.mxu0 %v903
        %923 = vmatprep.subr.bf16.mxu0 0
        %924 = vmatpush1.bf16.msra.mxu0 %v902
        %925 = vmatprep.subr.bf16.mxu0 0
        %926 = vmatpush1.bf16.msra.mxu0 %v901
        %927 = vmatprep.subr.bf16.mxu0 0
        %928 = vmatpush1.bf16.msra.mxu0 %v900
        %929 = vmatprep.subr.bf16.mxu0 0
        %930 = vmatpush1.bf16.msra.mxu0 %v899
        %931 = vmatprep.subr.bf16.mxu0 0
        %932 = vmatpush2.bf16.msra.mxu0 0
        %933 = vmatprep.subr.bf16.mxu0 0
        %934 = vmatpush2.bf16.msra.mxu0 0
        %935 = vmatprep.subr.bf16.mxu0 0
        %936 = vmatpush2.bf16.msra.mxu0 0
        %937 = vmatprep.subr.bf16.mxu0 0
        %938 = vmatpush2.bf16.msra.mxu0 0
        %939 = vmatprep.subr.bf16.mxu0 0
        %940 = vmatpush2.bf16.msra.mxu0 0
        %941 = vmatprep.subr.bf16.mxu0 0
        %942 = vmatpush2.bf16.msra.mxu0 0
        %943 = vmatprep.subr.bf16.mxu0 0
        %944 = vmatpush2.bf16.msra.mxu0 0
        %945 = vmatprep.subr.bf16.mxu0 0
        %946 = vmatpush2.bf16.msra.mxu0 0
        %947 = vmatprep.mubr.bf16.mxu0 0
        %948 = vmatmul.mubr.bf16.gmra.mxu0 %v859
        %v949 = vpop.f32.mrf.mxu0
        %v950 = vadd.f32 %v841, %v949
        %v951 = vpop.f32.mrf.mxu0
        %v952 = vpop.f32.mrf.mxu0
        %v953 = vadd.f32 %v841, %v952
        %v954 = vpop.f32.mrf.mxu0
        %955 = vmatprep.mubr.bf16.mxu0 0
        %956 = vmatmul.mubr.bf16.gmra.mxu0 %v860
        %v957 = vpop.f32.mrf.mxu0
        %v958 = vadd.f32 %v841, %v957
        %v959 = vpop.f32.mrf.mxu0
        %v960 = vpop.f32.mrf.mxu0
        %v961 = vadd.f32 %v841, %v960
        %v962 = vpop.f32.mrf.mxu0
        %963 = vmatprep.mubr.bf16.mxu0 0
        %964 = vmatmul.mubr.bf16.gmra.mxu0 %v861
        %v965 = vpop.f32.mrf.mxu0
        %v966 = vadd.f32 %v841, %v965
        %v967 = vpop.f32.mrf.mxu0
        %v968 = vpop.f32.mrf.mxu0
        %v969 = vadd.f32 %v841, %v968
        %v970 = vpop.f32.mrf.mxu0
        %971 = vmatprep.mubr.bf16.mxu0 0
        %972 = vmatmul.mubr.bf16.gmra.mxu0 %v862
        %v973 = vpop.f32.mrf.mxu0
        %v974 = vadd.f32 %v841, %v973
        %v975 = vpop.f32.mrf.mxu0
        %v976 = vpop.f32.mrf.mxu0
        %v977 = vadd.f32 %v841, %v976
        %v978 = vpop.f32.mrf.mxu0
        %979 = vdwg.mxu0
        %v980 = vld [vmem:[#allocation3] sm:$0xf]
        %v981 = vld [vmem:[#allocation3 + $0x4] sm:$0xf]
        %v982 = vld [vmem:[#allocation3 + $0x8] sm:$0xf]
        %v983 = vld [vmem:[#allocation3 + $0xc] sm:$0xf]
        %v984 = vld [vmem:[#allocation3 + $0x10] sm:$0xf]
        %v985 = vld [vmem:[#allocation3 + $0x14] sm:$0xf]
        %v986 = vld [vmem:[#allocation3 + $0x18] sm:$0xf]
        %v987 = vld [vmem:[#allocation3 + $0x1c] sm:$0xf]
        %s988 = scalar_lea.vmem %s1, 64
        %v989 = vld [vmem:[%s988] sm:$0xf]
        %v990 = vld [vmem:[%s988 + $0x4] sm:$0xf]
        %v991 = vld [vmem:[%s988 + $0x8] sm:$0xf]
        %v992 = vld [vmem:[%s988 + $0xc] sm:$0xf]
        %v993 = vld [vmem:[%s988 + $0x10] sm:$0xf]
        %v994 = vld [vmem:[%s988 + $0x14] sm:$0xf]
        %v995 = vld [vmem:[%s988 + $0x18] sm:$0xf]
        %v996 = vld [vmem:[%s988 + $0x1c] sm:$0xf]
        %v997 = vld [vmem:[%s988 + $0x20] sm:$0xf]
        %v998 = vld [vmem:[%s988 + $0x24] sm:$0xf]
        %v999 = vld [vmem:[%s988 + $0x28] sm:$0xf]
        %v1000 = vld [vmem:[%s988 + $0x2c] sm:$0xf]
        %v1001 = vld [vmem:[%s988 + $0x30] sm:$0xf]
        %v1002 = vld [vmem:[%s988 + $0x34] sm:$0xf]
        %v1003 = vld [vmem:[%s988 + $0x38] sm:$0xf]
        %v1004 = vld [vmem:[%s988 + $0x3c] sm:$0xf]
        %v1013 = vunpack.c.l.b16 %v980
        %v1014 = vunpack.c.l.b16 %v981
        %v1015 = vunpack.c.l.b16 %v982
        %v1016 = vunpack.c.l.b16 %v983
        %v1017 = vunpack.c.l.b16 %v984
        %v1018 = vunpack.c.l.b16 %v985
        %v1019 = vunpack.c.l.b16 %v986
        %v1020 = vunpack.c.l.b16 %v987
        %v1021 = vpack.c.b16 %v1014, %v1013
        %v1022 = vpack.c.b16 %v1016, %v1015
        %v1023 = vpack.c.b16 %v1018, %v1017
        %v1024 = vpack.c.b16 %v1020, %v1019
        %v1045 = vunpack.c.l.b16 %v989
        %v1046 = vunpack.c.l.b16 %v990
        %v1047 = vunpack.c.l.b16 %v991
        %v1048 = vunpack.c.l.b16 %v992
        %v1049 = vunpack.c.l.b16 %v993
        %v1050 = vunpack.c.l.b16 %v994
        %v1051 = vunpack.c.l.b16 %v995
        %v1052 = vunpack.c.l.b16 %v996
        %v1053 = vunpack.c.l.b16 %v997
        %v1054 = vunpack.c.l.b16 %v998
        %v1055 = vunpack.c.l.b16 %v999
        %v1056 = vunpack.c.l.b16 %v1000
        %v1057 = vunpack.c.l.b16 %v1001
        %v1058 = vunpack.c.l.b16 %v1002
        %v1059 = vunpack.c.l.b16 %v1003
        %v1060 = vunpack.c.l.b16 %v1004
        %v1061 = vpack.c.b16 %v1046, %v1045
        %v1062 = vpack.c.b16 %v1048, %v1047
        %v1063 = vpack.c.b16 %v1050, %v1049
        %v1064 = vpack.c.b16 %v1052, %v1051
        %v1065 = vpack.c.b16 %v1054, %v1053
        %v1066 = vpack.c.b16 %v1056, %v1055
        %v1067 = vpack.c.b16 %v1058, %v1057
        %v1068 = vpack.c.b16 %v1060, %v1059
        %1077 = vmatprep.subr.bf16.mxu0 0
        %1078 = vmatpush1.bf16.msra.mxu0 %v1068
        %1079 = vmatprep.subr.bf16.mxu0 0
        %1080 = vmatpush1.bf16.msra.mxu0 %v1067
        %1081 = vmatprep.subr.bf16.mxu0 0
        %1082 = vmatpush1.bf16.msra.mxu0 %v1066
        %1083 = vmatprep.subr.bf16.mxu0 0
        %1084 = vmatpush1.bf16.msra.mxu0 %v1065
        %1085 = vmatprep.subr.bf16.mxu0 0
        %1086 = vmatpush1.bf16.msra.mxu0 %v1064
        %1087 = vmatprep.subr.bf16.mxu0 0
        %1088 = vmatpush1.bf16.msra.mxu0 %v1063
        %1089 = vmatprep.subr.bf16.mxu0 0
        %1090 = vmatpush1.bf16.msra.mxu0 %v1062
        %1091 = vmatprep.subr.bf16.mxu0 0
        %1092 = vmatpush1.bf16.msra.mxu0 %v1061
        %1093 = vmatprep.subr.bf16.mxu0 0
        %1094 = vmatpush2.bf16.msra.mxu0 0
        %1095 = vmatprep.subr.bf16.mxu0 0
        %1096 = vmatpush2.bf16.msra.mxu0 0
        %1097 = vmatprep.subr.bf16.mxu0 0
        %1098 = vmatpush2.bf16.msra.mxu0 0
        %1099 = vmatprep.subr.bf16.mxu0 0
        %1100 = vmatpush2.bf16.msra.mxu0 0
        %1101 = vmatprep.subr.bf16.mxu0 0
        %1102 = vmatpush2.bf16.msra.mxu0 0
        %1103 = vmatprep.subr.bf16.mxu0 0
        %1104 = vmatpush2.bf16.msra.mxu0 0
        %1105 = vmatprep.subr.bf16.mxu0 0
        %1106 = vmatpush2.bf16.msra.mxu0 0
        %1107 = vmatprep.subr.bf16.mxu0 0
        %1108 = vmatpush2.bf16.msra.mxu0 0
        %1109 = vmatprep.mubr.bf16.mxu0 0
        %1110 = vmatmul.mubr.bf16.gmra.mxu0 %v1021
        %v1111 = vpop.f32.mrf.mxu0
        %v1112 = vadd.f32 0.0, %v1111
        %v1113 = vpop.f32.mrf.mxu0
        %v1114 = vpop.f32.mrf.mxu0
        %v1115 = vadd.f32 0.0, %v1114
        %v1116 = vpop.f32.mrf.mxu0
        %1117 = vmatprep.mubr.bf16.mxu0 0
        %1118 = vmatmul.mubr.bf16.gmra.mxu0 %v1022
        %v1119 = vpop.f32.mrf.mxu0
        %v1120 = vadd.f32 0.0, %v1119
        %v1121 = vpop.f32.mrf.mxu0
        %v1122 = vpop.f32.mrf.mxu0
        %v1123 = vadd.f32 0.0, %v1122
        %v1124 = vpop.f32.mrf.mxu0
        %1125 = vmatprep.mubr.bf16.mxu0 0
        %1126 = vmatmul.mubr.bf16.gmra.mxu0 %v1023
        %v1127 = vpop.f32.mrf.mxu0
        %v1128 = vadd.f32 0.0, %v1127
        %v1129 = vpop.f32.mrf.mxu0
        %v1130 = vpop.f32.mrf.mxu0
        %v1131 = vadd.f32 0.0, %v1130
        %v1132 = vpop.f32.mrf.mxu0
        %1133 = vmatprep.mubr.bf16.mxu0 0
        %1134 = vmatmul.mubr.bf16.gmra.mxu0 %v1024
        %v1135 = vpop.f32.mrf.mxu0
        %v1136 = vadd.f32 0.0, %v1135
        %v1137 = vpop.f32.mrf.mxu0
        %v1138 = vpop.f32.mrf.mxu0
        %v1139 = vadd.f32 0.0, %v1138
        %v1140 = vpop.f32.mrf.mxu0
        %1141 = vdwg.mxu0
        %v1142 = vadd.f32 %v950, %v1112
        %v1143 = vadd.f32 %v953, %v1115
        %v1144 = vadd.f32 %v958, %v1120
        %v1145 = vadd.f32 %v961, %v1123
        %v1146 = vadd.f32 %v966, %v1128
        %v1147 = vadd.f32 %v969, %v1131
        %v1148 = vadd.f32 %v974, %v1136
        %v1149 = vadd.f32 %v977, %v1139
        %v1150 = vld [vmem:[#allocation2 + $0x4] sm:$0xf]
        %v1151 = vld [vmem:[#allocation2 + $0x8] sm:$0xf]
        %v1152 = vld [vmem:[#allocation2 + $0xc] sm:$0xf]
        %v1153 = vld [vmem:[#allocation2 + $0x10] sm:$0xf]
        %v1154 = vld [vmem:[#allocation2 + $0x14] sm:$0xf]
        %v1155 = vld [vmem:[#allocation2 + $0x18] sm:$0xf]
        %v1156 = vld [vmem:[#allocation2 + $0x1c] sm:$0xf]
        %v1157 = vld [vmem:[#allocation2 + $0x20] sm:$0xf]
        %s1158 = scalar_lea.vmem %s1, 128
        %v1159 = vld [vmem:[%s1158] sm:$0xf]
        %v1160 = vld [vmem:[%s1158 + $0x4] sm:$0xf]
        %v1161 = vld [vmem:[%s1158 + $0x8] sm:$0xf]
        %v1162 = vld [vmem:[%s1158 + $0xc] sm:$0xf]
        %v1163 = vld [vmem:[%s1158 + $0x10] sm:$0xf]
        %v1164 = vld [vmem:[%s1158 + $0x14] sm:$0xf]
        %v1165 = vld [vmem:[%s1158 + $0x18] sm:$0xf]
        %v1166 = vld [vmem:[%s1158 + $0x1c] sm:$0xf]
        %v1167 = vld [vmem:[%s1158 + $0x20] sm:$0xf]
        %v1168 = vld [vmem:[%s1158 + $0x24] sm:$0xf]
        %v1169 = vld [vmem:[%s1158 + $0x28] sm:$0xf]
        %v1170 = vld [vmem:[%s1158 + $0x2c] sm:$0xf]
        %v1171 = vld [vmem:[%s1158 + $0x30] sm:$0xf]
        %v1172 = vld [vmem:[%s1158 + $0x34] sm:$0xf]
        %v1173 = vld [vmem:[%s1158 + $0x38] sm:$0xf]
        %v1174 = vld [vmem:[%s1158 + $0x3c] sm:$0xf]
        %v1183 = vunpack.c.l.b16 %v1150
        %v1184 = vunpack.c.l.b16 %v1151
        %v1185 = vunpack.c.l.b16 %v1152
        %v1186 = vunpack.c.l.b16 %v1153
        %v1187 = vunpack.c.l.b16 %v1154
        %v1188 = vunpack.c.l.b16 %v1155
        %v1189 = vunpack.c.l.b16 %v1156
        %v1190 = vunpack.c.l.b16 %v1157
        %v1191 = vpack.c.b16 %v1184, %v1183
        %v1192 = vpack.c.b16 %v1186, %v1185
        %v1193 = vpack.c.b16 %v1188, %v1187
        %v1194 = vpack.c.b16 %v1190, %v1189
        %v1215 = vunpack.c.l.b16 %v1159
        %v1216 = vunpack.c.l.b16 %v1160
        %v1217 = vunpack.c.l.b16 %v1161
        %v1218 = vunpack.c.l.b16 %v1162
        %v1219 = vunpack.c.l.b16 %v1163
        %v1220 = vunpack.c.l.b16 %v1164
        %v1221 = vunpack.c.l.b16 %v1165
        %v1222 = vunpack.c.l.b16 %v1166
        %v1223 = vunpack.c.l.b16 %v1167
        %v1224 = vunpack.c.l.b16 %v1168
        %v1225 = vunpack.c.l.b16 %v1169
        %v1226 = vunpack.c.l.b16 %v1170
        %v1227 = vunpack.c.l.b16 %v1171
        %v1228 = vunpack.c.l.b16 %v1172
        %v1229 = vunpack.c.l.b16 %v1173
        %v1230 = vunpack.c.l.b16 %v1174
        %v1231 = vpack.c.b16 %v1216, %v1215
        %v1232 = vpack.c.b16 %v1218, %v1217
        %v1233 = vpack.c.b16 %v1220, %v1219
        %v1234 = vpack.c.b16 %v1222, %v1221
        %v1235 = vpack.c.b16 %v1224, %v1223
        %v1236 = vpack.c.b16 %v1226, %v1225
        %v1237 = vpack.c.b16 %v1228, %v1227
        %v1238 = vpack.c.b16 %v1230, %v1229
        %1247 = vmatprep.subr.bf16.mxu0 0
        %1248 = vmatpush1.bf16.msra.mxu0 %v1238
        %1249 = vmatprep.subr.bf16.mxu0 0
        %1250 = vmatpush1.bf16.msra.mxu0 %v1237
        %1251 = vmatprep.subr.bf16.mxu0 0
        %1252 = vmatpush1.bf16.msra.mxu0 %v1236
        %1253 = vmatprep.subr.bf16.mxu0 0
        %1254 = vmatpush1.bf16.msra.mxu0 %v1235
        %1255 = vmatprep.subr.bf16.mxu0 0
        %1256 = vmatpush1.bf16.msra.mxu0 %v1234
        %1257 = vmatprep.subr.bf16.mxu0 0
        %1258 = vmatpush1.bf16.msra.mxu0 %v1233
        %1259 = vmatprep.subr.bf16.mxu0 0
        %1260 = vmatpush1.bf16.msra.mxu0 %v1232
        %1261 = vmatprep.subr.bf16.mxu0 0
        %1262 = vmatpush1.bf16.msra.mxu0 %v1231
        %1263 = vmatprep.subr.bf16.mxu0 0
        %1264 = vmatpush2.bf16.msra.mxu0 0
        %1265 = vmatprep.subr.bf16.mxu0 0
        %1266 = vmatpush2.bf16.msra.mxu0 0
        %1267 = vmatprep.subr.bf16.mxu0 0
        %1268 = vmatpush2.bf16.msra.mxu0 0
        %1269 = vmatprep.subr.bf16.mxu0 0
        %1270 = vmatpush2.bf16.msra.mxu0 0
        %1271 = vmatprep.subr.bf16.mxu0 0
        %1272 = vmatpush2.bf16.msra.mxu0 0
        %1273 = vmatprep.subr.bf16.mxu0 0
        %1274 = vmatpush2.bf16.msra.mxu0 0
        %1275 = vmatprep.subr.bf16.mxu0 0
        %1276 = vmatpush2.bf16.msra.mxu0 0
        %1277 = vmatprep.subr.bf16.mxu0 0
        %1278 = vmatpush2.bf16.msra.mxu0 0
        %1279 = vmatprep.mubr.bf16.mxu0 0
        %1280 = vmatmul.mubr.bf16.gmra.mxu0 %v1191
        %v1281 = vpop.f32.mrf.mxu0
        %v1282 = vadd.f32 0.0, %v1281
        %v1283 = vpop.f32.mrf.mxu0
        %v1284 = vpop.f32.mrf.mxu0
        %v1285 = vadd.f32 0.0, %v1284
        %v1286 = vpop.f32.mrf.mxu0
        %1287 = vmatprep.mubr.bf16.mxu0 0
        %1288 = vmatmul.mubr.bf16.gmra.mxu0 %v1192
        %v1289 = vpop.f32.mrf.mxu0
        %v1290 = vadd.f32 0.0, %v1289
        %v1291 = vpop.f32.mrf.mxu0
        %v1292 = vpop.f32.mrf.mxu0
        %v1293 = vadd.f32 0.0, %v1292
        %v1294 = vpop.f32.mrf.mxu0
        %1295 = vmatprep.mubr.bf16.mxu0 0
        %1296 = vmatmul.mubr.bf16.gmra.mxu0 %v1193
        %v1297 = vpop.f32.mrf.mxu0
        %v1298 = vadd.f32 0.0, %v1297
        %v1299 = vpop.f32.mrf.mxu0
        %v1300 = vpop.f32.mrf.mxu0
        %v1301 = vadd.f32 0.0, %v1300
        %v1302 = vpop.f32.mrf.mxu0
        %1303 = vmatprep.mubr.bf16.mxu0 0
        %1304 = vmatmul.mubr.bf16.gmra.mxu0 %v1194
        %v1305 = vpop.f32.mrf.mxu0
        %v1306 = vadd.f32 0.0, %v1305
        %v1307 = vpop.f32.mrf.mxu0
        %v1308 = vpop.f32.mrf.mxu0
        %v1309 = vadd.f32 0.0, %v1308
        %v1310 = vpop.f32.mrf.mxu0
        %1311 = vdwg.mxu0
        %v1312 = vadd.f32 %v1142, %v1282
        %v1313 = vadd.f32 %v1143, %v1285
        %v1314 = vadd.f32 %v1144, %v1290
        %v1315 = vadd.f32 %v1145, %v1293
        %v1316 = vadd.f32 %v1146, %v1298
        %v1317 = vadd.f32 %v1147, %v1301
        %v1318 = vadd.f32 %v1148, %v1306
        %v1319 = vadd.f32 %v1149, %v1309
        %v1320 = vld [vmem:[#allocation3 + $0x4] sm:$0xf]
        %v1321 = vld [vmem:[#allocation3 + $0x8] sm:$0xf]
        %v1322 = vld [vmem:[#allocation3 + $0xc] sm:$0xf]
        %v1323 = vld [vmem:[#allocation3 + $0x10] sm:$0xf]
        %v1324 = vld [vmem:[#allocation3 + $0x14] sm:$0xf]
        %v1325 = vld [vmem:[#allocation3 + $0x18] sm:$0xf]
        %v1326 = vld [vmem:[#allocation3 + $0x1c] sm:$0xf]
        %v1327 = vld [vmem:[#allocation3 + $0x20] sm:$0xf]
        %s1328 = scalar_lea.vmem %s1, 192
        %v1329 = vld [vmem:[%s1328] sm:$0xf]
        %v1330 = vld [vmem:[%s1328 + $0x4] sm:$0xf]
        %v1331 = vld [vmem:[%s1328 + $0x8] sm:$0xf]
        %v1332 = vld [vmem:[%s1328 + $0xc] sm:$0xf]
        %v1333 = vld [vmem:[%s1328 + $0x10] sm:$0xf]
        %v1334 = vld [vmem:[%s1328 + $0x14] sm:$0xf]
        %v1335 = vld [vmem:[%s1328 + $0x18] sm:$0xf]
        %v1336 = vld [vmem:[%s1328 + $0x1c] sm:$0xf]
        %v1337 = vld [vmem:[%s1328 + $0x20] sm:$0xf]
        %v1338 = vld [vmem:[%s1328 + $0x24] sm:$0xf]
        %v1339 = vld [vmem:[%s1328 + $0x28] sm:$0xf]
        %v1340 = vld [vmem:[%s1328 + $0x2c] sm:$0xf]
        %v1341 = vld [vmem:[%s1328 + $0x30] sm:$0xf]
        %v1342 = vld [vmem:[%s1328 + $0x34] sm:$0xf]
        %v1343 = vld [vmem:[%s1328 + $0x38] sm:$0xf]
        %v1344 = vld [vmem:[%s1328 + $0x3c] sm:$0xf]
        %v1353 = vunpack.c.l.b16 %v1320
        %v1354 = vunpack.c.l.b16 %v1321
        %v1355 = vunpack.c.l.b16 %v1322
        %v1356 = vunpack.c.l.b16 %v1323
        %v1357 = vunpack.c.l.b16 %v1324
        %v1358 = vunpack.c.l.b16 %v1325
        %v1359 = vunpack.c.l.b16 %v1326
        %v1360 = vunpack.c.l.b16 %v1327
        %v1361 = vpack.c.b16 %v1354, %v1353
        %v1362 = vpack.c.b16 %v1356, %v1355
        %v1363 = vpack.c.b16 %v1358, %v1357
        %v1364 = vpack.c.b16 %v1360, %v1359
        %v1385 = vunpack.c.l.b16 %v1329
        %v1386 = vunpack.c.l.b16 %v1330
        %v1387 = vunpack.c.l.b16 %v1331
        %v1388 = vunpack.c.l.b16 %v1332
        %v1389 = vunpack.c.l.b16 %v1333
        %v1390 = vunpack.c.l.b16 %v1334
        %v1391 = vunpack.c.l.b16 %v1335
        %v1392 = vunpack.c.l.b16 %v1336
        %v1393 = vunpack.c.l.b16 %v1337
        %v1394 = vunpack.c.l.b16 %v1338
        %v1395 = vunpack.c.l.b16 %v1339
        %v1396 = vunpack.c.l.b16 %v1340
        %v1397 = vunpack.c.l.b16 %v1341
        %v1398 = vunpack.c.l.b16 %v1342
        %v1399 = vunpack.c.l.b16 %v1343
        %v1400 = vunpack.c.l.b16 %v1344
        %v1401 = vpack.c.b16 %v1386, %v1385
        %v1402 = vpack.c.b16 %v1388, %v1387
        %v1403 = vpack.c.b16 %v1390, %v1389
        %v1404 = vpack.c.b16 %v1392, %v1391
        %v1405 = vpack.c.b16 %v1394, %v1393
        %v1406 = vpack.c.b16 %v1396, %v1395
        %v1407 = vpack.c.b16 %v1398, %v1397
        %v1408 = vpack.c.b16 %v1400, %v1399
        %1417 = vmatprep.subr.bf16.mxu0 0
        %1418 = vmatpush1.bf16.msra.mxu0 %v1408
        %1419 = vmatprep.subr.bf16.mxu0 0
        %1420 = vmatpush1.bf16.msra.mxu0 %v1407
        %1421 = vmatprep.subr.bf16.mxu0 0
        %1422 = vmatpush1.bf16.msra.mxu0 %v1406
        %1423 = vmatprep.subr.bf16.mxu0 0
        %1424 = vmatpush1.bf16.msra.mxu0 %v1405
        %1425 = vmatprep.subr.bf16.mxu0 0
        %1426 = vmatpush1.bf16.msra.mxu0 %v1404
        %1427 = vmatprep.subr.bf16.mxu0 0
        %1428 = vmatpush1.bf16.msra.mxu0 %v1403
        %1429 = vmatprep.subr.bf16.mxu0 0
        %1430 = vmatpush1.bf16.msra.mxu0 %v1402
        %1431 = vmatprep.subr.bf16.mxu0 0
        %1432 = vmatpush1.bf16.msra.mxu0 %v1401
        %1433 = vmatprep.subr.bf16.mxu0 0
        %1434 = vmatpush2.bf16.msra.mxu0 0
        %1435 = vmatprep.subr.bf16.mxu0 0
        %1436 = vmatpush2.bf16.msra.mxu0 0
        %1437 = vmatprep.subr.bf16.mxu0 0
        %1438 = vmatpush2.bf16.msra.mxu0 0
        %1439 = vmatprep.subr.bf16.mxu0 0
        %1440 = vmatpush2.bf16.msra.mxu0 0
        %1441 = vmatprep.subr.bf16.mxu0 0
        %1442 = vmatpush2.bf16.msra.mxu0 0
        %1443 = vmatprep.subr.bf16.mxu0 0
        %1444 = vmatpush2.bf16.msra.mxu0 0
        %1445 = vmatprep.subr.bf16.mxu0 0
        %1446 = vmatpush2.bf16.msra.mxu0 0
        %1447 = vmatprep.subr.bf16.mxu0 0
        %1448 = vmatpush2.bf16.msra.mxu0 0
        %1449 = vmatprep.mubr.bf16.mxu0 0
        %1450 = vmatmul.mubr.bf16.gmra.mxu0 %v1361
        %v1451 = vpop.f32.mrf.mxu0
        %v1452 = vadd.f32 0.0, %v1451
        %v1453 = vpop.f32.mrf.mxu0
        %v1454 = vpop.f32.mrf.mxu0
        %v1455 = vadd.f32 0.0, %v1454
        %v1456 = vpop.f32.mrf.mxu0
        %1457 = vmatprep.mubr.bf16.mxu0 0
        %1458 = vmatmul.mubr.bf16.gmra.mxu0 %v1362
        %v1459 = vpop.f32.mrf.mxu0
        %v1460 = vadd.f32 0.0, %v1459
        %v1461 = vpop.f32.mrf.mxu0
        %v1462 = vpop.f32.mrf.mxu0
        %v1463 = vadd.f32 0.0, %v1462
        %v1464 = vpop.f32.mrf.mxu0
        %1465 = vmatprep.mubr.bf16.mxu0 0
        %1466 = vmatmul.mubr.bf16.gmra.mxu0 %v1363
        %v1467 = vpop.f32.mrf.mxu0
        %v1468 = vadd.f32 0.0, %v1467
        %v1469 = vpop.f32.mrf.mxu0
        %v1470 = vpop.f32.mrf.mxu0
        %v1471 = vadd.f32 0.0, %v1470
        %v1472 = vpop.f32.mrf.mxu0
        %1473 = vmatprep.mubr.bf16.mxu0 0
        %1474 = vmatmul.mubr.bf16.gmra.mxu0 %v1364
        %v1475 = vpop.f32.mrf.mxu0
        %v1476 = vadd.f32 0.0, %v1475
        %v1477 = vpop.f32.mrf.mxu0
        %v1478 = vpop.f32.mrf.mxu0
        %v1479 = vadd.f32 0.0, %v1478
        %v1480 = vpop.f32.mrf.mxu0
        %1481 = vdwg.mxu0
        %v1482 = vadd.f32 %v1312, %v1452
        %v1483 = vadd.f32 %v1313, %v1455
        %v1484 = vadd.f32 %v1314, %v1460
        %v1485 = vadd.f32 %v1315, %v1463
        %v1486 = vadd.f32 %v1316, %v1468
        %v1487 = vadd.f32 %v1317, %v1471
        %v1488 = vadd.f32 %v1318, %v1476
        %v1489 = vadd.f32 %v1319, %v1479
        %vm1490 = vcmask 523264
        %1491 = vst.msk [vmem:[%s163] sm:$0xff] %vm1490, %v1482
        %1492 = vst.msk [vmem:[%s163 + $0x8] sm:$0xff] %vm1490, %v1483
        %1493 = vst.msk [vmem:[%s163 + $0x10] sm:$0xff] %vm1490, %v1484
        %1494 = vst.msk [vmem:[%s163 + $0x18] sm:$0xff] %vm1490, %v1485
        %1495 = vst.msk [vmem:[%s163 + $0x20] sm:$0xff] %vm1490, %v1486
        %1496 = vst.msk [vmem:[%s163 + $0x28] sm:$0xff] %vm1490, %v1487
        %1497 = vst.msk [vmem:[%s163 + $0x30] sm:$0xff] %vm1490, %v1488
        %1498 = vst.msk [vmem:[%s163 + $0x38] sm:$0xff] %vm1490, %v1489
        %s1499 = sand.u32 %s93, 1
        %s1500 = scalar_lea.sflag [#allocation5], %s1499
        %s1501 = sand.u32 %s93, 1
        %s1502 = smul.addr %s1501, 64
        %s1503 = scalar_lea.vmem [#allocation4], %s1502
        // Predicated region
        $region33: #{res_block_up_down_sample.5} parent=31 // pred_check
          %p1504 = pneg %p103
        $region34: #{res_block_up_down_sample.5} parent=31 // pred_check_branch
          %1506 = sbr.rel (%p1504) target = $region36
        $region35: #{res_block_up_down_sample.5} parent=31 // pred_region
          %s1508 = ssub.s32 1024, 1024
          %1509 = vsyncadd %s1500, %s1508
          %s1510 = smul.addr %s17, 8
          %s1511 = smul.addr %s1510, 128
          %s1512 = scalar_lea.hbm %s3, %s1511
          %s1513 = sshll.u32 %s1503, 4
          %s1514 = int_to_ptr.vmem [resolvable:$true] %s1513
          %1519 = dma.vmem_to_hbm [thread:$0]  %s1514, 1024, %s1512, %s1500, 128, 128, 8
        $region36: #{res_block_up_down_sample.5} parent=31 // pred_fallthru
          _
      $region32: #{res_block_up_down_sample.5} parent=5 // pred_fallthru
        _
      %p1520 = scmp.le.s32.totalorder 2, %s12
      // Predicated region
      $region37: #{res_block_up_down_sample.5} parent=5 // pred_check
        %p1521 = pneg %p1520
      $region38: #{res_block_up_down_sample.5} parent=5 // pred_check_branch
        %1523 = sbr.rel (%p1521) target = $region40
      $region39: #{res_block_up_down_sample.5} parent=5 // pred_region
        %s1524 = ssub.s32 %s12, 2
        // Predicated region
        $region41: #{res_block_up_down_sample.5} parent=39 // pred_check
          %p1525 = pneg %p109
        $region42: #{res_block_up_down_sample.5} parent=39 // pred_check_branch
          %1527 = sbr.rel (%p1525) target = $region44
        $region43: #{res_block_up_down_sample.5} parent=39 // pred_region
          %s1528 = sand.u32 %s94, 1
          %s1529 = scalar_lea.sflag [#allocation5], %s1528
          %s1530 = sand.u32 %s94, 1
          %s1531 = smul.addr %s1530, 64
          %s1532 = scalar_lea.vmem [#allocation4], %s1531
          %1533 = dma.done %s1529, 1024
        $region44: #{res_block_up_down_sample.5} parent=39 // pred_fallthru
          _
      $region40: #{res_block_up_down_sample.5} parent=5 // pred_fallthru
        _
    $region6: #{res_block_up_down_sample.5} parent=1 // loop_footer
      %s16 = sadd.s32 1, %s12
    $region7: #{res_block_up_down_sample.5} parent=1 // loop_footer_branch
      %11 = sbr.rel target = $region3
    $region8: #{res_block_up_down_sample.5} parent=1 // loop_exit
      _
    %1534 = vsyncpa [#allocation5], 1
    %s1535 = scalar_lea.sflag [#allocation5], 1
    %1536 = vsyncpa %s1535, 1

// kernel: res_block_up_down_sample.3
$region0: #{res_block_up_down_sample.3}
  #allocation0 [shape = 'u32[]', space=smem, size = 0x4, offset = 0x4, fixed_abs, tag = 'smem constant byte address 0x4 - core index']
  #allocation1 [shape = 'u32[144,128]{1,0:T(1,128)}', space=vmem, size = 0x12000, scoped, tag = 'internal scratch']
  #allocation2 [shape = 'bf16[288,96]{1,0:T(8,128)(2,1)}', space=vmem, size = 0x12000, scoped, tag = 'scratch operand']
  %s0 = inlined_call_operand.vmem [shape: bf16[2,256,32], index: 0, kind: input, shape index: {}]
  %s1 = inlined_call_operand.vmem [shape: f32[1,32], index: 1, kind: input, shape index: {}]
  %s2 = inlined_call_operand.vmem [shape: f32[1,32], index: 2, kind: input, shape index: {}]
  %s3 = inlined_call_operand.vmem [shape: bf16[3,96,32], index: 3, kind: input, shape index: {}]
  %s4 = inlined_call_operand.vmem [shape: f32[1,32], index: 4, kind: input, shape index: {}]
  %s5 = inlined_call_operand.vmem [shape: f32[1,32], index: 5, kind: input, shape index: {}]
  %s6 = inlined_call_operand.vmem [shape: f32[1,32], index: 6, kind: input, shape index: {}]
  %s7 = inlined_call_operand.vmem [shape: bf16[3,96,32], index: 7, kind: input, shape index: {}]
  %s8 = inlined_call_operand.vmem [shape: f32[1,32], index: 8, kind: input, shape index: {}]
  %s9 = inlined_call_operand.vmem [shape: bf16[2,256,32], index: 9, kind: output, shape index: {}]
  %s10 = sld [smem:[#allocation0]]
  $region69: #{res_block_up_down_sample.3} parent=0
    _
  %s12 = ssub.s32 1, %s10
  %s13 = scalar_select 0, %s12, %s10
  loop: start=0, step=1, limit=4
  $region2: #{res_block_up_down_sample.3} parent=0 // loop_pre_header
    _
  $region3: #{res_block_up_down_sample.3} parent=0 // loop_header
    %s15 = sphi 0, %s19
    %p16 = scmp.ge.s32.totalorder %s15, 4
    %s25 = sphi 0, %s27
    %s28 = sphi 0, %s25
    %s29 = sphi 0, %s28
    %s45 = sphi 0, %s29
    %s49 = sphi 0, %s49
    %s51 = sphi 0, %s49
    %s52 = sphi 0, %s51
    %s66 = sphi 0, %s52
    %s70 = sphi 0, %s70
    %s72 = sphi 0, %s70
    %s73 = sphi 0, %s72
    %s87 = sphi 0, %s73
    %s91 = sphi 0, %s91
    %s93 = sphi 0, %s91
    %s94 = sphi 0, %s93
    %s108 = sphi 0, %s94
    %s112 = sphi 0, %s112
    %s114 = sphi 0, %s112
    %s115 = sphi 0, %s114
    %s129 = sphi 0, %s115
    %s133 = sphi 0, %s133
    %s135 = sphi 0, %s133
    %s136 = sphi 0, %s135
    %s150 = sphi 0, %s136
    %s154 = sphi 0, %s154
    %s156 = sphi 0, %s154
    %s157 = sphi 0, %s156
    %s171 = sphi 0, %s157
    %s175 = sphi 0, %s175
    %s177 = sphi 0, %s175
    %s178 = sphi 0, %s177
    %s192 = sphi 0, %s178
    %s196 = sphi 0, %s196
    %s198 = sphi 0, %s196
    %s199 = sphi 0, %s198
    %s213 = sphi 0, %s199
    %s219 = sphi 0, %s221
    %s222 = sphi 0, %s219
    %s223 = sphi 0, %s222
    %s239 = sphi 0, %s223
  $region4: #{res_block_up_down_sample.3} parent=0 // loop_header_branch
    %18 = sbr.rel (%p16) target = $region8
  $region5: #{res_block_up_down_sample.3} parent=0 // loop_body
    %s20 = ssub.s32 %s15, 1
    %s21 = ssub.s32 %s15, 2
    %s22 = sadd.s32 %s15, 1
    %s23 = ssub.s32 %s15, %s22
    %p24 = scmp.eq.s32.totalorder %s23, 0
    %s26 = sadd.s32 %s25, 1
    %s27 = scalar_select %p24, %s25, %s26
    %p30 = pneg %p24
    %p31 = scmp.eq.s32.totalorder %s15, 1
    %p32 = por %p30, %p31
    %p33 = scmp.ne.s32.totalorder %s25, %s28
    %p34 = scmp.eq.s32.totalorder %s15, 0
    %p35 = por %p33, %p34
    %p36 = scmp.ne.s32.totalorder %s25, %s28
    %p37 = scmp.eq.s32.totalorder %s20, 1
    %p38 = por %p36, %p37
    %p39 = scmp.ne.s32.totalorder %s28, %s29
    %p40 = scmp.eq.s32.totalorder %s20, 0
    %p41 = por %p39, %p40
    %p42 = scmp.ne.s32.totalorder %s28, %s29
    %p43 = scmp.eq.s32.totalorder %s21, 1
    %p44 = por %p42, %p43
    %p46 = scmp.ne.s32.totalorder %s29, %s45
    %p47 = scmp.eq.s32.totalorder %s21, 0
    %p48 = por %p46, %p47
    %s50 = sadd.s32 %s49, 1
    %p53 = scmp.eq.s32.totalorder %s15, 1
    %p54 = scmp.ne.s32.totalorder %s49, %s51
    %p55 = scmp.eq.s32.totalorder %s15, 0
    %p56 = por %p54, %p55
    %p57 = scmp.ne.s32.totalorder %s49, %s51
    %p58 = scmp.eq.s32.totalorder %s20, 1
    %p59 = por %p57, %p58
    %p60 = scmp.ne.s32.totalorder %s51, %s52
    %p61 = scmp.eq.s32.totalorder %s20, 0
    %p62 = por %p60, %p61
    %p63 = scmp.ne.s32.totalorder %s51, %s52
    %p64 = scmp.eq.s32.totalorder %s21, 1
    %p65 = por %p63, %p64
    %p67 = scmp.ne.s32.totalorder %s52, %s66
    %p68 = scmp.eq.s32.totalorder %s21, 0
    %p69 = por %p67, %p68
    %s71 = sadd.s32 %s70, 1
    %p74 = scmp.eq.s32.totalorder %s15, 1
    %p75 = scmp.ne.s32.totalorder %s70, %s72
    %p76 = scmp.eq.s32.totalorder %s15, 0
    %p77 = por %p75, %p76
    %p78 = scmp.ne.s32.totalorder %s70, %s72
    %p79 = scmp.eq.s32.totalorder %s20, 1
    %p80 = por %p78, %p79
    %p81 = scmp.ne.s32.totalorder %s72, %s73
    %p82 = scmp.eq.s32.totalorder %s20, 0
    %p83 = por %p81, %p82
    %p84 = scmp.ne.s32.totalorder %s72, %s73
    %p85 = scmp.eq.s32.totalorder %s21, 1
    %p86 = por %p84, %p85
    %p88 = scmp.ne.s32.totalorder %s73, %s87
    %p89 = scmp.eq.s32.totalorder %s21, 0
    %p90 = por %p88, %p89
    %s92 = sadd.s32 %s91, 1
    %p95 = scmp.eq.s32.totalorder %s15, 1
    %p96 = scmp.ne.s32.totalorder %s91, %s93
    %p97 = scmp.eq.s32.totalorder %s15, 0
    %p98 = por %p96, %p97
    %p99 = scmp.ne.s32.totalorder %s91, %s93
    %p100 = scmp.eq.s32.totalorder %s20, 1
    %p101 = por %p99, %p100
    %p102 = scmp.ne.s32.totalorder %s93, %s94
    %p103 = scmp.eq.s32.totalorder %s20, 0
    %p104 = por %p102, %p103
    %p105 = scmp.ne.s32.totalorder %s93, %s94
    %p106 = scmp.eq.s32.totalorder %s21, 1
    %p107 = por %p105, %p106
    %p109 = scmp.ne.s32.totalorder %s94, %s108
    %p110 = scmp.eq.s32.totalorder %s21, 0
    %p111 = por %p109, %p110
    %s113 = sadd.s32 %s112, 1
    %p116 = scmp.eq.s32.totalorder %s15, 1
    %p117 = scmp.ne.s32.totalorder %s112, %s114
    %p118 = scmp.eq.s32.totalorder %s15, 0
    %p119 = por %p117, %p118
    %p120 = scmp.ne.s32.totalorder %s112, %s114
    %p121 = scmp.eq.s32.totalorder %s20, 1
    %p122 = por %p120, %p121
    %p123 = scmp.ne.s32.totalorder %s114, %s115
    %p124 = scmp.eq.s32.totalorder %s20, 0
    %p125 = por %p123, %p124
    %p126 = scmp.ne.s32.totalorder %s114, %s115
    %p127 = scmp.eq.s32.totalorder %s21, 1
    %p128 = por %p126, %p127
    %p130 = scmp.ne.s32.totalorder %s115, %s129
    %p131 = scmp.eq.s32.totalorder %s21, 0
    %p132 = por %p130, %p131
    %s134 = sadd.s32 %s133, 1
    %p137 = scmp.eq.s32.totalorder %s15, 1
    %p138 = scmp.ne.s32.totalorder %s133, %s135
    %p139 = scmp.eq.s32.totalorder %s15, 0
    %p140 = por %p138, %p139
    %p141 = scmp.ne.s32.totalorder %s133, %s135
    %p142 = scmp.eq.s32.totalorder %s20, 1
    %p143 = por %p141, %p142
    %p144 = scmp.ne.s32.totalorder %s135, %s136
    %p145 = scmp.eq.s32.totalorder %s20, 0
    %p146 = por %p144, %p145
    %p147 = scmp.ne.s32.totalorder %s135, %s136
    %p148 = scmp.eq.s32.totalorder %s21, 1
    %p149 = por %p147, %p148
    %p151 = scmp.ne.s32.totalorder %s136, %s150
    %p152 = scmp.eq.s32.totalorder %s21, 0
    %p153 = por %p151, %p152
    %s155 = sadd.s32 %s154, 1
    %p158 = scmp.eq.s32.totalorder %s15, 1
    %p159 = scmp.ne.s32.totalorder %s154, %s156
    %p160 = scmp.eq.s32.totalorder %s15, 0
    %p161 = por %p159, %p160
    %p162 = scmp.ne.s32.totalorder %s154, %s156
    %p163 = scmp.eq.s32.totalorder %s20, 1
    %p164 = por %p162, %p163
    %p165 = scmp.ne.s32.totalorder %s156, %s157
    %p166 = scmp.eq.s32.totalorder %s20, 0
    %p167 = por %p165, %p166
    %p168 = scmp.ne.s32.totalorder %s156, %s157
    %p169 = scmp.eq.s32.totalorder %s21, 1
    %p170 = por %p168, %p169
    %p172 = scmp.ne.s32.totalorder %s157, %s171
    %p173 = scmp.eq.s32.totalorder %s21, 0
    %p174 = por %p172, %p173
    %s176 = sadd.s32 %s175, 1
    %p179 = scmp.eq.s32.totalorder %s15, 1
    %p180 = scmp.ne.s32.totalorder %s175, %s177
    %p181 = scmp.eq.s32.totalorder %s15, 0
    %p182 = por %p180, %p181
    %p183 = scmp.ne.s32.totalorder %s175, %s177
    %p184 = scmp.eq.s32.totalorder %s20, 1
    %p185 = por %p183, %p184
    %p186 = scmp.ne.s32.totalorder %s177, %s178
    %p187 = scmp.eq.s32.totalorder %s20, 0
    %p188 = por %p186, %p187
    %p189 = scmp.ne.s32.totalorder %s177, %s178
    %p190 = scmp.eq.s32.totalorder %s21, 1
    %p191 = por %p189, %p190
    %p193 = scmp.ne.s32.totalorder %s178, %s192
    %p194 = scmp.eq.s32.totalorder %s21, 0
    %p195 = por %p193, %p194
    %s197 = sadd.s32 %s196, 1
    %p200 = scmp.eq.s32.totalorder %s15, 1
    %p201 = scmp.ne.s32.totalorder %s196, %s198
    %p202 = scmp.eq.s32.totalorder %s15, 0
    %p203 = por %p201, %p202
    %p204 = scmp.ne.s32.totalorder %s196, %s198
    %p205 = scmp.eq.s32.totalorder %s20, 1
    %p206 = por %p204, %p205
    %p207 = scmp.ne.s32.totalorder %s198, %s199
    %p208 = scmp.eq.s32.totalorder %s20, 0
    %p209 = por %p207, %p208
    %p210 = scmp.ne.s32.totalorder %s198, %s199
    %p211 = scmp.eq.s32.totalorder %s21, 1
    %p212 = por %p210, %p211
    %p214 = scmp.ne.s32.totalorder %s199, %s213
    %p215 = scmp.eq.s32.totalorder %s21, 0
    %p216 = por %p214, %p215
    %s217 = ssub.s32 %s15, %s22
    %p218 = scmp.eq.s32.totalorder %s217, 0
    %s220 = sadd.s32 %s219, 1
    %s221 = scalar_select %p218, %s219, %s220
    %p224 = pneg %p218
    %p225 = scmp.eq.s32.totalorder %s15, 1
    %p226 = por %p224, %p225
    %p227 = scmp.ne.s32.totalorder %s219, %s222
    %p228 = scmp.eq.s32.totalorder %s15, 0
    %p229 = por %p227, %p228
    %p230 = scmp.ne.s32.totalorder %s219, %s222
    %p231 = scmp.eq.s32.totalorder %s20, 1
    %p232 = por %p230, %p231
    %p233 = scmp.ne.s32.totalorder %s222, %s223
    %p234 = scmp.eq.s32.totalorder %s20, 0
    %p235 = por %p233, %p234
    %p236 = scmp.ne.s32.totalorder %s222, %s223
    %p237 = scmp.eq.s32.totalorder %s21, 1
    %p238 = por %p236, %p237
    %p240 = scmp.ne.s32.totalorder %s223, %s239
    %p241 = scmp.eq.s32.totalorder %s21, 0
    %p242 = por %p240, %p241
    %p243 = scmp.le.s32.totalorder 1, %s15
    %p244 = scmp.lt.s32.totalorder %s15, 3
    %p245 = pnand %p243, %p244
    %p246 = pneg %p245
    // Predicated region
    $region9: #{res_block_up_down_sample.3} parent=5 // pred_check
      _
    $region10: #{res_block_up_down_sample.3} parent=5 // pred_check_branch
      %248 = sbr.rel (%p245) target = $region12
    $region11: #{res_block_up_down_sample.3} parent=5 // pred_region
      %s249 = ssub.s32 %s15, 1
      // Predicated region
      $region13: #{res_block_up_down_sample.3} parent=11 // pred_check
        %p250 = pneg %p62
      $region14: #{res_block_up_down_sample.3} parent=11 // pred_check_branch
        %252 = sbr.rel (%p250) target = $region16
      $region15: #{res_block_up_down_sample.3} parent=11 // pred_region
        _
      $region16: #{res_block_up_down_sample.3} parent=11 // pred_fallthru
        _
      // Predicated region
      $region17: #{res_block_up_down_sample.3} parent=11 // pred_check
        %p253 = pneg %p83
      $region18: #{res_block_up_down_sample.3} parent=11 // pred_check_branch
        %255 = sbr.rel (%p253) target = $region20
      $region19: #{res_block_up_down_sample.3} parent=11 // pred_region
        _
      $region20: #{res_block_up_down_sample.3} parent=11 // pred_fallthru
        _
      // Predicated region
      $region21: #{res_block_up_down_sample.3} parent=11 // pred_check
        %p256 = pneg %p104
      $region22: #{res_block_up_down_sample.3} parent=11 // pred_check_branch
        %258 = sbr.rel (%p256) target = $region24
      $region23: #{res_block_up_down_sample.3} parent=11 // pred_region
        _
      $region24: #{res_block_up_down_sample.3} parent=11 // pred_fallthru
        _
      // Predicated region
      $region25: #{res_block_up_down_sample.3} parent=11 // pred_check
        %p259 = pneg %p125
      $region26: #{res_block_up_down_sample.3} parent=11 // pred_check_branch
        %261 = sbr.rel (%p259) target = $region28
      $region27: #{res_block_up_down_sample.3} parent=11 // pred_region
        _
      $region28: #{res_block_up_down_sample.3} parent=11 // pred_fallthru
        _
      // Predicated region
      $region29: #{res_block_up_down_sample.3} parent=11 // pred_check
        %p262 = pneg %p146
      $region30: #{res_block_up_down_sample.3} parent=11 // pred_check_branch
        %264 = sbr.rel (%p262) target = $region32
      $region31: #{res_block_up_down_sample.3} parent=11 // pred_region
        _
      $region32: #{res_block_up_down_sample.3} parent=11 // pred_fallthru
        _
      // Predicated region
      $region33: #{res_block_up_down_sample.3} parent=11 // pred_check
        %p265 = pneg %p167
      $region34: #{res_block_up_down_sample.3} parent=11 // pred_check_branch
        %267 = sbr.rel (%p265) target = $region36
      $region35: #{res_block_up_down_sample.3} parent=11 // pred_region
        _
      $region36: #{res_block_up_down_sample.3} parent=11 // pred_fallthru
        _
      // Predicated region
      $region37: #{res_block_up_down_sample.3} parent=11 // pred_check
        %p268 = pneg %p188
      $region38: #{res_block_up_down_sample.3} parent=11 // pred_check_branch
        %270 = sbr.rel (%p268) target = $region40
      $region39: #{res_block_up_down_sample.3} parent=11 // pred_region
        _
      $region40: #{res_block_up_down_sample.3} parent=11 // pred_fallthru
        _
      // Predicated region
      $region41: #{res_block_up_down_sample.3} parent=11 // pred_check
        %p271 = pneg %p209
      $region42: #{res_block_up_down_sample.3} parent=11 // pred_check_branch
        %273 = sbr.rel (%p271) target = $region44
      $region43: #{res_block_up_down_sample.3} parent=11 // pred_region
        _
      $region44: #{res_block_up_down_sample.3} parent=11 // pred_fallthru
        _
    $region12: #{res_block_up_down_sample.3} parent=5 // pred_fallthru
      _
    %p274 = scmp.lt.s32.totalorder %s15, 2
    // Predicated region
    $region45: #{res_block_up_down_sample.3} parent=5 // pred_check
      %p275 = pneg %p274
    $region46: #{res_block_up_down_sample.3} parent=5 // pred_check_branch
      %277 = sbr.rel (%p275) target = $region48
    $region47: #{res_block_up_down_sample.3} parent=5 // pred_region
      // Predicated region
      $region49: #{res_block_up_down_sample.3} parent=47 // pred_check
        %p278 = pneg %p35
      $region50: #{res_block_up_down_sample.3} parent=47 // pred_check_branch
        %280 = sbr.rel (%p278) target = $region52
      $region51: #{res_block_up_down_sample.3} parent=47 // pred_region
        %p281 = scmp.lt.s32.totalorder %s15, 1
        %s282 = scalar_select %p281, %s15, 1
        %s283 = smul.addr %s282, 32
        %s284 = smul.addr %s283, 4
        %s285 = scalar_lea.vmem %s0, %s284
      $region52: #{res_block_up_down_sample.3} parent=47 // pred_fallthru
        _
    $region48: #{res_block_up_down_sample.3} parent=5 // pred_fallthru
      _
    %p286 = scmp.le.s32.totalorder 1, %s15
    %p287 = scmp.lt.s32.totalorder %s15, 3
    %p288 = pnand %p286, %p287
    %p289 = pneg %p288
    // Predicated region
    $region53: #{res_block_up_down_sample.3} parent=5 // pred_check
      _
    $region54: #{res_block_up_down_sample.3} parent=5 // pred_check_branch
      %291 = sbr.rel (%p288) target = $region56
    $region55: #{res_block_up_down_sample.3} parent=5 // pred_region
      %s292 = ssub.s32 %s15, 1
      %p293 = scmp.lt.s32.totalorder %s20, 1
      %s294 = scalar_select %p293, %s20, 1
      %s295 = smul.addr %s294, 32
      %s296 = smul.addr %s295, 4
      %s297 = scalar_lea.vmem %s0, %s296
      %p298 = pneg %p41
      %p299 = pneg %p38
      %p300 = pneg %p62
      %p301 = pneg %p59
      %p302 = pneg %p83
      %p303 = pneg %p80
      %p304 = pneg %p104
      %p305 = pneg %p101
      %p306 = pneg %p125
      %p307 = pneg %p122
      %p308 = pneg %p146
      %p309 = pneg %p143
      %p310 = pneg %p167
      %p311 = pneg %p164
      %p312 = pneg %p188
      %p313 = pneg %p185
      %p314 = pneg %p209
      %p315 = pneg %p206
      %p316 = pneg %p235
      %p317 = pneg %p232
      %p318 = scmp.lt.s32.totalorder %s20, 1
      %s319 = scalar_select %p318, %s20, 1
      %s320 = smul.addr %s319, 32
      %s321 = smul.addr %s320, 4
      %s322 = scalar_lea.vmem %s9, %s321
      %p323 = scmp.lt.s32.totalorder %s20, 1
      %s324 = scalar_select %p323, %s20, 1
      %s325 = smul.addr %s324, 32
      %s326 = smul.addr %s325, 4
      %s327 = scalar_lea.vmem %s0, %s326
      %p328 = scmp.lt.s32.totalorder %s20, 1
      %s329 = scalar_select %p328, %s20, 1
      %s330 = smul.addr %s329, 32
      %s331 = smul.addr %s330, 4
      %s332 = scalar_lea.vmem %s9, %s331
      %vm334 = vcmask 781312
      %335 = vst.msk [vmem:[#allocation2] sm:$0xf] %vm334, 0
      %336 = vst.msk [vmem:[#allocation2 + $0x4] sm:$0xf] %vm334, 0
      %337 = vst.msk [vmem:[#allocation2 + $0x88] sm:$0xf] %vm334, 0
      %338 = vst.msk [vmem:[#allocation2 + $0x8c] sm:$0xf] %vm334, 0
      %v339 = vlaneseq
      %v340 = vshrl.u32 %v339, 7
      %v341 = vadd.s32 %v340, 8
      %v342 = vadd.s32 %v340, 16
      %v343 = vadd.s32 %v340, 24
      %v344 = vadd.s32 %v340, 32
      %v345 = vadd.s32 %v340, 40
      %v346 = vadd.s32 %v340, 48
      %v347 = vadd.s32 %v340, 56
      %v348 = vadd.s32 %v340, 64
      %v349 = vadd.s32 %v340, 72
      %v350 = vadd.s32 %v340, 80
      %v351 = vadd.s32 %v340, 88
      %v352 = vadd.s32 %v340, 96
      %v353 = vadd.s32 %v340, 104
      %v354 = vadd.s32 %v340, 112
      %v355 = vadd.s32 %v340, 120
      %v356 = vadd.s32 %v340, 128
      %v357 = vadd.s32 %v340, 136
      %v358 = vadd.s32 %v340, 144
      %v359 = vadd.s32 %v340, 152
      %v360 = vadd.s32 %v340, 160
      %v361 = vadd.s32 %v340, 168
      %v362 = vadd.s32 %v340, 176
      %v363 = vadd.s32 %v340, 184
      %v364 = vadd.s32 %v340, 192
      %v365 = vadd.s32 %v340, 200
      %v366 = vadd.s32 %v340, 208
      %v367 = vadd.s32 %v340, 216
      %v368 = vadd.s32 %v340, 224
      %v369 = vadd.s32 %v340, 232
      %v370 = vadd.s32 %v340, 240
      %v371 = vadd.s32 %v340, 248
      %vm372 = vcmp.lt.s32.totalorder %v340, 0
      %v373 = vsub.s32 0, %v340
      %v374 = vsel %vm372, %v373, %v340
      %v375 = vshrl.u32 %v374, 4
      %v376 = vand.u32 %v374, 15
      %v377 = vsub.s32 0, %v376
      %v378 = vsel %vm372, %v377, %v376
      %vm379 = vcmp.lt.s32.totalorder %v341, 0
      %v380 = vsub.s32 0, %v341
      %v381 = vsel %vm379, %v380, %v341
      %v382 = vshrl.u32 %v381, 4
      %v383 = vand.u32 %v381, 15
      %v384 = vsub.s32 0, %v383
      %v385 = vsel %vm379, %v384, %v383
      %vm386 = vcmp.lt.s32.totalorder %v342, 0
      %v387 = vsub.s32 0, %v342
      %v388 = vsel %vm386, %v387, %v342
      %v389 = vshrl.u32 %v388, 4
      %v390 = vand.u32 %v388, 15
      %v391 = vsub.s32 0, %v390
      %v392 = vsel %vm386, %v391, %v390
      %vm393 = vcmp.lt.s32.totalorder %v343, 0
      %v394 = vsub.s32 0, %v343
      %v395 = vsel %vm393, %v394, %v343
      %v396 = vshrl.u32 %v395, 4
      %v397 = vand.u32 %v395, 15
      %v398 = vsub.s32 0, %v397
      %v399 = vsel %vm393, %v398, %v397
      %vm400 = vcmp.lt.s32.totalorder %v344, 0
      %v401 = vsub.s32 0, %v344
      %v402 = vsel %vm400, %v401, %v344
      %v403 = vshrl.u32 %v402, 4
      %v404 = vand.u32 %v402, 15
      %v405 = vsub.s32 0, %v404
      %v406 = vsel %vm400, %v405, %v404
      %vm407 = vcmp.lt.s32.totalorder %v345, 0
      %v408 = vsub.s32 0, %v345
      %v409 = vsel %vm407, %v408, %v345
      %v410 = vshrl.u32 %v409, 4
      %v411 = vand.u32 %v409, 15
      %v412 = vsub.s32 0, %v411
      %v413 = vsel %vm407, %v412, %v411
      %vm414 = vcmp.lt.s32.totalorder %v346, 0
      %v415 = vsub.s32 0, %v346
      %v416 = vsel %vm414, %v415, %v346
      %v417 = vshrl.u32 %v416, 4
      %v418 = vand.u32 %v416, 15
      %v419 = vsub.s32 0, %v418
      %v420 = vsel %vm414, %v419, %v418
      %vm421 = vcmp.lt.s32.totalorder %v347, 0
      %v422 = vsub.s32 0, %v347
      %v423 = vsel %vm421, %v422, %v347
      %v424 = vshrl.u32 %v423, 4
      %v425 = vand.u32 %v423, 15
      %v426 = vsub.s32 0, %v425
      %v427 = vsel %vm421, %v426, %v425
      %vm428 = vcmp.lt.s32.totalorder %v348, 0
      %v429 = vsub.s32 0, %v348
      %v430 = vsel %vm428, %v429, %v348
      %v431 = vshrl.u32 %v430, 4
      %v432 = vand.u32 %v430, 15
      %v433 = vsub.s32 0, %v432
      %v434 = vsel %vm428, %v433, %v432
      %vm435 = vcmp.lt.s32.totalorder %v349, 0
      %v436 = vsub.s32 0, %v349
      %v437 = vsel %vm435, %v436, %v349
      %v438 = vshrl.u32 %v437, 4
      %v439 = vand.u32 %v437, 15
      %v440 = vsub.s32 0, %v439
      %v441 = vsel %vm435, %v440, %v439
      %vm442 = vcmp.lt.s32.totalorder %v350, 0
      %v443 = vsub.s32 0, %v350
      %v444 = vsel %vm442, %v443, %v350
      %v445 = vshrl.u32 %v444, 4
      %v446 = vand.u32 %v444, 15
      %v447 = vsub.s32 0, %v446
      %v448 = vsel %vm442, %v447, %v446
      %vm449 = vcmp.lt.s32.totalorder %v351, 0
      %v450 = vsub.s32 0, %v351
      %v451 = vsel %vm449, %v450, %v351
      %v452 = vshrl.u32 %v451, 4
      %v453 = vand.u32 %v451, 15
      %v454 = vsub.s32 0, %v453
      %v455 = vsel %vm449, %v454, %v453
      %vm456 = vcmp.lt.s32.totalorder %v352, 0
      %v457 = vsub.s32 0, %v352
      %v458 = vsel %vm456, %v457, %v352
      %v459 = vshrl.u32 %v458, 4
      %v460 = vand.u32 %v458, 15
      %v461 = vsub.s32 0, %v460
      %v462 = vsel %vm456, %v461, %v460
      %vm463 = vcmp.lt.s32.totalorder %v353, 0
      %v464 = vsub.s32 0, %v353
      %v465 = vsel %vm463, %v464, %v353
      %v466 = vshrl.u32 %v465, 4
      %v467 = vand.u32 %v465, 15
      %v468 = vsub.s32 0, %v467
      %v469 = vsel %vm463, %v468, %v467
      %vm470 = vcmp.lt.s32.totalorder %v354, 0
      %v471 = vsub.s32 0, %v354
      %v472 = vsel %vm470, %v471, %v354
      %v473 = vshrl.u32 %v472, 4
      %v474 = vand.u32 %v472, 15
      %v475 = vsub.s32 0, %v474
      %v476 = vsel %vm470, %v475, %v474
      %vm477 = vcmp.lt.s32.totalorder %v355, 0
      %v478 = vsub.s32 0, %v355
      %v479 = vsel %vm477, %v478, %v355
      %v480 = vshrl.u32 %v479, 4
      %v481 = vand.u32 %v479, 15
      %v482 = vsub.s32 0, %v481
      %v483 = vsel %vm477, %v482, %v481
      %vm484 = vcmp.lt.s32.totalorder %v356, 0
      %v485 = vsub.s32 0, %v356
      %v486 = vsel %vm484, %v485, %v356
      %v487 = vshrl.u32 %v486, 4
      %v488 = vand.u32 %v486, 15
      %v489 = vsub.s32 0, %v488
      %v490 = vsel %vm484, %v489, %v488
      %vm491 = vcmp.lt.s32.totalorder %v357, 0
      %v492 = vsub.s32 0, %v357
      %v493 = vsel %vm491, %v492, %v357
      %v494 = vshrl.u32 %v493, 4
      %v495 = vand.u32 %v493, 15
      %v496 = vsub.s32 0, %v495
      %v497 = vsel %vm491, %v496, %v495
      %vm498 = vcmp.lt.s32.totalorder %v358, 0
      %v499 = vsub.s32 0, %v358
      %v500 = vsel %vm498, %v499, %v358
      %v501 = vshrl.u32 %v500, 4
      %v502 = vand.u32 %v500, 15
      %v503 = vsub.s32 0, %v502
      %v504 = vsel %vm498, %v503, %v502
      %vm505 = vcmp.lt.s32.totalorder %v359, 0
      %v506 = vsub.s32 0, %v359
      %v507 = vsel %vm505, %v506, %v359
      %v508 = vshrl.u32 %v507, 4
      %v509 = vand.u32 %v507, 15
      %v510 = vsub.s32 0, %v509
      %v511 = vsel %vm505, %v510, %v509
      %vm512 = vcmp.lt.s32.totalorder %v360, 0
      %v513 = vsub.s32 0, %v360
      %v514 = vsel %vm512, %v513, %v360
      %v515 = vshrl.u32 %v514, 4
      %v516 = vand.u32 %v514, 15
      %v517 = vsub.s32 0, %v516
      %v518 = vsel %vm512, %v517, %v516
      %vm519 = vcmp.lt.s32.totalorder %v361, 0
      %v520 = vsub.s32 0, %v361
      %v521 = vsel %vm519, %v520, %v361
      %v522 = vshrl.u32 %v521, 4
      %v523 = vand.u32 %v521, 15
      %v524 = vsub.s32 0, %v523
      %v525 = vsel %vm519, %v524, %v523
      %vm526 = vcmp.lt.s32.totalorder %v362, 0
      %v527 = vsub.s32 0, %v362
      %v528 = vsel %vm526, %v527, %v362
      %v529 = vshrl.u32 %v528, 4
      %v530 = vand.u32 %v528, 15
      %v531 = vsub.s32 0, %v530
      %v532 = vsel %vm526, %v531, %v530
      %vm533 = vcmp.lt.s32.totalorder %v363, 0
      %v534 = vsub.s32 0, %v363
      %v535 = vsel %vm533, %v534, %v363
      %v536 = vshrl.u32 %v535, 4
      %v537 = vand.u32 %v535, 15
      %v538 = vsub.s32 0, %v537
      %v539 = vsel %vm533, %v538, %v537
      %vm540 = vcmp.lt.s32.totalorder %v364, 0
      %v541 = vsub.s32 0, %v364
      %v542 = vsel %vm540, %v541, %v364
      %v543 = vshrl.u32 %v542, 4
      %v544 = vand.u32 %v542, 15
      %v545 = vsub.s32 0, %v544
      %v546 = vsel %vm540, %v545, %v544
      %vm547 = vcmp.lt.s32.totalorder %v365, 0
      %v548 = vsub.s32 0, %v365
      %v549 = vsel %vm547, %v548, %v365
      %v550 = vshrl.u32 %v549, 4
      %v551 = vand.u32 %v549, 15
      %v552 = vsub.s32 0, %v551
      %v553 = vsel %vm547, %v552, %v551
      %vm554 = vcmp.lt.s32.totalorder %v366, 0
      %v555 = vsub.s32 0, %v366
      %v556 = vsel %vm554, %v555, %v366
      %v557 = vshrl.u32 %v556, 4
      %v558 = vand.u32 %v556, 15
      %v559 = vsub.s32 0, %v558
      %v560 = vsel %vm554, %v559, %v558
      %vm561 = vcmp.lt.s32.totalorder %v367, 0
      %v562 = vsub.s32 0, %v367
      %v563 = vsel %vm561, %v562, %v367
      %v564 = vshrl.u32 %v563, 4
      %v565 = vand.u32 %v563, 15
      %v566 = vsub.s32 0, %v565
      %v567 = vsel %vm561, %v566, %v565
      %vm568 = vcmp.lt.s32.totalorder %v368, 0
      %v569 = vsub.s32 0, %v368
      %v570 = vsel %vm568, %v569, %v368
      %v571 = vshrl.u32 %v570, 4
      %v572 = vand.u32 %v570, 15
      %v573 = vsub.s32 0, %v572
      %v574 = vsel %vm568, %v573, %v572
      %vm575 = vcmp.lt.s32.totalorder %v369, 0
      %v576 = vsub.s32 0, %v369
      %v577 = vsel %vm575, %v576, %v369
      %v578 = vshrl.u32 %v577, 4
      %v579 = vand.u32 %v577, 15
      %v580 = vsub.s32 0, %v579
      %v581 = vsel %vm575, %v580, %v579
      %vm582 = vcmp.lt.s32.totalorder %v370, 0
      %v583 = vsub.s32 0, %v370
      %v584 = vsel %vm582, %v583, %v370
      %v585 = vshrl.u32 %v584, 4
      %v586 = vand.u32 %v584, 15
      %v587 = vsub.s32 0, %v586
      %v588 = vsel %vm582, %v587, %v586
      %vm589 = vcmp.lt.s32.totalorder %v371, 0
      %v590 = vsub.s32 0, %v371
      %v591 = vsel %vm589, %v590, %v371
      %v592 = vshrl.u32 %v591, 4
      %v593 = vand.u32 %v591, 15
      %v594 = vsub.s32 0, %v593
      %v595 = vsel %vm589, %v594, %v593
      %vm596 = vcmp.ne.s32.totalorder %v378, 0
      %vm597 = vcmp.ne.s32.totalorder %v385, 0
      %vm598 = vcmp.ne.s32.totalorder %v392, 0
      %vm599 = vcmp.ne.s32.totalorder %v399, 0
      %vm600 = vcmp.ne.s32.totalorder %v406, 0
      %vm601 = vcmp.ne.s32.totalorder %v413, 0
      %vm602 = vcmp.ne.s32.totalorder %v420, 0
      %vm603 = vcmp.ne.s32.totalorder %v427, 0
      %vm604 = vcmp.ne.s32.totalorder %v434, 0
      %vm605 = vcmp.ne.s32.totalorder %v441, 0
      %vm606 = vcmp.ne.s32.totalorder %v448, 0
      %vm607 = vcmp.ne.s32.totalorder %v455, 0
      %vm608 = vcmp.ne.s32.totalorder %v462, 0
      %vm609 = vcmp.ne.s32.totalorder %v469, 0
      %vm610 = vcmp.ne.s32.totalorder %v476, 0
      %vm611 = vcmp.ne.s32.totalorder %v483, 0
      %vm612 = vcmp.ne.s32.totalorder %v490, 0
      %vm613 = vcmp.ne.s32.totalorder %v497, 0
      %vm614 = vcmp.ne.s32.totalorder %v504, 0
      %vm615 = vcmp.ne.s32.totalorder %v511, 0
      %vm616 = vcmp.ne.s32.totalorder %v518, 0
      %vm617 = vcmp.ne.s32.totalorder %v525, 0
      %vm618 = vcmp.ne.s32.totalorder %v532, 0
      %vm619 = vcmp.ne.s32.totalorder %v539, 0
      %vm620 = vcmp.ne.s32.totalorder %v546, 0
      %vm621 = vcmp.ne.s32.totalorder %v553, 0
      %vm622 = vcmp.ne.s32.totalorder %v560, 0
      %vm623 = vcmp.ne.s32.totalorder %v567, 0
      %vm624 = vcmp.ne.s32.totalorder %v574, 0
      %vm625 = vcmp.ne.s32.totalorder %v581, 0
      %vm626 = vcmp.ne.s32.totalorder %v588, 0
      %vm627 = vcmp.ne.s32.totalorder %v595, 0
      %vm628 = vcmp.lt.s32.totalorder %v378, 0
      %vm629 = vcmp.lt.s32.totalorder %v385, 0
      %vm630 = vcmp.lt.s32.totalorder %v392, 0
      %vm631 = vcmp.lt.s32.totalorder %v399, 0
      %vm632 = vcmp.lt.s32.totalorder %v406, 0
      %vm633 = vcmp.lt.s32.totalorder %v413, 0
      %vm634 = vcmp.lt.s32.totalorder %v420, 0
      %vm635 = vcmp.lt.s32.totalorder %v427, 0
      %vm636 = vcmp.lt.s32.totalorder %v434, 0
      %vm637 = vcmp.lt.s32.totalorder %v441, 0
      %vm638 = vcmp.lt.s32.totalorder %v448, 0
      %vm639 = vcmp.lt.s32.totalorder %v455, 0
      %vm640 = vcmp.lt.s32.totalorder %v462, 0
      %vm641 = vcmp.lt.s32.totalorder %v469, 0
      %vm642 = vcmp.lt.s32.totalorder %v476, 0
      %vm643 = vcmp.lt.s32.totalorder %v483, 0
      %vm644 = vcmp.lt.s32.totalorder %v490, 0
      %vm645 = vcmp.lt.s32.totalorder %v497, 0
      %vm646 = vcmp.lt.s32.totalorder %v504, 0
      %vm647 = vcmp.lt.s32.totalorder %v511, 0
      %vm648 = vcmp.lt.s32.totalorder %v518, 0
      %vm649 = vcmp.lt.s32.totalorder %v525, 0
      %vm650 = vcmp.lt.s32.totalorder %v532, 0
      %vm651 = vcmp.lt.s32.totalorder %v539, 0
      %vm652 = vcmp.lt.s32.totalorder %v546, 0
      %vm653 = vcmp.lt.s32.totalorder %v553, 0
      %vm654 = vcmp.lt.s32.totalorder %v560, 0
      %vm655 = vcmp.lt.s32.totalorder %v567, 0
      %vm656 = vcmp.lt.s32.totalorder %v574, 0
      %vm657 = vcmp.lt.s32.totalorder %v581, 0
      %vm658 = vcmp.lt.s32.totalorder %v588, 0
      %vm659 = vcmp.lt.s32.totalorder %v595, 0
      %vm660 = vmand %vm628, %vm596
      %vm661 = vmand %vm629, %vm597
      %vm662 = vmand %vm630, %vm598
      %vm663 = vmand %vm631, %vm599
      %vm664 = vmand %vm632, %vm600
      %vm665 = vmand %vm633, %vm601
      %vm666 = vmand %vm634, %vm602
      %vm667 = vmand %vm635, %vm603
      %vm668 = vmand %vm636, %vm604
      %vm669 = vmand %vm637, %vm605
      %vm670 = vmand %vm638, %vm606
      %vm671 = vmand %vm639, %vm607
      %vm672 = vmand %vm640, %vm608
      %vm673 = vmand %vm641, %vm609
      %vm674 = vmand %vm642, %vm610
      %vm675 = vmand %vm643, %vm611
      %vm676 = vmand %vm644, %vm612
      %vm677 = vmand %vm645, %vm613
      %vm678 = vmand %vm646, %vm614
      %vm679 = vmand %vm647, %vm615
      %vm680 = vmand %vm648, %vm616
      %vm681 = vmand %vm649, %vm617
      %vm682 = vmand %vm650, %vm618
      %vm683 = vmand %vm651, %vm619
      %vm684 = vmand %vm652, %vm620
      %vm685 = vmand %vm653, %vm621
      %vm686 = vmand %vm654, %vm622
      %vm687 = vmand %vm655, %vm623
      %vm688 = vmand %vm656, %vm624
      %vm689 = vmand %vm657, %vm625
      %vm690 = vmand %vm658, %vm626
      %vm691 = vmand %vm659, %vm627
      %v692 = vadd.s32 %v378, 16
      %v693 = vadd.s32 %v385, 16
      %v694 = vadd.s32 %v392, 16
      %v695 = vadd.s32 %v399, 16
      %v696 = vadd.s32 %v406, 16
      %v697 = vadd.s32 %v413, 16
      %v698 = vadd.s32 %v420, 16
      %v699 = vadd.s32 %v427, 16
      %v700 = vadd.s32 %v434, 16
      %v701 = vadd.s32 %v441, 16
      %v702 = vadd.s32 %v448, 16
      %v703 = vadd.s32 %v455, 16
      %v704 = vadd.s32 %v462, 16
      %v705 = vadd.s32 %v469, 16
      %v706 = vadd.s32 %v476, 16
      %v707 = vadd.s32 %v483, 16
      %v708 = vadd.s32 %v490, 16
      %v709 = vadd.s32 %v497, 16
      %v710 = vadd.s32 %v504, 16
      %v711 = vadd.s32 %v511, 16
      %v712 = vadd.s32 %v518, 16
      %v713 = vadd.s32 %v525, 16
      %v714 = vadd.s32 %v532, 16
      %v715 = vadd.s32 %v539, 16
      %v716 = vadd.s32 %v546, 16
      %v717 = vadd.s32 %v553, 16
      %v718 = vadd.s32 %v560, 16
      %v719 = vadd.s32 %v567, 16
      %v720 = vadd.s32 %v574, 16
      %v721 = vadd.s32 %v581, 16
      %v722 = vadd.s32 %v588, 16
      %v723 = vadd.s32 %v595, 16
      %v724 = vsel %vm660, %v692, %v378
      %v725 = vsel %vm661, %v693, %v385
      %v726 = vsel %vm662, %v694, %v392
      %v727 = vsel %vm663, %v695, %v399
      %v728 = vsel %vm664, %v696, %v406
      %v729 = vsel %vm665, %v697, %v413
      %v730 = vsel %vm666, %v698, %v420
      %v731 = vsel %vm667, %v699, %v427
      %v732 = vsel %vm668, %v700, %v434
      %v733 = vsel %vm669, %v701, %v441
      %v734 = vsel %vm670, %v702, %v448
      %v735 = vsel %vm671, %v703, %v455
      %v736 = vsel %vm672, %v704, %v462
      %v737 = vsel %vm673, %v705, %v469
      %v738 = vsel %vm674, %v706, %v476
      %v739 = vsel %vm675, %v707, %v483
      %v740 = vsel %vm676, %v708, %v490
      %v741 = vsel %vm677, %v709, %v497
      %v742 = vsel %vm678, %v710, %v504
      %v743 = vsel %vm679, %v711, %v511
      %v744 = vsel %vm680, %v712, %v518
      %v745 = vsel %vm681, %v713, %v525
      %v746 = vsel %vm682, %v714, %v532
      %v747 = vsel %vm683, %v715, %v539
      %v748 = vsel %vm684, %v716, %v546
      %v749 = vsel %vm685, %v717, %v553
      %v750 = vsel %vm686, %v718, %v560
      %v751 = vsel %vm687, %v719, %v567
      %v752 = vsel %vm688, %v720, %v574
      %v753 = vsel %vm689, %v721, %v581
      %v754 = vsel %vm690, %v722, %v588
      %v755 = vsel %vm691, %v723, %v595
      %vm756 = vcmp.eq.s32.totalorder %v724, 0
      %vm757 = vcmp.eq.s32.totalorder %v725, 0
      %vm758 = vcmp.eq.s32.totalorder %v726, 0
      %vm759 = vcmp.eq.s32.totalorder %v727, 0
      %vm760 = vcmp.eq.s32.totalorder %v728, 0
      %vm761 = vcmp.eq.s32.totalorder %v729, 0
      %vm762 = vcmp.eq.s32.totalorder %v730, 0
      %vm763 = vcmp.eq.s32.totalorder %v731, 0
      %vm764 = vcmp.eq.s32.totalorder %v732, 0
      %vm765 = vcmp.eq.s32.totalorder %v733, 0
      %vm766 = vcmp.eq.s32.totalorder %v734, 0
      %vm767 = vcmp.eq.s32.totalorder %v735, 0
      %vm768 = vcmp.eq.s32.totalorder %v736, 0
      %vm769 = vcmp.eq.s32.totalorder %v737, 0
      %vm770 = vcmp.eq.s32.totalorder %v738, 0
      %vm771 = vcmp.eq.s32.totalorder %v739, 0
      %vm772 = vcmp.eq.s32.totalorder %v740, 0
      %vm773 = vcmp.eq.s32.totalorder %v741, 0
      %vm774 = vcmp.eq.s32.totalorder %v742, 0
      %vm775 = vcmp.eq.s32.totalorder %v743, 0
      %vm776 = vcmp.eq.s32.totalorder %v744, 0
      %vm777 = vcmp.eq.s32.totalorder %v745, 0
      %vm778 = vcmp.eq.s32.totalorder %v746, 0
      %vm779 = vcmp.eq.s32.totalorder %v747, 0
      %vm780 = vcmp.eq.s32.totalorder %v748, 0
      %vm781 = vcmp.eq.s32.totalorder %v749, 0
      %vm782 = vcmp.eq.s32.totalorder %v750, 0
      %vm783 = vcmp.eq.s32.totalorder %v751, 0
      %vm784 = vcmp.eq.s32.totalorder %v752, 0
      %vm785 = vcmp.eq.s32.totalorder %v753, 0
      %vm786 = vcmp.eq.s32.totalorder %v754, 0
      %vm787 = vcmp.eq.s32.totalorder %v755, 0
      %vm788 = vcmp.eq.s32.totalorder %v724, 15
      %vm789 = vcmp.eq.s32.totalorder %v725, 15
      %vm790 = vcmp.eq.s32.totalorder %v726, 15
      %vm791 = vcmp.eq.s32.totalorder %v727, 15
      %vm792 = vcmp.eq.s32.totalorder %v728, 15
      %vm793 = vcmp.eq.s32.totalorder %v729, 15
      %vm794 = vcmp.eq.s32.totalorder %v730, 15
      %vm795 = vcmp.eq.s32.totalorder %v731, 15
      %vm796 = vcmp.eq.s32.totalorder %v732, 15
      %vm797 = vcmp.eq.s32.totalorder %v733, 15
      %vm798 = vcmp.eq.s32.totalorder %v734, 15
      %vm799 = vcmp.eq.s32.totalorder %v735, 15
      %vm800 = vcmp.eq.s32.totalorder %v736, 15
      %vm801 = vcmp.eq.s32.totalorder %v737, 15
      %vm802 = vcmp.eq.s32.totalorder %v738, 15
      %vm803 = vcmp.eq.s32.totalorder %v739, 15
      %vm804 = vcmp.eq.s32.totalorder %v740, 15
      %vm805 = vcmp.eq.s32.totalorder %v741, 15
      %vm806 = vcmp.eq.s32.totalorder %v742, 15
      %vm807 = vcmp.eq.s32.totalorder %v743, 15
      %vm808 = vcmp.eq.s32.totalorder %v744, 15
      %vm809 = vcmp.eq.s32.totalorder %v745, 15
      %vm810 = vcmp.eq.s32.totalorder %v746, 15
      %vm811 = vcmp.eq.s32.totalorder %v747, 15
      %vm812 = vcmp.eq.s32.totalorder %v748, 15
      %vm813 = vcmp.eq.s32.totalorder %v749, 15
      %vm814 = vcmp.eq.s32.totalorder %v750, 15
      %vm815 = vcmp.eq.s32.totalorder %v751, 15
      %vm816 = vcmp.eq.s32.totalorder %v752, 15
      %vm817 = vcmp.eq.s32.totalorder %v753, 15
      %vm818 = vcmp.eq.s32.totalorder %v754, 15
      %vm819 = vcmp.eq.s32.totalorder %v755, 15
      %v820 = vld [vmem:[%s327] sm:$0xf]
      %v821 = vld [vmem:[%s327 + $0x4] sm:$0xf]
      %v822 = vld [vmem:[%s327 + $0x8] sm:$0xf]
      %v823 = vld [vmem:[%s327 + $0xc] sm:$0xf]
      %v824 = vld [vmem:[%s327 + $0x10] sm:$0xf]
      %v825 = vld [vmem:[%s327 + $0x14] sm:$0xf]
      %v826 = vld [vmem:[%s327 + $0x18] sm:$0xf]
      %v827 = vld [vmem:[%s327 + $0x1c] sm:$0xf]
      %v828 = vld [vmem:[%s327 + $0x20] sm:$0xf]
      %v829 = vld [vmem:[%s327 + $0x24] sm:$0xf]
      %v830 = vld [vmem:[%s327 + $0x28] sm:$0xf]
      %v831 = vld [vmem:[%s327 + $0x2c] sm:$0xf]
      %v832 = vld [vmem:[%s327 + $0x30] sm:$0xf]
      %v833 = vld [vmem:[%s327 + $0x34] sm:$0xf]
      %v834 = vld [vmem:[%s327 + $0x38] sm:$0xf]
      %v835 = vld [vmem:[%s327 + $0x3c] sm:$0xf]
      %v836 = vld [vmem:[%s327 + $0x40] sm:$0xf]
      %v837 = vld [vmem:[%s327 + $0x44] sm:$0xf]
      %v838 = vld [vmem:[%s327 + $0x48] sm:$0xf]
      %v839 = vld [vmem:[%s327 + $0x4c] sm:$0xf]
      %v840 = vld [vmem:[%s327 + $0x50] sm:$0xf]
      %v841 = vld [vmem:[%s327 + $0x54] sm:$0xf]
      %v842 = vld [vmem:[%s327 + $0x58] sm:$0xf]
      %v843 = vld [vmem:[%s327 + $0x5c] sm:$0xf]
      %v844 = vld [vmem:[%s327 + $0x60] sm:$0xf]
      %v845 = vld [vmem:[%s327 + $0x64] sm:$0xf]
      %v846 = vld [vmem:[%s327 + $0x68] sm:$0xf]
      %v847 = vld [vmem:[%s327 + $0x6c] sm:$0xf]
      %v848 = vld [vmem:[%s327 + $0x70] sm:$0xf]
      %v849 = vld [vmem:[%s327 + $0x74] sm:$0xf]
      %v850 = vld [vmem:[%s327 + $0x78] sm:$0xf]
      %v851 = vld [vmem:[%s327 + $0x7c] sm:$0xf]
      %v852 = vunpack.c.l.bf16 %v820
      %v853 = vunpack.c.l.bf16 %v821
      %v854 = vunpack.c.l.bf16 %v822
      %v855 = vunpack.c.l.bf16 %v823
      %v856 = vunpack.c.l.bf16 %v824
      %v857 = vunpack.c.l.bf16 %v825
      %v858 = vunpack.c.l.bf16 %v826
      %v859 = vunpack.c.l.bf16 %v827
      %v860 = vunpack.c.l.bf16 %v828
      %v861 = vunpack.c.l.bf16 %v829
      %v862 = vunpack.c.l.bf16 %v830
      %v863 = vunpack.c.l.bf16 %v831
      %v864 = vunpack.c.l.bf16 %v832
      %v865 = vunpack.c.l.bf16 %v833
      %v866 = vunpack.c.l.bf16 %v834
      %v867 = vunpack.c.l.bf16 %v835
      %v868 = vunpack.c.l.bf16 %v836
      %v869 = vunpack.c.l.bf16 %v837
      %v870 = vunpack.c.l.bf16 %v838
      %v871 = vunpack.c.l.bf16 %v839
      %v872 = vunpack.c.l.bf16 %v840
      %v873 = vunpack.c.l.bf16 %v841
      %v874 = vunpack.c.l.bf16 %v842
      %v875 = vunpack.c.l.bf16 %v843
      %v876 = vunpack.c.l.bf16 %v844
      %v877 = vunpack.c.l.bf16 %v845
      %v878 = vunpack.c.l.bf16 %v846
      %v879 = vunpack.c.l.bf16 %v847
      %v880 = vunpack.c.l.bf16 %v848
      %v881 = vunpack.c.l.bf16 %v849
      %v882 = vunpack.c.l.bf16 %v850
      %v883 = vunpack.c.l.bf16 %v851
      %vm884 = vcmask 261120
      %v885 = vsel %vm884, %v852, 0.0
      %v886 = vsel %vm884, %v853, 0.0
      %v887 = vadd.f32 %v885, %v886
      %v888 = vsel %vm884, %v854, 0.0
      %v889 = vadd.f32 %v887, %v888
      %v890 = vsel %vm884, %v855, 0.0
      %v891 = vadd.f32 %v889, %v890
      %v892 = vsel %vm884, %v856, 0.0
      %v893 = vadd.f32 %v891, %v892
      %v894 = vsel %vm884, %v857, 0.0
      %v895 = vadd.f32 %v893, %v894
      %v896 = vsel %vm884, %v858, 0.0
      %v897 = vadd.f32 %v895, %v896
      %v898 = vsel %vm884, %v859, 0.0
      %v899 = vadd.f32 %v897, %v898
      %v900 = vsel %vm884, %v860, 0.0
      %v901 = vadd.f32 %v899, %v900
      %v902 = vsel %vm884, %v861, 0.0
      %v903 = vadd.f32 %v901, %v902
      %v904 = vsel %vm884, %v862, 0.0
      %v905 = vadd.f32 %v903, %v904
      %v906 = vsel %vm884, %v863, 0.0
      %v907 = vadd.f32 %v905, %v906
      %v908 = vsel %vm884, %v864, 0.0
      %v909 = vadd.f32 %v907, %v908
      %v910 = vsel %vm884, %v865, 0.0
      %v911 = vadd.f32 %v909, %v910
      %v912 = vsel %vm884, %v866, 0.0
      %v913 = vadd.f32 %v911, %v912
      %v914 = vsel %vm884, %v867, 0.0
      %v915 = vadd.f32 %v913, %v914
      %v916 = vsel %vm884, %v868, 0.0
      %v917 = vadd.f32 %v915, %v916
      %v918 = vsel %vm884, %v869, 0.0
      %v919 = vadd.f32 %v917, %v918
      %v920 = vsel %vm884, %v870, 0.0
      %v921 = vadd.f32 %v919, %v920
      %v922 = vsel %vm884, %v871, 0.0
      %v923 = vadd.f32 %v921, %v922
      %v924 = vsel %vm884, %v872, 0.0
      %v925 = vadd.f32 %v923, %v924
      %v926 = vsel %vm884, %v873, 0.0
      %v927 = vadd.f32 %v925, %v926
      %v928 = vsel %vm884, %v874, 0.0
      %v929 = vadd.f32 %v927, %v928
      %v930 = vsel %vm884, %v875, 0.0
      %v931 = vadd.f32 %v929, %v930
      %v932 = vsel %vm884, %v876, 0.0
      %v933 = vadd.f32 %v931, %v932
      %v934 = vsel %vm884, %v877, 0.0
      %v935 = vadd.f32 %v933, %v934
      %v936 = vsel %vm884, %v878, 0.0
      %v937 = vadd.f32 %v935, %v936
      %v938 = vsel %vm884, %v879, 0.0
      %v939 = vadd.f32 %v937, %v938
      %v940 = vsel %vm884, %v880, 0.0
      %v941 = vadd.f32 %v939, %v940
      %v942 = vsel %vm884, %v881, 0.0
      %v943 = vadd.f32 %v941, %v942
      %v944 = vsel %vm884, %v882, 0.0
      %v945 = vadd.f32 %v943, %v944
      %v946 = vsel %vm884, %v883, 0.0
      %v947 = vadd.f32 %v945, %v946
      %v948 = vrot.slane %v947, 4
      %v949 = vadd.f32 %v947, %v948
      %v950 = vrot.slane %v949, 2
      %v951 = vadd.f32 %v949, %v950
      %v952 = vrot.slane %v951, 1
      %v953 = vadd.f32 %v951, %v952
      %v954 = vmul.f32 %v852, %v852
      %v955 = vmul.f32 %v853, %v853
      %v956 = vmul.f32 %v854, %v854
      %v957 = vmul.f32 %v855, %v855
      %v958 = vmul.f32 %v856, %v856
      %v959 = vmul.f32 %v857, %v857
      %v960 = vmul.f32 %v858, %v858
      %v961 = vmul.f32 %v859, %v859
      %v962 = vmul.f32 %v860, %v860
      %v963 = vmul.f32 %v861, %v861
      %v964 = vmul.f32 %v862, %v862
      %v965 = vmul.f32 %v863, %v863
      %v966 = vmul.f32 %v864, %v864
      %v967 = vmul.f32 %v865, %v865
      %v968 = vmul.f32 %v866, %v866
      %v969 = vmul.f32 %v867, %v867
      %v970 = vmul.f32 %v868, %v868
      %v971 = vmul.f32 %v869, %v869
      %v972 = vmul.f32 %v870, %v870
      %v973 = vmul.f32 %v871, %v871
      %v974 = vmul.f32 %v872, %v872
      %v975 = vmul.f32 %v873, %v873
      %v976 = vmul.f32 %v874, %v874
      %v977 = vmul.f32 %v875, %v875
      %v978 = vmul.f32 %v876, %v876
      %v979 = vmul.f32 %v877, %v877
      %v980 = vmul.f32 %v878, %v878
      %v981 = vmul.f32 %v879, %v879
      %v982 = vmul.f32 %v880, %v880
      %v983 = vmul.f32 %v881, %v881
      %v984 = vmul.f32 %v882, %v882
      %v985 = vmul.f32 %v883, %v883
      %v986 = vsel %vm884, %v954, 0.0
      %v987 = vsel %vm884, %v955, 0.0
      %v988 = vadd.f32 %v986, %v987
      %v989 = vsel %vm884, %v956, 0.0
      %v990 = vadd.f32 %v988, %v989
      %v991 = vsel %vm884, %v957, 0.0
      %v992 = vadd.f32 %v990, %v991
      %v993 = vsel %vm884, %v958, 0.0
      %v994 = vadd.f32 %v992, %v993
      %v995 = vsel %vm884, %v959, 0.0
      %v996 = vadd.f32 %v994, %v995
      %v997 = vsel %vm884, %v960, 0.0
      %v998 = vadd.f32 %v996, %v997
      %v999 = vsel %vm884, %v961, 0.0
      %v1000 = vadd.f32 %v998, %v999
      %v1001 = vsel %vm884, %v962, 0.0
      %v1002 = vadd.f32 %v1000, %v1001
      %v1003 = vsel %vm884, %v963, 0.0
      %v1004 = vadd.f32 %v1002, %v1003
      %v1005 = vsel %vm884, %v964, 0.0
      %v1006 = vadd.f32 %v1004, %v1005
      %v1007 = vsel %vm884, %v965, 0.0
      %v1008 = vadd.f32 %v1006, %v1007
      %v1009 = vsel %vm884, %v966, 0.0
      %v1010 = vadd.f32 %v1008, %v1009
      %v1011 = vsel %vm884, %v967, 0.0
      %v1012 = vadd.f32 %v1010, %v1011
      %v1013 = vsel %vm884, %v968, 0.0
      %v1014 = vadd.f32 %v1012, %v1013
      %v1015 = vsel %vm884, %v969, 0.0
      %v1016 = vadd.f32 %v1014, %v1015
      %v1017 = vsel %vm884, %v970, 0.0
      %v1018 = vadd.f32 %v1016, %v1017
      %v1019 = vsel %vm884, %v971, 0.0
      %v1020 = vadd.f32 %v1018, %v1019
      %v1021 = vsel %vm884, %v972, 0.0
      %v1022 = vadd.f32 %v1020, %v1021
      %v1023 = vsel %vm884, %v973, 0.0
      %v1024 = vadd.f32 %v1022, %v1023
      %v1025 = vsel %vm884, %v974, 0.0
      %v1026 = vadd.f32 %v1024, %v1025
      %v1027 = vsel %vm884, %v975, 0.0
      %v1028 = vadd.f32 %v1026, %v1027
      %v1029 = vsel %vm884, %v976, 0.0
      %v1030 = vadd.f32 %v1028, %v1029
      %v1031 = vsel %vm884, %v977, 0.0
      %v1032 = vadd.f32 %v1030, %v1031
      %v1033 = vsel %vm884, %v978, 0.0
      %v1034 = vadd.f32 %v1032, %v1033
      %v1035 = vsel %vm884, %v979, 0.0
      %v1036 = vadd.f32 %v1034, %v1035
      %v1037 = vsel %vm884, %v980, 0.0
      %v1038 = vadd.f32 %v1036, %v1037
      %v1039 = vsel %vm884, %v981, 0.0
      %v1040 = vadd.f32 %v1038, %v1039
      %v1041 = vsel %vm884, %v982, 0.0
      %v1042 = vadd.f32 %v1040, %v1041
      %v1043 = vsel %vm884, %v983, 0.0
      %v1044 = vadd.f32 %v1042, %v1043
      %v1045 = vsel %vm884, %v984, 0.0
      %v1046 = vadd.f32 %v1044, %v1045
      %v1047 = vsel %vm884, %v985, 0.0
      %v1048 = vadd.f32 %v1046, %v1047
      %v1049 = vrot.slane %v1048, 4
      %v1050 = vadd.f32 %v1048, %v1049
      %v1051 = vrot.slane %v1050, 2
      %v1052 = vadd.f32 %v1050, %v1051
      %v1053 = vrot.slane %v1052, 1
      %v1054 = vadd.f32 %v1052, %v1053
      %vm1055 = vcmask 31744
      %v1056 = vsel %vm1055, %v953, 0.0
      %1057 = vadd.xlane.f32.xlu0 %v1056
      %v1058 = vpop.xlane.xlu0 %1057
      %1060 = vrot.lane.b32.xlu0 %v953, 124
      %v1061 = vpop.permute.xlu0 %1060
      %v1063 = vsel %vm1055, %v1061, 0.0
      %1064 = vadd.xlane.f32.xlu0 %v1063
      %v1065 = vpop.xlane.xlu0 %1064
      %1066 = vrot.lane.b32.xlu0 %v953, 120
      %v1067 = vpop.permute.xlu0 %1066
      %v1069 = vsel %vm1055, %v1067, 0.0
      %1070 = vadd.xlane.f32.xlu0 %v1069
      %v1071 = vpop.xlane.xlu0 %1070
      %1072 = vrot.lane.b32.xlu0 %v953, 116
      %v1073 = vpop.permute.xlu0 %1072
      %v1075 = vsel %vm1055, %v1073, 0.0
      %1076 = vadd.xlane.f32.xlu0 %v1075
      %v1077 = vpop.xlane.xlu0 %1076
      %1078 = vrot.lane.b32.xlu0 %v953, 112
      %v1079 = vpop.permute.xlu0 %1078
      %v1081 = vsel %vm1055, %v1079, 0.0
      %1082 = vadd.xlane.f32.xlu0 %v1081
      %v1083 = vpop.xlane.xlu0 %1082
      %1084 = vrot.lane.b32.xlu0 %v953, 108
      %v1085 = vpop.permute.xlu0 %1084
      %v1087 = vsel %vm1055, %v1085, 0.0
      %1088 = vadd.xlane.f32.xlu0 %v1087
      %v1089 = vpop.xlane.xlu0 %1088
      %1090 = vrot.lane.b32.xlu0 %v953, 104
      %v1091 = vpop.permute.xlu0 %1090
      %v1093 = vsel %vm1055, %v1091, 0.0
      %1094 = vadd.xlane.f32.xlu0 %v1093
      %v1095 = vpop.xlane.xlu0 %1094
      %1096 = vrot.lane.b32.xlu0 %v953, 100
      %v1097 = vpop.permute.xlu0 %1096
      %v1099 = vsel %vm1055, %v1097, 0.0
      %1100 = vadd.xlane.f32.xlu0 %v1099
      %v1101 = vpop.xlane.xlu0 %1100
      %v1102 = vsel %vm1055, %v1058, %v1065
      %vm1103 = vcmask 64512
      %v1104 = vsel %vm1103, %v1102, %v1071
      %vm1105 = vcmask 97280
      %v1106 = vsel %vm1105, %v1104, %v1077
      %vm1107 = vcmask 130048
      %v1108 = vsel %vm1107, %v1106, %v1083
      %vm1109 = vcmask 162816
      %v1110 = vsel %vm1109, %v1108, %v1089
      %vm1111 = vcmask 195584
      %v1112 = vsel %vm1111, %v1110, %v1095
      %vm1113 = vcmask 228352
      %v1114 = vsel %vm1113, %v1112, %v1101
      %v1115 = vmul.f32 %v1114, 0.0009765625
      %v1116 = vsel %vm1055, %v1054, 0.0
      %1117 = vadd.xlane.f32.xlu0 %v1116
      %v1118 = vpop.xlane.xlu0 %1117
      %1120 = vrot.lane.b32.xlu0 %v1054, 124
      %v1121 = vpop.permute.xlu0 %1120
      %v1123 = vsel %vm1055, %v1121, 0.0
      %1124 = vadd.xlane.f32.xlu0 %v1123
      %v1125 = vpop.xlane.xlu0 %1124
      %1126 = vrot.lane.b32.xlu0 %v1054, 120
      %v1127 = vpop.permute.xlu0 %1126
      %v1129 = vsel %vm1055, %v1127, 0.0
      %1130 = vadd.xlane.f32.xlu0 %v1129
      %v1131 = vpop.xlane.xlu0 %1130
      %1132 = vrot.lane.b32.xlu0 %v1054, 116
      %v1133 = vpop.permute.xlu0 %1132
      %v1135 = vsel %vm1055, %v1133, 0.0
      %1136 = vadd.xlane.f32.xlu0 %v1135
      %v1137 = vpop.xlane.xlu0 %1136
      %1138 = vrot.lane.b32.xlu0 %v1054, 112
      %v1139 = vpop.permute.xlu0 %1138
      %v1141 = vsel %vm1055, %v1139, 0.0
      %1142 = vadd.xlane.f32.xlu0 %v1141
      %v1143 = vpop.xlane.xlu0 %1142
      %1144 = vrot.lane.b32.xlu0 %v1054, 108
      %v1145 = vpop.permute.xlu0 %1144
      %v1147 = vsel %vm1055, %v1145, 0.0
      %1148 = vadd.xlane.f32.xlu0 %v1147
      %v1149 = vpop.xlane.xlu0 %1148
      %1150 = vrot.lane.b32.xlu0 %v1054, 104
      %v1151 = vpop.permute.xlu0 %1150
      %v1153 = vsel %vm1055, %v1151, 0.0
      %1154 = vadd.xlane.f32.xlu0 %v1153
      %v1155 = vpop.xlane.xlu0 %1154
      %1156 = vrot.lane.b32.xlu0 %v1054, 100
      %v1157 = vpop.permute.xlu0 %1156
      %v1159 = vsel %vm1055, %v1157, 0.0
      %1160 = vadd.xlane.f32.xlu0 %v1159
      %v1161 = vpop.xlane.xlu0 %1160
      %v1162 = vsel %vm1055, %v1118, %v1125
      %v1163 = vsel %vm1103, %v1162, %v1131
      %v1164 = vsel %vm1105, %v1163, %v1137
      %v1165 = vsel %vm1107, %v1164, %v1143
      %v1166 = vsel %vm1109, %v1165, %v1149
      %v1167 = vsel %vm1111, %v1166, %v1155
      %v1168 = vsel %vm1113, %v1167, %v1161
      %v1169 = vmul.f32 %v1168, 0.0009765625
      %v1170 = vmul.f32 %v1115, %v1115
      %v1171 = vsub.f32 %v1169, %v1170
      %v1172 = vmax.f32 %v1171, 0.0
      %v1173 = vld [vmem:[%s1] sm:$0x1]
      %v1174 = vadd.f32 %v1172, 1e-05
      %v1175 = vrsqrt.pop %v1174
      %v1176 = vmul.f32 %v1173, %v1175
      %v1177 = vld [vmem:[%s2] sm:$0x1]
      %v1178 = vmul.f32 %v1115, %v1176
      %v1179 = vsub.f32 %v1177, %v1178
      %v1181 = vlaneseq
      %v1182 = vshrl.u32 %v1181, 7
      %v1183 = vsub.s32 0, %v1182
      %v1184 = vrot.slane %v1176, %v1183
      %v1186 = vmul.f32 %v852, %v1184
      %v1187 = vmul.f32 %v853, %v1184
      %v1188 = vmul.f32 %v854, %v1184
      %v1189 = vmul.f32 %v855, %v1184
      %v1190 = vmul.f32 %v856, %v1184
      %v1191 = vmul.f32 %v857, %v1184
      %v1192 = vmul.f32 %v858, %v1184
      %v1193 = vmul.f32 %v859, %v1184
      %v1194 = vmul.f32 %v860, %v1184
      %v1195 = vmul.f32 %v861, %v1184
      %v1196 = vmul.f32 %v862, %v1184
      %v1197 = vmul.f32 %v863, %v1184
      %v1198 = vmul.f32 %v864, %v1184
      %v1199 = vmul.f32 %v865, %v1184
      %v1200 = vmul.f32 %v866, %v1184
      %v1201 = vmul.f32 %v867, %v1184
      %v1202 = vmul.f32 %v868, %v1184
      %v1203 = vmul.f32 %v869, %v1184
      %v1204 = vmul.f32 %v870, %v1184
      %v1205 = vmul.f32 %v871, %v1184
      %v1206 = vmul.f32 %v872, %v1184
      %v1207 = vmul.f32 %v873, %v1184
      %v1208 = vmul.f32 %v874, %v1184
      %v1209 = vmul.f32 %v875, %v1184
      %v1210 = vmul.f32 %v876, %v1184
      %v1211 = vmul.f32 %v877, %v1184
      %v1212 = vmul.f32 %v878, %v1184
      %v1213 = vmul.f32 %v879, %v1184
      %v1214 = vmul.f32 %v880, %v1184
      %v1215 = vmul.f32 %v881, %v1184
      %v1216 = vmul.f32 %v882, %v1184
      %v1217 = vmul.f32 %v883, %v1184
      %v1219 = vlaneseq
      %v1220 = vshrl.u32 %v1219, 7
      %v1221 = vsub.s32 0, %v1220
      %v1222 = vrot.slane %v1179, %v1221
      %v1224 = vadd.f32 %v1186, %v1222
      %v1225 = vadd.f32 %v1187, %v1222
      %v1226 = vadd.f32 %v1188, %v1222
      %v1227 = vadd.f32 %v1189, %v1222
      %v1228 = vadd.f32 %v1190, %v1222
      %v1229 = vadd.f32 %v1191, %v1222
      %v1230 = vadd.f32 %v1192, %v1222
      %v1231 = vadd.f32 %v1193, %v1222
      %v1232 = vadd.f32 %v1194, %v1222
      %v1233 = vadd.f32 %v1195, %v1222
      %v1234 = vadd.f32 %v1196, %v1222
      %v1235 = vadd.f32 %v1197, %v1222
      %v1236 = vadd.f32 %v1198, %v1222
      %v1237 = vadd.f32 %v1199, %v1222
      %v1238 = vadd.f32 %v1200, %v1222
      %v1239 = vadd.f32 %v1201, %v1222
      %v1240 = vadd.f32 %v1202, %v1222
      %v1241 = vadd.f32 %v1203, %v1222
      %v1242 = vadd.f32 %v1204, %v1222
      %v1243 = vadd.f32 %v1205, %v1222
      %v1244 = vadd.f32 %v1206, %v1222
      %v1245 = vadd.f32 %v1207, %v1222
      %v1246 = vadd.f32 %v1208, %v1222
      %v1247 = vadd.f32 %v1209, %v1222
      %v1248 = vadd.f32 %v1210, %v1222
      %v1249 = vadd.f32 %v1211, %v1222
      %v1250 = vadd.f32 %v1212, %v1222
      %v1251 = vadd.f32 %v1213, %v1222
      %v1252 = vadd.f32 %v1214, %v1222
      %v1253 = vadd.f32 %v1215, %v1222
      %v1254 = vadd.f32 %v1216, %v1222
      %v1255 = vadd.f32 %v1217, %v1222
      %v1256 = vxor.u32 %v1224, 2147483648
      %v1257 = vxor.u32 %v1225, 2147483648
      %v1258 = vxor.u32 %v1226, 2147483648
      %v1259 = vxor.u32 %v1227, 2147483648
      %v1260 = vxor.u32 %v1228, 2147483648
      %v1261 = vxor.u32 %v1229, 2147483648
      %v1262 = vxor.u32 %v1230, 2147483648
      %v1263 = vxor.u32 %v1231, 2147483648
      %v1264 = vxor.u32 %v1232, 2147483648
      %v1265 = vxor.u32 %v1233, 2147483648
      %v1266 = vxor.u32 %v1234, 2147483648
      %v1267 = vxor.u32 %v1235, 2147483648
      %v1268 = vxor.u32 %v1236, 2147483648
      %v1269 = vxor.u32 %v1237, 2147483648
      %v1270 = vxor.u32 %v1238, 2147483648
      %v1271 = vxor.u32 %v1239, 2147483648
      %v1272 = vxor.u32 %v1240, 2147483648
      %v1273 = vxor.u32 %v1241, 2147483648
      %v1274 = vxor.u32 %v1242, 2147483648
      %v1275 = vxor.u32 %v1243, 2147483648
      %v1276 = vxor.u32 %v1244, 2147483648
      %v1277 = vxor.u32 %v1245, 2147483648
      %v1278 = vxor.u32 %v1246, 2147483648
      %v1279 = vxor.u32 %v1247, 2147483648
      %v1280 = vxor.u32 %v1248, 2147483648
      %v1281 = vxor.u32 %v1249, 2147483648
      %v1282 = vxor.u32 %v1250, 2147483648
      %v1283 = vxor.u32 %v1251, 2147483648
      %v1284 = vxor.u32 %v1252, 2147483648
      %v1285 = vxor.u32 %v1253, 2147483648
      %v1286 = vxor.u32 %v1254, 2147483648
      %v1287 = vxor.u32 %v1255, 2147483648
      %v1288 = vmul.f32 %v1256, 1.442695
      %v1289 = vpow.pop %v1288
      %v1290 = vmul.f32 %v1257, 1.442695
      %v1291 = vpow.pop %v1290
      %v1292 = vmul.f32 %v1258, 1.442695
      %v1293 = vpow.pop %v1292
      %v1294 = vmul.f32 %v1259, 1.442695
      %v1295 = vpow.pop %v1294
      %v1296 = vmul.f32 %v1260, 1.442695
      %v1297 = vpow.pop %v1296
      %v1298 = vmul.f32 %v1261, 1.442695
      %v1299 = vpow.pop %v1298
      %v1300 = vmul.f32 %v1262, 1.442695
      %v1301 = vpow.pop %v1300
      %v1302 = vmul.f32 %v1263, 1.442695
      %v1303 = vpow.pop %v1302
      %v1304 = vmul.f32 %v1264, 1.442695
      %v1305 = vpow.pop %v1304
      %v1306 = vmul.f32 %v1265, 1.442695
      %v1307 = vpow.pop %v1306
      %v1308 = vmul.f32 %v1266, 1.442695
      %v1309 = vpow.pop %v1308
      %v1310 = vmul.f32 %v1267, 1.442695
      %v1311 = vpow.pop %v1310
      %v1312 = vmul.f32 %v1268, 1.442695
      %v1313 = vpow.pop %v1312
      %v1314 = vmul.f32 %v1269, 1.442695
      %v1315 = vpow.pop %v1314
      %v1316 = vmul.f32 %v1270, 1.442695
      %v1317 = vpow.pop %v1316
      %v1318 = vmul.f32 %v1271, 1.442695
      %v1319 = vpow.pop %v1318
      %v1320 = vmul.f32 %v1272, 1.442695
      %v1321 = vpow.pop %v1320
      %v1322 = vmul.f32 %v1273, 1.442695
      %v1323 = vpow.pop %v1322
      %v1324 = vmul.f32 %v1274, 1.442695
      %v1325 = vpow.pop %v1324
      %v1326 = vmul.f32 %v1275, 1.442695
      %v1327 = vpow.pop %v1326
      %v1328 = vmul.f32 %v1276, 1.442695
      %v1329 = vpow.pop %v1328
      %v1330 = vmul.f32 %v1277, 1.442695
      %v1331 = vpow.pop %v1330
      %v1332 = vmul.f32 %v1278, 1.442695
      %v1333 = vpow.pop %v1332
      %v1334 = vmul.f32 %v1279, 1.442695
      %v1335 = vpow.pop %v1334
      %v1336 = vmul.f32 %v1280, 1.442695
      %v1337 = vpow.pop %v1336
      %v1338 = vmul.f32 %v1281, 1.442695
      %v1339 = vpow.pop %v1338
      %v1340 = vmul.f32 %v1282, 1.442695
      %v1341 = vpow.pop %v1340
      %v1342 = vmul.f32 %v1283, 1.442695
      %v1343 = vpow.pop %v1342
      %v1344 = vmul.f32 %v1284, 1.442695
      %v1345 = vpow.pop %v1344
      %v1346 = vmul.f32 %v1285, 1.442695
      %v1347 = vpow.pop %v1346
      %v1348 = vmul.f32 %v1286, 1.442695
      %v1349 = vpow.pop %v1348
      %v1350 = vmul.f32 %v1287, 1.442695
      %v1351 = vpow.pop %v1350
      %v1352 = vadd.f32 %v1289, 1.0
      %v1353 = vadd.f32 %v1291, 1.0
      %v1354 = vadd.f32 %v1293, 1.0
      %v1355 = vadd.f32 %v1295, 1.0
      %v1356 = vadd.f32 %v1297, 1.0
      %v1357 = vadd.f32 %v1299, 1.0
      %v1358 = vadd.f32 %v1301, 1.0
      %v1359 = vadd.f32 %v1303, 1.0
      %v1360 = vadd.f32 %v1305, 1.0
      %v1361 = vadd.f32 %v1307, 1.0
      %v1362 = vadd.f32 %v1309, 1.0
      %v1363 = vadd.f32 %v1311, 1.0
      %v1364 = vadd.f32 %v1313, 1.0
      %v1365 = vadd.f32 %v1315, 1.0
      %v1366 = vadd.f32 %v1317, 1.0
      %v1367 = vadd.f32 %v1319, 1.0
      %v1368 = vadd.f32 %v1321, 1.0
      %v1369 = vadd.f32 %v1323, 1.0
      %v1370 = vadd.f32 %v1325, 1.0
      %v1371 = vadd.f32 %v1327, 1.0
      %v1372 = vadd.f32 %v1329, 1.0
      %v1373 = vadd.f32 %v1331, 1.0
      %v1374 = vadd.f32 %v1333, 1.0
      %v1375 = vadd.f32 %v1335, 1.0
      %v1376 = vadd.f32 %v1337, 1.0
      %v1377 = vadd.f32 %v1339, 1.0
      %v1378 = vadd.f32 %v1341, 1.0
      %v1379 = vadd.f32 %v1343, 1.0
      %v1380 = vadd.f32 %v1345, 1.0
      %v1381 = vadd.f32 %v1347, 1.0
      %v1382 = vadd.f32 %v1349, 1.0
      %v1383 = vadd.f32 %v1351, 1.0
      %v1384 = vrcp.pop %v1352
      %v1385 = vmul.f32 1.0, %v1384
      %v1386 = vrcp.pop %v1353
      %v1387 = vmul.f32 1.0, %v1386
      %v1388 = vrcp.pop %v1354
      %v1389 = vmul.f32 1.0, %v1388
      %v1390 = vrcp.pop %v1355
      %v1391 = vmul.f32 1.0, %v1390
      %v1392 = vrcp.pop %v1356
      %v1393 = vmul.f32 1.0, %v1392
      %v1394 = vrcp.pop %v1357
      %v1395 = vmul.f32 1.0, %v1394
      %v1396 = vrcp.pop %v1358
      %v1397 = vmul.f32 1.0, %v1396
      %v1398 = vrcp.pop %v1359
      %v1399 = vmul.f32 1.0, %v1398
      %v1400 = vrcp.pop %v1360
      %v1401 = vmul.f32 1.0, %v1400
      %v1402 = vrcp.pop %v1361
      %v1403 = vmul.f32 1.0, %v1402
      %v1404 = vrcp.pop %v1362
      %v1405 = vmul.f32 1.0, %v1404
      %v1406 = vrcp.pop %v1363
      %v1407 = vmul.f32 1.0, %v1406
      %v1408 = vrcp.pop %v1364
      %v1409 = vmul.f32 1.0, %v1408
      %v1410 = vrcp.pop %v1365
      %v1411 = vmul.f32 1.0, %v1410
      %v1412 = vrcp.pop %v1366
      %v1413 = vmul.f32 1.0, %v1412
      %v1414 = vrcp.pop %v1367
      %v1415 = vmul.f32 1.0, %v1414
      %v1416 = vrcp.pop %v1368
      %v1417 = vmul.f32 1.0, %v1416
      %v1418 = vrcp.pop %v1369
      %v1419 = vmul.f32 1.0, %v1418
      %v1420 = vrcp.pop %v1370
      %v1421 = vmul.f32 1.0, %v1420
      %v1422 = vrcp.pop %v1371
      %v1423 = vmul.f32 1.0, %v1422
      %v1424 = vrcp.pop %v1372
      %v1425 = vmul.f32 1.0, %v1424
      %v1426 = vrcp.pop %v1373
      %v1427 = vmul.f32 1.0, %v1426
      %v1428 = vrcp.pop %v1374
      %v1429 = vmul.f32 1.0, %v1428
      %v1430 = vrcp.pop %v1375
      %v1431 = vmul.f32 1.0, %v1430
      %v1432 = vrcp.pop %v1376
      %v1433 = vmul.f32 1.0, %v1432
      %v1434 = vrcp.pop %v1377
      %v1435 = vmul.f32 1.0, %v1434
      %v1436 = vrcp.pop %v1378
      %v1437 = vmul.f32 1.0, %v1436
      %v1438 = vrcp.pop %v1379
      %v1439 = vmul.f32 1.0, %v1438
      %v1440 = vrcp.pop %v1380
      %v1441 = vmul.f32 1.0, %v1440
      %v1442 = vrcp.pop %v1381
      %v1443 = vmul.f32 1.0, %v1442
      %v1444 = vrcp.pop %v1382
      %v1445 = vmul.f32 1.0, %v1444
      %v1446 = vrcp.pop %v1383
      %v1447 = vmul.f32 1.0, %v1446
      %v1448 = vmul.f32 %v1224, %v1385
      %v1449 = vmul.f32 %v1225, %v1387
      %v1450 = vmul.f32 %v1226, %v1389
      %v1451 = vmul.f32 %v1227, %v1391
      %v1452 = vmul.f32 %v1228, %v1393
      %v1453 = vmul.f32 %v1229, %v1395
      %v1454 = vmul.f32 %v1230, %v1397
      %v1455 = vmul.f32 %v1231, %v1399
      %v1456 = vmul.f32 %v1232, %v1401
      %v1457 = vmul.f32 %v1233, %v1403
      %v1458 = vmul.f32 %v1234, %v1405
      %v1459 = vmul.f32 %v1235, %v1407
      %v1460 = vmul.f32 %v1236, %v1409
      %v1461 = vmul.f32 %v1237, %v1411
      %v1462 = vmul.f32 %v1238, %v1413
      %v1463 = vmul.f32 %v1239, %v1415
      %v1464 = vmul.f32 %v1240, %v1417
      %v1465 = vmul.f32 %v1241, %v1419
      %v1466 = vmul.f32 %v1242, %v1421
      %v1467 = vmul.f32 %v1243, %v1423
      %v1468 = vmul.f32 %v1244, %v1425
      %v1469 = vmul.f32 %v1245, %v1427
      %v1470 = vmul.f32 %v1246, %v1429
      %v1471 = vmul.f32 %v1247, %v1431
      %v1472 = vmul.f32 %v1248, %v1433
      %v1473 = vmul.f32 %v1249, %v1435
      %v1474 = vmul.f32 %v1250, %v1437
      %v1475 = vmul.f32 %v1251, %v1439
      %v1476 = vmul.f32 %v1252, %v1441
      %v1477 = vmul.f32 %v1253, %v1443
      %v1478 = vmul.f32 %v1254, %v1445
      %v1479 = vmul.f32 %v1255, %v1447
      %v1480 = vpack.c.bf16 %v1449, %v1448
      %v1481 = vpack.c.bf16 %v1451, %v1450
      %v1482 = vpack.c.bf16 %v1453, %v1452
      %v1483 = vpack.c.bf16 %v1455, %v1454
      %v1484 = vpack.c.bf16 %v1457, %v1456
      %v1485 = vpack.c.bf16 %v1459, %v1458
      %v1486 = vpack.c.bf16 %v1461, %v1460
      %v1487 = vpack.c.bf16 %v1463, %v1462
      %v1488 = vpack.c.bf16 %v1465, %v1464
      %v1489 = vpack.c.bf16 %v1467, %v1466
      %v1490 = vpack.c.bf16 %v1469, %v1468
      %v1491 = vpack.c.bf16 %v1471, %v1470
      %v1492 = vpack.c.bf16 %v1473, %v1472
      %v1493 = vpack.c.bf16 %v1475, %v1474
      %v1494 = vpack.c.bf16 %v1477, %v1476
      %v1495 = vpack.c.bf16 %v1479, %v1478
      %v1512 = vunpack.c.l.b16 %v1480
      %v1513 = vunpack.c.h.b16 %v1480
      %v1514 = vunpack.c.l.b16 %v1481
      %v1515 = vunpack.c.h.b16 %v1481
      %v1516 = vunpack.c.l.b16 %v1482
      %v1517 = vunpack.c.h.b16 %v1482
      %v1518 = vunpack.c.l.b16 %v1483
      %v1519 = vunpack.c.h.b16 %v1483
      %v1520 = vunpack.c.l.b16 %v1484
      %v1521 = vunpack.c.h.b16 %v1484
      %v1522 = vunpack.c.l.b16 %v1485
      %v1523 = vunpack.c.h.b16 %v1485
      %v1524 = vunpack.c.l.b16 %v1486
      %v1525 = vunpack.c.h.b16 %v1486
      %v1526 = vunpack.c.l.b16 %v1487
      %v1527 = vunpack.c.h.b16 %v1487
      %v1528 = vunpack.c.l.b16 %v1488
      %v1529 = vunpack.c.h.b16 %v1488
      %v1530 = vunpack.c.l.b16 %v1489
      %v1531 = vunpack.c.h.b16 %v1489
      %v1532 = vunpack.c.l.b16 %v1490
      %v1533 = vunpack.c.h.b16 %v1490
      %v1534 = vunpack.c.l.b16 %v1491
      %v1535 = vunpack.c.h.b16 %v1491
      %v1536 = vunpack.c.l.b16 %v1492
      %v1537 = vunpack.c.h.b16 %v1492
      %v1538 = vunpack.c.l.b16 %v1493
      %v1539 = vunpack.c.h.b16 %v1493
      %v1540 = vunpack.c.l.b16 %v1494
      %v1541 = vunpack.c.h.b16 %v1494
      %v1542 = vunpack.c.l.b16 %v1495
      %v1543 = vunpack.c.h.b16 %v1495
      %v1544 = vpack.c.b16 %v1512, %v1512
      %v1545 = vpack.c.b16 %v1513, %v1513
      %v1546 = vpack.c.b16 %v1514, %v1514
      %v1547 = vpack.c.b16 %v1515, %v1515
      %v1548 = vpack.c.b16 %v1516, %v1516
      %v1549 = vpack.c.b16 %v1517, %v1517
      %v1550 = vpack.c.b16 %v1518, %v1518
      %v1551 = vpack.c.b16 %v1519, %v1519
      %v1552 = vpack.c.b16 %v1520, %v1520
      %v1553 = vpack.c.b16 %v1521, %v1521
      %v1554 = vpack.c.b16 %v1522, %v1522
      %v1555 = vpack.c.b16 %v1523, %v1523
      %v1556 = vpack.c.b16 %v1524, %v1524
      %v1557 = vpack.c.b16 %v1525, %v1525
      %v1558 = vpack.c.b16 %v1526, %v1526
      %v1559 = vpack.c.b16 %v1527, %v1527
      %v1560 = vpack.c.b16 %v1528, %v1528
      %v1561 = vpack.c.b16 %v1529, %v1529
      %v1562 = vpack.c.b16 %v1530, %v1530
      %v1563 = vpack.c.b16 %v1531, %v1531
      %v1564 = vpack.c.b16 %v1532, %v1532
      %v1565 = vpack.c.b16 %v1533, %v1533
      %v1566 = vpack.c.b16 %v1534, %v1534
      %v1567 = vpack.c.b16 %v1535, %v1535
      %v1568 = vpack.c.b16 %v1536, %v1536
      %v1569 = vpack.c.b16 %v1537, %v1537
      %v1570 = vpack.c.b16 %v1538, %v1538
      %v1571 = vpack.c.b16 %v1539, %v1539
      %v1572 = vpack.c.b16 %v1540, %v1540
      %v1573 = vpack.c.b16 %v1541, %v1541
      %v1574 = vpack.c.b16 %v1542, %v1542
      %v1575 = vpack.c.b16 %v1543, %v1543
      %1576 = vrot.lane.b32.xlu0 %v1544, 32
      %v1577 = vpop.permute.xlu0 %1576
      %1578 = vrot.lane.b32.xlu0 %v1545, 32
      %v1579 = vpop.permute.xlu0 %1578
      %1580 = vrot.lane.b32.xlu0 %v1546, 32
      %v1581 = vpop.permute.xlu0 %1580
      %1582 = vrot.lane.b32.xlu0 %v1547, 32
      %v1583 = vpop.permute.xlu0 %1582
      %1584 = vrot.lane.b32.xlu0 %v1548, 32
      %v1585 = vpop.permute.xlu0 %1584
      %1586 = vrot.lane.b32.xlu0 %v1549, 32
      %v1587 = vpop.permute.xlu0 %1586
      %1588 = vrot.lane.b32.xlu0 %v1550, 32
      %v1589 = vpop.permute.xlu0 %1588
      %1590 = vrot.lane.b32.xlu0 %v1551, 32
      %v1591 = vpop.permute.xlu0 %1590
      %1592 = vrot.lane.b32.xlu0 %v1552, 32
      %v1593 = vpop.permute.xlu0 %1592
      %1594 = vrot.lane.b32.xlu0 %v1553, 32
      %v1595 = vpop.permute.xlu0 %1594
      %1596 = vrot.lane.b32.xlu0 %v1554, 32
      %v1597 = vpop.permute.xlu0 %1596
      %1598 = vrot.lane.b32.xlu0 %v1555, 32
      %v1599 = vpop.permute.xlu0 %1598
      %1600 = vrot.lane.b32.xlu0 %v1556, 32
      %v1601 = vpop.permute.xlu0 %1600
      %1602 = vrot.lane.b32.xlu0 %v1557, 32
      %v1603 = vpop.permute.xlu0 %1602
      %1604 = vrot.lane.b32.xlu0 %v1558, 32
      %v1605 = vpop.permute.xlu0 %1604
      %1606 = vrot.lane.b32.xlu0 %v1559, 32
      %v1607 = vpop.permute.xlu0 %1606
      %1608 = vrot.lane.b32.xlu0 %v1560, 32
      %v1609 = vpop.permute.xlu0 %1608
      %1610 = vrot.lane.b32.xlu0 %v1561, 32
      %v1611 = vpop.permute.xlu0 %1610
      %1612 = vrot.lane.b32.xlu0 %v1562, 32
      %v1613 = vpop.permute.xlu0 %1612
      %1614 = vrot.lane.b32.xlu0 %v1563, 32
      %v1615 = vpop.permute.xlu0 %1614
      %1616 = vrot.lane.b32.xlu0 %v1564, 32
      %v1617 = vpop.permute.xlu0 %1616
      %1618 = vrot.lane.b32.xlu0 %v1565, 32
      %v1619 = vpop.permute.xlu0 %1618
      %1620 = vrot.lane.b32.xlu0 %v1566, 32
      %v1621 = vpop.permute.xlu0 %1620
      %1622 = vrot.lane.b32.xlu0 %v1567, 32
      %v1623 = vpop.permute.xlu0 %1622
      %1624 = vrot.lane.b32.xlu0 %v1568, 32
      %v1625 = vpop.permute.xlu0 %1624
      %1626 = vrot.lane.b32.xlu0 %v1569, 32
      %v1627 = vpop.permute.xlu0 %1626
      %1628 = vrot.lane.b32.xlu0 %v1570, 32
      %v1629 = vpop.permute.xlu0 %1628
      %1630 = vrot.lane.b32.xlu0 %v1571, 32
      %v1631 = vpop.permute.xlu0 %1630
      %1632 = vrot.lane.b32.xlu0 %v1572, 32
      %v1633 = vpop.permute.xlu0 %1632
      %1634 = vrot.lane.b32.xlu0 %v1573, 32
      %v1635 = vpop.permute.xlu0 %1634
      %1636 = vrot.lane.b32.xlu0 %v1574, 32
      %v1637 = vpop.permute.xlu0 %1636
      %1638 = vrot.lane.b32.xlu0 %v1575, 32
      %v1639 = vpop.permute.xlu0 %1638
      %vm1672 = vcmask 519424
      %1673 = vst.msk [vmem:[#allocation2 + $0x8] sm:$0xf] %vm1672, %v1577
      %1674 = vst.msk [vmem:[#allocation2 + $0xc] sm:$0xf] %vm1672, %v1579
      %1675 = vst.msk [vmem:[#allocation2 + $0x10] sm:$0xf] %vm1672, %v1581
      %1676 = vst.msk [vmem:[#allocation2 + $0x14] sm:$0xf] %vm1672, %v1583
      %1677 = vst.msk [vmem:[#allocation2 + $0x18] sm:$0xf] %vm1672, %v1585
      %1678 = vst.msk [vmem:[#allocation2 + $0x1c] sm:$0xf] %vm1672, %v1587
      %1679 = vst.msk [vmem:[#allocation2 + $0x20] sm:$0xf] %vm1672, %v1589
      %1680 = vst.msk [vmem:[#allocation2 + $0x24] sm:$0xf] %vm1672, %v1591
      %1681 = vst.msk [vmem:[#allocation2 + $0x28] sm:$0xf] %vm1672, %v1593
      %1682 = vst.msk [vmem:[#allocation2 + $0x2c] sm:$0xf] %vm1672, %v1595
      %1683 = vst.msk [vmem:[#allocation2 + $0x30] sm:$0xf] %vm1672, %v1597
      %1684 = vst.msk [vmem:[#allocation2 + $0x34] sm:$0xf] %vm1672, %v1599
      %1685 = vst.msk [vmem:[#allocation2 + $0x38] sm:$0xf] %vm1672, %v1601
      %1686 = vst.msk [vmem:[#allocation2 + $0x3c] sm:$0xf] %vm1672, %v1603
      %1687 = vst.msk [vmem:[#allocation2 + $0x40] sm:$0xf] %vm1672, %v1605
      %1688 = vst.msk [vmem:[#allocation2 + $0x44] sm:$0xf] %vm1672, %v1607
      %1689 = vst.msk [vmem:[#allocation2 + $0x48] sm:$0xf] %vm1672, %v1609
      %1690 = vst.msk [vmem:[#allocation2 + $0x4c] sm:$0xf] %vm1672, %v1611
      %1691 = vst.msk [vmem:[#allocation2 + $0x50] sm:$0xf] %vm1672, %v1613
      %1692 = vst.msk [vmem:[#allocation2 + $0x54] sm:$0xf] %vm1672, %v1615
      %1693 = vst.msk [vmem:[#allocation2 + $0x58] sm:$0xf] %vm1672, %v1617
      %1694 = vst.msk [vmem:[#allocation2 + $0x5c] sm:$0xf] %vm1672, %v1619
      %1695 = vst.msk [vmem:[#allocation2 + $0x60] sm:$0xf] %vm1672, %v1621
      %1696 = vst.msk [vmem:[#allocation2 + $0x64] sm:$0xf] %vm1672, %v1623
      %1697 = vst.msk [vmem:[#allocation2 + $0x68] sm:$0xf] %vm1672, %v1625
      %1698 = vst.msk [vmem:[#allocation2 + $0x6c] sm:$0xf] %vm1672, %v1627
      %1699 = vst.msk [vmem:[#allocation2 + $0x70] sm:$0xf] %vm1672, %v1629
      %1700 = vst.msk [vmem:[#allocation2 + $0x74] sm:$0xf] %vm1672, %v1631
      %1701 = vst.msk [vmem:[#allocation2 + $0x78] sm:$0xf] %vm1672, %v1633
      %1702 = vst.msk [vmem:[#allocation2 + $0x7c] sm:$0xf] %vm1672, %v1635
      %1703 = vst.msk [vmem:[#allocation2 + $0x80] sm:$0xf] %vm1672, %v1637
      %1704 = vst.msk [vmem:[#allocation2 + $0x84] sm:$0xf] %vm1672, %v1639
      %v1705 = vrot.slane %v1448, 7
      %v1706 = vrot.slane %v1449, 7
      %v1707 = vrot.slane %v1450, 7
      %v1708 = vrot.slane %v1451, 7
      %v1709 = vrot.slane %v1452, 7
      %v1710 = vrot.slane %v1453, 7
      %v1711 = vrot.slane %v1454, 7
      %v1712 = vrot.slane %v1455, 7
      %v1713 = vrot.slane %v1456, 7
      %v1714 = vrot.slane %v1457, 7
      %v1715 = vrot.slane %v1458, 7
      %v1716 = vrot.slane %v1459, 7
      %v1717 = vrot.slane %v1460, 7
      %v1718 = vrot.slane %v1461, 7
      %v1719 = vrot.slane %v1462, 7
      %v1720 = vrot.slane %v1463, 7
      %v1721 = vrot.slane %v1464, 7
      %v1722 = vrot.slane %v1465, 7
      %v1723 = vrot.slane %v1466, 7
      %v1724 = vrot.slane %v1467, 7
      %v1725 = vrot.slane %v1468, 7
      %v1726 = vrot.slane %v1469, 7
      %v1727 = vrot.slane %v1470, 7
      %v1728 = vrot.slane %v1471, 7
      %v1729 = vrot.slane %v1472, 7
      %v1730 = vrot.slane %v1473, 7
      %v1731 = vrot.slane %v1474, 7
      %v1732 = vrot.slane %v1475, 7
      %v1733 = vrot.slane %v1476, 7
      %v1734 = vrot.slane %v1477, 7
      %v1735 = vrot.slane %v1478, 7
      %v1736 = vrot.slane %v1479, 7
      %vm1737 = vcmp.lt.s32.totalorder %v340, 1
      %v1738 = vsel %vm1737, %v1735, %v1736
      %v1739 = vsel %vm1737, %v1734, %v1735
      %v1740 = vsel %vm1737, %v1733, %v1734
      %v1741 = vsel %vm1737, %v1732, %v1733
      %v1742 = vsel %vm1737, %v1731, %v1732
      %v1743 = vsel %vm1737, %v1730, %v1731
      %v1744 = vsel %vm1737, %v1729, %v1730
      %v1745 = vsel %vm1737, %v1728, %v1729
      %v1746 = vsel %vm1737, %v1727, %v1728
      %v1747 = vsel %vm1737, %v1726, %v1727
      %v1748 = vsel %vm1737, %v1725, %v1726
      %v1749 = vsel %vm1737, %v1724, %v1725
      %v1750 = vsel %vm1737, %v1723, %v1724
      %v1751 = vsel %vm1737, %v1722, %v1723
      %v1752 = vsel %vm1737, %v1721, %v1722
      %v1753 = vsel %vm1737, %v1720, %v1721
      %v1754 = vsel %vm1737, %v1719, %v1720
      %v1755 = vsel %vm1737, %v1718, %v1719
      %v1756 = vsel %vm1737, %v1717, %v1718
      %v1757 = vsel %vm1737, %v1716, %v1717
      %v1758 = vsel %vm1737, %v1715, %v1716
      %v1759 = vsel %vm1737, %v1714, %v1715
      %v1760 = vsel %vm1737, %v1713, %v1714
      %v1761 = vsel %vm1737, %v1712, %v1713
      %v1762 = vsel %vm1737, %v1711, %v1712
      %v1763 = vsel %vm1737, %v1710, %v1711
      %v1764 = vsel %vm1737, %v1709, %v1710
      %v1765 = vsel %vm1737, %v1708, %v1709
      %v1766 = vsel %vm1737, %v1707, %v1708
      %v1767 = vsel %vm1737, %v1706, %v1707
      %v1768 = vsel %vm1737, %v1705, %v1706
      %v1769 = vsel %vm1737, %v1736, %v1705
      %v1770 = vsel %vm756, 0.0, %v1769
      %v1771 = vsel %vm757, 0.0, %v1768
      %v1772 = vsel %vm758, 0.0, %v1767
      %v1773 = vsel %vm759, 0.0, %v1766
      %v1774 = vsel %vm760, 0.0, %v1765
      %v1775 = vsel %vm761, 0.0, %v1764
      %v1776 = vsel %vm762, 0.0, %v1763
      %v1777 = vsel %vm763, 0.0, %v1762
      %v1778 = vsel %vm764, 0.0, %v1761
      %v1779 = vsel %vm765, 0.0, %v1760
      %v1780 = vsel %vm766, 0.0, %v1759
      %v1781 = vsel %vm767, 0.0, %v1758
      %v1782 = vsel %vm768, 0.0, %v1757
      %v1783 = vsel %vm769, 0.0, %v1756
      %v1784 = vsel %vm770, 0.0, %v1755
      %v1785 = vsel %vm771, 0.0, %v1754
      %v1786 = vsel %vm772, 0.0, %v1753
      %v1787 = vsel %vm773, 0.0, %v1752
      %v1788 = vsel %vm774, 0.0, %v1751
      %v1789 = vsel %vm775, 0.0, %v1750
      %v1790 = vsel %vm776, 0.0, %v1749
      %v1791 = vsel %vm777, 0.0, %v1748
      %v1792 = vsel %vm778, 0.0, %v1747
      %v1793 = vsel %vm779, 0.0, %v1746
      %v1794 = vsel %vm780, 0.0, %v1745
      %v1795 = vsel %vm781, 0.0, %v1744
      %v1796 = vsel %vm782, 0.0, %v1743
      %v1797 = vsel %vm783, 0.0, %v1742
      %v1798 = vsel %vm784, 0.0, %v1741
      %v1799 = vsel %vm785, 0.0, %v1740
      %v1800 = vsel %vm786, 0.0, %v1739
      %v1801 = vsel %vm787, 0.0, %v1738
      %v1802 = vpack.c.bf16 %v1771, %v1770
      %v1803 = vpack.c.bf16 %v1773, %v1772
      %v1804 = vpack.c.bf16 %v1775, %v1774
      %v1805 = vpack.c.bf16 %v1777, %v1776
      %v1806 = vpack.c.bf16 %v1779, %v1778
      %v1807 = vpack.c.bf16 %v1781, %v1780
      %v1808 = vpack.c.bf16 %v1783, %v1782
      %v1809 = vpack.c.bf16 %v1785, %v1784
      %v1810 = vpack.c.bf16 %v1787, %v1786
      %v1811 = vpack.c.bf16 %v1789, %v1788
      %v1812 = vpack.c.bf16 %v1791, %v1790
      %v1813 = vpack.c.bf16 %v1793, %v1792
      %v1814 = vpack.c.bf16 %v1795, %v1794
      %v1815 = vpack.c.bf16 %v1797, %v1796
      %v1816 = vpack.c.bf16 %v1799, %v1798
      %v1817 = vpack.c.bf16 %v1801, %v1800
      %v1834 = vunpack.c.l.b16 %v1802
      %v1835 = vunpack.c.h.b16 %v1802
      %v1836 = vunpack.c.l.b16 %v1803
      %v1837 = vunpack.c.h.b16 %v1803
      %v1838 = vunpack.c.l.b16 %v1804
      %v1839 = vunpack.c.h.b16 %v1804
      %v1840 = vunpack.c.l.b16 %v1805
      %v1841 = vunpack.c.h.b16 %v1805
      %v1842 = vunpack.c.l.b16 %v1806
      %v1843 = vunpack.c.h.b16 %v1806
      %v1844 = vunpack.c.l.b16 %v1807
      %v1845 = vunpack.c.h.b16 %v1807
      %v1846 = vunpack.c.l.b16 %v1808
      %v1847 = vunpack.c.h.b16 %v1808
      %v1848 = vunpack.c.l.b16 %v1809
      %v1849 = vunpack.c.h.b16 %v1809
      %v1850 = vunpack.c.l.b16 %v1810
      %v1851 = vunpack.c.h.b16 %v1810
      %v1852 = vunpack.c.l.b16 %v1811
      %v1853 = vunpack.c.h.b16 %v1811
      %v1854 = vunpack.c.l.b16 %v1812
      %v1855 = vunpack.c.h.b16 %v1812
      %v1856 = vunpack.c.l.b16 %v1813
      %v1857 = vunpack.c.h.b16 %v1813
      %v1858 = vunpack.c.l.b16 %v1814
      %v1859 = vunpack.c.h.b16 %v1814
      %v1860 = vunpack.c.l.b16 %v1815
      %v1861 = vunpack.c.h.b16 %v1815
      %v1862 = vunpack.c.l.b16 %v1816
      %v1863 = vunpack.c.h.b16 %v1816
      %v1864 = vunpack.c.l.b16 %v1817
      %v1865 = vunpack.c.h.b16 %v1817
      %v1866 = vpack.c.b16 %v1834, %v1834
      %v1867 = vpack.c.b16 %v1835, %v1835
      %v1868 = vpack.c.b16 %v1836, %v1836
      %v1869 = vpack.c.b16 %v1837, %v1837
      %v1870 = vpack.c.b16 %v1838, %v1838
      %v1871 = vpack.c.b16 %v1839, %v1839
      %v1872 = vpack.c.b16 %v1840, %v1840
      %v1873 = vpack.c.b16 %v1841, %v1841
      %v1874 = vpack.c.b16 %v1842, %v1842
      %v1875 = vpack.c.b16 %v1843, %v1843
      %v1876 = vpack.c.b16 %v1844, %v1844
      %v1877 = vpack.c.b16 %v1845, %v1845
      %v1878 = vpack.c.b16 %v1846, %v1846
      %v1879 = vpack.c.b16 %v1847, %v1847
      %v1880 = vpack.c.b16 %v1848, %v1848
      %v1881 = vpack.c.b16 %v1849, %v1849
      %v1882 = vpack.c.b16 %v1850, %v1850
      %v1883 = vpack.c.b16 %v1851, %v1851
      %v1884 = vpack.c.b16 %v1852, %v1852
      %v1885 = vpack.c.b16 %v1853, %v1853
      %v1886 = vpack.c.b16 %v1854, %v1854
      %v1887 = vpack.c.b16 %v1855, %v1855
      %v1888 = vpack.c.b16 %v1856, %v1856
      %v1889 = vpack.c.b16 %v1857, %v1857
      %v1890 = vpack.c.b16 %v1858, %v1858
      %v1891 = vpack.c.b16 %v1859, %v1859
      %v1892 = vpack.c.b16 %v1860, %v1860
      %v1893 = vpack.c.b16 %v1861, %v1861
      %v1894 = vpack.c.b16 %v1862, %v1862
      %v1895 = vpack.c.b16 %v1863, %v1863
      %v1896 = vpack.c.b16 %v1864, %v1864
      %v1897 = vpack.c.b16 %v1865, %v1865
      %vm1930 = vcmask 257024
      %1931 = vst.msk [vmem:[#allocation2 + $0x8] sm:$0xf] %vm1930, %v1866
      %1932 = vst.msk [vmem:[#allocation2 + $0xc] sm:$0xf] %vm1930, %v1867
      %1933 = vst.msk [vmem:[#allocation2 + $0x10] sm:$0xf] %vm1930, %v1868
      %1934 = vst.msk [vmem:[#allocation2 + $0x14] sm:$0xf] %vm1930, %v1869
      %1935 = vst.msk [vmem:[#allocation2 + $0x18] sm:$0xf] %vm1930, %v1870
      %1936 = vst.msk [vmem:[#allocation2 + $0x1c] sm:$0xf] %vm1930, %v1871
      %1937 = vst.msk [vmem:[#allocation2 + $0x20] sm:$0xf] %vm1930, %v1872
      %1938 = vst.msk [vmem:[#allocation2 + $0x24] sm:$0xf] %vm1930, %v1873
      %1939 = vst.msk [vmem:[#allocation2 + $0x28] sm:$0xf] %vm1930, %v1874
      %1940 = vst.msk [vmem:[#allocation2 + $0x2c] sm:$0xf] %vm1930, %v1875
      %1941 = vst.msk [vmem:[#allocation2 + $0x30] sm:$0xf] %vm1930, %v1876
      %1942 = vst.msk [vmem:[#allocation2 + $0x34] sm:$0xf] %vm1930, %v1877
      %1943 = vst.msk [vmem:[#allocation2 + $0x38] sm:$0xf] %vm1930, %v1878
      %1944 = vst.msk [vmem:[#allocation2 + $0x3c] sm:$0xf] %vm1930, %v1879
      %1945 = vst.msk [vmem:[#allocation2 + $0x40] sm:$0xf] %vm1930, %v1880
      %1946 = vst.msk [vmem:[#allocation2 + $0x44] sm:$0xf] %vm1930, %v1881
      %1947 = vst.msk [vmem:[#allocation2 + $0x48] sm:$0xf] %vm1930, %v1882
      %1948 = vst.msk [vmem:[#allocation2 + $0x4c] sm:$0xf] %vm1930, %v1883
      %1949 = vst.msk [vmem:[#allocation2 + $0x50] sm:$0xf] %vm1930, %v1884
      %1950 = vst.msk [vmem:[#allocation2 + $0x54] sm:$0xf] %vm1930, %v1885
      %1951 = vst.msk [vmem:[#allocation2 + $0x58] sm:$0xf] %vm1930, %v1886
      %1952 = vst.msk [vmem:[#allocation2 + $0x5c] sm:$0xf] %vm1930, %v1887
      %1953 = vst.msk [vmem:[#allocation2 + $0x60] sm:$0xf] %vm1930, %v1888
      %1954 = vst.msk [vmem:[#allocation2 + $0x64] sm:$0xf] %vm1930, %v1889
      %1955 = vst.msk [vmem:[#allocation2 + $0x68] sm:$0xf] %vm1930, %v1890
      %1956 = vst.msk [vmem:[#allocation2 + $0x6c] sm:$0xf] %vm1930, %v1891
      %1957 = vst.msk [vmem:[#allocation2 + $0x70] sm:$0xf] %vm1930, %v1892
      %1958 = vst.msk [vmem:[#allocation2 + $0x74] sm:$0xf] %vm1930, %v1893
      %1959 = vst.msk [vmem:[#allocation2 + $0x78] sm:$0xf] %vm1930, %v1894
      %1960 = vst.msk [vmem:[#allocation2 + $0x7c] sm:$0xf] %vm1930, %v1895
      %1961 = vst.msk [vmem:[#allocation2 + $0x80] sm:$0xf] %vm1930, %v1896
      %1962 = vst.msk [vmem:[#allocation2 + $0x84] sm:$0xf] %vm1930, %v1897
      %v1963 = vrot.slane %v1448, 1
      %v1964 = vrot.slane %v1449, 1
      %v1965 = vrot.slane %v1450, 1
      %v1966 = vrot.slane %v1451, 1
      %v1967 = vrot.slane %v1452, 1
      %v1968 = vrot.slane %v1453, 1
      %v1969 = vrot.slane %v1454, 1
      %v1970 = vrot.slane %v1455, 1
      %v1971 = vrot.slane %v1456, 1
      %v1972 = vrot.slane %v1457, 1
      %v1973 = vrot.slane %v1458, 1
      %v1974 = vrot.slane %v1459, 1
      %v1975 = vrot.slane %v1460, 1
      %v1976 = vrot.slane %v1461, 1
      %v1977 = vrot.slane %v1462, 1
      %v1978 = vrot.slane %v1463, 1
      %v1979 = vrot.slane %v1464, 1
      %v1980 = vrot.slane %v1465, 1
      %v1981 = vrot.slane %v1466, 1
      %v1982 = vrot.slane %v1467, 1
      %v1983 = vrot.slane %v1468, 1
      %v1984 = vrot.slane %v1469, 1
      %v1985 = vrot.slane %v1470, 1
      %v1986 = vrot.slane %v1471, 1
      %v1987 = vrot.slane %v1472, 1
      %v1988 = vrot.slane %v1473, 1
      %v1989 = vrot.slane %v1474, 1
      %v1990 = vrot.slane %v1475, 1
      %v1991 = vrot.slane %v1476, 1
      %v1992 = vrot.slane %v1477, 1
      %v1993 = vrot.slane %v1478, 1
      %v1994 = vrot.slane %v1479, 1
      %vm1995 = vcmp.lt.s32.totalorder %v340, 7
      %v1996 = vsel %vm1995, %v1993, %v1994
      %v1997 = vsel %vm1995, %v1992, %v1993
      %v1998 = vsel %vm1995, %v1991, %v1992
      %v1999 = vsel %vm1995, %v1990, %v1991
      %v2000 = vsel %vm1995, %v1989, %v1990
      %v2001 = vsel %vm1995, %v1988, %v1989
      %v2002 = vsel %vm1995, %v1987, %v1988
      %v2003 = vsel %vm1995, %v1986, %v1987
      %v2004 = vsel %vm1995, %v1985, %v1986
      %v2005 = vsel %vm1995, %v1984, %v1985
      %v2006 = vsel %vm1995, %v1983, %v1984
      %v2007 = vsel %vm1995, %v1982, %v1983
      %v2008 = vsel %vm1995, %v1981, %v1982
      %v2009 = vsel %vm1995, %v1980, %v1981
      %v2010 = vsel %vm1995, %v1979, %v1980
      %v2011 = vsel %vm1995, %v1978, %v1979
      %v2012 = vsel %vm1995, %v1977, %v1978
      %v2013 = vsel %vm1995, %v1976, %v1977
      %v2014 = vsel %vm1995, %v1975, %v1976
      %v2015 = vsel %vm1995, %v1974, %v1975
      %v2016 = vsel %vm1995, %v1973, %v1974
      %v2017 = vsel %vm1995, %v1972, %v1973
      %v2018 = vsel %vm1995, %v1971, %v1972
      %v2019 = vsel %vm1995, %v1970, %v1971
      %v2020 = vsel %vm1995, %v1969, %v1970
      %v2021 = vsel %vm1995, %v1968, %v1969
      %v2022 = vsel %vm1995, %v1967, %v1968
      %v2023 = vsel %vm1995, %v1966, %v1967
      %v2024 = vsel %vm1995, %v1965, %v1966
      %v2025 = vsel %vm1995, %v1964, %v1965
      %v2026 = vsel %vm1995, %v1963, %v1964
      %v2027 = vsel %vm1995, %v1994, %v1963
      %v2028 = vsel %vm788, 0.0, %v2026
      %v2029 = vsel %vm789, 0.0, %v2025
      %v2030 = vsel %vm790, 0.0, %v2024
      %v2031 = vsel %vm791, 0.0, %v2023
      %v2032 = vsel %vm792, 0.0, %v2022
      %v2033 = vsel %vm793, 0.0, %v2021
      %v2034 = vsel %vm794, 0.0, %v2020
      %v2035 = vsel %vm795, 0.0, %v2019
      %v2036 = vsel %vm796, 0.0, %v2018
      %v2037 = vsel %vm797, 0.0, %v2017
      %v2038 = vsel %vm798, 0.0, %v2016
      %v2039 = vsel %vm799, 0.0, %v2015
      %v2040 = vsel %vm800, 0.0, %v2014
      %v2041 = vsel %vm801, 0.0, %v2013
      %v2042 = vsel %vm802, 0.0, %v2012
      %v2043 = vsel %vm803, 0.0, %v2011
      %v2044 = vsel %vm804, 0.0, %v2010
      %v2045 = vsel %vm805, 0.0, %v2009
      %v2046 = vsel %vm806, 0.0, %v2008
      %v2047 = vsel %vm807, 0.0, %v2007
      %v2048 = vsel %vm808, 0.0, %v2006
      %v2049 = vsel %vm809, 0.0, %v2005
      %v2050 = vsel %vm810, 0.0, %v2004
      %v2051 = vsel %vm811, 0.0, %v2003
      %v2052 = vsel %vm812, 0.0, %v2002
      %v2053 = vsel %vm813, 0.0, %v2001
      %v2054 = vsel %vm814, 0.0, %v2000
      %v2055 = vsel %vm815, 0.0, %v1999
      %v2056 = vsel %vm816, 0.0, %v1998
      %v2057 = vsel %vm817, 0.0, %v1997
      %v2058 = vsel %vm818, 0.0, %v1996
      %v2059 = vsel %vm819, 0.0, %v2027
      %v2060 = vpack.c.bf16 %v2029, %v2028
      %v2061 = vpack.c.bf16 %v2031, %v2030
      %v2062 = vpack.c.bf16 %v2033, %v2032
      %v2063 = vpack.c.bf16 %v2035, %v2034
      %v2064 = vpack.c.bf16 %v2037, %v2036
      %v2065 = vpack.c.bf16 %v2039, %v2038
      %v2066 = vpack.c.bf16 %v2041, %v2040
      %v2067 = vpack.c.bf16 %v2043, %v2042
      %v2068 = vpack.c.bf16 %v2045, %v2044
      %v2069 = vpack.c.bf16 %v2047, %v2046
      %v2070 = vpack.c.bf16 %v2049, %v2048
      %v2071 = vpack.c.bf16 %v2051, %v2050
      %v2072 = vpack.c.bf16 %v2053, %v2052
      %v2073 = vpack.c.bf16 %v2055, %v2054
      %v2074 = vpack.c.bf16 %v2057, %v2056
      %v2075 = vpack.c.bf16 %v2059, %v2058
      %v2092 = vunpack.c.l.b16 %v2060
      %v2093 = vunpack.c.h.b16 %v2060
      %v2094 = vunpack.c.l.b16 %v2061
      %v2095 = vunpack.c.h.b16 %v2061
      %v2096 = vunpack.c.l.b16 %v2062
      %v2097 = vunpack.c.h.b16 %v2062
      %v2098 = vunpack.c.l.b16 %v2063
      %v2099 = vunpack.c.h.b16 %v2063
      %v2100 = vunpack.c.l.b16 %v2064
      %v2101 = vunpack.c.h.b16 %v2064
      %v2102 = vunpack.c.l.b16 %v2065
      %v2103 = vunpack.c.h.b16 %v2065
      %v2104 = vunpack.c.l.b16 %v2066
      %v2105 = vunpack.c.h.b16 %v2066
      %v2106 = vunpack.c.l.b16 %v2067
      %v2107 = vunpack.c.h.b16 %v2067
      %v2108 = vunpack.c.l.b16 %v2068
      %v2109 = vunpack.c.h.b16 %v2068
      %v2110 = vunpack.c.l.b16 %v2069
      %v2111 = vunpack.c.h.b16 %v2069
      %v2112 = vunpack.c.l.b16 %v2070
      %v2113 = vunpack.c.h.b16 %v2070
      %v2114 = vunpack.c.l.b16 %v2071
      %v2115 = vunpack.c.h.b16 %v2071
      %v2116 = vunpack.c.l.b16 %v2072
      %v2117 = vunpack.c.h.b16 %v2072
      %v2118 = vunpack.c.l.b16 %v2073
      %v2119 = vunpack.c.h.b16 %v2073
      %v2120 = vunpack.c.l.b16 %v2074
      %v2121 = vunpack.c.h.b16 %v2074
      %v2122 = vunpack.c.l.b16 %v2075
      %v2123 = vunpack.c.h.b16 %v2075
      %v2124 = vpack.c.b16 %v2092, %v2092
      %v2125 = vpack.c.b16 %v2093, %v2093
      %v2126 = vpack.c.b16 %v2094, %v2094
      %v2127 = vpack.c.b16 %v2095, %v2095
      %v2128 = vpack.c.b16 %v2096, %v2096
      %v2129 = vpack.c.b16 %v2097, %v2097
      %v2130 = vpack.c.b16 %v2098, %v2098
      %v2131 = vpack.c.b16 %v2099, %v2099
      %v2132 = vpack.c.b16 %v2100, %v2100
      %v2133 = vpack.c.b16 %v2101, %v2101
      %v2134 = vpack.c.b16 %v2102, %v2102
      %v2135 = vpack.c.b16 %v2103, %v2103
      %v2136 = vpack.c.b16 %v2104, %v2104
      %v2137 = vpack.c.b16 %v2105, %v2105
      %v2138 = vpack.c.b16 %v2106, %v2106
      %v2139 = vpack.c.b16 %v2107, %v2107
      %v2140 = vpack.c.b16 %v2108, %v2108
      %v2141 = vpack.c.b16 %v2109, %v2109
      %v2142 = vpack.c.b16 %v2110, %v2110
      %v2143 = vpack.c.b16 %v2111, %v2111
      %v2144 = vpack.c.b16 %v2112, %v2112
      %v2145 = vpack.c.b16 %v2113, %v2113
      %v2146 = vpack.c.b16 %v2114, %v2114
      %v2147 = vpack.c.b16 %v2115, %v2115
      %v2148 = vpack.c.b16 %v2116, %v2116
      %v2149 = vpack.c.b16 %v2117, %v2117
      %v2150 = vpack.c.b16 %v2118, %v2118
      %v2151 = vpack.c.b16 %v2119, %v2119
      %v2152 = vpack.c.b16 %v2120, %v2120
      %v2153 = vpack.c.b16 %v2121, %v2121
      %v2154 = vpack.c.b16 %v2122, %v2122
      %v2155 = vpack.c.b16 %v2123, %v2123
      %2156 = vrot.lane.b32.xlu0 %v2124, 64
      %v2157 = vpop.permute.xlu0 %2156
      %2158 = vrot.lane.b32.xlu0 %v2125, 64
      %v2159 = vpop.permute.xlu0 %2158
      %2160 = vrot.lane.b32.xlu0 %v2126, 64
      %v2161 = vpop.permute.xlu0 %2160
      %2162 = vrot.lane.b32.xlu0 %v2127, 64
      %v2163 = vpop.permute.xlu0 %2162
      %2164 = vrot.lane.b32.xlu0 %v2128, 64
      %v2165 = vpop.permute.xlu0 %2164
      %2166 = vrot.lane.b32.xlu0 %v2129, 64
      %v2167 = vpop.permute.xlu0 %2166
      %2168 = vrot.lane.b32.xlu0 %v2130, 64
      %v2169 = vpop.permute.xlu0 %2168
      %2170 = vrot.lane.b32.xlu0 %v2131, 64
      %v2171 = vpop.permute.xlu0 %2170
      %2172 = vrot.lane.b32.xlu0 %v2132, 64
      %v2173 = vpop.permute.xlu0 %2172
      %2174 = vrot.lane.b32.xlu0 %v2133, 64
      %v2175 = vpop.permute.xlu0 %2174
      %2176 = vrot.lane.b32.xlu0 %v2134, 64
      %v2177 = vpop.permute.xlu0 %2176
      %2178 = vrot.lane.b32.xlu0 %v2135, 64
      %v2179 = vpop.permute.xlu0 %2178
      %2180 = vrot.lane.b32.xlu0 %v2136, 64
      %v2181 = vpop.permute.xlu0 %2180
      %2182 = vrot.lane.b32.xlu0 %v2137, 64
      %v2183 = vpop.permute.xlu0 %2182
      %2184 = vrot.lane.b32.xlu0 %v2138, 64
      %v2185 = vpop.permute.xlu0 %2184
      %2186 = vrot.lane.b32.xlu0 %v2139, 64
      %v2187 = vpop.permute.xlu0 %2186
      %2188 = vrot.lane.b32.xlu0 %v2140, 64
      %v2189 = vpop.permute.xlu0 %2188
      %2190 = vrot.lane.b32.xlu0 %v2141, 64
      %v2191 = vpop.permute.xlu0 %2190
      %2192 = vrot.lane.b32.xlu0 %v2142, 64
      %v2193 = vpop.permute.xlu0 %2192
      %2194 = vrot.lane.b32.xlu0 %v2143, 64
      %v2195 = vpop.permute.xlu0 %2194
      %2196 = vrot.lane.b32.xlu0 %v2144, 64
      %v2197 = vpop.permute.xlu0 %2196
      %2198 = vrot.lane.b32.xlu0 %v2145, 64
      %v2199 = vpop.permute.xlu0 %2198
      %2200 = vrot.lane.b32.xlu0 %v2146, 64
      %v2201 = vpop.permute.xlu0 %2200
      %2202 = vrot.lane.b32.xlu0 %v2147, 64
      %v2203 = vpop.permute.xlu0 %2202
      %2204 = vrot.lane.b32.xlu0 %v2148, 64
      %v2205 = vpop.permute.xlu0 %2204
      %2206 = vrot.lane.b32.xlu0 %v2149, 64
      %v2207 = vpop.permute.xlu0 %2206
      %2208 = vrot.lane.b32.xlu0 %v2150, 64
      %v2209 = vpop.permute.xlu0 %2208
      %2210 = vrot.lane.b32.xlu0 %v2151, 64
      %v2211 = vpop.permute.xlu0 %2210
      %2212 = vrot.lane.b32.xlu0 %v2152, 64
      %v2213 = vpop.permute.xlu0 %2212
      %2214 = vrot.lane.b32.xlu0 %v2153, 64
      %v2215 = vpop.permute.xlu0 %2214
      %2216 = vrot.lane.b32.xlu0 %v2154, 64
      %v2217 = vpop.permute.xlu0 %2216
      %2218 = vrot.lane.b32.xlu0 %v2155, 64
      %v2219 = vpop.permute.xlu0 %2218
      %vm2252 = vcmask 781824
      %2253 = vst.msk [vmem:[#allocation2 + $0x8] sm:$0xf] %vm2252, %v2157
      %2254 = vst.msk [vmem:[#allocation2 + $0xc] sm:$0xf] %vm2252, %v2159
      %2255 = vst.msk [vmem:[#allocation2 + $0x10] sm:$0xf] %vm2252, %v2161
      %2256 = vst.msk [vmem:[#allocation2 + $0x14] sm:$0xf] %vm2252, %v2163
      %2257 = vst.msk [vmem:[#allocation2 + $0x18] sm:$0xf] %vm2252, %v2165
      %2258 = vst.msk [vmem:[#allocation2 + $0x1c] sm:$0xf] %vm2252, %v2167
      %2259 = vst.msk [vmem:[#allocation2 + $0x20] sm:$0xf] %vm2252, %v2169
      %2260 = vst.msk [vmem:[#allocation2 + $0x24] sm:$0xf] %vm2252, %v2171
      %2261 = vst.msk [vmem:[#allocation2 + $0x28] sm:$0xf] %vm2252, %v2173
      %2262 = vst.msk [vmem:[#allocation2 + $0x2c] sm:$0xf] %vm2252, %v2175
      %2263 = vst.msk [vmem:[#allocation2 + $0x30] sm:$0xf] %vm2252, %v2177
      %2264 = vst.msk [vmem:[#allocation2 + $0x34] sm:$0xf] %vm2252, %v2179
      %2265 = vst.msk [vmem:[#allocation2 + $0x38] sm:$0xf] %vm2252, %v2181
      %2266 = vst.msk [vmem:[#allocation2 + $0x3c] sm:$0xf] %vm2252, %v2183
      %2267 = vst.msk [vmem:[#allocation2 + $0x40] sm:$0xf] %vm2252, %v2185
      %2268 = vst.msk [vmem:[#allocation2 + $0x44] sm:$0xf] %vm2252, %v2187
      %2269 = vst.msk [vmem:[#allocation2 + $0x48] sm:$0xf] %vm2252, %v2189
      %2270 = vst.msk [vmem:[#allocation2 + $0x4c] sm:$0xf] %vm2252, %v2191
      %2271 = vst.msk [vmem:[#allocation2 + $0x50] sm:$0xf] %vm2252, %v2193
      %2272 = vst.msk [vmem:[#allocation2 + $0x54] sm:$0xf] %vm2252, %v2195
      %2273 = vst.msk [vmem:[#allocation2 + $0x58] sm:$0xf] %vm2252, %v2197
      %2274 = vst.msk [vmem:[#allocation2 + $0x5c] sm:$0xf] %vm2252, %v2199
      %2275 = vst.msk [vmem:[#allocation2 + $0x60] sm:$0xf] %vm2252, %v2201
      %2276 = vst.msk [vmem:[#allocation2 + $0x64] sm:$0xf] %vm2252, %v2203
      %2277 = vst.msk [vmem:[#allocation2 + $0x68] sm:$0xf] %vm2252, %v2205
      %2278 = vst.msk [vmem:[#allocation2 + $0x6c] sm:$0xf] %vm2252, %v2207
      %2279 = vst.msk [vmem:[#allocation2 + $0x70] sm:$0xf] %vm2252, %v2209
      %2280 = vst.msk [vmem:[#allocation2 + $0x74] sm:$0xf] %vm2252, %v2211
      %2281 = vst.msk [vmem:[#allocation2 + $0x78] sm:$0xf] %vm2252, %v2213
      %2282 = vst.msk [vmem:[#allocation2 + $0x7c] sm:$0xf] %vm2252, %v2215
      %2283 = vst.msk [vmem:[#allocation2 + $0x80] sm:$0xf] %vm2252, %v2217
      %2284 = vst.msk [vmem:[#allocation2 + $0x84] sm:$0xf] %vm2252, %v2219
      %v2285 = vld [vmem:[#allocation2] sm:$0xf]
      %v2286 = vld [vmem:[#allocation2 + $0x4] sm:$0xf]
      %v2287 = vld [vmem:[#allocation2 + $0x8] sm:$0xf]
      %v2288 = vld [vmem:[#allocation2 + $0xc] sm:$0xf]
      %v2289 = vld [vmem:[#allocation2 + $0x10] sm:$0xf]
      %v2290 = vld [vmem:[#allocation2 + $0x14] sm:$0xf]
      %v2291 = vld [vmem:[#allocation2 + $0x18] sm:$0xf]
      %v2292 = vld [vmem:[#allocation2 + $0x1c] sm:$0xf]
      %v2293 = vld [vmem:[#allocation2 + $0x20] sm:$0xf]
      %v2294 = vld [vmem:[#allocation2 + $0x24] sm:$0xf]
      %v2295 = vld [vmem:[#allocation2 + $0x28] sm:$0xf]
      %v2296 = vld [vmem:[#allocation2 + $0x2c] sm:$0xf]
      %v2297 = vld [vmem:[#allocation2 + $0x30] sm:$0xf]
      %v2298 = vld [vmem:[#allocation2 + $0x34] sm:$0xf]
      %v2299 = vld [vmem:[#allocation2 + $0x38] sm:$0xf]
      %v2300 = vld [vmem:[#allocation2 + $0x3c] sm:$0xf]
      %v2301 = vld [vmem:[#allocation2 + $0x40] sm:$0xf]
      %v2302 = vld [vmem:[#allocation2 + $0x44] sm:$0xf]
      %v2303 = vld [vmem:[#allocation2 + $0x48] sm:$0xf]
      %v2304 = vld [vmem:[#allocation2 + $0x4c] sm:$0xf]
      %v2305 = vld [vmem:[#allocation2 + $0x50] sm:$0xf]
      %v2306 = vld [vmem:[#allocation2 + $0x54] sm:$0xf]
      %v2307 = vld [vmem:[#allocation2 + $0x58] sm:$0xf]
      %v2308 = vld [vmem:[#allocation2 + $0x5c] sm:$0xf]
      %v2309 = vld [vmem:[#allocation2 + $0x60] sm:$0xf]
      %v2310 = vld [vmem:[#allocation2 + $0x64] sm:$0xf]
      %v2311 = vld [vmem:[#allocation2 + $0x68] sm:$0xf]
      %v2312 = vld [vmem:[#allocation2 + $0x6c] sm:$0xf]
      %v2313 = vld [vmem:[#allocation2 + $0x70] sm:$0xf]
      %v2314 = vld [vmem:[#allocation2 + $0x74] sm:$0xf]
      %v2315 = vld [vmem:[#allocation2 + $0x78] sm:$0xf]
      %v2316 = vld [vmem:[#allocation2 + $0x7c] sm:$0xf]
      %v2317 = vld [vmem:[%s3] sm:$0xf]
      %v2318 = vld [vmem:[%s3 + $0x4] sm:$0xf]
      %v2319 = vld [vmem:[%s3 + $0x8] sm:$0xf]
      %v2320 = vld [vmem:[%s3 + $0xc] sm:$0xf]
      %v2321 = vld [vmem:[%s3 + $0x10] sm:$0xf]
      %v2322 = vld [vmem:[%s3 + $0x14] sm:$0xf]
      %v2323 = vld [vmem:[%s3 + $0x18] sm:$0xf]
      %v2324 = vld [vmem:[%s3 + $0x1c] sm:$0xf]
      %v2325 = vld [vmem:[%s3 + $0x20] sm:$0xf]
      %v2326 = vld [vmem:[%s3 + $0x24] sm:$0xf]
      %v2327 = vld [vmem:[%s3 + $0x28] sm:$0xf]
      %v2328 = vld [vmem:[%s3 + $0x2c] sm:$0xf]
      %v2329 = vld [vmem:[%s4] sm:$0x1]
      %v2331 = vlaneseq
      %v2332 = vshrl.u32 %v2331, 7
      %v2333 = vsub.s32 0, %v2332
      %v2334 = vrot.slane %v2329, %v2333
      %v2368 = vunpack.c.l.b16 %v2285
      %v2369 = vunpack.c.l.b16 %v2286
      %v2370 = vunpack.c.l.b16 %v2287
      %v2371 = vunpack.c.l.b16 %v2288
      %v2372 = vunpack.c.l.b16 %v2289
      %v2373 = vunpack.c.l.b16 %v2290
      %v2374 = vunpack.c.l.b16 %v2291
      %v2375 = vunpack.c.l.b16 %v2292
      %v2376 = vunpack.c.l.b16 %v2293
      %v2377 = vunpack.c.l.b16 %v2294
      %v2378 = vunpack.c.l.b16 %v2295
      %v2379 = vunpack.c.l.b16 %v2296
      %v2380 = vunpack.c.l.b16 %v2297
      %v2381 = vunpack.c.l.b16 %v2298
      %v2382 = vunpack.c.l.b16 %v2299
      %v2383 = vunpack.c.l.b16 %v2300
      %v2384 = vunpack.c.l.b16 %v2301
      %v2385 = vunpack.c.l.b16 %v2302
      %v2386 = vunpack.c.l.b16 %v2303
      %v2387 = vunpack.c.l.b16 %v2304
      %v2388 = vunpack.c.l.b16 %v2305
      %v2389 = vunpack.c.l.b16 %v2306
      %v2390 = vunpack.c.l.b16 %v2307
      %v2391 = vunpack.c.l.b16 %v2308
      %v2392 = vunpack.c.l.b16 %v2309
      %v2393 = vunpack.c.l.b16 %v2310
      %v2394 = vunpack.c.l.b16 %v2311
      %v2395 = vunpack.c.l.b16 %v2312
      %v2396 = vunpack.c.l.b16 %v2313
      %v2397 = vunpack.c.l.b16 %v2314
      %v2398 = vunpack.c.l.b16 %v2315
      %v2399 = vunpack.c.l.b16 %v2316
      %v2400 = vpack.c.b16 %v2369, %v2368
      %v2401 = vpack.c.b16 %v2371, %v2370
      %v2402 = vpack.c.b16 %v2373, %v2372
      %v2403 = vpack.c.b16 %v2375, %v2374
      %v2404 = vpack.c.b16 %v2377, %v2376
      %v2405 = vpack.c.b16 %v2379, %v2378
      %v2406 = vpack.c.b16 %v2381, %v2380
      %v2407 = vpack.c.b16 %v2383, %v2382
      %v2408 = vpack.c.b16 %v2385, %v2384
      %v2409 = vpack.c.b16 %v2387, %v2386
      %v2410 = vpack.c.b16 %v2389, %v2388
      %v2411 = vpack.c.b16 %v2391, %v2390
      %v2412 = vpack.c.b16 %v2393, %v2392
      %v2413 = vpack.c.b16 %v2395, %v2394
      %v2414 = vpack.c.b16 %v2397, %v2396
      %v2415 = vpack.c.b16 %v2399, %v2398
      %v2428 = vunpack.c.l.b16 %v2317
      %v2429 = vunpack.c.l.b16 %v2318
      %v2430 = vunpack.c.l.b16 %v2319
      %v2431 = vunpack.c.l.b16 %v2320
      %v2432 = vunpack.c.l.b16 %v2321
      %v2433 = vunpack.c.l.b16 %v2322
      %v2434 = vunpack.c.l.b16 %v2323
      %v2435 = vunpack.c.l.b16 %v2324
      %v2436 = vunpack.c.l.b16 %v2325
      %v2437 = vunpack.c.l.b16 %v2326
      %v2438 = vunpack.c.l.b16 %v2327
      %v2439 = vunpack.c.l.b16 %v2328
      %v2440 = vpack.c.b16 %v2429, %v2428
      %v2441 = vpack.c.b16 %v2431, %v2430
      %v2442 = vpack.c.b16 %v2433, %v2432
      %v2443 = vpack.c.b16 %v2435, %v2434
      %v2444 = vpack.c.b16 %v2437, %v2436
      %v2445 = vpack.c.b16 %v2439, %v2438
      %vm2452 = vcmask 785408
      %v2454 = vsel %vm2452, %v2400, 0
      %v2457 = vsel %vm2452, %v2401, 0
      %v2460 = vsel %vm2452, %v2402, 0
      %v2463 = vsel %vm2452, %v2403, 0
      %v2466 = vsel %vm2452, %v2404, 0
      %v2469 = vsel %vm2452, %v2405, 0
      %v2472 = vsel %vm2452, %v2406, 0
      %v2475 = vsel %vm2452, %v2407, 0
      %v2478 = vsel %vm2452, %v2408, 0
      %v2481 = vsel %vm2452, %v2409, 0
      %v2484 = vsel %vm2452, %v2410, 0
      %v2487 = vsel %vm2452, %v2411, 0
      %v2490 = vsel %vm2452, %v2412, 0
      %v2493 = vsel %vm2452, %v2413, 0
      %v2496 = vsel %vm2452, %v2414, 0
      %v2499 = vsel %vm2452, %v2415, 0
      %2501 = vmatprep.subr.bf16.mxu0 0
      %2502 = vmatpush1.bf16.msra.mxu0 0
      %2503 = vmatprep.subr.bf16.mxu0 0
      %2504 = vmatpush1.bf16.msra.mxu0 0
      %2505 = vmatprep.subr.bf16.mxu0 0
      %2506 = vmatpush1.bf16.msra.mxu0 %v2445
      %2507 = vmatprep.subr.bf16.mxu0 0
      %2508 = vmatpush1.bf16.msra.mxu0 %v2444
      %2509 = vmatprep.subr.bf16.mxu0 0
      %2510 = vmatpush1.bf16.msra.mxu0 %v2443
      %2511 = vmatprep.subr.bf16.mxu0 0
      %2512 = vmatpush1.bf16.msra.mxu0 %v2442
      %2513 = vmatprep.subr.bf16.mxu0 0
      %2514 = vmatpush1.bf16.msra.mxu0 %v2441
      %2515 = vmatprep.subr.bf16.mxu0 0
      %2516 = vmatpush1.bf16.msra.mxu0 %v2440
      %2517 = vmatprep.subr.bf16.mxu0 0
      %2518 = vmatpush2.bf16.msra.mxu0 0
      %2519 = vmatprep.subr.bf16.mxu0 0
      %2520 = vmatpush2.bf16.msra.mxu0 0
      %2521 = vmatprep.subr.bf16.mxu0 0
      %2522 = vmatpush2.bf16.msra.mxu0 0
      %2523 = vmatprep.subr.bf16.mxu0 0
      %2524 = vmatpush2.bf16.msra.mxu0 0
      %2525 = vmatprep.subr.bf16.mxu0 0
      %2526 = vmatpush2.bf16.msra.mxu0 0
      %2527 = vmatprep.subr.bf16.mxu0 0
      %2528 = vmatpush2.bf16.msra.mxu0 0
      %2529 = vmatprep.subr.bf16.mxu0 0
      %2530 = vmatpush2.bf16.msra.mxu0 0
      %2531 = vmatprep.subr.bf16.mxu0 0
      %2532 = vmatpush2.bf16.msra.mxu0 0
      %2533 = vmatprep.mubr.bf16.mxu0 0
      %2534 = vmatmul.mubr.bf16.gmra.mxu0 %v2454
      %v2535 = vpop.f32.mrf.mxu0
      %v2536 = vadd.f32 %v2334, %v2535
      %v2537 = vpop.f32.mrf.mxu0
      %v2538 = vpop.f32.mrf.mxu0
      %v2539 = vadd.f32 %v2334, %v2538
      %v2540 = vpop.f32.mrf.mxu0
      %2541 = vmatprep.mubr.bf16.mxu0 0
      %2542 = vmatmul.mubr.bf16.gmra.mxu0 %v2457
      %v2543 = vpop.f32.mrf.mxu0
      %v2544 = vadd.f32 %v2334, %v2543
      %v2545 = vpop.f32.mrf.mxu0
      %v2546 = vpop.f32.mrf.mxu0
      %v2547 = vadd.f32 %v2334, %v2546
      %v2548 = vpop.f32.mrf.mxu0
      %2549 = vmatprep.mubr.bf16.mxu0 0
      %2550 = vmatmul.mubr.bf16.gmra.mxu0 %v2460
      %v2551 = vpop.f32.mrf.mxu0
      %v2552 = vadd.f32 %v2334, %v2551
      %v2553 = vpop.f32.mrf.mxu0
      %v2554 = vpop.f32.mrf.mxu0
      %v2555 = vadd.f32 %v2334, %v2554
      %v2556 = vpop.f32.mrf.mxu0
      %2557 = vmatprep.mubr.bf16.mxu0 0
      %2558 = vmatmul.mubr.bf16.gmra.mxu0 %v2463
      %v2559 = vpop.f32.mrf.mxu0
      %v2560 = vadd.f32 %v2334, %v2559
      %v2561 = vpop.f32.mrf.mxu0
      %v2562 = vpop.f32.mrf.mxu0
      %v2563 = vadd.f32 %v2334, %v2562
      %v2564 = vpop.f32.mrf.mxu0
      %2565 = vmatprep.mubr.bf16.mxu0 0
      %2566 = vmatmul.mubr.bf16.gmra.mxu0 %v2466
      %v2567 = vpop.f32.mrf.mxu0
      %v2568 = vadd.f32 %v2334, %v2567
      %v2569 = vpop.f32.mrf.mxu0
      %v2570 = vpop.f32.mrf.mxu0
      %v2571 = vadd.f32 %v2334, %v2570
      %v2572 = vpop.f32.mrf.mxu0
      %2573 = vmatprep.mubr.bf16.mxu0 0
      %2574 = vmatmul.mubr.bf16.gmra.mxu0 %v2469
      %v2575 = vpop.f32.mrf.mxu0
      %v2576 = vadd.f32 %v2334, %v2575
      %v2577 = vpop.f32.mrf.mxu0
      %v2578 = vpop.f32.mrf.mxu0
      %v2579 = vadd.f32 %v2334, %v2578
      %v2580 = vpop.f32.mrf.mxu0
      %2581 = vmatprep.mubr.bf16.mxu0 0
      %2582 = vmatmul.mubr.bf16.gmra.mxu0 %v2472
      %v2583 = vpop.f32.mrf.mxu0
      %v2584 = vadd.f32 %v2334, %v2583
      %v2585 = vpop.f32.mrf.mxu0
      %v2586 = vpop.f32.mrf.mxu0
      %v2587 = vadd.f32 %v2334, %v2586
      %v2588 = vpop.f32.mrf.mxu0
      %2589 = vmatprep.mubr.bf16.mxu0 0
      %2590 = vmatmul.mubr.bf16.gmra.mxu0 %v2475
      %v2591 = vpop.f32.mrf.mxu0
      %v2592 = vadd.f32 %v2334, %v2591
      %v2593 = vpop.f32.mrf.mxu0
      %v2594 = vpop.f32.mrf.mxu0
      %v2595 = vadd.f32 %v2334, %v2594
      %v2596 = vpop.f32.mrf.mxu0
      %2597 = vmatprep.mubr.bf16.mxu0 0
      %2598 = vmatmul.mubr.bf16.gmra.mxu0 %v2478
      %v2599 = vpop.f32.mrf.mxu0
      %v2600 = vadd.f32 %v2334, %v2599
      %v2601 = vpop.f32.mrf.mxu0
      %v2602 = vpop.f32.mrf.mxu0
      %v2603 = vadd.f32 %v2334, %v2602
      %v2604 = vpop.f32.mrf.mxu0
      %2605 = vmatprep.mubr.bf16.mxu0 0
      %2606 = vmatmul.mubr.bf16.gmra.mxu0 %v2481
      %v2607 = vpop.f32.mrf.mxu0
      %v2608 = vadd.f32 %v2334, %v2607
      %v2609 = vpop.f32.mrf.mxu0
      %v2610 = vpop.f32.mrf.mxu0
      %v2611 = vadd.f32 %v2334, %v2610
      %v2612 = vpop.f32.mrf.mxu0
      %2613 = vmatprep.mubr.bf16.mxu0 0
      %2614 = vmatmul.mubr.bf16.gmra.mxu0 %v2484
      %v2615 = vpop.f32.mrf.mxu0
      %v2616 = vadd.f32 %v2334, %v2615
      %v2617 = vpop.f32.mrf.mxu0
      %v2618 = vpop.f32.mrf.mxu0
      %v2619 = vadd.f32 %v2334, %v2618
      %v2620 = vpop.f32.mrf.mxu0
      %2621 = vmatprep.mubr.bf16.mxu0 0
      %2622 = vmatmul.mubr.bf16.gmra.mxu0 %v2487
      %v2623 = vpop.f32.mrf.mxu0
      %v2624 = vadd.f32 %v2334, %v2623
      %v2625 = vpop.f32.mrf.mxu0
      %v2626 = vpop.f32.mrf.mxu0
      %v2627 = vadd.f32 %v2334, %v2626
      %v2628 = vpop.f32.mrf.mxu0
      %2629 = vmatprep.mubr.bf16.mxu0 0
      %2630 = vmatmul.mubr.bf16.gmra.mxu0 %v2490
      %v2631 = vpop.f32.mrf.mxu0
      %v2632 = vadd.f32 %v2334, %v2631
      %v2633 = vpop.f32.mrf.mxu0
      %v2634 = vpop.f32.mrf.mxu0
      %v2635 = vadd.f32 %v2334, %v2634
      %v2636 = vpop.f32.mrf.mxu0
      %2637 = vmatprep.mubr.bf16.mxu0 0
      %2638 = vmatmul.mubr.bf16.gmra.mxu0 %v2493
      %v2639 = vpop.f32.mrf.mxu0
      %v2640 = vadd.f32 %v2334, %v2639
      %v2641 = vpop.f32.mrf.mxu0
      %v2642 = vpop.f32.mrf.mxu0
      %v2643 = vadd.f32 %v2334, %v2642
      %v2644 = vpop.f32.mrf.mxu0
      %2645 = vmatprep.mubr.bf16.mxu0 0
      %2646 = vmatmul.mubr.bf16.gmra.mxu0 %v2496
      %v2647 = vpop.f32.mrf.mxu0
      %v2648 = vadd.f32 %v2334, %v2647
      %v2649 = vpop.f32.mrf.mxu0
      %v2650 = vpop.f32.mrf.mxu0
      %v2651 = vadd.f32 %v2334, %v2650
      %v2652 = vpop.f32.mrf.mxu0
      %2653 = vmatprep.mubr.bf16.mxu0 0
      %2654 = vmatmul.mubr.bf16.gmra.mxu0 %v2499
      %v2655 = vpop.f32.mrf.mxu0
      %v2656 = vadd.f32 %v2334, %v2655
      %v2657 = vpop.f32.mrf.mxu0
      %v2658 = vpop.f32.mrf.mxu0
      %v2659 = vadd.f32 %v2334, %v2658
      %v2660 = vpop.f32.mrf.mxu0
      %2661 = vdwg.mxu0
      %v2662 = vld [vmem:[#allocation2 + $0x8] sm:$0xf]
      %v2663 = vld [vmem:[#allocation2 + $0xc] sm:$0xf]
      %v2664 = vld [vmem:[#allocation2 + $0x10] sm:$0xf]
      %v2665 = vld [vmem:[#allocation2 + $0x14] sm:$0xf]
      %v2666 = vld [vmem:[#allocation2 + $0x18] sm:$0xf]
      %v2667 = vld [vmem:[#allocation2 + $0x1c] sm:$0xf]
      %v2668 = vld [vmem:[#allocation2 + $0x20] sm:$0xf]
      %v2669 = vld [vmem:[#allocation2 + $0x24] sm:$0xf]
      %v2670 = vld [vmem:[#allocation2 + $0x28] sm:$0xf]
      %v2671 = vld [vmem:[#allocation2 + $0x2c] sm:$0xf]
      %v2672 = vld [vmem:[#allocation2 + $0x30] sm:$0xf]
      %v2673 = vld [vmem:[#allocation2 + $0x34] sm:$0xf]
      %v2674 = vld [vmem:[#allocation2 + $0x38] sm:$0xf]
      %v2675 = vld [vmem:[#allocation2 + $0x3c] sm:$0xf]
      %v2676 = vld [vmem:[#allocation2 + $0x40] sm:$0xf]
      %v2677 = vld [vmem:[#allocation2 + $0x44] sm:$0xf]
      %v2678 = vld [vmem:[#allocation2 + $0x48] sm:$0xf]
      %v2679 = vld [vmem:[#allocation2 + $0x4c] sm:$0xf]
      %v2680 = vld [vmem:[#allocation2 + $0x50] sm:$0xf]
      %v2681 = vld [vmem:[#allocation2 + $0x54] sm:$0xf]
      %v2682 = vld [vmem:[#allocation2 + $0x58] sm:$0xf]
      %v2683 = vld [vmem:[#allocation2 + $0x5c] sm:$0xf]
      %v2684 = vld [vmem:[#allocation2 + $0x60] sm:$0xf]
      %v2685 = vld [vmem:[#allocation2 + $0x64] sm:$0xf]
      %v2686 = vld [vmem:[#allocation2 + $0x68] sm:$0xf]
      %v2687 = vld [vmem:[#allocation2 + $0x6c] sm:$0xf]
      %v2688 = vld [vmem:[#allocation2 + $0x70] sm:$0xf]
      %v2689 = vld [vmem:[#allocation2 + $0x74] sm:$0xf]
      %v2690 = vld [vmem:[#allocation2 + $0x78] sm:$0xf]
      %v2691 = vld [vmem:[#allocation2 + $0x7c] sm:$0xf]
      %v2692 = vld [vmem:[#allocation2 + $0x80] sm:$0xf]
      %v2693 = vld [vmem:[#allocation2 + $0x84] sm:$0xf]
      %s2694 = scalar_lea.vmem %s3, 48
      %v2695 = vld [vmem:[%s2694] sm:$0xf]
      %v2696 = vld [vmem:[%s2694 + $0x4] sm:$0xf]
      %v2697 = vld [vmem:[%s2694 + $0x8] sm:$0xf]
      %v2698 = vld [vmem:[%s2694 + $0xc] sm:$0xf]
      %v2699 = vld [vmem:[%s2694 + $0x10] sm:$0xf]
      %v2700 = vld [vmem:[%s2694 + $0x14] sm:$0xf]
      %v2701 = vld [vmem:[%s2694 + $0x18] sm:$0xf]
      %v2702 = vld [vmem:[%s2694 + $0x1c] sm:$0xf]
      %v2703 = vld [vmem:[%s2694 + $0x20] sm:$0xf]
      %v2704 = vld [vmem:[%s2694 + $0x24] sm:$0xf]
      %v2705 = vld [vmem:[%s2694 + $0x28] sm:$0xf]
      %v2706 = vld [vmem:[%s2694 + $0x2c] sm:$0xf]
      %v2739 = vunpack.c.l.b16 %v2662
      %v2740 = vunpack.c.l.b16 %v2663
      %v2741 = vunpack.c.l.b16 %v2664
      %v2742 = vunpack.c.l.b16 %v2665
      %v2743 = vunpack.c.l.b16 %v2666
      %v2744 = vunpack.c.l.b16 %v2667
      %v2745 = vunpack.c.l.b16 %v2668
      %v2746 = vunpack.c.l.b16 %v2669
      %v2747 = vunpack.c.l.b16 %v2670
      %v2748 = vunpack.c.l.b16 %v2671
      %v2749 = vunpack.c.l.b16 %v2672
      %v2750 = vunpack.c.l.b16 %v2673
      %v2751 = vunpack.c.l.b16 %v2674
      %v2752 = vunpack.c.l.b16 %v2675
      %v2753 = vunpack.c.l.b16 %v2676
      %v2754 = vunpack.c.l.b16 %v2677
      %v2755 = vunpack.c.l.b16 %v2678
      %v2756 = vunpack.c.l.b16 %v2679
      %v2757 = vunpack.c.l.b16 %v2680
      %v2758 = vunpack.c.l.b16 %v2681
      %v2759 = vunpack.c.l.b16 %v2682
      %v2760 = vunpack.c.l.b16 %v2683
      %v2761 = vunpack.c.l.b16 %v2684
      %v2762 = vunpack.c.l.b16 %v2685
      %v2763 = vunpack.c.l.b16 %v2686
      %v2764 = vunpack.c.l.b16 %v2687
      %v2765 = vunpack.c.l.b16 %v2688
      %v2766 = vunpack.c.l.b16 %v2689
      %v2767 = vunpack.c.l.b16 %v2690
      %v2768 = vunpack.c.l.b16 %v2691
      %v2769 = vunpack.c.l.b16 %v2692
      %v2770 = vunpack.c.l.b16 %v2693
      %v2771 = vpack.c.b16 %v2740, %v2739
      %v2772 = vpack.c.b16 %v2742, %v2741
      %v2773 = vpack.c.b16 %v2744, %v2743
      %v2774 = vpack.c.b16 %v2746, %v2745
      %v2775 = vpack.c.b16 %v2748, %v2747
      %v2776 = vpack.c.b16 %v2750, %v2749
      %v2777 = vpack.c.b16 %v2752, %v2751
      %v2778 = vpack.c.b16 %v2754, %v2753
      %v2779 = vpack.c.b16 %v2756, %v2755
      %v2780 = vpack.c.b16 %v2758, %v2757
      %v2781 = vpack.c.b16 %v2760, %v2759
      %v2782 = vpack.c.b16 %v2762, %v2761
      %v2783 = vpack.c.b16 %v2764, %v2763
      %v2784 = vpack.c.b16 %v2766, %v2765
      %v2785 = vpack.c.b16 %v2768, %v2767
      %v2786 = vpack.c.b16 %v2770, %v2769
      %v2799 = vunpack.c.l.b16 %v2695
      %v2800 = vunpack.c.l.b16 %v2696
      %v2801 = vunpack.c.l.b16 %v2697
      %v2802 = vunpack.c.l.b16 %v2698
      %v2803 = vunpack.c.l.b16 %v2699
      %v2804 = vunpack.c.l.b16 %v2700
      %v2805 = vunpack.c.l.b16 %v2701
      %v2806 = vunpack.c.l.b16 %v2702
      %v2807 = vunpack.c.l.b16 %v2703
      %v2808 = vunpack.c.l.b16 %v2704
      %v2809 = vunpack.c.l.b16 %v2705
      %v2810 = vunpack.c.l.b16 %v2706
      %v2811 = vpack.c.b16 %v2800, %v2799
      %v2812 = vpack.c.b16 %v2802, %v2801
      %v2813 = vpack.c.b16 %v2804, %v2803
      %v2814 = vpack.c.b16 %v2806, %v2805
      %v2815 = vpack.c.b16 %v2808, %v2807
      %v2816 = vpack.c.b16 %v2810, %v2809
      %v2824 = vsel %vm2452, %v2771, 0
      %v2827 = vsel %vm2452, %v2772, 0
      %v2830 = vsel %vm2452, %v2773, 0
      %v2833 = vsel %vm2452, %v2774, 0
      %v2836 = vsel %vm2452, %v2775, 0
      %v2839 = vsel %vm2452, %v2776, 0
      %v2842 = vsel %vm2452, %v2777, 0
      %v2845 = vsel %vm2452, %v2778, 0
      %v2848 = vsel %vm2452, %v2779, 0
      %v2851 = vsel %vm2452, %v2780, 0
      %v2854 = vsel %vm2452, %v2781, 0
      %v2857 = vsel %vm2452, %v2782, 0
      %v2860 = vsel %vm2452, %v2783, 0
      %v2863 = vsel %vm2452, %v2784, 0
      %v2866 = vsel %vm2452, %v2785, 0
      %v2869 = vsel %vm2452, %v2786, 0
      %2871 = vmatprep.subr.bf16.mxu0 0
      %2872 = vmatpush1.bf16.msra.mxu0 0
      %2873 = vmatprep.subr.bf16.mxu0 0
      %2874 = vmatpush1.bf16.msra.mxu0 0
      %2875 = vmatprep.subr.bf16.mxu0 0
      %2876 = vmatpush1.bf16.msra.mxu0 %v2816
      %2877 = vmatprep.subr.bf16.mxu0 0
      %2878 = vmatpush1.bf16.msra.mxu0 %v2815
      %2879 = vmatprep.subr.bf16.mxu0 0
      %2880 = vmatpush1.bf16.msra.mxu0 %v2814
      %2881 = vmatprep.subr.bf16.mxu0 0
      %2882 = vmatpush1.bf16.msra.mxu0 %v2813
      %2883 = vmatprep.subr.bf16.mxu0 0
      %2884 = vmatpush1.bf16.msra.mxu0 %v2812
      %2885 = vmatprep.subr.bf16.mxu0 0
      %2886 = vmatpush1.bf16.msra.mxu0 %v2811
      %2887 = vmatprep.subr.bf16.mxu0 0
      %2888 = vmatpush2.bf16.msra.mxu0 0
      %2889 = vmatprep.subr.bf16.mxu0 0
      %2890 = vmatpush2.bf16.msra.mxu0 0
      %2891 = vmatprep.subr.bf16.mxu0 0
      %2892 = vmatpush2.bf16.msra.mxu0 0
      %2893 = vmatprep.subr.bf16.mxu0 0
      %2894 = vmatpush2.bf16.msra.mxu0 0
      %2895 = vmatprep.subr.bf16.mxu0 0
      %2896 = vmatpush2.bf16.msra.mxu0 0
      %2897 = vmatprep.subr.bf16.mxu0 0
      %2898 = vmatpush2.bf16.msra.mxu0 0
      %2899 = vmatprep.subr.bf16.mxu0 0
      %2900 = vmatpush2.bf16.msra.mxu0 0
      %2901 = vmatprep.subr.bf16.mxu0 0
      %2902 = vmatpush2.bf16.msra.mxu0 0
      %2903 = vmatprep.mubr.bf16.mxu0 0
      %2904 = vmatmul.mubr.bf16.gmra.mxu0 %v2824
      %v2905 = vpop.f32.mrf.mxu0
      %v2906 = vadd.f32 0.0, %v2905
      %v2907 = vpop.f32.mrf.mxu0
      %v2908 = vpop.f32.mrf.mxu0
      %v2909 = vadd.f32 0.0, %v2908
      %v2910 = vpop.f32.mrf.mxu0
      %2911 = vmatprep.mubr.bf16.mxu0 0
      %2912 = vmatmul.mubr.bf16.gmra.mxu0 %v2827
      %v2913 = vpop.f32.mrf.mxu0
      %v2914 = vadd.f32 0.0, %v2913
      %v2915 = vpop.f32.mrf.mxu0
      %v2916 = vpop.f32.mrf.mxu0
      %v2917 = vadd.f32 0.0, %v2916
      %v2918 = vpop.f32.mrf.mxu0
      %2919 = vmatprep.mubr.bf16.mxu0 0
      %2920 = vmatmul.mubr.bf16.gmra.mxu0 %v2830
      %v2921 = vpop.f32.mrf.mxu0
      %v2922 = vadd.f32 0.0, %v2921
      %v2923 = vpop.f32.mrf.mxu0
      %v2924 = vpop.f32.mrf.mxu0
      %v2925 = vadd.f32 0.0, %v2924
      %v2926 = vpop.f32.mrf.mxu0
      %2927 = vmatprep.mubr.bf16.mxu0 0
      %2928 = vmatmul.mubr.bf16.gmra.mxu0 %v2833
      %v2929 = vpop.f32.mrf.mxu0
      %v2930 = vadd.f32 0.0, %v2929
      %v2931 = vpop.f32.mrf.mxu0
      %v2932 = vpop.f32.mrf.mxu0
      %v2933 = vadd.f32 0.0, %v2932
      %v2934 = vpop.f32.mrf.mxu0
      %2935 = vmatprep.mubr.bf16.mxu0 0
      %2936 = vmatmul.mubr.bf16.gmra.mxu0 %v2836
      %v2937 = vpop.f32.mrf.mxu0
      %v2938 = vadd.f32 0.0, %v2937
      %v2939 = vpop.f32.mrf.mxu0
      %v2940 = vpop.f32.mrf.mxu0
      %v2941 = vadd.f32 0.0, %v2940
      %v2942 = vpop.f32.mrf.mxu0
      %2943 = vmatprep.mubr.bf16.mxu0 0
      %2944 = vmatmul.mubr.bf16.gmra.mxu0 %v2839
      %v2945 = vpop.f32.mrf.mxu0
      %v2946 = vadd.f32 0.0, %v2945
      %v2947 = vpop.f32.mrf.mxu0
      %v2948 = vpop.f32.mrf.mxu0
      %v2949 = vadd.f32 0.0, %v2948
      %v2950 = vpop.f32.mrf.mxu0
      %2951 = vmatprep.mubr.bf16.mxu0 0
      %2952 = vmatmul.mubr.bf16.gmra.mxu0 %v2842
      %v2953 = vpop.f32.mrf.mxu0
      %v2954 = vadd.f32 0.0, %v2953
      %v2955 = vpop.f32.mrf.mxu0
      %v2956 = vpop.f32.mrf.mxu0
      %v2957 = vadd.f32 0.0, %v2956
      %v2958 = vpop.f32.mrf.mxu0
      %2959 = vmatprep.mubr.bf16.mxu0 0
      %2960 = vmatmul.mubr.bf16.gmra.mxu0 %v2845
      %v2961 = vpop.f32.mrf.mxu0
      %v2962 = vadd.f32 0.0, %v2961
      %v2963 = vpop.f32.mrf.mxu0
      %v2964 = vpop.f32.mrf.mxu0
      %v2965 = vadd.f32 0.0, %v2964
      %v2966 = vpop.f32.mrf.mxu0
      %2967 = vmatprep.mubr.bf16.mxu0 0
      %2968 = vmatmul.mubr.bf16.gmra.mxu0 %v2848
      %v2969 = vpop.f32.mrf.mxu0
      %v2970 = vadd.f32 0.0, %v2969
      %v2971 = vpop.f32.mrf.mxu0
      %v2972 = vpop.f32.mrf.mxu0
      %v2973 = vadd.f32 0.0, %v2972
      %v2974 = vpop.f32.mrf.mxu0
      %2975 = vmatprep.mubr.bf16.mxu0 0
      %2976 = vmatmul.mubr.bf16.gmra.mxu0 %v2851
      %v2977 = vpop.f32.mrf.mxu0
      %v2978 = vadd.f32 0.0, %v2977
      %v2979 = vpop.f32.mrf.mxu0
      %v2980 = vpop.f32.mrf.mxu0
      %v2981 = vadd.f32 0.0, %v2980
      %v2982 = vpop.f32.mrf.mxu0
      %2983 = vmatprep.mubr.bf16.mxu0 0
      %2984 = vmatmul.mubr.bf16.gmra.mxu0 %v2854
      %v2985 = vpop.f32.mrf.mxu0
      %v2986 = vadd.f32 0.0, %v2985
      %v2987 = vpop.f32.mrf.mxu0
      %v2988 = vpop.f32.mrf.mxu0
      %v2989 = vadd.f32 0.0, %v2988
      %v2990 = vpop.f32.mrf.mxu0
      %2991 = vmatprep.mubr.bf16.mxu0 0
      %2992 = vmatmul.mubr.bf16.gmra.mxu0 %v2857
      %v2993 = vpop.f32.mrf.mxu0
      %v2994 = vadd.f32 0.0, %v2993
      %v2995 = vpop.f32.mrf.mxu0
      %v2996 = vpop.f32.mrf.mxu0
      %v2997 = vadd.f32 0.0, %v2996
      %v2998 = vpop.f32.mrf.mxu0
      %2999 = vmatprep.mubr.bf16.mxu0 0
      %3000 = vmatmul.mubr.bf16.gmra.mxu0 %v2860
      %v3001 = vpop.f32.mrf.mxu0
      %v3002 = vadd.f32 0.0, %v3001
      %v3003 = vpop.f32.mrf.mxu0
      %v3004 = vpop.f32.mrf.mxu0
      %v3005 = vadd.f32 0.0, %v3004
      %v3006 = vpop.f32.mrf.mxu0
      %3007 = vmatprep.mubr.bf16.mxu0 0
      %3008 = vmatmul.mubr.bf16.gmra.mxu0 %v2863
      %v3009 = vpop.f32.mrf.mxu0
      %v3010 = vadd.f32 0.0, %v3009
      %v3011 = vpop.f32.mrf.mxu0
      %v3012 = vpop.f32.mrf.mxu0
      %v3013 = vadd.f32 0.0, %v3012
      %v3014 = vpop.f32.mrf.mxu0
      %3015 = vmatprep.mubr.bf16.mxu0 0
      %3016 = vmatmul.mubr.bf16.gmra.mxu0 %v2866
      %v3017 = vpop.f32.mrf.mxu0
      %v3018 = vadd.f32 0.0, %v3017
      %v3019 = vpop.f32.mrf.mxu0
      %v3020 = vpop.f32.mrf.mxu0
      %v3021 = vadd.f32 0.0, %v3020
      %v3022 = vpop.f32.mrf.mxu0
      %3023 = vmatprep.mubr.bf16.mxu0 0
      %3024 = vmatmul.mubr.bf16.gmra.mxu0 %v2869
      %v3025 = vpop.f32.mrf.mxu0
      %v3026 = vadd.f32 0.0, %v3025
      %v3027 = vpop.f32.mrf.mxu0
      %v3028 = vpop.f32.mrf.mxu0
      %v3029 = vadd.f32 0.0, %v3028
      %v3030 = vpop.f32.mrf.mxu0
      %3031 = vdwg.mxu0
      %v3032 = vadd.f32 %v2536, %v2906
      %v3033 = vadd.f32 %v2539, %v2909
      %v3034 = vadd.f32 %v2544, %v2914
      %v3035 = vadd.f32 %v2547, %v2917
      %v3036 = vadd.f32 %v2552, %v2922
      %v3037 = vadd.f32 %v2555, %v2925
      %v3038 = vadd.f32 %v2560, %v2930
      %v3039 = vadd.f32 %v2563, %v2933
      %v3040 = vadd.f32 %v2568, %v2938
      %v3041 = vadd.f32 %v2571, %v2941
      %v3042 = vadd.f32 %v2576, %v2946
      %v3043 = vadd.f32 %v2579, %v2949
      %v3044 = vadd.f32 %v2584, %v2954
      %v3045 = vadd.f32 %v2587, %v2957
      %v3046 = vadd.f32 %v2592, %v2962
      %v3047 = vadd.f32 %v2595, %v2965
      %v3048 = vadd.f32 %v2600, %v2970
      %v3049 = vadd.f32 %v2603, %v2973
      %v3050 = vadd.f32 %v2608, %v2978
      %v3051 = vadd.f32 %v2611, %v2981
      %v3052 = vadd.f32 %v2616, %v2986
      %v3053 = vadd.f32 %v2619, %v2989
      %v3054 = vadd.f32 %v2624, %v2994
      %v3055 = vadd.f32 %v2627, %v2997
      %v3056 = vadd.f32 %v2632, %v3002
      %v3057 = vadd.f32 %v2635, %v3005
      %v3058 = vadd.f32 %v2640, %v3010
      %v3059 = vadd.f32 %v2643, %v3013
      %v3060 = vadd.f32 %v2648, %v3018
      %v3061 = vadd.f32 %v2651, %v3021
      %v3062 = vadd.f32 %v2656, %v3026
      %v3063 = vadd.f32 %v2659, %v3029
      %v3064 = vld [vmem:[#allocation2 + $0x10] sm:$0xf]
      %v3065 = vld [vmem:[#allocation2 + $0x14] sm:$0xf]
      %v3066 = vld [vmem:[#allocation2 + $0x18] sm:$0xf]
      %v3067 = vld [vmem:[#allocation2 + $0x1c] sm:$0xf]
      %v3068 = vld [vmem:[#allocation2 + $0x20] sm:$0xf]
      %v3069 = vld [vmem:[#allocation2 + $0x24] sm:$0xf]
      %v3070 = vld [vmem:[#allocation2 + $0x28] sm:$0xf]
      %v3071 = vld [vmem:[#allocation2 + $0x2c] sm:$0xf]
      %v3072 = vld [vmem:[#allocation2 + $0x30] sm:$0xf]
      %v3073 = vld [vmem:[#allocation2 + $0x34] sm:$0xf]
      %v3074 = vld [vmem:[#allocation2 + $0x38] sm:$0xf]
      %v3075 = vld [vmem:[#allocation2 + $0x3c] sm:$0xf]
      %v3076 = vld [vmem:[#allocation2 + $0x40] sm:$0xf]
      %v3077 = vld [vmem:[#allocation2 + $0x44] sm:$0xf]
      %v3078 = vld [vmem:[#allocation2 + $0x48] sm:$0xf]
      %v3079 = vld [vmem:[#allocation2 + $0x4c] sm:$0xf]
      %v3080 = vld [vmem:[#allocation2 + $0x50] sm:$0xf]
      %v3081 = vld [vmem:[#allocation2 + $0x54] sm:$0xf]
      %v3082 = vld [vmem:[#allocation2 + $0x58] sm:$0xf]
      %v3083 = vld [vmem:[#allocation2 + $0x5c] sm:$0xf]
      %v3084 = vld [vmem:[#allocation2 + $0x60] sm:$0xf]
      %v3085 = vld [vmem:[#allocation2 + $0x64] sm:$0xf]
      %v3086 = vld [vmem:[#allocation2 + $0x68] sm:$0xf]
      %v3087 = vld [vmem:[#allocation2 + $0x6c] sm:$0xf]
      %v3088 = vld [vmem:[#allocation2 + $0x70] sm:$0xf]
      %v3089 = vld [vmem:[#allocation2 + $0x74] sm:$0xf]
      %v3090 = vld [vmem:[#allocation2 + $0x78] sm:$0xf]
      %v3091 = vld [vmem:[#allocation2 + $0x7c] sm:$0xf]
      %v3092 = vld [vmem:[#allocation2 + $0x80] sm:$0xf]
      %v3093 = vld [vmem:[#allocation2 + $0x84] sm:$0xf]
      %v3094 = vld [vmem:[#allocation2 + $0x88] sm:$0xf]
      %v3095 = vld [vmem:[#allocation2 + $0x8c] sm:$0xf]
      %s3096 = scalar_lea.vmem %s3, 96
      %v3097 = vld [vmem:[%s3096] sm:$0xf]
      %v3098 = vld [vmem:[%s3096 + $0x4] sm:$0xf]
      %v3099 = vld [vmem:[%s3096 + $0x8] sm:$0xf]
      %v3100 = vld [vmem:[%s3096 + $0xc] sm:$0xf]
      %v3101 = vld [vmem:[%s3096 + $0x10] sm:$0xf]
      %v3102 = vld [vmem:[%s3096 + $0x14] sm:$0xf]
      %v3103 = vld [vmem:[%s3096 + $0x18] sm:$0xf]
      %v3104 = vld [vmem:[%s3096 + $0x1c] sm:$0xf]
      %v3105 = vld [vmem:[%s3096 + $0x20] sm:$0xf]
      %v3106 = vld [vmem:[%s3096 + $0x24] sm:$0xf]
      %v3107 = vld [vmem:[%s3096 + $0x28] sm:$0xf]
      %v3108 = vld [vmem:[%s3096 + $0x2c] sm:$0xf]
      %v3141 = vunpack.c.l.b16 %v3064
      %v3142 = vunpack.c.l.b16 %v3065
      %v3143 = vunpack.c.l.b16 %v3066
      %v3144 = vunpack.c.l.b16 %v3067
      %v3145 = vunpack.c.l.b16 %v3068
      %v3146 = vunpack.c.l.b16 %v3069
      %v3147 = vunpack.c.l.b16 %v3070
      %v3148 = vunpack.c.l.b16 %v3071
      %v3149 = vunpack.c.l.b16 %v3072
      %v3150 = vunpack.c.l.b16 %v3073
      %v3151 = vunpack.c.l.b16 %v3074
      %v3152 = vunpack.c.l.b16 %v3075
      %v3153 = vunpack.c.l.b16 %v3076
      %v3154 = vunpack.c.l.b16 %v3077
      %v3155 = vunpack.c.l.b16 %v3078
      %v3156 = vunpack.c.l.b16 %v3079
      %v3157 = vunpack.c.l.b16 %v3080
      %v3158 = vunpack.c.l.b16 %v3081
      %v3159 = vunpack.c.l.b16 %v3082
      %v3160 = vunpack.c.l.b16 %v3083
      %v3161 = vunpack.c.l.b16 %v3084
      %v3162 = vunpack.c.l.b16 %v3085
      %v3163 = vunpack.c.l.b16 %v3086
      %v3164 = vunpack.c.l.b16 %v3087
      %v3165 = vunpack.c.l.b16 %v3088
      %v3166 = vunpack.c.l.b16 %v3089
      %v3167 = vunpack.c.l.b16 %v3090
      %v3168 = vunpack.c.l.b16 %v3091
      %v3169 = vunpack.c.l.b16 %v3092
      %v3170 = vunpack.c.l.b16 %v3093
      %v3171 = vunpack.c.l.b16 %v3094
      %v3172 = vunpack.c.l.b16 %v3095
      %v3173 = vpack.c.b16 %v3142, %v3141
      %v3174 = vpack.c.b16 %v3144, %v3143
      %v3175 = vpack.c.b16 %v3146, %v3145
      %v3176 = vpack.c.b16 %v3148, %v3147
      %v3177 = vpack.c.b16 %v3150, %v3149
      %v3178 = vpack.c.b16 %v3152, %v3151
      %v3179 = vpack.c.b16 %v3154, %v3153
      %v3180 = vpack.c.b16 %v3156, %v3155
      %v3181 = vpack.c.b16 %v3158, %v3157
      %v3182 = vpack.c.b16 %v3160, %v3159
      %v3183 = vpack.c.b16 %v3162, %v3161
      %v3184 = vpack.c.b16 %v3164, %v3163
      %v3185 = vpack.c.b16 %v3166, %v3165
      %v3186 = vpack.c.b16 %v3168, %v3167
      %v3187 = vpack.c.b16 %v3170, %v3169
      %v3188 = vpack.c.b16 %v3172, %v3171
      %v3201 = vunpack.c.l.b16 %v3097
      %v3202 = vunpack.c.l.b16 %v3098
      %v3203 = vunpack.c.l.b16 %v3099
      %v3204 = vunpack.c.l.b16 %v3100
      %v3205 = vunpack.c.l.b16 %v3101
      %v3206 = vunpack.c.l.b16 %v3102
      %v3207 = vunpack.c.l.b16 %v3103
      %v3208 = vunpack.c.l.b16 %v3104
      %v3209 = vunpack.c.l.b16 %v3105
      %v3210 = vunpack.c.l.b16 %v3106
      %v3211 = vunpack.c.l.b16 %v3107
      %v3212 = vunpack.c.l.b16 %v3108
      %v3213 = vpack.c.b16 %v3202, %v3201
      %v3214 = vpack.c.b16 %v3204, %v3203
      %v3215 = vpack.c.b16 %v3206, %v3205
      %v3216 = vpack.c.b16 %v3208, %v3207
      %v3217 = vpack.c.b16 %v3210, %v3209
      %v3218 = vpack.c.b16 %v3212, %v3211
      %v3226 = vsel %vm2452, %v3173, 0
      %v3229 = vsel %vm2452, %v3174, 0
      %v3232 = vsel %vm2452, %v3175, 0
      %v3235 = vsel %vm2452, %v3176, 0
      %v3238 = vsel %vm2452, %v3177, 0
      %v3241 = vsel %vm2452, %v3178, 0
      %v3244 = vsel %vm2452, %v3179, 0
      %v3247 = vsel %vm2452, %v3180, 0
      %v3250 = vsel %vm2452, %v3181, 0
      %v3253 = vsel %vm2452, %v3182, 0
      %v3256 = vsel %vm2452, %v3183, 0
      %v3259 = vsel %vm2452, %v3184, 0
      %v3262 = vsel %vm2452, %v3185, 0
      %v3265 = vsel %vm2452, %v3186, 0
      %v3268 = vsel %vm2452, %v3187, 0
      %v3271 = vsel %vm2452, %v3188, 0
      %3273 = vmatprep.subr.bf16.mxu0 0
      %3274 = vmatpush1.bf16.msra.mxu0 0
      %3275 = vmatprep.subr.bf16.mxu0 0
      %3276 = vmatpush1.bf16.msra.mxu0 0
      %3277 = vmatprep.subr.bf16.mxu0 0
      %3278 = vmatpush1.bf16.msra.mxu0 %v3218
      %3279 = vmatprep.subr.bf16.mxu0 0
      %3280 = vmatpush1.bf16.msra.mxu0 %v3217
      %3281 = vmatprep.subr.bf16.mxu0 0
      %3282 = vmatpush1.bf16.msra.mxu0 %v3216
      %3283 = vmatprep.subr.bf16.mxu0 0
      %3284 = vmatpush1.bf16.msra.mxu0 %v3215
      %3285 = vmatprep.subr.bf16.mxu0 0
      %3286 = vmatpush1.bf16.msra.mxu0 %v3214
      %3287 = vmatprep.subr.bf16.mxu0 0
      %3288 = vmatpush1.bf16.msra.mxu0 %v3213
      %3289 = vmatprep.subr.bf16.mxu0 0
      %3290 = vmatpush2.bf16.msra.mxu0 0
      %3291 = vmatprep.subr.bf16.mxu0 0
      %3292 = vmatpush2.bf16.msra.mxu0 0
      %3293 = vmatprep.subr.bf16.mxu0 0
      %3294 = vmatpush2.bf16.msra.mxu0 0
      %3295 = vmatprep.subr.bf16.mxu0 0
      %3296 = vmatpush2.bf16.msra.mxu0 0
      %3297 = vmatprep.subr.bf16.mxu0 0
      %3298 = vmatpush2.bf16.msra.mxu0 0
      %3299 = vmatprep.subr.bf16.mxu0 0
      %3300 = vmatpush2.bf16.msra.mxu0 0
      %3301 = vmatprep.subr.bf16.mxu0 0
      %3302 = vmatpush2.bf16.msra.mxu0 0
      %3303 = vmatprep.subr.bf16.mxu0 0
      %3304 = vmatpush2.bf16.msra.mxu0 0
      %3305 = vmatprep.mubr.bf16.mxu0 0
      %3306 = vmatmul.mubr.bf16.gmra.mxu0 %v3226
      %v3307 = vpop.f32.mrf.mxu0
      %v3308 = vadd.f32 0.0, %v3307
      %v3309 = vpop.f32.mrf.mxu0
      %v3310 = vpop.f32.mrf.mxu0
      %v3311 = vadd.f32 0.0, %v3310
      %v3312 = vpop.f32.mrf.mxu0
      %3313 = vmatprep.mubr.bf16.mxu0 0
      %3314 = vmatmul.mubr.bf16.gmra.mxu0 %v3229
      %v3315 = vpop.f32.mrf.mxu0
      %v3316 = vadd.f32 0.0, %v3315
      %v3317 = vpop.f32.mrf.mxu0
      %v3318 = vpop.f32.mrf.mxu0
      %v3319 = vadd.f32 0.0, %v3318
      %v3320 = vpop.f32.mrf.mxu0
      %3321 = vmatprep.mubr.bf16.mxu0 0
      %3322 = vmatmul.mubr.bf16.gmra.mxu0 %v3232
      %v3323 = vpop.f32.mrf.mxu0
      %v3324 = vadd.f32 0.0, %v3323
      %v3325 = vpop.f32.mrf.mxu0
      %v3326 = vpop.f32.mrf.mxu0
      %v3327 = vadd.f32 0.0, %v3326
      %v3328 = vpop.f32.mrf.mxu0
      %3329 = vmatprep.mubr.bf16.mxu0 0
      %3330 = vmatmul.mubr.bf16.gmra.mxu0 %v3235
      %v3331 = vpop.f32.mrf.mxu0
      %v3332 = vadd.f32 0.0, %v3331
      %v3333 = vpop.f32.mrf.mxu0
      %v3334 = vpop.f32.mrf.mxu0
      %v3335 = vadd.f32 0.0, %v3334
      %v3336 = vpop.f32.mrf.mxu0
      %3337 = vmatprep.mubr.bf16.mxu0 0
      %3338 = vmatmul.mubr.bf16.gmra.mxu0 %v3238
      %v3339 = vpop.f32.mrf.mxu0
      %v3340 = vadd.f32 0.0, %v3339
      %v3341 = vpop.f32.mrf.mxu0
      %v3342 = vpop.f32.mrf.mxu0
      %v3343 = vadd.f32 0.0, %v3342
      %v3344 = vpop.f32.mrf.mxu0
      %3345 = vmatprep.mubr.bf16.mxu0 0
      %3346 = vmatmul.mubr.bf16.gmra.mxu0 %v3241
      %v3347 = vpop.f32.mrf.mxu0
      %v3348 = vadd.f32 0.0, %v3347
      %v3349 = vpop.f32.mrf.mxu0
      %v3350 = vpop.f32.mrf.mxu0
      %v3351 = vadd.f32 0.0, %v3350
      %v3352 = vpop.f32.mrf.mxu0
      %3353 = vmatprep.mubr.bf16.mxu0 0
      %3354 = vmatmul.mubr.bf16.gmra.mxu0 %v3244
      %v3355 = vpop.f32.mrf.mxu0
      %v3356 = vadd.f32 0.0, %v3355
      %v3357 = vpop.f32.mrf.mxu0
      %v3358 = vpop.f32.mrf.mxu0
      %v3359 = vadd.f32 0.0, %v3358
      %v3360 = vpop.f32.mrf.mxu0
      %3361 = vmatprep.mubr.bf16.mxu0 0
      %3362 = vmatmul.mubr.bf16.gmra.mxu0 %v3247
      %v3363 = vpop.f32.mrf.mxu0
      %v3364 = vadd.f32 0.0, %v3363
      %v3365 = vpop.f32.mrf.mxu0
      %v3366 = vpop.f32.mrf.mxu0
      %v3367 = vadd.f32 0.0, %v3366
      %v3368 = vpop.f32.mrf.mxu0
      %3369 = vmatprep.mubr.bf16.mxu0 0
      %3370 = vmatmul.mubr.bf16.gmra.mxu0 %v3250
      %v3371 = vpop.f32.mrf.mxu0
      %v3372 = vadd.f32 0.0, %v3371
      %v3373 = vpop.f32.mrf.mxu0
      %v3374 = vpop.f32.mrf.mxu0
      %v3375 = vadd.f32 0.0, %v3374
      %v3376 = vpop.f32.mrf.mxu0
      %3377 = vmatprep.mubr.bf16.mxu0 0
      %3378 = vmatmul.mubr.bf16.gmra.mxu0 %v3253
      %v3379 = vpop.f32.mrf.mxu0
      %v3380 = vadd.f32 0.0, %v3379
      %v3381 = vpop.f32.mrf.mxu0
      %v3382 = vpop.f32.mrf.mxu0
      %v3383 = vadd.f32 0.0, %v3382
      %v3384 = vpop.f32.mrf.mxu0
      %3385 = vmatprep.mubr.bf16.mxu0 0
      %3386 = vmatmul.mubr.bf16.gmra.mxu0 %v3256
      %v3387 = vpop.f32.mrf.mxu0
      %v3388 = vadd.f32 0.0, %v3387
      %v3389 = vpop.f32.mrf.mxu0
      %v3390 = vpop.f32.mrf.mxu0
      %v3391 = vadd.f32 0.0, %v3390
      %v3392 = vpop.f32.mrf.mxu0
      %3393 = vmatprep.mubr.bf16.mxu0 0
      %3394 = vmatmul.mubr.bf16.gmra.mxu0 %v3259
      %v3395 = vpop.f32.mrf.mxu0
      %v3396 = vadd.f32 0.0, %v3395
      %v3397 = vpop.f32.mrf.mxu0
      %v3398 = vpop.f32.mrf.mxu0
      %v3399 = vadd.f32 0.0, %v3398
      %v3400 = vpop.f32.mrf.mxu0
      %3401 = vmatprep.mubr.bf16.mxu0 0
      %3402 = vmatmul.mubr.bf16.gmra.mxu0 %v3262
      %v3403 = vpop.f32.mrf.mxu0
      %v3404 = vadd.f32 0.0, %v3403
      %v3405 = vpop.f32.mrf.mxu0
      %v3406 = vpop.f32.mrf.mxu0
      %v3407 = vadd.f32 0.0, %v3406
      %v3408 = vpop.f32.mrf.mxu0
      %3409 = vmatprep.mubr.bf16.mxu0 0
      %3410 = vmatmul.mubr.bf16.gmra.mxu0 %v3265
      %v3411 = vpop.f32.mrf.mxu0
      %v3412 = vadd.f32 0.0, %v3411
      %v3413 = vpop.f32.mrf.mxu0
      %v3414 = vpop.f32.mrf.mxu0
      %v3415 = vadd.f32 0.0, %v3414
      %v3416 = vpop.f32.mrf.mxu0
      %3417 = vmatprep.mubr.bf16.mxu0 0
      %3418 = vmatmul.mubr.bf16.gmra.mxu0 %v3268
      %v3419 = vpop.f32.mrf.mxu0
      %v3420 = vadd.f32 0.0, %v3419
      %v3421 = vpop.f32.mrf.mxu0
      %v3422 = vpop.f32.mrf.mxu0
      %v3423 = vadd.f32 0.0, %v3422
      %v3424 = vpop.f32.mrf.mxu0
      %3425 = vmatprep.mubr.bf16.mxu0 0
      %3426 = vmatmul.mubr.bf16.gmra.mxu0 %v3271
      %v3427 = vpop.f32.mrf.mxu0
      %v3428 = vadd.f32 0.0, %v3427
      %v3429 = vpop.f32.mrf.mxu0
      %v3430 = vpop.f32.mrf.mxu0
      %v3431 = vadd.f32 0.0, %v3430
      %v3432 = vpop.f32.mrf.mxu0
      %3433 = vdwg.mxu0
      %v3434 = vadd.f32 %v3032, %v3308
      %v3435 = vadd.f32 %v3033, %v3311
      %v3436 = vadd.f32 %v3034, %v3316
      %v3437 = vadd.f32 %v3035, %v3319
      %v3438 = vadd.f32 %v3036, %v3324
      %v3439 = vadd.f32 %v3037, %v3327
      %v3440 = vadd.f32 %v3038, %v3332
      %v3441 = vadd.f32 %v3039, %v3335
      %v3442 = vadd.f32 %v3040, %v3340
      %v3443 = vadd.f32 %v3041, %v3343
      %v3444 = vadd.f32 %v3042, %v3348
      %v3445 = vadd.f32 %v3043, %v3351
      %v3446 = vadd.f32 %v3044, %v3356
      %v3447 = vadd.f32 %v3045, %v3359
      %v3448 = vadd.f32 %v3046, %v3364
      %v3449 = vadd.f32 %v3047, %v3367
      %v3450 = vadd.f32 %v3048, %v3372
      %v3451 = vadd.f32 %v3049, %v3375
      %v3452 = vadd.f32 %v3050, %v3380
      %v3453 = vadd.f32 %v3051, %v3383
      %v3454 = vadd.f32 %v3052, %v3388
      %v3455 = vadd.f32 %v3053, %v3391
      %v3456 = vadd.f32 %v3054, %v3396
      %v3457 = vadd.f32 %v3055, %v3399
      %v3458 = vadd.f32 %v3056, %v3404
      %v3459 = vadd.f32 %v3057, %v3407
      %v3460 = vadd.f32 %v3058, %v3412
      %v3461 = vadd.f32 %v3059, %v3415
      %v3462 = vadd.f32 %v3060, %v3420
      %v3463 = vadd.f32 %v3061, %v3423
      %v3464 = vadd.f32 %v3062, %v3428
      %v3465 = vadd.f32 %v3063, %v3431
      %v3466 = vsel %vm884, %v3434, 0.0
      %v3467 = vsel %vm884, %v3435, 0.0
      %v3468 = vadd.f32 %v3466, %v3467
      %v3469 = vsel %vm884, %v3436, 0.0
      %v3470 = vadd.f32 %v3468, %v3469
      %v3471 = vsel %vm884, %v3437, 0.0
      %v3472 = vadd.f32 %v3470, %v3471
      %v3473 = vsel %vm884, %v3438, 0.0
      %v3474 = vadd.f32 %v3472, %v3473
      %v3475 = vsel %vm884, %v3439, 0.0
      %v3476 = vadd.f32 %v3474, %v3475
      %v3477 = vsel %vm884, %v3440, 0.0
      %v3478 = vadd.f32 %v3476, %v3477
      %v3479 = vsel %vm884, %v3441, 0.0
      %v3480 = vadd.f32 %v3478, %v3479
      %v3481 = vsel %vm884, %v3442, 0.0
      %v3482 = vadd.f32 %v3480, %v3481
      %v3483 = vsel %vm884, %v3443, 0.0
      %v3484 = vadd.f32 %v3482, %v3483
      %v3485 = vsel %vm884, %v3444, 0.0
      %v3486 = vadd.f32 %v3484, %v3485
      %v3487 = vsel %vm884, %v3445, 0.0
      %v3488 = vadd.f32 %v3486, %v3487
      %v3489 = vsel %vm884, %v3446, 0.0
      %v3490 = vadd.f32 %v3488, %v3489
      %v3491 = vsel %vm884, %v3447, 0.0
      %v3492 = vadd.f32 %v3490, %v3491
      %v3493 = vsel %vm884, %v3448, 0.0
      %v3494 = vadd.f32 %v3492, %v3493
      %v3495 = vsel %vm884, %v3449, 0.0
      %v3496 = vadd.f32 %v3494, %v3495
      %v3497 = vsel %vm884, %v3450, 0.0
      %v3498 = vadd.f32 %v3496, %v3497
      %v3499 = vsel %vm884, %v3451, 0.0
      %v3500 = vadd.f32 %v3498, %v3499
      %v3501 = vsel %vm884, %v3452, 0.0
      %v3502 = vadd.f32 %v3500, %v3501
      %v3503 = vsel %vm884, %v3453, 0.0
      %v3504 = vadd.f32 %v3502, %v3503
      %v3505 = vsel %vm884, %v3454, 0.0
      %v3506 = vadd.f32 %v3504, %v3505
      %v3507 = vsel %vm884, %v3455, 0.0
      %v3508 = vadd.f32 %v3506, %v3507
      %v3509 = vsel %vm884, %v3456, 0.0
      %v3510 = vadd.f32 %v3508, %v3509
      %v3511 = vsel %vm884, %v3457, 0.0
      %v3512 = vadd.f32 %v3510, %v3511
      %v3513 = vsel %vm884, %v3458, 0.0
      %v3514 = vadd.f32 %v3512, %v3513
      %v3515 = vsel %vm884, %v3459, 0.0
      %v3516 = vadd.f32 %v3514, %v3515
      %v3517 = vsel %vm884, %v3460, 0.0
      %v3518 = vadd.f32 %v3516, %v3517
      %v3519 = vsel %vm884, %v3461, 0.0
      %v3520 = vadd.f32 %v3518, %v3519
      %v3521 = vsel %vm884, %v3462, 0.0
      %v3522 = vadd.f32 %v3520, %v3521
      %v3523 = vsel %vm884, %v3463, 0.0
      %v3524 = vadd.f32 %v3522, %v3523
      %v3525 = vsel %vm884, %v3464, 0.0
      %v3526 = vadd.f32 %v3524, %v3525
      %v3527 = vsel %vm884, %v3465, 0.0
      %v3528 = vadd.f32 %v3526, %v3527
      %v3529 = vrot.slane %v3528, 4
      %v3530 = vadd.f32 %v3528, %v3529
      %v3531 = vrot.slane %v3530, 2
      %v3532 = vadd.f32 %v3530, %v3531
      %v3533 = vrot.slane %v3532, 1
      %v3534 = vadd.f32 %v3532, %v3533
      %v3535 = vmul.f32 %v3434, %v3434
      %v3536 = vmul.f32 %v3435, %v3435
      %v3537 = vmul.f32 %v3436, %v3436
      %v3538 = vmul.f32 %v3437, %v3437
      %v3539 = vmul.f32 %v3438, %v3438
      %v3540 = vmul.f32 %v3439, %v3439
      %v3541 = vmul.f32 %v3440, %v3440
      %v3542 = vmul.f32 %v3441, %v3441
      %v3543 = vmul.f32 %v3442, %v3442
      %v3544 = vmul.f32 %v3443, %v3443
      %v3545 = vmul.f32 %v3444, %v3444
      %v3546 = vmul.f32 %v3445, %v3445
      %v3547 = vmul.f32 %v3446, %v3446
      %v3548 = vmul.f32 %v3447, %v3447
      %v3549 = vmul.f32 %v3448, %v3448
      %v3550 = vmul.f32 %v3449, %v3449
      %v3551 = vmul.f32 %v3450, %v3450
      %v3552 = vmul.f32 %v3451, %v3451
      %v3553 = vmul.f32 %v3452, %v3452
      %v3554 = vmul.f32 %v3453, %v3453
      %v3555 = vmul.f32 %v3454, %v3454
      %v3556 = vmul.f32 %v3455, %v3455
      %v3557 = vmul.f32 %v3456, %v3456
      %v3558 = vmul.f32 %v3457, %v3457
      %v3559 = vmul.f32 %v3458, %v3458
      %v3560 = vmul.f32 %v3459, %v3459
      %v3561 = vmul.f32 %v3460, %v3460
      %v3562 = vmul.f32 %v3461, %v3461
      %v3563 = vmul.f32 %v3462, %v3462
      %v3564 = vmul.f32 %v3463, %v3463
      %v3565 = vmul.f32 %v3464, %v3464
      %v3566 = vmul.f32 %v3465, %v3465
      %v3567 = vsel %vm884, %v3535, 0.0
      %v3568 = vsel %vm884, %v3536, 0.0
      %v3569 = vadd.f32 %v3567, %v3568
      %v3570 = vsel %vm884, %v3537, 0.0
      %v3571 = vadd.f32 %v3569, %v3570
      %v3572 = vsel %vm884, %v3538, 0.0
      %v3573 = vadd.f32 %v3571, %v3572
      %v3574 = vsel %vm884, %v3539, 0.0
      %v3575 = vadd.f32 %v3573, %v3574
      %v3576 = vsel %vm884, %v3540, 0.0
      %v3577 = vadd.f32 %v3575, %v3576
      %v3578 = vsel %vm884, %v3541, 0.0
      %v3579 = vadd.f32 %v3577, %v3578
      %v3580 = vsel %vm884, %v3542, 0.0
      %v3581 = vadd.f32 %v3579, %v3580
      %v3582 = vsel %vm884, %v3543, 0.0
      %v3583 = vadd.f32 %v3581, %v3582
      %v3584 = vsel %vm884, %v3544, 0.0
      %v3585 = vadd.f32 %v3583, %v3584
      %v3586 = vsel %vm884, %v3545, 0.0
      %v3587 = vadd.f32 %v3585, %v3586
      %v3588 = vsel %vm884, %v3546, 0.0
      %v3589 = vadd.f32 %v3587, %v3588
      %v3590 = vsel %vm884, %v3547, 0.0
      %v3591 = vadd.f32 %v3589, %v3590
      %v3592 = vsel %vm884, %v3548, 0.0
      %v3593 = vadd.f32 %v3591, %v3592
      %v3594 = vsel %vm884, %v3549, 0.0
      %v3595 = vadd.f32 %v3593, %v3594
      %v3596 = vsel %vm884, %v3550, 0.0
      %v3597 = vadd.f32 %v3595, %v3596
      %v3598 = vsel %vm884, %v3551, 0.0
      %v3599 = vadd.f32 %v3597, %v3598
      %v3600 = vsel %vm884, %v3552, 0.0
      %v3601 = vadd.f32 %v3599, %v3600
      %v3602 = vsel %vm884, %v3553, 0.0
      %v3603 = vadd.f32 %v3601, %v3602
      %v3604 = vsel %vm884, %v3554, 0.0
      %v3605 = vadd.f32 %v3603, %v3604
      %v3606 = vsel %vm884, %v3555, 0.0
      %v3607 = vadd.f32 %v3605, %v3606
      %v3608 = vsel %vm884, %v3556, 0.0
      %v3609 = vadd.f32 %v3607, %v3608
      %v3610 = vsel %vm884, %v3557, 0.0
      %v3611 = vadd.f32 %v3609, %v3610
      %v3612 = vsel %vm884, %v3558, 0.0
      %v3613 = vadd.f32 %v3611, %v3612
      %v3614 = vsel %vm884, %v3559, 0.0
      %v3615 = vadd.f32 %v3613, %v3614
      %v3616 = vsel %vm884, %v3560, 0.0
      %v3617 = vadd.f32 %v3615, %v3616
      %v3618 = vsel %vm884, %v3561, 0.0
      %v3619 = vadd.f32 %v3617, %v3618
      %v3620 = vsel %vm884, %v3562, 0.0
      %v3621 = vadd.f32 %v3619, %v3620
      %v3622 = vsel %vm884, %v3563, 0.0
      %v3623 = vadd.f32 %v3621, %v3622
      %v3624 = vsel %vm884, %v3564, 0.0
      %v3625 = vadd.f32 %v3623, %v3624
      %v3626 = vsel %vm884, %v3565, 0.0
      %v3627 = vadd.f32 %v3625, %v3626
      %v3628 = vsel %vm884, %v3566, 0.0
      %v3629 = vadd.f32 %v3627, %v3628
      %v3630 = vrot.slane %v3629, 4
      %v3631 = vadd.f32 %v3629, %v3630
      %v3632 = vrot.slane %v3631, 2
      %v3633 = vadd.f32 %v3631, %v3632
      %v3634 = vrot.slane %v3633, 1
      %v3635 = vadd.f32 %v3633, %v3634
      %v3636 = vsel %vm1055, %v3534, 0.0
      %3637 = vadd.xlane.f32.xlu0 %v3636
      %v3638 = vpop.xlane.xlu0 %3637
      %3640 = vrot.lane.b32.xlu0 %v3534, 124
      %v3641 = vpop.permute.xlu0 %3640
      %v3643 = vsel %vm1055, %v3641, 0.0
      %3644 = vadd.xlane.f32.xlu0 %v3643
      %v3645 = vpop.xlane.xlu0 %3644
      %3646 = vrot.lane.b32.xlu0 %v3534, 120
      %v3647 = vpop.permute.xlu0 %3646
      %v3649 = vsel %vm1055, %v3647, 0.0
      %3650 = vadd.xlane.f32.xlu0 %v3649
      %v3651 = vpop.xlane.xlu0 %3650
      %3652 = vrot.lane.b32.xlu0 %v3534, 116
      %v3653 = vpop.permute.xlu0 %3652
      %v3655 = vsel %vm1055, %v3653, 0.0
      %3656 = vadd.xlane.f32.xlu0 %v3655
      %v3657 = vpop.xlane.xlu0 %3656
      %3658 = vrot.lane.b32.xlu0 %v3534, 112
      %v3659 = vpop.permute.xlu0 %3658
      %v3661 = vsel %vm1055, %v3659, 0.0
      %3662 = vadd.xlane.f32.xlu0 %v3661
      %v3663 = vpop.xlane.xlu0 %3662
      %3664 = vrot.lane.b32.xlu0 %v3534, 108
      %v3665 = vpop.permute.xlu0 %3664
      %v3667 = vsel %vm1055, %v3665, 0.0
      %3668 = vadd.xlane.f32.xlu0 %v3667
      %v3669 = vpop.xlane.xlu0 %3668
      %3670 = vrot.lane.b32.xlu0 %v3534, 104
      %v3671 = vpop.permute.xlu0 %3670
      %v3673 = vsel %vm1055, %v3671, 0.0
      %3674 = vadd.xlane.f32.xlu0 %v3673
      %v3675 = vpop.xlane.xlu0 %3674
      %3676 = vrot.lane.b32.xlu0 %v3534, 100
      %v3677 = vpop.permute.xlu0 %3676
      %v3679 = vsel %vm1055, %v3677, 0.0
      %3680 = vadd.xlane.f32.xlu0 %v3679
      %v3681 = vpop.xlane.xlu0 %3680
      %v3682 = vsel %vm1055, %v3638, %v3645
      %v3683 = vsel %vm1103, %v3682, %v3651
      %v3684 = vsel %vm1105, %v3683, %v3657
      %v3685 = vsel %vm1107, %v3684, %v3663
      %v3686 = vsel %vm1109, %v3685, %v3669
      %v3687 = vsel %vm1111, %v3686, %v3675
      %v3688 = vsel %vm1113, %v3687, %v3681
      %v3689 = vmul.f32 %v3688, 0.0009765625
      %v3690 = vsel %vm1055, %v3635, 0.0
      %3691 = vadd.xlane.f32.xlu0 %v3690
      %v3692 = vpop.xlane.xlu0 %3691
      %3694 = vrot.lane.b32.xlu0 %v3635, 124
      %v3695 = vpop.permute.xlu0 %3694
      %v3697 = vsel %vm1055, %v3695, 0.0
      %3698 = vadd.xlane.f32.xlu0 %v3697
      %v3699 = vpop.xlane.xlu0 %3698
      %3700 = vrot.lane.b32.xlu0 %v3635, 120
      %v3701 = vpop.permute.xlu0 %3700
      %v3703 = vsel %vm1055, %v3701, 0.0
      %3704 = vadd.xlane.f32.xlu0 %v3703
      %v3705 = vpop.xlane.xlu0 %3704
      %3706 = vrot.lane.b32.xlu0 %v3635, 116
      %v3707 = vpop.permute.xlu0 %3706
      %v3709 = vsel %vm1055, %v3707, 0.0
      %3710 = vadd.xlane.f32.xlu0 %v3709
      %v3711 = vpop.xlane.xlu0 %3710
      %3712 = vrot.lane.b32.xlu0 %v3635, 112
      %v3713 = vpop.permute.xlu0 %3712
      %v3715 = vsel %vm1055, %v3713, 0.0
      %3716 = vadd.xlane.f32.xlu0 %v3715
      %v3717 = vpop.xlane.xlu0 %3716
      %3718 = vrot.lane.b32.xlu0 %v3635, 108
      %v3719 = vpop.permute.xlu0 %3718
      %v3721 = vsel %vm1055, %v3719, 0.0
      %3722 = vadd.xlane.f32.xlu0 %v3721
      %v3723 = vpop.xlane.xlu0 %3722
      %3724 = vrot.lane.b32.xlu0 %v3635, 104
      %v3725 = vpop.permute.xlu0 %3724
      %v3727 = vsel %vm1055, %v3725, 0.0
      %3728 = vadd.xlane.f32.xlu0 %v3727
      %v3729 = vpop.xlane.xlu0 %3728
      %3730 = vrot.lane.b32.xlu0 %v3635, 100
      %v3731 = vpop.permute.xlu0 %3730
      %v3733 = vsel %vm1055, %v3731, 0.0
      %3734 = vadd.xlane.f32.xlu0 %v3733
      %v3735 = vpop.xlane.xlu0 %3734
      %v3736 = vsel %vm1055, %v3692, %v3699
      %v3737 = vsel %vm1103, %v3736, %v3705
      %v3738 = vsel %vm1105, %v3737, %v3711
      %v3739 = vsel %vm1107, %v3738, %v3717
      %v3740 = vsel %vm1109, %v3739, %v3723
      %v3741 = vsel %vm1111, %v3740, %v3729
      %v3742 = vsel %vm1113, %v3741, %v3735
      %v3743 = vmul.f32 %v3742, 0.0009765625
      %v3744 = vmul.f32 %v3689, %v3689
      %v3745 = vsub.f32 %v3743, %v3744
      %v3746 = vmax.f32 %v3745, 0.0
      %v3747 = vld [vmem:[%s5] sm:$0x1]
      %v3748 = vadd.f32 %v3746, 1e-05
      %v3749 = vrsqrt.pop %v3748
      %v3750 = vmul.f32 %v3747, %v3749
      %v3751 = vld [vmem:[%s6] sm:$0x1]
      %v3752 = vmul.f32 %v3689, %v3750
      %v3753 = vsub.f32 %v3751, %v3752
      %v3755 = vlaneseq
      %v3756 = vshrl.u32 %v3755, 7
      %v3757 = vsub.s32 0, %v3756
      %v3758 = vrot.slane %v3750, %v3757
      %v3760 = vmul.f32 %v3434, %v3758
      %v3761 = vmul.f32 %v3435, %v3758
      %v3762 = vmul.f32 %v3436, %v3758
      %v3763 = vmul.f32 %v3437, %v3758
      %v3764 = vmul.f32 %v3438, %v3758
      %v3765 = vmul.f32 %v3439, %v3758
      %v3766 = vmul.f32 %v3440, %v3758
      %v3767 = vmul.f32 %v3441, %v3758
      %v3768 = vmul.f32 %v3442, %v3758
      %v3769 = vmul.f32 %v3443, %v3758
      %v3770 = vmul.f32 %v3444, %v3758
      %v3771 = vmul.f32 %v3445, %v3758
      %v3772 = vmul.f32 %v3446, %v3758
      %v3773 = vmul.f32 %v3447, %v3758
      %v3774 = vmul.f32 %v3448, %v3758
      %v3775 = vmul.f32 %v3449, %v3758
      %v3776 = vmul.f32 %v3450, %v3758
      %v3777 = vmul.f32 %v3451, %v3758
      %v3778 = vmul.f32 %v3452, %v3758
      %v3779 = vmul.f32 %v3453, %v3758
      %v3780 = vmul.f32 %v3454, %v3758
      %v3781 = vmul.f32 %v3455, %v3758
      %v3782 = vmul.f32 %v3456, %v3758
      %v3783 = vmul.f32 %v3457, %v3758
      %v3784 = vmul.f32 %v3458, %v3758
      %v3785 = vmul.f32 %v3459, %v3758
      %v3786 = vmul.f32 %v3460, %v3758
      %v3787 = vmul.f32 %v3461, %v3758
      %v3788 = vmul.f32 %v3462, %v3758
      %v3789 = vmul.f32 %v3463, %v3758
      %v3790 = vmul.f32 %v3464, %v3758
      %v3791 = vmul.f32 %v3465, %v3758
      %v3793 = vlaneseq
      %v3794 = vshrl.u32 %v3793, 7
      %v3795 = vsub.s32 0, %v3794
      %v3796 = vrot.slane %v3753, %v3795
      %v3798 = vadd.f32 %v3760, %v3796
      %v3799 = vadd.f32 %v3761, %v3796
      %v3800 = vadd.f32 %v3762, %v3796
      %v3801 = vadd.f32 %v3763, %v3796
      %v3802 = vadd.f32 %v3764, %v3796
      %v3803 = vadd.f32 %v3765, %v3796
      %v3804 = vadd.f32 %v3766, %v3796
      %v3805 = vadd.f32 %v3767, %v3796
      %v3806 = vadd.f32 %v3768, %v3796
      %v3807 = vadd.f32 %v3769, %v3796
      %v3808 = vadd.f32 %v3770, %v3796
      %v3809 = vadd.f32 %v3771, %v3796
      %v3810 = vadd.f32 %v3772, %v3796
      %v3811 = vadd.f32 %v3773, %v3796
      %v3812 = vadd.f32 %v3774, %v3796
      %v3813 = vadd.f32 %v3775, %v3796
      %v3814 = vadd.f32 %v3776, %v3796
      %v3815 = vadd.f32 %v3777, %v3796
      %v3816 = vadd.f32 %v3778, %v3796
      %v3817 = vadd.f32 %v3779, %v3796
      %v3818 = vadd.f32 %v3780, %v3796
      %v3819 = vadd.f32 %v3781, %v3796
      %v3820 = vadd.f32 %v3782, %v3796
      %v3821 = vadd.f32 %v3783, %v3796
      %v3822 = vadd.f32 %v3784, %v3796
      %v3823 = vadd.f32 %v3785, %v3796
      %v3824 = vadd.f32 %v3786, %v3796
      %v3825 = vadd.f32 %v3787, %v3796
      %v3826 = vadd.f32 %v3788, %v3796
      %v3827 = vadd.f32 %v3789, %v3796
      %v3828 = vadd.f32 %v3790, %v3796
      %v3829 = vadd.f32 %v3791, %v3796
      %v3830 = vxor.u32 %v3798, 2147483648
      %v3831 = vxor.u32 %v3799, 2147483648
      %v3832 = vxor.u32 %v3800, 2147483648
      %v3833 = vxor.u32 %v3801, 2147483648
      %v3834 = vxor.u32 %v3802, 2147483648
      %v3835 = vxor.u32 %v3803, 2147483648
      %v3836 = vxor.u32 %v3804, 2147483648
      %v3837 = vxor.u32 %v3805, 2147483648
      %v3838 = vxor.u32 %v3806, 2147483648
      %v3839 = vxor.u32 %v3807, 2147483648
      %v3840 = vxor.u32 %v3808, 2147483648
      %v3841 = vxor.u32 %v3809, 2147483648
      %v3842 = vxor.u32 %v3810, 2147483648
      %v3843 = vxor.u32 %v3811, 2147483648
      %v3844 = vxor.u32 %v3812, 2147483648
      %v3845 = vxor.u32 %v3813, 2147483648
      %v3846 = vxor.u32 %v3814, 2147483648
      %v3847 = vxor.u32 %v3815, 2147483648
      %v3848 = vxor.u32 %v3816, 2147483648
      %v3849 = vxor.u32 %v3817, 2147483648
      %v3850 = vxor.u32 %v3818, 2147483648
      %v3851 = vxor.u32 %v3819, 2147483648
      %v3852 = vxor.u32 %v3820, 2147483648
      %v3853 = vxor.u32 %v3821, 2147483648
      %v3854 = vxor.u32 %v3822, 2147483648
      %v3855 = vxor.u32 %v3823, 2147483648
      %v3856 = vxor.u32 %v3824, 2147483648
      %v3857 = vxor.u32 %v3825, 2147483648
      %v3858 = vxor.u32 %v3826, 2147483648
      %v3859 = vxor.u32 %v3827, 2147483648
      %v3860 = vxor.u32 %v3828, 2147483648
      %v3861 = vxor.u32 %v3829, 2147483648
      %v3862 = vmul.f32 %v3830, 1.442695
      %v3863 = vpow.pop %v3862
      %v3864 = vmul.f32 %v3831, 1.442695
      %v3865 = vpow.pop %v3864
      %v3866 = vmul.f32 %v3832, 1.442695
      %v3867 = vpow.pop %v3866
      %v3868 = vmul.f32 %v3833, 1.442695
      %v3869 = vpow.pop %v3868
      %v3870 = vmul.f32 %v3834, 1.442695
      %v3871 = vpow.pop %v3870
      %v3872 = vmul.f32 %v3835, 1.442695
      %v3873 = vpow.pop %v3872
      %v3874 = vmul.f32 %v3836, 1.442695
      %v3875 = vpow.pop %v3874
      %v3876 = vmul.f32 %v3837, 1.442695
      %v3877 = vpow.pop %v3876
      %v3878 = vmul.f32 %v3838, 1.442695
      %v3879 = vpow.pop %v3878
      %v3880 = vmul.f32 %v3839, 1.442695
      %v3881 = vpow.pop %v3880
      %v3882 = vmul.f32 %v3840, 1.442695
      %v3883 = vpow.pop %v3882
      %v3884 = vmul.f32 %v3841, 1.442695
      %v3885 = vpow.pop %v3884
      %v3886 = vmul.f32 %v3842, 1.442695
      %v3887 = vpow.pop %v3886
      %v3888 = vmul.f32 %v3843, 1.442695
      %v3889 = vpow.pop %v3888
      %v3890 = vmul.f32 %v3844, 1.442695
      %v3891 = vpow.pop %v3890
      %v3892 = vmul.f32 %v3845, 1.442695
      %v3893 = vpow.pop %v3892
      %v3894 = vmul.f32 %v3846, 1.442695
      %v3895 = vpow.pop %v3894
      %v3896 = vmul.f32 %v3847, 1.442695
      %v3897 = vpow.pop %v3896
      %v3898 = vmul.f32 %v3848, 1.442695
      %v3899 = vpow.pop %v3898
      %v3900 = vmul.f32 %v3849, 1.442695
      %v3901 = vpow.pop %v3900
      %v3902 = vmul.f32 %v3850, 1.442695
      %v3903 = vpow.pop %v3902
      %v3904 = vmul.f32 %v3851, 1.442695
      %v3905 = vpow.pop %v3904
      %v3906 = vmul.f32 %v3852, 1.442695
      %v3907 = vpow.pop %v3906
      %v3908 = vmul.f32 %v3853, 1.442695
      %v3909 = vpow.pop %v3908
      %v3910 = vmul.f32 %v3854, 1.442695
      %v3911 = vpow.pop %v3910
      %v3912 = vmul.f32 %v3855, 1.442695
      %v3913 = vpow.pop %v3912
      %v3914 = vmul.f32 %v3856, 1.442695
      %v3915 = vpow.pop %v3914
      %v3916 = vmul.f32 %v3857, 1.442695
      %v3917 = vpow.pop %v3916
      %v3918 = vmul.f32 %v3858, 1.442695
      %v3919 = vpow.pop %v3918
      %v3920 = vmul.f32 %v3859, 1.442695
      %v3921 = vpow.pop %v3920
      %v3922 = vmul.f32 %v3860, 1.442695
      %v3923 = vpow.pop %v3922
      %v3924 = vmul.f32 %v3861, 1.442695
      %v3925 = vpow.pop %v3924
      %v3926 = vadd.f32 %v3863, 1.0
      %v3927 = vadd.f32 %v3865, 1.0
      %v3928 = vadd.f32 %v3867, 1.0
      %v3929 = vadd.f32 %v3869, 1.0
      %v3930 = vadd.f32 %v3871, 1.0
      %v3931 = vadd.f32 %v3873, 1.0
      %v3932 = vadd.f32 %v3875, 1.0
      %v3933 = vadd.f32 %v3877, 1.0
      %v3934 = vadd.f32 %v3879, 1.0
      %v3935 = vadd.f32 %v3881, 1.0
      %v3936 = vadd.f32 %v3883, 1.0
      %v3937 = vadd.f32 %v3885, 1.0
      %v3938 = vadd.f32 %v3887, 1.0
      %v3939 = vadd.f32 %v3889, 1.0
      %v3940 = vadd.f32 %v3891, 1.0
      %v3941 = vadd.f32 %v3893, 1.0
      %v3942 = vadd.f32 %v3895, 1.0
      %v3943 = vadd.f32 %v3897, 1.0
      %v3944 = vadd.f32 %v3899, 1.0
      %v3945 = vadd.f32 %v3901, 1.0
      %v3946 = vadd.f32 %v3903, 1.0
      %v3947 = vadd.f32 %v3905, 1.0
      %v3948 = vadd.f32 %v3907, 1.0
      %v3949 = vadd.f32 %v3909, 1.0
      %v3950 = vadd.f32 %v3911, 1.0
      %v3951 = vadd.f32 %v3913, 1.0
      %v3952 = vadd.f32 %v3915, 1.0
      %v3953 = vadd.f32 %v3917, 1.0
      %v3954 = vadd.f32 %v3919, 1.0
      %v3955 = vadd.f32 %v3921, 1.0
      %v3956 = vadd.f32 %v3923, 1.0
      %v3957 = vadd.f32 %v3925, 1.0
      %v3958 = vrcp.pop %v3926
      %v3959 = vmul.f32 1.0, %v3958
      %v3960 = vrcp.pop %v3927
      %v3961 = vmul.f32 1.0, %v3960
      %v3962 = vrcp.pop %v3928
      %v3963 = vmul.f32 1.0, %v3962
      %v3964 = vrcp.pop %v3929
      %v3965 = vmul.f32 1.0, %v3964
      %v3966 = vrcp.pop %v3930
      %v3967 = vmul.f32 1.0, %v3966
      %v3968 = vrcp.pop %v3931
      %v3969 = vmul.f32 1.0, %v3968
      %v3970 = vrcp.pop %v3932
      %v3971 = vmul.f32 1.0, %v3970
      %v3972 = vrcp.pop %v3933
      %v3973 = vmul.f32 1.0, %v3972
      %v3974 = vrcp.pop %v3934
      %v3975 = vmul.f32 1.0, %v3974
      %v3976 = vrcp.pop %v3935
      %v3977 = vmul.f32 1.0, %v3976
      %v3978 = vrcp.pop %v3936
      %v3979 = vmul.f32 1.0, %v3978
      %v3980 = vrcp.pop %v3937
      %v3981 = vmul.f32 1.0, %v3980
      %v3982 = vrcp.pop %v3938
      %v3983 = vmul.f32 1.0, %v3982
      %v3984 = vrcp.pop %v3939
      %v3985 = vmul.f32 1.0, %v3984
      %v3986 = vrcp.pop %v3940
      %v3987 = vmul.f32 1.0, %v3986
      %v3988 = vrcp.pop %v3941
      %v3989 = vmul.f32 1.0, %v3988
      %v3990 = vrcp.pop %v3942
      %v3991 = vmul.f32 1.0, %v3990
      %v3992 = vrcp.pop %v3943
      %v3993 = vmul.f32 1.0, %v3992
      %v3994 = vrcp.pop %v3944
      %v3995 = vmul.f32 1.0, %v3994
      %v3996 = vrcp.pop %v3945
      %v3997 = vmul.f32 1.0, %v3996
      %v3998 = vrcp.pop %v3946
      %v3999 = vmul.f32 1.0, %v3998
      %v4000 = vrcp.pop %v3947
      %v4001 = vmul.f32 1.0, %v4000
      %v4002 = vrcp.pop %v3948
      %v4003 = vmul.f32 1.0, %v4002
      %v4004 = vrcp.pop %v3949
      %v4005 = vmul.f32 1.0, %v4004
      %v4006 = vrcp.pop %v3950
      %v4007 = vmul.f32 1.0, %v4006
      %v4008 = vrcp.pop %v3951
      %v4009 = vmul.f32 1.0, %v4008
      %v4010 = vrcp.pop %v3952
      %v4011 = vmul.f32 1.0, %v4010
      %v4012 = vrcp.pop %v3953
      %v4013 = vmul.f32 1.0, %v4012
      %v4014 = vrcp.pop %v3954
      %v4015 = vmul.f32 1.0, %v4014
      %v4016 = vrcp.pop %v3955
      %v4017 = vmul.f32 1.0, %v4016
      %v4018 = vrcp.pop %v3956
      %v4019 = vmul.f32 1.0, %v4018
      %v4020 = vrcp.pop %v3957
      %v4021 = vmul.f32 1.0, %v4020
      %v4022 = vmul.f32 %v3798, %v3959
      %v4023 = vmul.f32 %v3799, %v3961
      %v4024 = vmul.f32 %v3800, %v3963
      %v4025 = vmul.f32 %v3801, %v3965
      %v4026 = vmul.f32 %v3802, %v3967
      %v4027 = vmul.f32 %v3803, %v3969
      %v4028 = vmul.f32 %v3804, %v3971
      %v4029 = vmul.f32 %v3805, %v3973
      %v4030 = vmul.f32 %v3806, %v3975
      %v4031 = vmul.f32 %v3807, %v3977
      %v4032 = vmul.f32 %v3808, %v3979
      %v4033 = vmul.f32 %v3809, %v3981
      %v4034 = vmul.f32 %v3810, %v3983
      %v4035 = vmul.f32 %v3811, %v3985
      %v4036 = vmul.f32 %v3812, %v3987
      %v4037 = vmul.f32 %v3813, %v3989
      %v4038 = vmul.f32 %v3814, %v3991
      %v4039 = vmul.f32 %v3815, %v3993
      %v4040 = vmul.f32 %v3816, %v3995
      %v4041 = vmul.f32 %v3817, %v3997
      %v4042 = vmul.f32 %v3818, %v3999
      %v4043 = vmul.f32 %v3819, %v4001
      %v4044 = vmul.f32 %v3820, %v4003
      %v4045 = vmul.f32 %v3821, %v4005
      %v4046 = vmul.f32 %v3822, %v4007
      %v4047 = vmul.f32 %v3823, %v4009
      %v4048 = vmul.f32 %v3824, %v4011
      %v4049 = vmul.f32 %v3825, %v4013
      %v4050 = vmul.f32 %v3826, %v4015
      %v4051 = vmul.f32 %v3827, %v4017
      %v4052 = vmul.f32 %v3828, %v4019
      %v4053 = vmul.f32 %v3829, %v4021
      %v4054 = vpack.c.bf16 %v4023, %v4022
      %v4055 = vpack.c.bf16 %v4025, %v4024
      %v4056 = vpack.c.bf16 %v4027, %v4026
      %v4057 = vpack.c.bf16 %v4029, %v4028
      %v4058 = vpack.c.bf16 %v4031, %v4030
      %v4059 = vpack.c.bf16 %v4033, %v4032
      %v4060 = vpack.c.bf16 %v4035, %v4034
      %v4061 = vpack.c.bf16 %v4037, %v4036
      %v4062 = vpack.c.bf16 %v4039, %v4038
      %v4063 = vpack.c.bf16 %v4041, %v4040
      %v4064 = vpack.c.bf16 %v4043, %v4042
      %v4065 = vpack.c.bf16 %v4045, %v4044
      %v4066 = vpack.c.bf16 %v4047, %v4046
      %v4067 = vpack.c.bf16 %v4049, %v4048
      %v4068 = vpack.c.bf16 %v4051, %v4050
      %v4069 = vpack.c.bf16 %v4053, %v4052
      %v4086 = vunpack.c.l.b16 %v4054
      %v4087 = vunpack.c.h.b16 %v4054
      %v4088 = vunpack.c.l.b16 %v4055
      %v4089 = vunpack.c.h.b16 %v4055
      %v4090 = vunpack.c.l.b16 %v4056
      %v4091 = vunpack.c.h.b16 %v4056
      %v4092 = vunpack.c.l.b16 %v4057
      %v4093 = vunpack.c.h.b16 %v4057
      %v4094 = vunpack.c.l.b16 %v4058
      %v4095 = vunpack.c.h.b16 %v4058
      %v4096 = vunpack.c.l.b16 %v4059
      %v4097 = vunpack.c.h.b16 %v4059
      %v4098 = vunpack.c.l.b16 %v4060
      %v4099 = vunpack.c.h.b16 %v4060
      %v4100 = vunpack.c.l.b16 %v4061
      %v4101 = vunpack.c.h.b16 %v4061
      %v4102 = vunpack.c.l.b16 %v4062
      %v4103 = vunpack.c.h.b16 %v4062
      %v4104 = vunpack.c.l.b16 %v4063
      %v4105 = vunpack.c.h.b16 %v4063
      %v4106 = vunpack.c.l.b16 %v4064
      %v4107 = vunpack.c.h.b16 %v4064
      %v4108 = vunpack.c.l.b16 %v4065
      %v4109 = vunpack.c.h.b16 %v4065
      %v4110 = vunpack.c.l.b16 %v4066
      %v4111 = vunpack.c.h.b16 %v4066
      %v4112 = vunpack.c.l.b16 %v4067
      %v4113 = vunpack.c.h.b16 %v4067
      %v4114 = vunpack.c.l.b16 %v4068
      %v4115 = vunpack.c.h.b16 %v4068
      %v4116 = vunpack.c.l.b16 %v4069
      %v4117 = vunpack.c.h.b16 %v4069
      %v4118 = vpack.c.b16 %v4086, %v4086
      %v4119 = vpack.c.b16 %v4087, %v4087
      %v4120 = vpack.c.b16 %v4088, %v4088
      %v4121 = vpack.c.b16 %v4089, %v4089
      %v4122 = vpack.c.b16 %v4090, %v4090
      %v4123 = vpack.c.b16 %v4091, %v4091
      %v4124 = vpack.c.b16 %v4092, %v4092
      %v4125 = vpack.c.b16 %v4093, %v4093
      %v4126 = vpack.c.b16 %v4094, %v4094
      %v4127 = vpack.c.b16 %v4095, %v4095
      %v4128 = vpack.c.b16 %v4096, %v4096
      %v4129 = vpack.c.b16 %v4097, %v4097
      %v4130 = vpack.c.b16 %v4098, %v4098
      %v4131 = vpack.c.b16 %v4099, %v4099
      %v4132 = vpack.c.b16 %v4100, %v4100
      %v4133 = vpack.c.b16 %v4101, %v4101
      %v4134 = vpack.c.b16 %v4102, %v4102
      %v4135 = vpack.c.b16 %v4103, %v4103
      %v4136 = vpack.c.b16 %v4104, %v4104
      %v4137 = vpack.c.b16 %v4105, %v4105
      %v4138 = vpack.c.b16 %v4106, %v4106
      %v4139 = vpack.c.b16 %v4107, %v4107
      %v4140 = vpack.c.b16 %v4108, %v4108
      %v4141 = vpack.c.b16 %v4109, %v4109
      %v4142 = vpack.c.b16 %v4110, %v4110
      %v4143 = vpack.c.b16 %v4111, %v4111
      %v4144 = vpack.c.b16 %v4112, %v4112
      %v4145 = vpack.c.b16 %v4113, %v4113
      %v4146 = vpack.c.b16 %v4114, %v4114
      %v4147 = vpack.c.b16 %v4115, %v4115
      %v4148 = vpack.c.b16 %v4116, %v4116
      %v4149 = vpack.c.b16 %v4117, %v4117
      %4150 = vrot.lane.b32.xlu0 %v4118, 32
      %v4151 = vpop.permute.xlu0 %4150
      %4152 = vrot.lane.b32.xlu0 %v4119, 32
      %v4153 = vpop.permute.xlu0 %4152
      %4154 = vrot.lane.b32.xlu0 %v4120, 32
      %v4155 = vpop.permute.xlu0 %4154
      %4156 = vrot.lane.b32.xlu0 %v4121, 32
      %v4157 = vpop.permute.xlu0 %4156
      %4158 = vrot.lane.b32.xlu0 %v4122, 32
      %v4159 = vpop.permute.xlu0 %4158
      %4160 = vrot.lane.b32.xlu0 %v4123, 32
      %v4161 = vpop.permute.xlu0 %4160
      %4162 = vrot.lane.b32.xlu0 %v4124, 32
      %v4163 = vpop.permute.xlu0 %4162
      %4164 = vrot.lane.b32.xlu0 %v4125, 32
      %v4165 = vpop.permute.xlu0 %4164
      %4166 = vrot.lane.b32.xlu0 %v4126, 32
      %v4167 = vpop.permute.xlu0 %4166
      %4168 = vrot.lane.b32.xlu0 %v4127, 32
      %v4169 = vpop.permute.xlu0 %4168
      %4170 = vrot.lane.b32.xlu0 %v4128, 32
      %v4171 = vpop.permute.xlu0 %4170
      %4172 = vrot.lane.b32.xlu0 %v4129, 32
      %v4173 = vpop.permute.xlu0 %4172
      %4174 = vrot.lane.b32.xlu0 %v4130, 32
      %v4175 = vpop.permute.xlu0 %4174
      %4176 = vrot.lane.b32.xlu0 %v4131, 32
      %v4177 = vpop.permute.xlu0 %4176
      %4178 = vrot.lane.b32.xlu0 %v4132, 32
      %v4179 = vpop.permute.xlu0 %4178
      %4180 = vrot.lane.b32.xlu0 %v4133, 32
      %v4181 = vpop.permute.xlu0 %4180
      %4182 = vrot.lane.b32.xlu0 %v4134, 32
      %v4183 = vpop.permute.xlu0 %4182
      %4184 = vrot.lane.b32.xlu0 %v4135, 32
      %v4185 = vpop.permute.xlu0 %4184
      %4186 = vrot.lane.b32.xlu0 %v4136, 32
      %v4187 = vpop.permute.xlu0 %4186
      %4188 = vrot.lane.b32.xlu0 %v4137, 32
      %v4189 = vpop.permute.xlu0 %4188
      %4190 = vrot.lane.b32.xlu0 %v4138, 32
      %v4191 = vpop.permute.xlu0 %4190
      %4192 = vrot.lane.b32.xlu0 %v4139, 32
      %v4193 = vpop.permute.xlu0 %4192
      %4194 = vrot.lane.b32.xlu0 %v4140, 32
      %v4195 = vpop.permute.xlu0 %4194
      %4196 = vrot.lane.b32.xlu0 %v4141, 32
      %v4197 = vpop.permute.xlu0 %4196
      %4198 = vrot.lane.b32.xlu0 %v4142, 32
      %v4199 = vpop.permute.xlu0 %4198
      %4200 = vrot.lane.b32.xlu0 %v4143, 32
      %v4201 = vpop.permute.xlu0 %4200
      %4202 = vrot.lane.b32.xlu0 %v4144, 32
      %v4203 = vpop.permute.xlu0 %4202
      %4204 = vrot.lane.b32.xlu0 %v4145, 32
      %v4205 = vpop.permute.xlu0 %4204
      %4206 = vrot.lane.b32.xlu0 %v4146, 32
      %v4207 = vpop.permute.xlu0 %4206
      %4208 = vrot.lane.b32.xlu0 %v4147, 32
      %v4209 = vpop.permute.xlu0 %4208
      %4210 = vrot.lane.b32.xlu0 %v4148, 32
      %v4211 = vpop.permute.xlu0 %4210
      %4212 = vrot.lane.b32.xlu0 %v4149, 32
      %v4213 = vpop.permute.xlu0 %4212
      %4246 = vst.msk [vmem:[#allocation2 + $0x8] sm:$0xf] %vm1672, %v4151
      %4247 = vst.msk [vmem:[#allocation2 + $0xc] sm:$0xf] %vm1672, %v4153
      %4248 = vst.msk [vmem:[#allocation2 + $0x10] sm:$0xf] %vm1672, %v4155
      %4249 = vst.msk [vmem:[#allocation2 + $0x14] sm:$0xf] %vm1672, %v4157
      %4250 = vst.msk [vmem:[#allocation2 + $0x18] sm:$0xf] %vm1672, %v4159
      %4251 = vst.msk [vmem:[#allocation2 + $0x1c] sm:$0xf] %vm1672, %v4161
      %4252 = vst.msk [vmem:[#allocation2 + $0x20] sm:$0xf] %vm1672, %v4163
      %4253 = vst.msk [vmem:[#allocation2 + $0x24] sm:$0xf] %vm1672, %v4165
      %4254 = vst.msk [vmem:[#allocation2 + $0x28] sm:$0xf] %vm1672, %v4167
      %4255 = vst.msk [vmem:[#allocation2 + $0x2c] sm:$0xf] %vm1672, %v4169
      %4256 = vst.msk [vmem:[#allocation2 + $0x30] sm:$0xf] %vm1672, %v4171
      %4257 = vst.msk [vmem:[#allocation2 + $0x34] sm:$0xf] %vm1672, %v4173
      %4258 = vst.msk [vmem:[#allocation2 + $0x38] sm:$0xf] %vm1672, %v4175
      %4259 = vst.msk [vmem:[#allocation2 + $0x3c] sm:$0xf] %vm1672, %v4177
      %4260 = vst.msk [vmem:[#allocation2 + $0x40] sm:$0xf] %vm1672, %v4179
      %4261 = vst.msk [vmem:[#allocation2 + $0x44] sm:$0xf] %vm1672, %v4181
      %4262 = vst.msk [vmem:[#allocation2 + $0x48] sm:$0xf] %vm1672, %v4183
      %4263 = vst.msk [vmem:[#allocation2 + $0x4c] sm:$0xf] %vm1672, %v4185
      %4264 = vst.msk [vmem:[#allocation2 + $0x50] sm:$0xf] %vm1672, %v4187
      %4265 = vst.msk [vmem:[#allocation2 + $0x54] sm:$0xf] %vm1672, %v4189
      %4266 = vst.msk [vmem:[#allocation2 + $0x58] sm:$0xf] %vm1672, %v4191
      %4267 = vst.msk [vmem:[#allocation2 + $0x5c] sm:$0xf] %vm1672, %v4193
      %4268 = vst.msk [vmem:[#allocation2 + $0x60] sm:$0xf] %vm1672, %v4195
      %4269 = vst.msk [vmem:[#allocation2 + $0x64] sm:$0xf] %vm1672, %v4197
      %4270 = vst.msk [vmem:[#allocation2 + $0x68] sm:$0xf] %vm1672, %v4199
      %4271 = vst.msk [vmem:[#allocation2 + $0x6c] sm:$0xf] %vm1672, %v4201
      %4272 = vst.msk [vmem:[#allocation2 + $0x70] sm:$0xf] %vm1672, %v4203
      %4273 = vst.msk [vmem:[#allocation2 + $0x74] sm:$0xf] %vm1672, %v4205
      %4274 = vst.msk [vmem:[#allocation2 + $0x78] sm:$0xf] %vm1672, %v4207
      %4275 = vst.msk [vmem:[#allocation2 + $0x7c] sm:$0xf] %vm1672, %v4209
      %4276 = vst.msk [vmem:[#allocation2 + $0x80] sm:$0xf] %vm1672, %v4211
      %4277 = vst.msk [vmem:[#allocation2 + $0x84] sm:$0xf] %vm1672, %v4213
      %v4278 = vrot.slane %v4022, 7
      %v4279 = vrot.slane %v4023, 7
      %v4280 = vrot.slane %v4024, 7
      %v4281 = vrot.slane %v4025, 7
      %v4282 = vrot.slane %v4026, 7
      %v4283 = vrot.slane %v4027, 7
      %v4284 = vrot.slane %v4028, 7
      %v4285 = vrot.slane %v4029, 7
      %v4286 = vrot.slane %v4030, 7
      %v4287 = vrot.slane %v4031, 7
      %v4288 = vrot.slane %v4032, 7
      %v4289 = vrot.slane %v4033, 7
      %v4290 = vrot.slane %v4034, 7
      %v4291 = vrot.slane %v4035, 7
      %v4292 = vrot.slane %v4036, 7
      %v4293 = vrot.slane %v4037, 7
      %v4294 = vrot.slane %v4038, 7
      %v4295 = vrot.slane %v4039, 7
      %v4296 = vrot.slane %v4040, 7
      %v4297 = vrot.slane %v4041, 7
      %v4298 = vrot.slane %v4042, 7
      %v4299 = vrot.slane %v4043, 7
      %v4300 = vrot.slane %v4044, 7
      %v4301 = vrot.slane %v4045, 7
      %v4302 = vrot.slane %v4046, 7
      %v4303 = vrot.slane %v4047, 7
      %v4304 = vrot.slane %v4048, 7
      %v4305 = vrot.slane %v4049, 7
      %v4306 = vrot.slane %v4050, 7
      %v4307 = vrot.slane %v4051, 7
      %v4308 = vrot.slane %v4052, 7
      %v4309 = vrot.slane %v4053, 7
      %v4310 = vsel %vm1737, %v4308, %v4309
      %v4311 = vsel %vm1737, %v4307, %v4308
      %v4312 = vsel %vm1737, %v4306, %v4307
      %v4313 = vsel %vm1737, %v4305, %v4306
      %v4314 = vsel %vm1737, %v4304, %v4305
      %v4315 = vsel %vm1737, %v4303, %v4304
      %v4316 = vsel %vm1737, %v4302, %v4303
      %v4317 = vsel %vm1737, %v4301, %v4302
      %v4318 = vsel %vm1737, %v4300, %v4301
      %v4319 = vsel %vm1737, %v4299, %v4300
      %v4320 = vsel %vm1737, %v4298, %v4299
      %v4321 = vsel %vm1737, %v4297, %v4298
      %v4322 = vsel %vm1737, %v4296, %v4297
      %v4323 = vsel %vm1737, %v4295, %v4296
      %v4324 = vsel %vm1737, %v4294, %v4295
      %v4325 = vsel %vm1737, %v4293, %v4294
      %v4326 = vsel %vm1737, %v4292, %v4293
      %v4327 = vsel %vm1737, %v4291, %v4292
      %v4328 = vsel %vm1737, %v4290, %v4291
      %v4329 = vsel %vm1737, %v4289, %v4290
      %v4330 = vsel %vm1737, %v4288, %v4289
      %v4331 = vsel %vm1737, %v4287, %v4288
      %v4332 = vsel %vm1737, %v4286, %v4287
      %v4333 = vsel %vm1737, %v4285, %v4286
      %v4334 = vsel %vm1737, %v4284, %v4285
      %v4335 = vsel %vm1737, %v4283, %v4284
      %v4336 = vsel %vm1737, %v4282, %v4283
      %v4337 = vsel %vm1737, %v4281, %v4282
      %v4338 = vsel %vm1737, %v4280, %v4281
      %v4339 = vsel %vm1737, %v4279, %v4280
      %v4340 = vsel %vm1737, %v4278, %v4279
      %v4341 = vsel %vm1737, %v4309, %v4278
      %v4342 = vsel %vm756, 0.0, %v4341
      %v4343 = vsel %vm757, 0.0, %v4340
      %v4344 = vsel %vm758, 0.0, %v4339
      %v4345 = vsel %vm759, 0.0, %v4338
      %v4346 = vsel %vm760, 0.0, %v4337
      %v4347 = vsel %vm761, 0.0, %v4336
      %v4348 = vsel %vm762, 0.0, %v4335
      %v4349 = vsel %vm763, 0.0, %v4334
      %v4350 = vsel %vm764, 0.0, %v4333
      %v4351 = vsel %vm765, 0.0, %v4332
      %v4352 = vsel %vm766, 0.0, %v4331
      %v4353 = vsel %vm767, 0.0, %v4330
      %v4354 = vsel %vm768, 0.0, %v4329
      %v4355 = vsel %vm769, 0.0, %v4328
      %v4356 = vsel %vm770, 0.0, %v4327
      %v4357 = vsel %vm771, 0.0, %v4326
      %v4358 = vsel %vm772, 0.0, %v4325
      %v4359 = vsel %vm773, 0.0, %v4324
      %v4360 = vsel %vm774, 0.0, %v4323
      %v4361 = vsel %vm775, 0.0, %v4322
      %v4362 = vsel %vm776, 0.0, %v4321
      %v4363 = vsel %vm777, 0.0, %v4320
      %v4364 = vsel %vm778, 0.0, %v4319
      %v4365 = vsel %vm779, 0.0, %v4318
      %v4366 = vsel %vm780, 0.0, %v4317
      %v4367 = vsel %vm781, 0.0, %v4316
      %v4368 = vsel %vm782, 0.0, %v4315
      %v4369 = vsel %vm783, 0.0, %v4314
      %v4370 = vsel %vm784, 0.0, %v4313
      %v4371 = vsel %vm785, 0.0, %v4312
      %v4372 = vsel %vm786, 0.0, %v4311
      %v4373 = vsel %vm787, 0.0, %v4310
      %v4374 = vpack.c.bf16 %v4343, %v4342
      %v4375 = vpack.c.bf16 %v4345, %v4344
      %v4376 = vpack.c.bf16 %v4347, %v4346
      %v4377 = vpack.c.bf16 %v4349, %v4348
      %v4378 = vpack.c.bf16 %v4351, %v4350
      %v4379 = vpack.c.bf16 %v4353, %v4352
      %v4380 = vpack.c.bf16 %v4355, %v4354
      %v4381 = vpack.c.bf16 %v4357, %v4356
      %v4382 = vpack.c.bf16 %v4359, %v4358
      %v4383 = vpack.c.bf16 %v4361, %v4360
      %v4384 = vpack.c.bf16 %v4363, %v4362
      %v4385 = vpack.c.bf16 %v4365, %v4364
      %v4386 = vpack.c.bf16 %v4367, %v4366
      %v4387 = vpack.c.bf16 %v4369, %v4368
      %v4388 = vpack.c.bf16 %v4371, %v4370
      %v4389 = vpack.c.bf16 %v4373, %v4372
      %v4406 = vunpack.c.l.b16 %v4374
      %v4407 = vunpack.c.h.b16 %v4374
      %v4408 = vunpack.c.l.b16 %v4375
      %v4409 = vunpack.c.h.b16 %v4375
      %v4410 = vunpack.c.l.b16 %v4376
      %v4411 = vunpack.c.h.b16 %v4376
      %v4412 = vunpack.c.l.b16 %v4377
      %v4413 = vunpack.c.h.b16 %v4377
      %v4414 = vunpack.c.l.b16 %v4378
      %v4415 = vunpack.c.h.b16 %v4378
      %v4416 = vunpack.c.l.b16 %v4379
      %v4417 = vunpack.c.h.b16 %v4379
      %v4418 = vunpack.c.l.b16 %v4380
      %v4419 = vunpack.c.h.b16 %v4380
      %v4420 = vunpack.c.l.b16 %v4381
      %v4421 = vunpack.c.h.b16 %v4381
      %v4422 = vunpack.c.l.b16 %v4382
      %v4423 = vunpack.c.h.b16 %v4382
      %v4424 = vunpack.c.l.b16 %v4383
      %v4425 = vunpack.c.h.b16 %v4383
      %v4426 = vunpack.c.l.b16 %v4384
      %v4427 = vunpack.c.h.b16 %v4384
      %v4428 = vunpack.c.l.b16 %v4385
      %v4429 = vunpack.c.h.b16 %v4385
      %v4430 = vunpack.c.l.b16 %v4386
      %v4431 = vunpack.c.h.b16 %v4386
      %v4432 = vunpack.c.l.b16 %v4387
      %v4433 = vunpack.c.h.b16 %v4387
      %v4434 = vunpack.c.l.b16 %v4388
      %v4435 = vunpack.c.h.b16 %v4388
      %v4436 = vunpack.c.l.b16 %v4389
      %v4437 = vunpack.c.h.b16 %v4389
      %v4438 = vpack.c.b16 %v4406, %v4406
      %v4439 = vpack.c.b16 %v4407, %v4407
      %v4440 = vpack.c.b16 %v4408, %v4408
      %v4441 = vpack.c.b16 %v4409, %v4409
      %v4442 = vpack.c.b16 %v4410, %v4410
      %v4443 = vpack.c.b16 %v4411, %v4411
      %v4444 = vpack.c.b16 %v4412, %v4412
      %v4445 = vpack.c.b16 %v4413, %v4413
      %v4446 = vpack.c.b16 %v4414, %v4414
      %v4447 = vpack.c.b16 %v4415, %v4415
      %v4448 = vpack.c.b16 %v4416, %v4416
      %v4449 = vpack.c.b16 %v4417, %v4417
      %v4450 = vpack.c.b16 %v4418, %v4418
      %v4451 = vpack.c.b16 %v4419, %v4419
      %v4452 = vpack.c.b16 %v4420, %v4420
      %v4453 = vpack.c.b16 %v4421, %v4421
      %v4454 = vpack.c.b16 %v4422, %v4422
      %v4455 = vpack.c.b16 %v4423, %v4423
      %v4456 = vpack.c.b16 %v4424, %v4424
      %v4457 = vpack.c.b16 %v4425, %v4425
      %v4458 = vpack.c.b16 %v4426, %v4426
      %v4459 = vpack.c.b16 %v4427, %v4427
      %v4460 = vpack.c.b16 %v4428, %v4428
      %v4461 = vpack.c.b16 %v4429, %v4429
      %v4462 = vpack.c.b16 %v4430, %v4430
      %v4463 = vpack.c.b16 %v4431, %v4431
      %v4464 = vpack.c.b16 %v4432, %v4432
      %v4465 = vpack.c.b16 %v4433, %v4433
      %v4466 = vpack.c.b16 %v4434, %v4434
      %v4467 = vpack.c.b16 %v4435, %v4435
      %v4468 = vpack.c.b16 %v4436, %v4436
      %v4469 = vpack.c.b16 %v4437, %v4437
      %4502 = vst.msk [vmem:[#allocation2 + $0x8] sm:$0xf] %vm1930, %v4438
      %4503 = vst.msk [vmem:[#allocation2 + $0xc] sm:$0xf] %vm1930, %v4439
      %4504 = vst.msk [vmem:[#allocation2 + $0x10] sm:$0xf] %vm1930, %v4440
      %4505 = vst.msk [vmem:[#allocation2 + $0x14] sm:$0xf] %vm1930, %v4441
      %4506 = vst.msk [vmem:[#allocation2 + $0x18] sm:$0xf] %vm1930, %v4442
      %4507 = vst.msk [vmem:[#allocation2 + $0x1c] sm:$0xf] %vm1930, %v4443
      %4508 = vst.msk [vmem:[#allocation2 + $0x20] sm:$0xf] %vm1930, %v4444
      %4509 = vst.msk [vmem:[#allocation2 + $0x24] sm:$0xf] %vm1930, %v4445
      %4510 = vst.msk [vmem:[#allocation2 + $0x28] sm:$0xf] %vm1930, %v4446
      %4511 = vst.msk [vmem:[#allocation2 + $0x2c] sm:$0xf] %vm1930, %v4447
      %4512 = vst.msk [vmem:[#allocation2 + $0x30] sm:$0xf] %vm1930, %v4448
      %4513 = vst.msk [vmem:[#allocation2 + $0x34] sm:$0xf] %vm1930, %v4449
      %4514 = vst.msk [vmem:[#allocation2 + $0x38] sm:$0xf] %vm1930, %v4450
      %4515 = vst.msk [vmem:[#allocation2 + $0x3c] sm:$0xf] %vm1930, %v4451
      %4516 = vst.msk [vmem:[#allocation2 + $0x40] sm:$0xf] %vm1930, %v4452
      %4517 = vst.msk [vmem:[#allocation2 + $0x44] sm:$0xf] %vm1930, %v4453
      %4518 = vst.msk [vmem:[#allocation2 + $0x48] sm:$0xf] %vm1930, %v4454
      %4519 = vst.msk [vmem:[#allocation2 + $0x4c] sm:$0xf] %vm1930, %v4455
      %4520 = vst.msk [vmem:[#allocation2 + $0x50] sm:$0xf] %vm1930, %v4456
      %4521 = vst.msk [vmem:[#allocation2 + $0x54] sm:$0xf] %vm1930, %v4457
      %4522 = vst.msk [vmem:[#allocation2 + $0x58] sm:$0xf] %vm1930, %v4458
      %4523 = vst.msk [vmem:[#allocation2 + $0x5c] sm:$0xf] %vm1930, %v4459
      %4524 = vst.msk [vmem:[#allocation2 + $0x60] sm:$0xf] %vm1930, %v4460
      %4525 = vst.msk [vmem:[#allocation2 + $0x64] sm:$0xf] %vm1930, %v4461
      %4526 = vst.msk [vmem:[#allocation2 + $0x68] sm:$0xf] %vm1930, %v4462
      %4527 = vst.msk [vmem:[#allocation2 + $0x6c] sm:$0xf] %vm1930, %v4463
      %4528 = vst.msk [vmem:[#allocation2 + $0x70] sm:$0xf] %vm1930, %v4464
      %4529 = vst.msk [vmem:[#allocation2 + $0x74] sm:$0xf] %vm1930, %v4465
      %4530 = vst.msk [vmem:[#allocation2 + $0x78] sm:$0xf] %vm1930, %v4466
      %4531 = vst.msk [vmem:[#allocation2 + $0x7c] sm:$0xf] %vm1930, %v4467
      %4532 = vst.msk [vmem:[#allocation2 + $0x80] sm:$0xf] %vm1930, %v4468
      %4533 = vst.msk [vmem:[#allocation2 + $0x84] sm:$0xf] %vm1930, %v4469
      %v4534 = vrot.slane %v4022, 1
      %v4535 = vrot.slane %v4023, 1
      %v4536 = vrot.slane %v4024, 1
      %v4537 = vrot.slane %v4025, 1
      %v4538 = vrot.slane %v4026, 1
      %v4539 = vrot.slane %v4027, 1
      %v4540 = vrot.slane %v4028, 1
      %v4541 = vrot.slane %v4029, 1
      %v4542 = vrot.slane %v4030, 1
      %v4543 = vrot.slane %v4031, 1
      %v4544 = vrot.slane %v4032, 1
      %v4545 = vrot.slane %v4033, 1
      %v4546 = vrot.slane %v4034, 1
      %v4547 = vrot.slane %v4035, 1
      %v4548 = vrot.slane %v4036, 1
      %v4549 = vrot.slane %v4037, 1
      %v4550 = vrot.slane %v4038, 1
      %v4551 = vrot.slane %v4039, 1
      %v4552 = vrot.slane %v4040, 1
      %v4553 = vrot.slane %v4041, 1
      %v4554 = vrot.slane %v4042, 1
      %v4555 = vrot.slane %v4043, 1
      %v4556 = vrot.slane %v4044, 1
      %v4557 = vrot.slane %v4045, 1
      %v4558 = vrot.slane %v4046, 1
      %v4559 = vrot.slane %v4047, 1
      %v4560 = vrot.slane %v4048, 1
      %v4561 = vrot.slane %v4049, 1
      %v4562 = vrot.slane %v4050, 1
      %v4563 = vrot.slane %v4051, 1
      %v4564 = vrot.slane %v4052, 1
      %v4565 = vrot.slane %v4053, 1
      %v4566 = vsel %vm1995, %v4564, %v4565
      %v4567 = vsel %vm1995, %v4563, %v4564
      %v4568 = vsel %vm1995, %v4562, %v4563
      %v4569 = vsel %vm1995, %v4561, %v4562
      %v4570 = vsel %vm1995, %v4560, %v4561
      %v4571 = vsel %vm1995, %v4559, %v4560
      %v4572 = vsel %vm1995, %v4558, %v4559
      %v4573 = vsel %vm1995, %v4557, %v4558
      %v4574 = vsel %vm1995, %v4556, %v4557
      %v4575 = vsel %vm1995, %v4555, %v4556
      %v4576 = vsel %vm1995, %v4554, %v4555
      %v4577 = vsel %vm1995, %v4553, %v4554
      %v4578 = vsel %vm1995, %v4552, %v4553
      %v4579 = vsel %vm1995, %v4551, %v4552
      %v4580 = vsel %vm1995, %v4550, %v4551
      %v4581 = vsel %vm1995, %v4549, %v4550
      %v4582 = vsel %vm1995, %v4548, %v4549
      %v4583 = vsel %vm1995, %v4547, %v4548
      %v4584 = vsel %vm1995, %v4546, %v4547
      %v4585 = vsel %vm1995, %v4545, %v4546
      %v4586 = vsel %vm1995, %v4544, %v4545
      %v4587 = vsel %vm1995, %v4543, %v4544
      %v4588 = vsel %vm1995, %v4542, %v4543
      %v4589 = vsel %vm1995, %v4541, %v4542
      %v4590 = vsel %vm1995, %v4540, %v4541
      %v4591 = vsel %vm1995, %v4539, %v4540
      %v4592 = vsel %vm1995, %v4538, %v4539
      %v4593 = vsel %vm1995, %v4537, %v4538
      %v4594 = vsel %vm1995, %v4536, %v4537
      %v4595 = vsel %vm1995, %v4535, %v4536
      %v4596 = vsel %vm1995, %v4534, %v4535
      %v4597 = vsel %vm1995, %v4565, %v4534
      %v4598 = vsel %vm788, 0.0, %v4596
      %v4599 = vsel %vm789, 0.0, %v4595
      %v4600 = vsel %vm790, 0.0, %v4594
      %v4601 = vsel %vm791, 0.0, %v4593
      %v4602 = vsel %vm792, 0.0, %v4592
      %v4603 = vsel %vm793, 0.0, %v4591
      %v4604 = vsel %vm794, 0.0, %v4590
      %v4605 = vsel %vm795, 0.0, %v4589
      %v4606 = vsel %vm796, 0.0, %v4588
      %v4607 = vsel %vm797, 0.0, %v4587
      %v4608 = vsel %vm798, 0.0, %v4586
      %v4609 = vsel %vm799, 0.0, %v4585
      %v4610 = vsel %vm800, 0.0, %v4584
      %v4611 = vsel %vm801, 0.0, %v4583
      %v4612 = vsel %vm802, 0.0, %v4582
      %v4613 = vsel %vm803, 0.0, %v4581
      %v4614 = vsel %vm804, 0.0, %v4580
      %v4615 = vsel %vm805, 0.0, %v4579
      %v4616 = vsel %vm806, 0.0, %v4578
      %v4617 = vsel %vm807, 0.0, %v4577
      %v4618 = vsel %vm808, 0.0, %v4576
      %v4619 = vsel %vm809, 0.0, %v4575
      %v4620 = vsel %vm810, 0.0, %v4574
      %v4621 = vsel %vm811, 0.0, %v4573
      %v4622 = vsel %vm812, 0.0, %v4572
      %v4623 = vsel %vm813, 0.0, %v4571
      %v4624 = vsel %vm814, 0.0, %v4570
      %v4625 = vsel %vm815, 0.0, %v4569
      %v4626 = vsel %vm816, 0.0, %v4568
      %v4627 = vsel %vm817, 0.0, %v4567
      %v4628 = vsel %vm818, 0.0, %v4566
      %v4629 = vsel %vm819, 0.0, %v4597
      %v4630 = vpack.c.bf16 %v4599, %v4598
      %v4631 = vpack.c.bf16 %v4601, %v4600
      %v4632 = vpack.c.bf16 %v4603, %v4602
      %v4633 = vpack.c.bf16 %v4605, %v4604
      %v4634 = vpack.c.bf16 %v4607, %v4606
      %v4635 = vpack.c.bf16 %v4609, %v4608
      %v4636 = vpack.c.bf16 %v4611, %v4610
      %v4637 = vpack.c.bf16 %v4613, %v4612
      %v4638 = vpack.c.bf16 %v4615, %v4614
      %v4639 = vpack.c.bf16 %v4617, %v4616
      %v4640 = vpack.c.bf16 %v4619, %v4618
      %v4641 = vpack.c.bf16 %v4621, %v4620
      %v4642 = vpack.c.bf16 %v4623, %v4622
      %v4643 = vpack.c.bf16 %v4625, %v4624
      %v4644 = vpack.c.bf16 %v4627, %v4626
      %v4645 = vpack.c.bf16 %v4629, %v4628
      %v4662 = vunpack.c.l.b16 %v4630
      %v4663 = vunpack.c.h.b16 %v4630
      %v4664 = vunpack.c.l.b16 %v4631
      %v4665 = vunpack.c.h.b16 %v4631
      %v4666 = vunpack.c.l.b16 %v4632
      %v4667 = vunpack.c.h.b16 %v4632
      %v4668 = vunpack.c.l.b16 %v4633
      %v4669 = vunpack.c.h.b16 %v4633
      %v4670 = vunpack.c.l.b16 %v4634
      %v4671 = vunpack.c.h.b16 %v4634
      %v4672 = vunpack.c.l.b16 %v4635
      %v4673 = vunpack.c.h.b16 %v4635
      %v4674 = vunpack.c.l.b16 %v4636
      %v4675 = vunpack.c.h.b16 %v4636
      %v4676 = vunpack.c.l.b16 %v4637
      %v4677 = vunpack.c.h.b16 %v4637
      %v4678 = vunpack.c.l.b16 %v4638
      %v4679 = vunpack.c.h.b16 %v4638
      %v4680 = vunpack.c.l.b16 %v4639
      %v4681 = vunpack.c.h.b16 %v4639
      %v4682 = vunpack.c.l.b16 %v4640
      %v4683 = vunpack.c.h.b16 %v4640
      %v4684 = vunpack.c.l.b16 %v4641
      %v4685 = vunpack.c.h.b16 %v4641
      %v4686 = vunpack.c.l.b16 %v4642
      %v4687 = vunpack.c.h.b16 %v4642
      %v4688 = vunpack.c.l.b16 %v4643
      %v4689 = vunpack.c.h.b16 %v4643
      %v4690 = vunpack.c.l.b16 %v4644
      %v4691 = vunpack.c.h.b16 %v4644
      %v4692 = vunpack.c.l.b16 %v4645
      %v4693 = vunpack.c.h.b16 %v4645
      %v4694 = vpack.c.b16 %v4662, %v4662
      %v4695 = vpack.c.b16 %v4663, %v4663
      %v4696 = vpack.c.b16 %v4664, %v4664
      %v4697 = vpack.c.b16 %v4665, %v4665
      %v4698 = vpack.c.b16 %v4666, %v4666
      %v4699 = vpack.c.b16 %v4667, %v4667
      %v4700 = vpack.c.b16 %v4668, %v4668
      %v4701 = vpack.c.b16 %v4669, %v4669
      %v4702 = vpack.c.b16 %v4670, %v4670
      %v4703 = vpack.c.b16 %v4671, %v4671
      %v4704 = vpack.c.b16 %v4672, %v4672
      %v4705 = vpack.c.b16 %v4673, %v4673
      %v4706 = vpack.c.b16 %v4674, %v4674
      %v4707 = vpack.c.b16 %v4675, %v4675
      %v4708 = vpack.c.b16 %v4676, %v4676
      %v4709 = vpack.c.b16 %v4677, %v4677
      %v4710 = vpack.c.b16 %v4678, %v4678
      %v4711 = vpack.c.b16 %v4679, %v4679
      %v4712 = vpack.c.b16 %v4680, %v4680
      %v4713 = vpack.c.b16 %v4681, %v4681
      %v4714 = vpack.c.b16 %v4682, %v4682
      %v4715 = vpack.c.b16 %v4683, %v4683
      %v4716 = vpack.c.b16 %v4684, %v4684
      %v4717 = vpack.c.b16 %v4685, %v4685
      %v4718 = vpack.c.b16 %v4686, %v4686
      %v4719 = vpack.c.b16 %v4687, %v4687
      %v4720 = vpack.c.b16 %v4688, %v4688
      %v4721 = vpack.c.b16 %v4689, %v4689
      %v4722 = vpack.c.b16 %v4690, %v4690
      %v4723 = vpack.c.b16 %v4691, %v4691
      %v4724 = vpack.c.b16 %v4692, %v4692
      %v4725 = vpack.c.b16 %v4693, %v4693
      %4726 = vrot.lane.b32.xlu0 %v4694, 64
      %v4727 = vpop.permute.xlu0 %4726
      %4728 = vrot.lane.b32.xlu0 %v4695, 64
      %v4729 = vpop.permute.xlu0 %4728
      %4730 = vrot.lane.b32.xlu0 %v4696, 64
      %v4731 = vpop.permute.xlu0 %4730
      %4732 = vrot.lane.b32.xlu0 %v4697, 64
      %v4733 = vpop.permute.xlu0 %4732
      %4734 = vrot.lane.b32.xlu0 %v4698, 64
      %v4735 = vpop.permute.xlu0 %4734
      %4736 = vrot.lane.b32.xlu0 %v4699, 64
      %v4737 = vpop.permute.xlu0 %4736
      %4738 = vrot.lane.b32.xlu0 %v4700, 64
      %v4739 = vpop.permute.xlu0 %4738
      %4740 = vrot.lane.b32.xlu0 %v4701, 64
      %v4741 = vpop.permute.xlu0 %4740
      %4742 = vrot.lane.b32.xlu0 %v4702, 64
      %v4743 = vpop.permute.xlu0 %4742
      %4744 = vrot.lane.b32.xlu0 %v4703, 64
      %v4745 = vpop.permute.xlu0 %4744
      %4746 = vrot.lane.b32.xlu0 %v4704, 64
      %v4747 = vpop.permute.xlu0 %4746
      %4748 = vrot.lane.b32.xlu0 %v4705, 64
      %v4749 = vpop.permute.xlu0 %4748
      %4750 = vrot.lane.b32.xlu0 %v4706, 64
      %v4751 = vpop.permute.xlu0 %4750
      %4752 = vrot.lane.b32.xlu0 %v4707, 64
      %v4753 = vpop.permute.xlu0 %4752
      %4754 = vrot.lane.b32.xlu0 %v4708, 64
      %v4755 = vpop.permute.xlu0 %4754
      %4756 = vrot.lane.b32.xlu0 %v4709, 64
      %v4757 = vpop.permute.xlu0 %4756
      %4758 = vrot.lane.b32.xlu0 %v4710, 64
      %v4759 = vpop.permute.xlu0 %4758
      %4760 = vrot.lane.b32.xlu0 %v4711, 64
      %v4761 = vpop.permute.xlu0 %4760
      %4762 = vrot.lane.b32.xlu0 %v4712, 64
      %v4763 = vpop.permute.xlu0 %4762
      %4764 = vrot.lane.b32.xlu0 %v4713, 64
      %v4765 = vpop.permute.xlu0 %4764
      %4766 = vrot.lane.b32.xlu0 %v4714, 64
      %v4767 = vpop.permute.xlu0 %4766
      %4768 = vrot.lane.b32.xlu0 %v4715, 64
      %v4769 = vpop.permute.xlu0 %4768
      %4770 = vrot.lane.b32.xlu0 %v4716, 64
      %v4771 = vpop.permute.xlu0 %4770
      %4772 = vrot.lane.b32.xlu0 %v4717, 64
      %v4773 = vpop.permute.xlu0 %4772
      %4774 = vrot.lane.b32.xlu0 %v4718, 64
      %v4775 = vpop.permute.xlu0 %4774
      %4776 = vrot.lane.b32.xlu0 %v4719, 64
      %v4777 = vpop.permute.xlu0 %4776
      %4778 = vrot.lane.b32.xlu0 %v4720, 64
      %v4779 = vpop.permute.xlu0 %4778
      %4780 = vrot.lane.b32.xlu0 %v4721, 64
      %v4781 = vpop.permute.xlu0 %4780
      %4782 = vrot.lane.b32.xlu0 %v4722, 64
      %v4783 = vpop.permute.xlu0 %4782
      %4784 = vrot.lane.b32.xlu0 %v4723, 64
      %v4785 = vpop.permute.xlu0 %4784
      %4786 = vrot.lane.b32.xlu0 %v4724, 64
      %v4787 = vpop.permute.xlu0 %4786
      %4788 = vrot.lane.b32.xlu0 %v4725, 64
      %v4789 = vpop.permute.xlu0 %4788
      %4822 = vst.msk [vmem:[#allocation2 + $0x8] sm:$0xf] %vm2252, %v4727
      %4823 = vst.msk [vmem:[#allocation2 + $0xc] sm:$0xf] %vm2252, %v4729
      %4824 = vst.msk [vmem:[#allocation2 + $0x10] sm:$0xf] %vm2252, %v4731
      %4825 = vst.msk [vmem:[#allocation2 + $0x14] sm:$0xf] %vm2252, %v4733
      %4826 = vst.msk [vmem:[#allocation2 + $0x18] sm:$0xf] %vm2252, %v4735
      %4827 = vst.msk [vmem:[#allocation2 + $0x1c] sm:$0xf] %vm2252, %v4737
      %4828 = vst.msk [vmem:[#allocation2 + $0x20] sm:$0xf] %vm2252, %v4739
      %4829 = vst.msk [vmem:[#allocation2 + $0x24] sm:$0xf] %vm2252, %v4741
      %4830 = vst.msk [vmem:[#allocation2 + $0x28] sm:$0xf] %vm2252, %v4743
      %4831 = vst.msk [vmem:[#allocation2 + $0x2c] sm:$0xf] %vm2252, %v4745
      %4832 = vst.msk [vmem:[#allocation2 + $0x30] sm:$0xf] %vm2252, %v4747
      %4833 = vst.msk [vmem:[#allocation2 + $0x34] sm:$0xf] %vm2252, %v4749
      %4834 = vst.msk [vmem:[#allocation2 + $0x38] sm:$0xf] %vm2252, %v4751
      %4835 = vst.msk [vmem:[#allocation2 + $0x3c] sm:$0xf] %vm2252, %v4753
      %4836 = vst.msk [vmem:[#allocation2 + $0x40] sm:$0xf] %vm2252, %v4755
      %4837 = vst.msk [vmem:[#allocation2 + $0x44] sm:$0xf] %vm2252, %v4757
      %4838 = vst.msk [vmem:[#allocation2 + $0x48] sm:$0xf] %vm2252, %v4759
      %4839 = vst.msk [vmem:[#allocation2 + $0x4c] sm:$0xf] %vm2252, %v4761
      %4840 = vst.msk [vmem:[#allocation2 + $0x50] sm:$0xf] %vm2252, %v4763
      %4841 = vst.msk [vmem:[#allocation2 + $0x54] sm:$0xf] %vm2252, %v4765
      %4842 = vst.msk [vmem:[#allocation2 + $0x58] sm:$0xf] %vm2252, %v4767
      %4843 = vst.msk [vmem:[#allocation2 + $0x5c] sm:$0xf] %vm2252, %v4769
      %4844 = vst.msk [vmem:[#allocation2 + $0x60] sm:$0xf] %vm2252, %v4771
      %4845 = vst.msk [vmem:[#allocation2 + $0x64] sm:$0xf] %vm2252, %v4773
      %4846 = vst.msk [vmem:[#allocation2 + $0x68] sm:$0xf] %vm2252, %v4775
      %4847 = vst.msk [vmem:[#allocation2 + $0x6c] sm:$0xf] %vm2252, %v4777
      %4848 = vst.msk [vmem:[#allocation2 + $0x70] sm:$0xf] %vm2252, %v4779
      %4849 = vst.msk [vmem:[#allocation2 + $0x74] sm:$0xf] %vm2252, %v4781
      %4850 = vst.msk [vmem:[#allocation2 + $0x78] sm:$0xf] %vm2252, %v4783
      %4851 = vst.msk [vmem:[#allocation2 + $0x7c] sm:$0xf] %vm2252, %v4785
      %4852 = vst.msk [vmem:[#allocation2 + $0x80] sm:$0xf] %vm2252, %v4787
      %4853 = vst.msk [vmem:[#allocation2 + $0x84] sm:$0xf] %vm2252, %v4789
      %v4854 = vld [vmem:[#allocation2] sm:$0xf]
      %v4855 = vld [vmem:[#allocation2 + $0x4] sm:$0xf]
      %v4856 = vld [vmem:[#allocation2 + $0x8] sm:$0xf]
      %v4857 = vld [vmem:[#allocation2 + $0xc] sm:$0xf]
      %v4858 = vld [vmem:[#allocation2 + $0x10] sm:$0xf]
      %v4859 = vld [vmem:[#allocation2 + $0x14] sm:$0xf]
      %v4860 = vld [vmem:[#allocation2 + $0x18] sm:$0xf]
      %v4861 = vld [vmem:[#allocation2 + $0x1c] sm:$0xf]
      %v4862 = vld [vmem:[#allocation2 + $0x20] sm:$0xf]
      %v4863 = vld [vmem:[#allocation2 + $0x24] sm:$0xf]
      %v4864 = vld [vmem:[#allocation2 + $0x28] sm:$0xf]
      %v4865 = vld [vmem:[#allocation2 + $0x2c] sm:$0xf]
      %v4866 = vld [vmem:[#allocation2 + $0x30] sm:$0xf]
      %v4867 = vld [vmem:[#allocation2 + $0x34] sm:$0xf]
      %v4868 = vld [vmem:[#allocation2 + $0x38] sm:$0xf]
      %v4869 = vld [vmem:[#allocation2 + $0x3c] sm:$0xf]
      %v4870 = vld [vmem:[#allocation2 + $0x40] sm:$0xf]
      %v4871 = vld [vmem:[#allocation2 + $0x44] sm:$0xf]
      %v4872 = vld [vmem:[#allocation2 + $0x48] sm:$0xf]
      %v4873 = vld [vmem:[#allocation2 + $0x4c] sm:$0xf]
      %v4874 = vld [vmem:[#allocation2 + $0x50] sm:$0xf]
      %v4875 = vld [vmem:[#allocation2 + $0x54] sm:$0xf]
      %v4876 = vld [vmem:[#allocation2 + $0x58] sm:$0xf]
      %v4877 = vld [vmem:[#allocation2 + $0x5c] sm:$0xf]
      %v4878 = vld [vmem:[#allocation2 + $0x60] sm:$0xf]
      %v4879 = vld [vmem:[#allocation2 + $0x64] sm:$0xf]
      %v4880 = vld [vmem:[#allocation2 + $0x68] sm:$0xf]
      %v4881 = vld [vmem:[#allocation2 + $0x6c] sm:$0xf]
      %v4882 = vld [vmem:[#allocation2 + $0x70] sm:$0xf]
      %v4883 = vld [vmem:[#allocation2 + $0x74] sm:$0xf]
      %v4884 = vld [vmem:[#allocation2 + $0x78] sm:$0xf]
      %v4885 = vld [vmem:[#allocation2 + $0x7c] sm:$0xf]
      %v4886 = vld [vmem:[%s7] sm:$0xf]
      %v4887 = vld [vmem:[%s7 + $0x4] sm:$0xf]
      %v4888 = vld [vmem:[%s7 + $0x8] sm:$0xf]
      %v4889 = vld [vmem:[%s7 + $0xc] sm:$0xf]
      %v4890 = vld [vmem:[%s7 + $0x10] sm:$0xf]
      %v4891 = vld [vmem:[%s7 + $0x14] sm:$0xf]
      %v4892 = vld [vmem:[%s7 + $0x18] sm:$0xf]
      %v4893 = vld [vmem:[%s7 + $0x1c] sm:$0xf]
      %v4894 = vld [vmem:[%s7 + $0x20] sm:$0xf]
      %v4895 = vld [vmem:[%s7 + $0x24] sm:$0xf]
      %v4896 = vld [vmem:[%s7 + $0x28] sm:$0xf]
      %v4897 = vld [vmem:[%s7 + $0x2c] sm:$0xf]
      %v4898 = vld [vmem:[%s8] sm:$0x1]
      %v4900 = vlaneseq
      %v4901 = vshrl.u32 %v4900, 7
      %v4902 = vsub.s32 0, %v4901
      %v4903 = vrot.slane %v4898, %v4902
      %v4937 = vunpack.c.l.b16 %v4854
      %v4938 = vunpack.c.l.b16 %v4855
      %v4939 = vunpack.c.l.b16 %v4856
      %v4940 = vunpack.c.l.b16 %v4857
      %v4941 = vunpack.c.l.b16 %v4858
      %v4942 = vunpack.c.l.b16 %v4859
      %v4943 = vunpack.c.l.b16 %v4860
      %v4944 = vunpack.c.l.b16 %v4861
      %v4945 = vunpack.c.l.b16 %v4862
      %v4946 = vunpack.c.l.b16 %v4863
      %v4947 = vunpack.c.l.b16 %v4864
      %v4948 = vunpack.c.l.b16 %v4865
      %v4949 = vunpack.c.l.b16 %v4866
      %v4950 = vunpack.c.l.b16 %v4867
      %v4951 = vunpack.c.l.b16 %v4868
      %v4952 = vunpack.c.l.b16 %v4869
      %v4953 = vunpack.c.l.b16 %v4870
      %v4954 = vunpack.c.l.b16 %v4871
      %v4955 = vunpack.c.l.b16 %v4872
      %v4956 = vunpack.c.l.b16 %v4873
      %v4957 = vunpack.c.l.b16 %v4874
      %v4958 = vunpack.c.l.b16 %v4875
      %v4959 = vunpack.c.l.b16 %v4876
      %v4960 = vunpack.c.l.b16 %v4877
      %v4961 = vunpack.c.l.b16 %v4878
      %v4962 = vunpack.c.l.b16 %v4879
      %v4963 = vunpack.c.l.b16 %v4880
      %v4964 = vunpack.c.l.b16 %v4881
      %v4965 = vunpack.c.l.b16 %v4882
      %v4966 = vunpack.c.l.b16 %v4883
      %v4967 = vunpack.c.l.b16 %v4884
      %v4968 = vunpack.c.l.b16 %v4885
      %v4969 = vpack.c.b16 %v4938, %v4937
      %v4970 = vpack.c.b16 %v4940, %v4939
      %v4971 = vpack.c.b16 %v4942, %v4941
      %v4972 = vpack.c.b16 %v4944, %v4943
      %v4973 = vpack.c.b16 %v4946, %v4945
      %v4974 = vpack.c.b16 %v4948, %v4947
      %v4975 = vpack.c.b16 %v4950, %v4949
      %v4976 = vpack.c.b16 %v4952, %v4951
      %v4977 = vpack.c.b16 %v4954, %v4953
      %v4978 = vpack.c.b16 %v4956, %v4955
      %v4979 = vpack.c.b16 %v4958, %v4957
      %v4980 = vpack.c.b16 %v4960, %v4959
      %v4981 = vpack.c.b16 %v4962, %v4961
      %v4982 = vpack.c.b16 %v4964, %v4963
      %v4983 = vpack.c.b16 %v4966, %v4965
      %v4984 = vpack.c.b16 %v4968, %v4967
      %v4997 = vunpack.c.l.b16 %v4886
      %v4998 = vunpack.c.l.b16 %v4887
      %v4999 = vunpack.c.l.b16 %v4888
      %v5000 = vunpack.c.l.b16 %v4889
      %v5001 = vunpack.c.l.b16 %v4890
      %v5002 = vunpack.c.l.b16 %v4891
      %v5003 = vunpack.c.l.b16 %v4892
      %v5004 = vunpack.c.l.b16 %v4893
      %v5005 = vunpack.c.l.b16 %v4894
      %v5006 = vunpack.c.l.b16 %v4895
      %v5007 = vunpack.c.l.b16 %v4896
      %v5008 = vunpack.c.l.b16 %v4897
      %v5009 = vpack.c.b16 %v4998, %v4997
      %v5010 = vpack.c.b16 %v5000, %v4999
      %v5011 = vpack.c.b16 %v5002, %v5001
      %v5012 = vpack.c.b16 %v5004, %v5003
      %v5013 = vpack.c.b16 %v5006, %v5005
      %v5014 = vpack.c.b16 %v5008, %v5007
      %v5022 = vsel %vm2452, %v4969, 0
      %v5025 = vsel %vm2452, %v4970, 0
      %v5028 = vsel %vm2452, %v4971, 0
      %v5031 = vsel %vm2452, %v4972, 0
      %v5034 = vsel %vm2452, %v4973, 0
      %v5037 = vsel %vm2452, %v4974, 0
      %v5040 = vsel %vm2452, %v4975, 0
      %v5043 = vsel %vm2452, %v4976, 0
      %v5046 = vsel %vm2452, %v4977, 0
      %v5049 = vsel %vm2452, %v4978, 0
      %v5052 = vsel %vm2452, %v4979, 0
      %v5055 = vsel %vm2452, %v4980, 0
      %v5058 = vsel %vm2452, %v4981, 0
      %v5061 = vsel %vm2452, %v4982, 0
      %v5064 = vsel %vm2452, %v4983, 0
      %v5067 = vsel %vm2452, %v4984, 0
      %5069 = vmatprep.subr.bf16.mxu0 0
      %5070 = vmatpush1.bf16.msra.mxu0 0
      %5071 = vmatprep.subr.bf16.mxu0 0
      %5072 = vmatpush1.bf16.msra.mxu0 0
      %5073 = vmatprep.subr.bf16.mxu0 0
      %5074 = vmatpush1.bf16.msra.mxu0 %v5014
      %5075 = vmatprep.subr.bf16.mxu0 0
      %5076 = vmatpush1.bf16.msra.mxu0 %v5013
      %5077 = vmatprep.subr.bf16.mxu0 0
      %5078 = vmatpush1.bf16.msra.mxu0 %v5012
      %5079 = vmatprep.subr.bf16.mxu0 0
      %5080 = vmatpush1.bf16.msra.mxu0 %v5011
      %5081 = vmatprep.subr.bf16.mxu0 0
      %5082 = vmatpush1.bf16.msra.mxu0 %v5010
      %5083 = vmatprep.subr.bf16.mxu0 0
      %5084 = vmatpush1.bf16.msra.mxu0 %v5009
      %5085 = vmatprep.subr.bf16.mxu0 0
      %5086 = vmatpush2.bf16.msra.mxu0 0
      %5087 = vmatprep.subr.bf16.mxu0 0
      %5088 = vmatpush2.bf16.msra.mxu0 0
      %5089 = vmatprep.subr.bf16.mxu0 0
      %5090 = vmatpush2.bf16.msra.mxu0 0
      %5091 = vmatprep.subr.bf16.mxu0 0
      %5092 = vmatpush2.bf16.msra.mxu0 0
      %5093 = vmatprep.subr.bf16.mxu0 0
      %5094 = vmatpush2.bf16.msra.mxu0 0
      %5095 = vmatprep.subr.bf16.mxu0 0
      %5096 = vmatpush2.bf16.msra.mxu0 0
      %5097 = vmatprep.subr.bf16.mxu0 0
      %5098 = vmatpush2.bf16.msra.mxu0 0
      %5099 = vmatprep.subr.bf16.mxu0 0
      %5100 = vmatpush2.bf16.msra.mxu0 0
      %5101 = vmatprep.mubr.bf16.mxu0 0
      %5102 = vmatmul.mubr.bf16.gmra.mxu0 %v5022
      %v5103 = vpop.f32.mrf.mxu0
      %v5104 = vadd.f32 %v4903, %v5103
      %v5105 = vpop.f32.mrf.mxu0
      %v5106 = vpop.f32.mrf.mxu0
      %v5107 = vadd.f32 %v4903, %v5106
      %v5108 = vpop.f32.mrf.mxu0
      %5109 = vmatprep.mubr.bf16.mxu0 0
      %5110 = vmatmul.mubr.bf16.gmra.mxu0 %v5025
      %v5111 = vpop.f32.mrf.mxu0
      %v5112 = vadd.f32 %v4903, %v5111
      %v5113 = vpop.f32.mrf.mxu0
      %v5114 = vpop.f32.mrf.mxu0
      %v5115 = vadd.f32 %v4903, %v5114
      %v5116 = vpop.f32.mrf.mxu0
      %5117 = vmatprep.mubr.bf16.mxu0 0
      %5118 = vmatmul.mubr.bf16.gmra.mxu0 %v5028
      %v5119 = vpop.f32.mrf.mxu0
      %v5120 = vadd.f32 %v4903, %v5119
      %v5121 = vpop.f32.mrf.mxu0
      %v5122 = vpop.f32.mrf.mxu0
      %v5123 = vadd.f32 %v4903, %v5122
      %v5124 = vpop.f32.mrf.mxu0
      %5125 = vmatprep.mubr.bf16.mxu0 0
      %5126 = vmatmul.mubr.bf16.gmra.mxu0 %v5031
      %v5127 = vpop.f32.mrf.mxu0
      %v5128 = vadd.f32 %v4903, %v5127
      %v5129 = vpop.f32.mrf.mxu0
      %v5130 = vpop.f32.mrf.mxu0
      %v5131 = vadd.f32 %v4903, %v5130
      %v5132 = vpop.f32.mrf.mxu0
      %5133 = vmatprep.mubr.bf16.mxu0 0
      %5134 = vmatmul.mubr.bf16.gmra.mxu0 %v5034
      %v5135 = vpop.f32.mrf.mxu0
      %v5136 = vadd.f32 %v4903, %v5135
      %v5137 = vpop.f32.mrf.mxu0
      %v5138 = vpop.f32.mrf.mxu0
      %v5139 = vadd.f32 %v4903, %v5138
      %v5140 = vpop.f32.mrf.mxu0
      %5141 = vmatprep.mubr.bf16.mxu0 0
      %5142 = vmatmul.mubr.bf16.gmra.mxu0 %v5037
      %v5143 = vpop.f32.mrf.mxu0
      %v5144 = vadd.f32 %v4903, %v5143
      %v5145 = vpop.f32.mrf.mxu0
      %v5146 = vpop.f32.mrf.mxu0
      %v5147 = vadd.f32 %v4903, %v5146
      %v5148 = vpop.f32.mrf.mxu0
      %5149 = vmatprep.mubr.bf16.mxu0 0
      %5150 = vmatmul.mubr.bf16.gmra.mxu0 %v5040
      %v5151 = vpop.f32.mrf.mxu0
      %v5152 = vadd.f32 %v4903, %v5151
      %v5153 = vpop.f32.mrf.mxu0
      %v5154 = vpop.f32.mrf.mxu0
      %v5155 = vadd.f32 %v4903, %v5154
      %v5156 = vpop.f32.mrf.mxu0
      %5157 = vmatprep.mubr.bf16.mxu0 0
      %5158 = vmatmul.mubr.bf16.gmra.mxu0 %v5043
      %v5159 = vpop.f32.mrf.mxu0
      %v5160 = vadd.f32 %v4903, %v5159
      %v5161 = vpop.f32.mrf.mxu0
      %v5162 = vpop.f32.mrf.mxu0
      %v5163 = vadd.f32 %v4903, %v5162
      %v5164 = vpop.f32.mrf.mxu0
      %5165 = vmatprep.mubr.bf16.mxu0 0
      %5166 = vmatmul.mubr.bf16.gmra.mxu0 %v5046
      %v5167 = vpop.f32.mrf.mxu0
      %v5168 = vadd.f32 %v4903, %v5167
      %v5169 = vpop.f32.mrf.mxu0
      %v5170 = vpop.f32.mrf.mxu0
      %v5171 = vadd.f32 %v4903, %v5170
      %v5172 = vpop.f32.mrf.mxu0
      %5173 = vmatprep.mubr.bf16.mxu0 0
      %5174 = vmatmul.mubr.bf16.gmra.mxu0 %v5049
      %v5175 = vpop.f32.mrf.mxu0
      %v5176 = vadd.f32 %v4903, %v5175
      %v5177 = vpop.f32.mrf.mxu0
      %v5178 = vpop.f32.mrf.mxu0
      %v5179 = vadd.f32 %v4903, %v5178
      %v5180 = vpop.f32.mrf.mxu0
      %5181 = vmatprep.mubr.bf16.mxu0 0
      %5182 = vmatmul.mubr.bf16.gmra.mxu0 %v5052
      %v5183 = vpop.f32.mrf.mxu0
      %v5184 = vadd.f32 %v4903, %v5183
      %v5185 = vpop.f32.mrf.mxu0
      %v5186 = vpop.f32.mrf.mxu0
      %v5187 = vadd.f32 %v4903, %v5186
      %v5188 = vpop.f32.mrf.mxu0
      %5189 = vmatprep.mubr.bf16.mxu0 0
      %5190 = vmatmul.mubr.bf16.gmra.mxu0 %v5055
      %v5191 = vpop.f32.mrf.mxu0
      %v5192 = vadd.f32 %v4903, %v5191
      %v5193 = vpop.f32.mrf.mxu0
      %v5194 = vpop.f32.mrf.mxu0
      %v5195 = vadd.f32 %v4903, %v5194
      %v5196 = vpop.f32.mrf.mxu0
      %5197 = vmatprep.mubr.bf16.mxu0 0
      %5198 = vmatmul.mubr.bf16.gmra.mxu0 %v5058
      %v5199 = vpop.f32.mrf.mxu0
      %v5200 = vadd.f32 %v4903, %v5199
      %v5201 = vpop.f32.mrf.mxu0
      %v5202 = vpop.f32.mrf.mxu0
      %v5203 = vadd.f32 %v4903, %v5202
      %v5204 = vpop.f32.mrf.mxu0
      %5205 = vmatprep.mubr.bf16.mxu0 0
      %5206 = vmatmul.mubr.bf16.gmra.mxu0 %v5061
      %v5207 = vpop.f32.mrf.mxu0
      %v5208 = vadd.f32 %v4903, %v5207
      %v5209 = vpop.f32.mrf.mxu0
      %v5210 = vpop.f32.mrf.mxu0
      %v5211 = vadd.f32 %v4903, %v5210
      %v5212 = vpop.f32.mrf.mxu0
      %5213 = vmatprep.mubr.bf16.mxu0 0
      %5214 = vmatmul.mubr.bf16.gmra.mxu0 %v5064
      %v5215 = vpop.f32.mrf.mxu0
      %v5216 = vadd.f32 %v4903, %v5215
      %v5217 = vpop.f32.mrf.mxu0
      %v5218 = vpop.f32.mrf.mxu0
      %v5219 = vadd.f32 %v4903, %v5218
      %v5220 = vpop.f32.mrf.mxu0
      %5221 = vmatprep.mubr.bf16.mxu0 0
      %5222 = vmatmul.mubr.bf16.gmra.mxu0 %v5067
      %v5223 = vpop.f32.mrf.mxu0
      %v5224 = vadd.f32 %v4903, %v5223
      %v5225 = vpop.f32.mrf.mxu0
      %v5226 = vpop.f32.mrf.mxu0
      %v5227 = vadd.f32 %v4903, %v5226
      %v5228 = vpop.f32.mrf.mxu0
      %5229 = vdwg.mxu0
      %v5230 = vld [vmem:[#allocation2 + $0x8] sm:$0xf]
      %v5231 = vld [vmem:[#allocation2 + $0xc] sm:$0xf]
      %v5232 = vld [vmem:[#allocation2 + $0x10] sm:$0xf]
      %v5233 = vld [vmem:[#allocation2 + $0x14] sm:$0xf]
      %v5234 = vld [vmem:[#allocation2 + $0x18] sm:$0xf]
      %v5235 = vld [vmem:[#allocation2 + $0x1c] sm:$0xf]
      %v5236 = vld [vmem:[#allocation2 + $0x20] sm:$0xf]
      %v5237 = vld [vmem:[#allocation2 + $0x24] sm:$0xf]
      %v5238 = vld [vmem:[#allocation2 + $0x28] sm:$0xf]
      %v5239 = vld [vmem:[#allocation2 + $0x2c] sm:$0xf]
      %v5240 = vld [vmem:[#allocation2 + $0x30] sm:$0xf]
      %v5241 = vld [vmem:[#allocation2 + $0x34] sm:$0xf]
      %v5242 = vld [vmem:[#allocation2 + $0x38] sm:$0xf]
      %v5243 = vld [vmem:[#allocation2 + $0x3c] sm:$0xf]
      %v5244 = vld [vmem:[#allocation2 + $0x40] sm:$0xf]
      %v5245 = vld [vmem:[#allocation2 + $0x44] sm:$0xf]
      %v5246 = vld [vmem:[#allocation2 + $0x48] sm:$0xf]
      %v5247 = vld [vmem:[#allocation2 + $0x4c] sm:$0xf]
      %v5248 = vld [vmem:[#allocation2 + $0x50] sm:$0xf]
      %v5249 = vld [vmem:[#allocation2 + $0x54] sm:$0xf]
      %v5250 = vld [vmem:[#allocation2 + $0x58] sm:$0xf]
      %v5251 = vld [vmem:[#allocation2 + $0x5c] sm:$0xf]
      %v5252 = vld [vmem:[#allocation2 + $0x60] sm:$0xf]
      %v5253 = vld [vmem:[#allocation2 + $0x64] sm:$0xf]
      %v5254 = vld [vmem:[#allocation2 + $0x68] sm:$0xf]
      %v5255 = vld [vmem:[#allocation2 + $0x6c] sm:$0xf]
      %v5256 = vld [vmem:[#allocation2 + $0x70] sm:$0xf]
      %v5257 = vld [vmem:[#allocation2 + $0x74] sm:$0xf]
      %v5258 = vld [vmem:[#allocation2 + $0x78] sm:$0xf]
      %v5259 = vld [vmem:[#allocation2 + $0x7c] sm:$0xf]
      %v5260 = vld [vmem:[#allocation2 + $0x80] sm:$0xf]
      %v5261 = vld [vmem:[#allocation2 + $0x84] sm:$0xf]
      %s5262 = scalar_lea.vmem %s7, 48
      %v5263 = vld [vmem:[%s5262] sm:$0xf]
      %v5264 = vld [vmem:[%s5262 + $0x4] sm:$0xf]
      %v5265 = vld [vmem:[%s5262 + $0x8] sm:$0xf]
      %v5266 = vld [vmem:[%s5262 + $0xc] sm:$0xf]
      %v5267 = vld [vmem:[%s5262 + $0x10] sm:$0xf]
      %v5268 = vld [vmem:[%s5262 + $0x14] sm:$0xf]
      %v5269 = vld [vmem:[%s5262 + $0x18] sm:$0xf]
      %v5270 = vld [vmem:[%s5262 + $0x1c] sm:$0xf]
      %v5271 = vld [vmem:[%s5262 + $0x20] sm:$0xf]
      %v5272 = vld [vmem:[%s5262 + $0x24] sm:$0xf]
      %v5273 = vld [vmem:[%s5262 + $0x28] sm:$0xf]
      %v5274 = vld [vmem:[%s5262 + $0x2c] sm:$0xf]
      %v5307 = vunpack.c.l.b16 %v5230
      %v5308 = vunpack.c.l.b16 %v5231
      %v5309 = vunpack.c.l.b16 %v5232
      %v5310 = vunpack.c.l.b16 %v5233
      %v5311 = vunpack.c.l.b16 %v5234
      %v5312 = vunpack.c.l.b16 %v5235
      %v5313 = vunpack.c.l.b16 %v5236
      %v5314 = vunpack.c.l.b16 %v5237
      %v5315 = vunpack.c.l.b16 %v5238
      %v5316 = vunpack.c.l.b16 %v5239
      %v5317 = vunpack.c.l.b16 %v5240
      %v5318 = vunpack.c.l.b16 %v5241
      %v5319 = vunpack.c.l.b16 %v5242
      %v5320 = vunpack.c.l.b16 %v5243
      %v5321 = vunpack.c.l.b16 %v5244
      %v5322 = vunpack.c.l.b16 %v5245
      %v5323 = vunpack.c.l.b16 %v5246
      %v5324 = vunpack.c.l.b16 %v5247
      %v5325 = vunpack.c.l.b16 %v5248
      %v5326 = vunpack.c.l.b16 %v5249
      %v5327 = vunpack.c.l.b16 %v5250
      %v5328 = vunpack.c.l.b16 %v5251
      %v5329 = vunpack.c.l.b16 %v5252
      %v5330 = vunpack.c.l.b16 %v5253
      %v5331 = vunpack.c.l.b16 %v5254
      %v5332 = vunpack.c.l.b16 %v5255
      %v5333 = vunpack.c.l.b16 %v5256
      %v5334 = vunpack.c.l.b16 %v5257
      %v5335 = vunpack.c.l.b16 %v5258
      %v5336 = vunpack.c.l.b16 %v5259
      %v5337 = vunpack.c.l.b16 %v5260
      %v5338 = vunpack.c.l.b16 %v5261
      %v5339 = vpack.c.b16 %v5308, %v5307
      %v5340 = vpack.c.b16 %v5310, %v5309
      %v5341 = vpack.c.b16 %v5312, %v5311
      %v5342 = vpack.c.b16 %v5314, %v5313
      %v5343 = vpack.c.b16 %v5316, %v5315
      %v5344 = vpack.c.b16 %v5318, %v5317
      %v5345 = vpack.c.b16 %v5320, %v5319
      %v5346 = vpack.c.b16 %v5322, %v5321
      %v5347 = vpack.c.b16 %v5324, %v5323
      %v5348 = vpack.c.b16 %v5326, %v5325
      %v5349 = vpack.c.b16 %v5328, %v5327
      %v5350 = vpack.c.b16 %v5330, %v5329
      %v5351 = vpack.c.b16 %v5332, %v5331
      %v5352 = vpack.c.b16 %v5334, %v5333
      %v5353 = vpack.c.b16 %v5336, %v5335
      %v5354 = vpack.c.b16 %v5338, %v5337
      %v5367 = vunpack.c.l.b16 %v5263
      %v5368 = vunpack.c.l.b16 %v5264
      %v5369 = vunpack.c.l.b16 %v5265
      %v5370 = vunpack.c.l.b16 %v5266
      %v5371 = vunpack.c.l.b16 %v5267
      %v5372 = vunpack.c.l.b16 %v5268
      %v5373 = vunpack.c.l.b16 %v5269
      %v5374 = vunpack.c.l.b16 %v5270
      %v5375 = vunpack.c.l.b16 %v5271
      %v5376 = vunpack.c.l.b16 %v5272
      %v5377 = vunpack.c.l.b16 %v5273
      %v5378 = vunpack.c.l.b16 %v5274
      %v5379 = vpack.c.b16 %v5368, %v5367
      %v5380 = vpack.c.b16 %v5370, %v5369
      %v5381 = vpack.c.b16 %v5372, %v5371
      %v5382 = vpack.c.b16 %v5374, %v5373
      %v5383 = vpack.c.b16 %v5376, %v5375
      %v5384 = vpack.c.b16 %v5378, %v5377
      %v5392 = vsel %vm2452, %v5339, 0
      %v5395 = vsel %vm2452, %v5340, 0
      %v5398 = vsel %vm2452, %v5341, 0
      %v5401 = vsel %vm2452, %v5342, 0
      %v5404 = vsel %vm2452, %v5343, 0
      %v5407 = vsel %vm2452, %v5344, 0
      %v5410 = vsel %vm2452, %v5345, 0
      %v5413 = vsel %vm2452, %v5346, 0
      %v5416 = vsel %vm2452, %v5347, 0
      %v5419 = vsel %vm2452, %v5348, 0
      %v5422 = vsel %vm2452, %v5349, 0
      %v5425 = vsel %vm2452, %v5350, 0
      %v5428 = vsel %vm2452, %v5351, 0
      %v5431 = vsel %vm2452, %v5352, 0
      %v5434 = vsel %vm2452, %v5353, 0
      %v5437 = vsel %vm2452, %v5354, 0
      %5439 = vmatprep.subr.bf16.mxu0 0
      %5440 = vmatpush1.bf16.msra.mxu0 0
      %5441 = vmatprep.subr.bf16.mxu0 0
      %5442 = vmatpush1.bf16.msra.mxu0 0
      %5443 = vmatprep.subr.bf16.mxu0 0
      %5444 = vmatpush1.bf16.msra.mxu0 %v5384
      %5445 = vmatprep.subr.bf16.mxu0 0
      %5446 = vmatpush1.bf16.msra.mxu0 %v5383
      %5447 = vmatprep.subr.bf16.mxu0 0
      %5448 = vmatpush1.bf16.msra.mxu0 %v5382
      %5449 = vmatprep.subr.bf16.mxu0 0
      %5450 = vmatpush1.bf16.msra.mxu0 %v5381
      %5451 = vmatprep.subr.bf16.mxu0 0
      %5452 = vmatpush1.bf16.msra.mxu0 %v5380
      %5453 = vmatprep.subr.bf16.mxu0 0
      %5454 = vmatpush1.bf16.msra.mxu0 %v5379
      %5455 = vmatprep.subr.bf16.mxu0 0
      %5456 = vmatpush2.bf16.msra.mxu0 0
      %5457 = vmatprep.subr.bf16.mxu0 0
      %5458 = vmatpush2.bf16.msra.mxu0 0
      %5459 = vmatprep.subr.bf16.mxu0 0
      %5460 = vmatpush2.bf16.msra.mxu0 0
      %5461 = vmatprep.subr.bf16.mxu0 0
      %5462 = vmatpush2.bf16.msra.mxu0 0
      %5463 = vmatprep.subr.bf16.mxu0 0
      %5464 = vmatpush2.bf16.msra.mxu0 0
      %5465 = vmatprep.subr.bf16.mxu0 0
      %5466 = vmatpush2.bf16.msra.mxu0 0
      %5467 = vmatprep.subr.bf16.mxu0 0
      %5468 = vmatpush2.bf16.msra.mxu0 0
      %5469 = vmatprep.subr.bf16.mxu0 0
      %5470 = vmatpush2.bf16.msra.mxu0 0
      %5471 = vmatprep.mubr.bf16.mxu0 0
      %5472 = vmatmul.mubr.bf16.gmra.mxu0 %v5392
      %v5473 = vpop.f32.mrf.mxu0
      %v5474 = vadd.f32 0.0, %v5473
      %v5475 = vpop.f32.mrf.mxu0
      %v5476 = vpop.f32.mrf.mxu0
      %v5477 = vadd.f32 0.0, %v5476
      %v5478 = vpop.f32.mrf.mxu0
      %5479 = vmatprep.mubr.bf16.mxu0 0
      %5480 = vmatmul.mubr.bf16.gmra.mxu0 %v5395
      %v5481 = vpop.f32.mrf.mxu0
      %v5482 = vadd.f32 0.0, %v5481
      %v5483 = vpop.f32.mrf.mxu0
      %v5484 = vpop.f32.mrf.mxu0
      %v5485 = vadd.f32 0.0, %v5484
      %v5486 = vpop.f32.mrf.mxu0
      %5487 = vmatprep.mubr.bf16.mxu0 0
      %5488 = vmatmul.mubr.bf16.gmra.mxu0 %v5398
      %v5489 = vpop.f32.mrf.mxu0
      %v5490 = vadd.f32 0.0, %v5489
      %v5491 = vpop.f32.mrf.mxu0
      %v5492 = vpop.f32.mrf.mxu0
      %v5493 = vadd.f32 0.0, %v5492
      %v5494 = vpop.f32.mrf.mxu0
      %5495 = vmatprep.mubr.bf16.mxu0 0
      %5496 = vmatmul.mubr.bf16.gmra.mxu0 %v5401
      %v5497 = vpop.f32.mrf.mxu0
      %v5498 = vadd.f32 0.0, %v5497
      %v5499 = vpop.f32.mrf.mxu0
      %v5500 = vpop.f32.mrf.mxu0
      %v5501 = vadd.f32 0.0, %v5500
      %v5502 = vpop.f32.mrf.mxu0
      %5503 = vmatprep.mubr.bf16.mxu0 0
      %5504 = vmatmul.mubr.bf16.gmra.mxu0 %v5404
      %v5505 = vpop.f32.mrf.mxu0
      %v5506 = vadd.f32 0.0, %v5505
      %v5507 = vpop.f32.mrf.mxu0
      %v5508 = vpop.f32.mrf.mxu0
      %v5509 = vadd.f32 0.0, %v5508
      %v5510 = vpop.f32.mrf.mxu0
      %5511 = vmatprep.mubr.bf16.mxu0 0
      %5512 = vmatmul.mubr.bf16.gmra.mxu0 %v5407
      %v5513 = vpop.f32.mrf.mxu0
      %v5514 = vadd.f32 0.0, %v5513
      %v5515 = vpop.f32.mrf.mxu0
      %v5516 = vpop.f32.mrf.mxu0
      %v5517 = vadd.f32 0.0, %v5516
      %v5518 = vpop.f32.mrf.mxu0
      %5519 = vmatprep.mubr.bf16.mxu0 0
      %5520 = vmatmul.mubr.bf16.gmra.mxu0 %v5410
      %v5521 = vpop.f32.mrf.mxu0
      %v5522 = vadd.f32 0.0, %v5521
      %v5523 = vpop.f32.mrf.mxu0
      %v5524 = vpop.f32.mrf.mxu0
      %v5525 = vadd.f32 0.0, %v5524
      %v5526 = vpop.f32.mrf.mxu0
      %5527 = vmatprep.mubr.bf16.mxu0 0
      %5528 = vmatmul.mubr.bf16.gmra.mxu0 %v5413
      %v5529 = vpop.f32.mrf.mxu0
      %v5530 = vadd.f32 0.0, %v5529
      %v5531 = vpop.f32.mrf.mxu0
      %v5532 = vpop.f32.mrf.mxu0
      %v5533 = vadd.f32 0.0, %v5532
      %v5534 = vpop.f32.mrf.mxu0
      %5535 = vmatprep.mubr.bf16.mxu0 0
      %5536 = vmatmul.mubr.bf16.gmra.mxu0 %v5416
      %v5537 = vpop.f32.mrf.mxu0
      %v5538 = vadd.f32 0.0, %v5537
      %v5539 = vpop.f32.mrf.mxu0
      %v5540 = vpop.f32.mrf.mxu0
      %v5541 = vadd.f32 0.0, %v5540
      %v5542 = vpop.f32.mrf.mxu0
      %5543 = vmatprep.mubr.bf16.mxu0 0
      %5544 = vmatmul.mubr.bf16.gmra.mxu0 %v5419
      %v5545 = vpop.f32.mrf.mxu0
      %v5546 = vadd.f32 0.0, %v5545
      %v5547 = vpop.f32.mrf.mxu0
      %v5548 = vpop.f32.mrf.mxu0
      %v5549 = vadd.f32 0.0, %v5548
      %v5550 = vpop.f32.mrf.mxu0
      %5551 = vmatprep.mubr.bf16.mxu0 0
      %5552 = vmatmul.mubr.bf16.gmra.mxu0 %v5422
      %v5553 = vpop.f32.mrf.mxu0
      %v5554 = vadd.f32 0.0, %v5553
      %v5555 = vpop.f32.mrf.mxu0
      %v5556 = vpop.f32.mrf.mxu0
      %v5557 = vadd.f32 0.0, %v5556
      %v5558 = vpop.f32.mrf.mxu0
      %5559 = vmatprep.mubr.bf16.mxu0 0
      %5560 = vmatmul.mubr.bf16.gmra.mxu0 %v5425
      %v5561 = vpop.f32.mrf.mxu0
      %v5562 = vadd.f32 0.0, %v5561
      %v5563 = vpop.f32.mrf.mxu0
      %v5564 = vpop.f32.mrf.mxu0
      %v5565 = vadd.f32 0.0, %v5564
      %v5566 = vpop.f32.mrf.mxu0
      %5567 = vmatprep.mubr.bf16.mxu0 0
      %5568 = vmatmul.mubr.bf16.gmra.mxu0 %v5428
      %v5569 = vpop.f32.mrf.mxu0
      %v5570 = vadd.f32 0.0, %v5569
      %v5571 = vpop.f32.mrf.mxu0
      %v5572 = vpop.f32.mrf.mxu0
      %v5573 = vadd.f32 0.0, %v5572
      %v5574 = vpop.f32.mrf.mxu0
      %5575 = vmatprep.mubr.bf16.mxu0 0
      %5576 = vmatmul.mubr.bf16.gmra.mxu0 %v5431
      %v5577 = vpop.f32.mrf.mxu0
      %v5578 = vadd.f32 0.0, %v5577
      %v5579 = vpop.f32.mrf.mxu0
      %v5580 = vpop.f32.mrf.mxu0
      %v5581 = vadd.f32 0.0, %v5580
      %v5582 = vpop.f32.mrf.mxu0
      %5583 = vmatprep.mubr.bf16.mxu0 0
      %5584 = vmatmul.mubr.bf16.gmra.mxu0 %v5434
      %v5585 = vpop.f32.mrf.mxu0
      %v5586 = vadd.f32 0.0, %v5585
      %v5587 = vpop.f32.mrf.mxu0
      %v5588 = vpop.f32.mrf.mxu0
      %v5589 = vadd.f32 0.0, %v5588
      %v5590 = vpop.f32.mrf.mxu0
      %5591 = vmatprep.mubr.bf16.mxu0 0
      %5592 = vmatmul.mubr.bf16.gmra.mxu0 %v5437
      %v5593 = vpop.f32.mrf.mxu0
      %v5594 = vadd.f32 0.0, %v5593
      %v5595 = vpop.f32.mrf.mxu0
      %v5596 = vpop.f32.mrf.mxu0
      %v5597 = vadd.f32 0.0, %v5596
      %v5598 = vpop.f32.mrf.mxu0
      %5599 = vdwg.mxu0
      %v5600 = vadd.f32 %v5104, %v5474
      %v5601 = vadd.f32 %v5107, %v5477
      %v5602 = vadd.f32 %v5112, %v5482
      %v5603 = vadd.f32 %v5115, %v5485
      %v5604 = vadd.f32 %v5120, %v5490
      %v5605 = vadd.f32 %v5123, %v5493
      %v5606 = vadd.f32 %v5128, %v5498
      %v5607 = vadd.f32 %v5131, %v5501
      %v5608 = vadd.f32 %v5136, %v5506
      %v5609 = vadd.f32 %v5139, %v5509
      %v5610 = vadd.f32 %v5144, %v5514
      %v5611 = vadd.f32 %v5147, %v5517
      %v5612 = vadd.f32 %v5152, %v5522
      %v5613 = vadd.f32 %v5155, %v5525
      %v5614 = vadd.f32 %v5160, %v5530
      %v5615 = vadd.f32 %v5163, %v5533
      %v5616 = vadd.f32 %v5168, %v5538
      %v5617 = vadd.f32 %v5171, %v5541
      %v5618 = vadd.f32 %v5176, %v5546
      %v5619 = vadd.f32 %v5179, %v5549
      %v5620 = vadd.f32 %v5184, %v5554
      %v5621 = vadd.f32 %v5187, %v5557
      %v5622 = vadd.f32 %v5192, %v5562
      %v5623 = vadd.f32 %v5195, %v5565
      %v5624 = vadd.f32 %v5200, %v5570
      %v5625 = vadd.f32 %v5203, %v5573
      %v5626 = vadd.f32 %v5208, %v5578
      %v5627 = vadd.f32 %v5211, %v5581
      %v5628 = vadd.f32 %v5216, %v5586
      %v5629 = vadd.f32 %v5219, %v5589
      %v5630 = vadd.f32 %v5224, %v5594
      %v5631 = vadd.f32 %v5227, %v5597
      %v5632 = vld [vmem:[#allocation2 + $0x10] sm:$0xf]
      %v5633 = vld [vmem:[#allocation2 + $0x14] sm:$0xf]
      %v5634 = vld [vmem:[#allocation2 + $0x18] sm:$0xf]
      %v5635 = vld [vmem:[#allocation2 + $0x1c] sm:$0xf]
      %v5636 = vld [vmem:[#allocation2 + $0x20] sm:$0xf]
      %v5637 = vld [vmem:[#allocation2 + $0x24] sm:$0xf]
      %v5638 = vld [vmem:[#allocation2 + $0x28] sm:$0xf]
      %v5639 = vld [vmem:[#allocation2 + $0x2c] sm:$0xf]
      %v5640 = vld [vmem:[#allocation2 + $0x30] sm:$0xf]
      %v5641 = vld [vmem:[#allocation2 + $0x34] sm:$0xf]
      %v5642 = vld [vmem:[#allocation2 + $0x38] sm:$0xf]
      %v5643 = vld [vmem:[#allocation2 + $0x3c] sm:$0xf]
      %v5644 = vld [vmem:[#allocation2 + $0x40] sm:$0xf]
      %v5645 = vld [vmem:[#allocation2 + $0x44] sm:$0xf]
      %v5646 = vld [vmem:[#allocation2 + $0x48] sm:$0xf]
      %v5647 = vld [vmem:[#allocation2 + $0x4c] sm:$0xf]
      %v5648 = vld [vmem:[#allocation2 + $0x50] sm:$0xf]
      %v5649 = vld [vmem:[#allocation2 + $0x54] sm:$0xf]
      %v5650 = vld [vmem:[#allocation2 + $0x58] sm:$0xf]
      %v5651 = vld [vmem:[#allocation2 + $0x5c] sm:$0xf]
      %v5652 = vld [vmem:[#allocation2 + $0x60] sm:$0xf]
      %v5653 = vld [vmem:[#allocation2 + $0x64] sm:$0xf]
      %v5654 = vld [vmem:[#allocation2 + $0x68] sm:$0xf]
      %v5655 = vld [vmem:[#allocation2 + $0x6c] sm:$0xf]
      %v5656 = vld [vmem:[#allocation2 + $0x70] sm:$0xf]
      %v5657 = vld [vmem:[#allocation2 + $0x74] sm:$0xf]
      %v5658 = vld [vmem:[#allocation2 + $0x78] sm:$0xf]
      %v5659 = vld [vmem:[#allocation2 + $0x7c] sm:$0xf]
      %v5660 = vld [vmem:[#allocation2 + $0x80] sm:$0xf]
      %v5661 = vld [vmem:[#allocation2 + $0x84] sm:$0xf]
      %v5662 = vld [vmem:[#allocation2 + $0x88] sm:$0xf]
      %v5663 = vld [vmem:[#allocation2 + $0x8c] sm:$0xf]
      %s5664 = scalar_lea.vmem %s7, 96
      %v5665 = vld [vmem:[%s5664] sm:$0xf]
      %v5666 = vld [vmem:[%s5664 + $0x4] sm:$0xf]
      %v5667 = vld [vmem:[%s5664 + $0x8] sm:$0xf]
      %v5668 = vld [vmem:[%s5664 + $0xc] sm:$0xf]
      %v5669 = vld [vmem:[%s5664 + $0x10] sm:$0xf]
      %v5670 = vld [vmem:[%s5664 + $0x14] sm:$0xf]
      %v5671 = vld [vmem:[%s5664 + $0x18] sm:$0xf]
      %v5672 = vld [vmem:[%s5664 + $0x1c] sm:$0xf]
      %v5673 = vld [vmem:[%s5664 + $0x20] sm:$0xf]
      %v5674 = vld [vmem:[%s5664 + $0x24] sm:$0xf]
      %v5675 = vld [vmem:[%s5664 + $0x28] sm:$0xf]
      %v5676 = vld [vmem:[%s5664 + $0x2c] sm:$0xf]
      %v5709 = vunpack.c.l.b16 %v5632
      %v5710 = vunpack.c.l.b16 %v5633
      %v5711 = vunpack.c.l.b16 %v5634
      %v5712 = vunpack.c.l.b16 %v5635
      %v5713 = vunpack.c.l.b16 %v5636
      %v5714 = vunpack.c.l.b16 %v5637
      %v5715 = vunpack.c.l.b16 %v5638
      %v5716 = vunpack.c.l.b16 %v5639
      %v5717 = vunpack.c.l.b16 %v5640
      %v5718 = vunpack.c.l.b16 %v5641
      %v5719 = vunpack.c.l.b16 %v5642
      %v5720 = vunpack.c.l.b16 %v5643
      %v5721 = vunpack.c.l.b16 %v5644
      %v5722 = vunpack.c.l.b16 %v5645
      %v5723 = vunpack.c.l.b16 %v5646
      %v5724 = vunpack.c.l.b16 %v5647
      %v5725 = vunpack.c.l.b16 %v5648
      %v5726 = vunpack.c.l.b16 %v5649
      %v5727 = vunpack.c.l.b16 %v5650
      %v5728 = vunpack.c.l.b16 %v5651
      %v5729 = vunpack.c.l.b16 %v5652
      %v5730 = vunpack.c.l.b16 %v5653
      %v5731 = vunpack.c.l.b16 %v5654
      %v5732 = vunpack.c.l.b16 %v5655
      %v5733 = vunpack.c.l.b16 %v5656
      %v5734 = vunpack.c.l.b16 %v5657
      %v5735 = vunpack.c.l.b16 %v5658
      %v5736 = vunpack.c.l.b16 %v5659
      %v5737 = vunpack.c.l.b16 %v5660
      %v5738 = vunpack.c.l.b16 %v5661
      %v5739 = vunpack.c.l.b16 %v5662
      %v5740 = vunpack.c.l.b16 %v5663
      %v5741 = vpack.c.b16 %v5710, %v5709
      %v5742 = vpack.c.b16 %v5712, %v5711
      %v5743 = vpack.c.b16 %v5714, %v5713
      %v5744 = vpack.c.b16 %v5716, %v5715
      %v5745 = vpack.c.b16 %v5718, %v5717
      %v5746 = vpack.c.b16 %v5720, %v5719
      %v5747 = vpack.c.b16 %v5722, %v5721
      %v5748 = vpack.c.b16 %v5724, %v5723
      %v5749 = vpack.c.b16 %v5726, %v5725
      %v5750 = vpack.c.b16 %v5728, %v5727
      %v5751 = vpack.c.b16 %v5730, %v5729
      %v5752 = vpack.c.b16 %v5732, %v5731
      %v5753 = vpack.c.b16 %v5734, %v5733
      %v5754 = vpack.c.b16 %v5736, %v5735
      %v5755 = vpack.c.b16 %v5738, %v5737
      %v5756 = vpack.c.b16 %v5740, %v5739
      %v5769 = vunpack.c.l.b16 %v5665
      %v5770 = vunpack.c.l.b16 %v5666
      %v5771 = vunpack.c.l.b16 %v5667
      %v5772 = vunpack.c.l.b16 %v5668
      %v5773 = vunpack.c.l.b16 %v5669
      %v5774 = vunpack.c.l.b16 %v5670
      %v5775 = vunpack.c.l.b16 %v5671
      %v5776 = vunpack.c.l.b16 %v5672
      %v5777 = vunpack.c.l.b16 %v5673
      %v5778 = vunpack.c.l.b16 %v5674
      %v5779 = vunpack.c.l.b16 %v5675
      %v5780 = vunpack.c.l.b16 %v5676
      %v5781 = vpack.c.b16 %v5770, %v5769
      %v5782 = vpack.c.b16 %v5772, %v5771
      %v5783 = vpack.c.b16 %v5774, %v5773
      %v5784 = vpack.c.b16 %v5776, %v5775
      %v5785 = vpack.c.b16 %v5778, %v5777
      %v5786 = vpack.c.b16 %v5780, %v5779
      %v5794 = vsel %vm2452, %v5741, 0
      %v5797 = vsel %vm2452, %v5742, 0
      %v5800 = vsel %vm2452, %v5743, 0
      %v5803 = vsel %vm2452, %v5744, 0
      %v5806 = vsel %vm2452, %v5745, 0
      %v5809 = vsel %vm2452, %v5746, 0
      %v5812 = vsel %vm2452, %v5747, 0
      %v5815 = vsel %vm2452, %v5748, 0
      %v5818 = vsel %vm2452, %v5749, 0
      %v5821 = vsel %vm2452, %v5750, 0
      %v5824 = vsel %vm2452, %v5751, 0
      %v5827 = vsel %vm2452, %v5752, 0
      %v5830 = vsel %vm2452, %v5753, 0
      %v5833 = vsel %vm2452, %v5754, 0
      %v5836 = vsel %vm2452, %v5755, 0
      %v5839 = vsel %vm2452, %v5756, 0
      %5841 = vmatprep.subr.bf16.mxu0 0
      %5842 = vmatpush1.bf16.msra.mxu0 0
      %5843 = vmatprep.subr.bf16.mxu0 0
      %5844 = vmatpush1.bf16.msra.mxu0 0
      %5845 = vmatprep.subr.bf16.mxu0 0
      %5846 = vmatpush1.bf16.msra.mxu0 %v5786
      %5847 = vmatprep.subr.bf16.mxu0 0
      %5848 = vmatpush1.bf16.msra.mxu0 %v5785
      %5849 = vmatprep.subr.bf16.mxu0 0
      %5850 = vmatpush1.bf16.msra.mxu0 %v5784
      %5851 = vmatprep.subr.bf16.mxu0 0
      %5852 = vmatpush1.bf16.msra.mxu0 %v5783
      %5853 = vmatprep.subr.bf16.mxu0 0
      %5854 = vmatpush1.bf16.msra.mxu0 %v5782
      %5855 = vmatprep.subr.bf16.mxu0 0
      %5856 = vmatpush1.bf16.msra.mxu0 %v5781
      %5857 = vmatprep.subr.bf16.mxu0 0
      %5858 = vmatpush2.bf16.msra.mxu0 0
      %5859 = vmatprep.subr.bf16.mxu0 0
      %5860 = vmatpush2.bf16.msra.mxu0 0
      %5861 = vmatprep.subr.bf16.mxu0 0
      %5862 = vmatpush2.bf16.msra.mxu0 0
      %5863 = vmatprep.subr.bf16.mxu0 0
      %5864 = vmatpush2.bf16.msra.mxu0 0
      %5865 = vmatprep.subr.bf16.mxu0 0
      %5866 = vmatpush2.bf16.msra.mxu0 0
      %5867 = vmatprep.subr.bf16.mxu0 0
      %5868 = vmatpush2.bf16.msra.mxu0 0
      %5869 = vmatprep.subr.bf16.mxu0 0
      %5870 = vmatpush2.bf16.msra.mxu0 0
      %5871 = vmatprep.subr.bf16.mxu0 0
      %5872 = vmatpush2.bf16.msra.mxu0 0
      %5873 = vmatprep.mubr.bf16.mxu0 0
      %5874 = vmatmul.mubr.bf16.gmra.mxu0 %v5794
      %v5875 = vpop.f32.mrf.mxu0
      %v5876 = vadd.f32 0.0, %v5875
      %v5877 = vpop.f32.mrf.mxu0
      %v5878 = vpop.f32.mrf.mxu0
      %v5879 = vadd.f32 0.0, %v5878
      %v5880 = vpop.f32.mrf.mxu0
      %5881 = vmatprep.mubr.bf16.mxu0 0
      %5882 = vmatmul.mubr.bf16.gmra.mxu0 %v5797
      %v5883 = vpop.f32.mrf.mxu0
      %v5884 = vadd.f32 0.0, %v5883
      %v5885 = vpop.f32.mrf.mxu0
      %v5886 = vpop.f32.mrf.mxu0
      %v5887 = vadd.f32 0.0, %v5886
      %v5888 = vpop.f32.mrf.mxu0
      %5889 = vmatprep.mubr.bf16.mxu0 0
      %5890 = vmatmul.mubr.bf16.gmra.mxu0 %v5800
      %v5891 = vpop.f32.mrf.mxu0
      %v5892 = vadd.f32 0.0, %v5891
      %v5893 = vpop.f32.mrf.mxu0
      %v5894 = vpop.f32.mrf.mxu0
      %v5895 = vadd.f32 0.0, %v5894
      %v5896 = vpop.f32.mrf.mxu0
      %5897 = vmatprep.mubr.bf16.mxu0 0
      %5898 = vmatmul.mubr.bf16.gmra.mxu0 %v5803
      %v5899 = vpop.f32.mrf.mxu0
      %v5900 = vadd.f32 0.0, %v5899
      %v5901 = vpop.f32.mrf.mxu0
      %v5902 = vpop.f32.mrf.mxu0
      %v5903 = vadd.f32 0.0, %v5902
      %v5904 = vpop.f32.mrf.mxu0
      %5905 = vmatprep.mubr.bf16.mxu0 0
      %5906 = vmatmul.mubr.bf16.gmra.mxu0 %v5806
      %v5907 = vpop.f32.mrf.mxu0
      %v5908 = vadd.f32 0.0, %v5907
      %v5909 = vpop.f32.mrf.mxu0
      %v5910 = vpop.f32.mrf.mxu0
      %v5911 = vadd.f32 0.0, %v5910
      %v5912 = vpop.f32.mrf.mxu0
      %5913 = vmatprep.mubr.bf16.mxu0 0
      %5914 = vmatmul.mubr.bf16.gmra.mxu0 %v5809
      %v5915 = vpop.f32.mrf.mxu0
      %v5916 = vadd.f32 0.0, %v5915
      %v5917 = vpop.f32.mrf.mxu0
      %v5918 = vpop.f32.mrf.mxu0
      %v5919 = vadd.f32 0.0, %v5918
      %v5920 = vpop.f32.mrf.mxu0
      %5921 = vmatprep.mubr.bf16.mxu0 0
      %5922 = vmatmul.mubr.bf16.gmra.mxu0 %v5812
      %v5923 = vpop.f32.mrf.mxu0
      %v5924 = vadd.f32 0.0, %v5923
      %v5925 = vpop.f32.mrf.mxu0
      %v5926 = vpop.f32.mrf.mxu0
      %v5927 = vadd.f32 0.0, %v5926
      %v5928 = vpop.f32.mrf.mxu0
      %5929 = vmatprep.mubr.bf16.mxu0 0
      %5930 = vmatmul.mubr.bf16.gmra.mxu0 %v5815
      %v5931 = vpop.f32.mrf.mxu0
      %v5932 = vadd.f32 0.0, %v5931
      %v5933 = vpop.f32.mrf.mxu0
      %v5934 = vpop.f32.mrf.mxu0
      %v5935 = vadd.f32 0.0, %v5934
      %v5936 = vpop.f32.mrf.mxu0
      %5937 = vmatprep.mubr.bf16.mxu0 0
      %5938 = vmatmul.mubr.bf16.gmra.mxu0 %v5818
      %v5939 = vpop.f32.mrf.mxu0
      %v5940 = vadd.f32 0.0, %v5939
      %v5941 = vpop.f32.mrf.mxu0
      %v5942 = vpop.f32.mrf.mxu0
      %v5943 = vadd.f32 0.0, %v5942
      %v5944 = vpop.f32.mrf.mxu0
      %5945 = vmatprep.mubr.bf16.mxu0 0
      %5946 = vmatmul.mubr.bf16.gmra.mxu0 %v5821
      %v5947 = vpop.f32.mrf.mxu0
      %v5948 = vadd.f32 0.0, %v5947
      %v5949 = vpop.f32.mrf.mxu0
      %v5950 = vpop.f32.mrf.mxu0
      %v5951 = vadd.f32 0.0, %v5950
      %v5952 = vpop.f32.mrf.mxu0
      %5953 = vmatprep.mubr.bf16.mxu0 0
      %5954 = vmatmul.mubr.bf16.gmra.mxu0 %v5824
      %v5955 = vpop.f32.mrf.mxu0
      %v5956 = vadd.f32 0.0, %v5955
      %v5957 = vpop.f32.mrf.mxu0
      %v5958 = vpop.f32.mrf.mxu0
      %v5959 = vadd.f32 0.0, %v5958
      %v5960 = vpop.f32.mrf.mxu0
      %5961 = vmatprep.mubr.bf16.mxu0 0
      %5962 = vmatmul.mubr.bf16.gmra.mxu0 %v5827
      %v5963 = vpop.f32.mrf.mxu0
      %v5964 = vadd.f32 0.0, %v5963
      %v5965 = vpop.f32.mrf.mxu0
      %v5966 = vpop.f32.mrf.mxu0
      %v5967 = vadd.f32 0.0, %v5966
      %v5968 = vpop.f32.mrf.mxu0
      %5969 = vmatprep.mubr.bf16.mxu0 0
      %5970 = vmatmul.mubr.bf16.gmra.mxu0 %v5830
      %v5971 = vpop.f32.mrf.mxu0
      %v5972 = vadd.f32 0.0, %v5971
      %v5973 = vpop.f32.mrf.mxu0
      %v5974 = vpop.f32.mrf.mxu0
      %v5975 = vadd.f32 0.0, %v5974
      %v5976 = vpop.f32.mrf.mxu0
      %5977 = vmatprep.mubr.bf16.mxu0 0
      %5978 = vmatmul.mubr.bf16.gmra.mxu0 %v5833
      %v5979 = vpop.f32.mrf.mxu0
      %v5980 = vadd.f32 0.0, %v5979
      %v5981 = vpop.f32.mrf.mxu0
      %v5982 = vpop.f32.mrf.mxu0
      %v5983 = vadd.f32 0.0, %v5982
      %v5984 = vpop.f32.mrf.mxu0
      %5985 = vmatprep.mubr.bf16.mxu0 0
      %5986 = vmatmul.mubr.bf16.gmra.mxu0 %v5836
      %v5987 = vpop.f32.mrf.mxu0
      %v5988 = vadd.f32 0.0, %v5987
      %v5989 = vpop.f32.mrf.mxu0
      %v5990 = vpop.f32.mrf.mxu0
      %v5991 = vadd.f32 0.0, %v5990
      %v5992 = vpop.f32.mrf.mxu0
      %5993 = vmatprep.mubr.bf16.mxu0 0
      %5994 = vmatmul.mubr.bf16.gmra.mxu0 %v5839
      %v5995 = vpop.f32.mrf.mxu0
      %v5996 = vadd.f32 0.0, %v5995
      %v5997 = vpop.f32.mrf.mxu0
      %v5998 = vpop.f32.mrf.mxu0
      %v5999 = vadd.f32 0.0, %v5998
      %v6000 = vpop.f32.mrf.mxu0
      %6001 = vdwg.mxu0
      %v6002 = vadd.f32 %v5600, %v5876
      %v6003 = vadd.f32 %v5601, %v5879
      %v6004 = vadd.f32 %v5602, %v5884
      %v6005 = vadd.f32 %v5603, %v5887
      %v6006 = vadd.f32 %v5604, %v5892
      %v6007 = vadd.f32 %v5605, %v5895
      %v6008 = vadd.f32 %v5606, %v5900
      %v6009 = vadd.f32 %v5607, %v5903
      %v6010 = vadd.f32 %v5608, %v5908
      %v6011 = vadd.f32 %v5609, %v5911
      %v6012 = vadd.f32 %v5610, %v5916
      %v6013 = vadd.f32 %v5611, %v5919
      %v6014 = vadd.f32 %v5612, %v5924
      %v6015 = vadd.f32 %v5613, %v5927
      %v6016 = vadd.f32 %v5614, %v5932
      %v6017 = vadd.f32 %v5615, %v5935
      %v6018 = vadd.f32 %v5616, %v5940
      %v6019 = vadd.f32 %v5617, %v5943
      %v6020 = vadd.f32 %v5618, %v5948
      %v6021 = vadd.f32 %v5619, %v5951
      %v6022 = vadd.f32 %v5620, %v5956
      %v6023 = vadd.f32 %v5621, %v5959
      %v6024 = vadd.f32 %v5622, %v5964
      %v6025 = vadd.f32 %v5623, %v5967
      %v6026 = vadd.f32 %v5624, %v5972
      %v6027 = vadd.f32 %v5625, %v5975
      %v6028 = vadd.f32 %v5626, %v5980
      %v6029 = vadd.f32 %v5627, %v5983
      %v6030 = vadd.f32 %v5628, %v5988
      %v6031 = vadd.f32 %v5629, %v5991
      %v6032 = vadd.f32 %v5630, %v5996
      %v6033 = vadd.f32 %v5631, %v5999
      %v6034 = vadd.f32 %v6002, %v852
      %v6035 = vadd.f32 %v6003, %v853
      %v6036 = vadd.f32 %v6004, %v854
      %v6037 = vadd.f32 %v6005, %v855
      %v6038 = vadd.f32 %v6006, %v856
      %v6039 = vadd.f32 %v6007, %v857
      %v6040 = vadd.f32 %v6008, %v858
      %v6041 = vadd.f32 %v6009, %v859
      %v6042 = vadd.f32 %v6010, %v860
      %v6043 = vadd.f32 %v6011, %v861
      %v6044 = vadd.f32 %v6012, %v862
      %v6045 = vadd.f32 %v6013, %v863
      %v6046 = vadd.f32 %v6014, %v864
      %v6047 = vadd.f32 %v6015, %v865
      %v6048 = vadd.f32 %v6016, %v866
      %v6049 = vadd.f32 %v6017, %v867
      %v6050 = vadd.f32 %v6018, %v868
      %v6051 = vadd.f32 %v6019, %v869
      %v6052 = vadd.f32 %v6020, %v870
      %v6053 = vadd.f32 %v6021, %v871
      %v6054 = vadd.f32 %v6022, %v872
      %v6055 = vadd.f32 %v6023, %v873
      %v6056 = vadd.f32 %v6024, %v874
      %v6057 = vadd.f32 %v6025, %v875
      %v6058 = vadd.f32 %v6026, %v876
      %v6059 = vadd.f32 %v6027, %v877
      %v6060 = vadd.f32 %v6028, %v878
      %v6061 = vadd.f32 %v6029, %v879
      %v6062 = vadd.f32 %v6030, %v880
      %v6063 = vadd.f32 %v6031, %v881
      %v6064 = vadd.f32 %v6032, %v882
      %v6065 = vadd.f32 %v6033, %v883
      %v6066 = vpack.c.bf16 %v6035, %v6034
      %v6067 = vpack.c.bf16 %v6037, %v6036
      %v6068 = vpack.c.bf16 %v6039, %v6038
      %v6069 = vpack.c.bf16 %v6041, %v6040
      %v6070 = vpack.c.bf16 %v6043, %v6042
      %v6071 = vpack.c.bf16 %v6045, %v6044
      %v6072 = vpack.c.bf16 %v6047, %v6046
      %v6073 = vpack.c.bf16 %v6049, %v6048
      %v6074 = vpack.c.bf16 %v6051, %v6050
      %v6075 = vpack.c.bf16 %v6053, %v6052
      %v6076 = vpack.c.bf16 %v6055, %v6054
      %v6077 = vpack.c.bf16 %v6057, %v6056
      %v6078 = vpack.c.bf16 %v6059, %v6058
      %v6079 = vpack.c.bf16 %v6061, %v6060
      %v6080 = vpack.c.bf16 %v6063, %v6062
      %v6081 = vpack.c.bf16 %v6065, %v6064
      %v6098 = vunpack.c.l.b16 %v6066
      %v6099 = vunpack.c.h.b16 %v6066
      %v6100 = vunpack.c.l.b16 %v6067
      %v6101 = vunpack.c.h.b16 %v6067
      %v6102 = vunpack.c.l.b16 %v6068
      %v6103 = vunpack.c.h.b16 %v6068
      %v6104 = vunpack.c.l.b16 %v6069
      %v6105 = vunpack.c.h.b16 %v6069
      %v6106 = vunpack.c.l.b16 %v6070
      %v6107 = vunpack.c.h.b16 %v6070
      %v6108 = vunpack.c.l.b16 %v6071
      %v6109 = vunpack.c.h.b16 %v6071
      %v6110 = vunpack.c.l.b16 %v6072
      %v6111 = vunpack.c.h.b16 %v6072
      %v6112 = vunpack.c.l.b16 %v6073
      %v6113 = vunpack.c.h.b16 %v6073
      %v6114 = vunpack.c.l.b16 %v6074
      %v6115 = vunpack.c.h.b16 %v6074
      %v6116 = vunpack.c.l.b16 %v6075
      %v6117 = vunpack.c.h.b16 %v6075
      %v6118 = vunpack.c.l.b16 %v6076
      %v6119 = vunpack.c.h.b16 %v6076
      %v6120 = vunpack.c.l.b16 %v6077
      %v6121 = vunpack.c.h.b16 %v6077
      %v6122 = vunpack.c.l.b16 %v6078
      %v6123 = vunpack.c.h.b16 %v6078
      %v6124 = vunpack.c.l.b16 %v6079
      %v6125 = vunpack.c.h.b16 %v6079
      %v6126 = vunpack.c.l.b16 %v6080
      %v6127 = vunpack.c.h.b16 %v6080
      %v6128 = vunpack.c.l.b16 %v6081
      %v6129 = vunpack.c.h.b16 %v6081
      %v6130 = vpack.c.b16 %v6098, %v6098
      %v6131 = vpack.c.b16 %v6099, %v6099
      %v6132 = vpack.c.b16 %v6100, %v6100
      %v6133 = vpack.c.b16 %v6101, %v6101
      %v6134 = vpack.c.b16 %v6102, %v6102
      %v6135 = vpack.c.b16 %v6103, %v6103
      %v6136 = vpack.c.b16 %v6104, %v6104
      %v6137 = vpack.c.b16 %v6105, %v6105
      %v6138 = vpack.c.b16 %v6106, %v6106
      %v6139 = vpack.c.b16 %v6107, %v6107
      %v6140 = vpack.c.b16 %v6108, %v6108
      %v6141 = vpack.c.b16 %v6109, %v6109
      %v6142 = vpack.c.b16 %v6110, %v6110
      %v6143 = vpack.c.b16 %v6111, %v6111
      %v6144 = vpack.c.b16 %v6112, %v6112
      %v6145 = vpack.c.b16 %v6113, %v6113
      %v6146 = vpack.c.b16 %v6114, %v6114
      %v6147 = vpack.c.b16 %v6115, %v6115
      %v6148 = vpack.c.b16 %v6116, %v6116
      %v6149 = vpack.c.b16 %v6117, %v6117
      %v6150 = vpack.c.b16 %v6118, %v6118
      %v6151 = vpack.c.b16 %v6119, %v6119
      %v6152 = vpack.c.b16 %v6120, %v6120
      %v6153 = vpack.c.b16 %v6121, %v6121
      %v6154 = vpack.c.b16 %v6122, %v6122
      %v6155 = vpack.c.b16 %v6123, %v6123
      %v6156 = vpack.c.b16 %v6124, %v6124
      %v6157 = vpack.c.b16 %v6125, %v6125
      %v6158 = vpack.c.b16 %v6126, %v6126
      %v6159 = vpack.c.b16 %v6127, %v6127
      %v6160 = vpack.c.b16 %v6128, %v6128
      %v6161 = vpack.c.b16 %v6129, %v6129
      %6194 = vst.msk [vmem:[%s332] sm:$0xf] %vm1930, %v6130
      %6195 = vst.msk [vmem:[%s332 + $0x4] sm:$0xf] %vm1930, %v6131
      %6196 = vst.msk [vmem:[%s332 + $0x8] sm:$0xf] %vm1930, %v6132
      %6197 = vst.msk [vmem:[%s332 + $0xc] sm:$0xf] %vm1930, %v6133
      %6198 = vst.msk [vmem:[%s332 + $0x10] sm:$0xf] %vm1930, %v6134
      %6199 = vst.msk [vmem:[%s332 + $0x14] sm:$0xf] %vm1930, %v6135
      %6200 = vst.msk [vmem:[%s332 + $0x18] sm:$0xf] %vm1930, %v6136
      %6201 = vst.msk [vmem:[%s332 + $0x1c] sm:$0xf] %vm1930, %v6137
      %6202 = vst.msk [vmem:[%s332 + $0x20] sm:$0xf] %vm1930, %v6138
      %6203 = vst.msk [vmem:[%s332 + $0x24] sm:$0xf] %vm1930, %v6139
      %6204 = vst.msk [vmem:[%s332 + $0x28] sm:$0xf] %vm1930, %v6140
      %6205 = vst.msk [vmem:[%s332 + $0x2c] sm:$0xf] %vm1930, %v6141
      %6206 = vst.msk [vmem:[%s332 + $0x30] sm:$0xf] %vm1930, %v6142
      %6207 = vst.msk [vmem:[%s332 + $0x34] sm:$0xf] %vm1930, %v6143
      %6208 = vst.msk [vmem:[%s332 + $0x38] sm:$0xf] %vm1930, %v6144
      %6209 = vst.msk [vmem:[%s332 + $0x3c] sm:$0xf] %vm1930, %v6145
      %6210 = vst.msk [vmem:[%s332 + $0x40] sm:$0xf] %vm1930, %v6146
      %6211 = vst.msk [vmem:[%s332 + $0x44] sm:$0xf] %vm1930, %v6147
      %6212 = vst.msk [vmem:[%s332 + $0x48] sm:$0xf] %vm1930, %v6148
      %6213 = vst.msk [vmem:[%s332 + $0x4c] sm:$0xf] %vm1930, %v6149
      %6214 = vst.msk [vmem:[%s332 + $0x50] sm:$0xf] %vm1930, %v6150
      %6215 = vst.msk [vmem:[%s332 + $0x54] sm:$0xf] %vm1930, %v6151
      %6216 = vst.msk [vmem:[%s332 + $0x58] sm:$0xf] %vm1930, %v6152
      %6217 = vst.msk [vmem:[%s332 + $0x5c] sm:$0xf] %vm1930, %v6153
      %6218 = vst.msk [vmem:[%s332 + $0x60] sm:$0xf] %vm1930, %v6154
      %6219 = vst.msk [vmem:[%s332 + $0x64] sm:$0xf] %vm1930, %v6155
      %6220 = vst.msk [vmem:[%s332 + $0x68] sm:$0xf] %vm1930, %v6156
      %6221 = vst.msk [vmem:[%s332 + $0x6c] sm:$0xf] %vm1930, %v6157
      %6222 = vst.msk [vmem:[%s332 + $0x70] sm:$0xf] %vm1930, %v6158
      %6223 = vst.msk [vmem:[%s332 + $0x74] sm:$0xf] %vm1930, %v6159
      %6224 = vst.msk [vmem:[%s332 + $0x78] sm:$0xf] %vm1930, %v6160
      %6225 = vst.msk [vmem:[%s332 + $0x7c] sm:$0xf] %vm1930, %v6161
      %p6226 = scmp.lt.s32.totalorder %s20, 1
      %s6227 = scalar_select %p6226, %s20, 1
      %s6228 = smul.addr %s6227, 32
      %s6229 = smul.addr %s6228, 4
      %s6230 = scalar_lea.vmem %s9, %s6229
      // Predicated region
      $region57: #{res_block_up_down_sample.3} parent=55 // pred_check
        %p6231 = pneg %p232
      $region58: #{res_block_up_down_sample.3} parent=55 // pred_check_branch
        %6233 = sbr.rel (%p6231) target = $region60
      $region59: #{res_block_up_down_sample.3} parent=55 // pred_region
        _
      $region60: #{res_block_up_down_sample.3} parent=55 // pred_fallthru
        _
    $region56: #{res_block_up_down_sample.3} parent=5 // pred_fallthru
      _
    %p6234 = scmp.le.s32.totalorder 2, %s15
    // Predicated region
    $region61: #{res_block_up_down_sample.3} parent=5 // pred_check
      %p6235 = pneg %p6234
    $region62: #{res_block_up_down_sample.3} parent=5 // pred_check_branch
      %6237 = sbr.rel (%p6235) target = $region64
    $region63: #{res_block_up_down_sample.3} parent=5 // pred_region
      %s6238 = ssub.s32 %s15, 2
      // Predicated region
      $region65: #{res_block_up_down_sample.3} parent=63 // pred_check
        %p6239 = pneg %p238
      $region66: #{res_block_up_down_sample.3} parent=63 // pred_check_branch
        %6241 = sbr.rel (%p6239) target = $region68
      $region67: #{res_block_up_down_sample.3} parent=63 // pred_region
        %p6242 = scmp.lt.s32.totalorder %s21, 1
        %s6243 = scalar_select %p6242, %s21, 1
        %s6244 = smul.addr %s6243, 32
        %s6245 = smul.addr %s6244, 4
        %s6246 = scalar_lea.vmem %s9, %s6245
      $region68: #{res_block_up_down_sample.3} parent=63 // pred_fallthru
        _
    $region64: #{res_block_up_down_sample.3} parent=5 // pred_fallthru
      _
  $region6: #{res_block_up_down_sample.3} parent=0 // loop_footer
    %s19 = sadd.s32 1, %s15
  $region7: #{res_block_up_down_sample.3} parent=0 // loop_footer_branch
    %14 = sbr.rel target = $region3
  $region8: #{res_block_up_down_sample.3} parent=0 // loop_exit
    _

</llo_original>
